<compile_context>
chip_gen: v7x
topology: tpu7x:2x2x1
jax: 0.10.0
libtpu: 0.0.40
codegen_flags: <defaults>
</compile_context>

<pallas_src>
import jax
import jax.numpy as jnp
from jax import lax
from jax.experimental import pallas as pl
from jax.experimental.pallas import tpu as pltpu

EPS = 1e-5            # BatchNorm3d default eps
LEAKY_SLOPE = 0.01    # acti_func='leakyrelu', acti_func_param=0.01
LANE = 128            # lane width: pad channel dim to a multiple of this
BN_TILE_CAP = 2048    # max rows per grid step of the BN/activation pass


def _round_up(x, m):
    return ((x + m - 1) // m) * m


def _row_tile(m, cap=BN_TILE_CAP):
    """Largest divisor of m that is <= cap (keeps the BN grid exact, no tail)."""
    t = min(m, cap)
    while t > 1 and m % t != 0:
        t -= 1
    return max(t, 1)


# --------------------------------------------------------------------------
# Pallas kernels
# --------------------------------------------------------------------------
def _bn_act_kernel(y_ref, scale_ref, shift_ref, o_ref):
    """Fused BatchNorm (pre-folded per-channel scale/shift) + LeakyReLU.

    Operates on a lane-dense (TILE, Cout_padded) slab; reads/writes bf16,
    computes in f32.
    """
    z = y_ref[...].astype(jnp.float32) * scale_ref[...] + shift_ref[...]
    o_ref[...] = jnp.where(z >= 0, z, LEAKY_SLOPE * z).astype(o_ref.dtype)


# --------------------------------------------------------------------------
# One ConvolutionLayer: Conv3d(k=3,pad=1,bias) + BatchNorm3d(train) + LeakyReLU
# --------------------------------------------------------------------------
def conv_bn_lrelu(a_ndhwc, w_torch, b_vec, gamma, beta):
    n, d, h, w_sp, cin = a_ndhwc.shape
    cout = w_torch.shape[0]
    coutp = _round_up(cout, LANE)          # lane-dense channel width
    dp, hp, wp = d + 2, h + 2, w_sp + 2    # zero-padded spatial dims

    # Per output depth slice we compute the conv over the "padded grid":
    # rows_out = H * Wp rows (the Wp-W right-most columns per row are junk and
    # are masked out of the statistics and sliced away afterwards).  This lets
    # every (kh, kw) tap be a *contiguous* static row-slice of the flattened
    # (Hp*Wp, Cin) input slab -> no in-kernel gathers/reshapes.
    rows_out = h * wp
    rows_in = _round_up(hp * wp + 2, 8)    # +2 covers the kh=2,kw=2 tap overrun

    # ---- JAX-side prep (cheap, ~1.3x the activation bytes; no 27x blow-up) ----
    xpad = jnp.pad(a_ndhwc.astype(jnp.bfloat16),
                   ((0, 0), (1, 1), (1, 1), (1, 1), (0, 0)))
    xflat = xpad.reshape(n, dp, hp * wp, cin)
    xflat = jnp.pad(xflat, ((0, 0), (0, 0), (0, rows_in - hp * wp), (0, 0)))

    # (Cout, Cin, kD, kH, kW) -> (kd, kh, kw, Cin, Cout) -> (27, Cin, Cout_p)
    w27 = jnp.transpose(w_torch, (2, 3, 4, 1, 0)).reshape(27, cin, cout)
    w27 = jnp.pad(w27, ((0, 0), (0, 0), (0, coutp - cout))).astype(jnp.bfloat16)
    bias2d = jnp.pad(b_vec.reshape(1, cout).astype(jnp.float32),
                     ((0, 0), (0, coutp - cout)))

    # ---- Pass 1: conv (27 shifted MXU matmuls) + per-tile partial BN stats ----
    def conv_kernel(x0_ref, x1_ref, x2_ref, w_ref, b_ref, y_ref, s_ref, ss_ref):
        slabs = (x0_ref[0, 0], x1_ref[0, 0], x2_ref[0, 0])   # (rows_in, Cin) bf16
        acc = jnp.zeros((rows_out, coutp), jnp.float32)
        for kd in range(3):
            xf = slabs[kd]
            for kh in range(3):
                for kw in range(3):
                    off = kh * wp + kw                       # static row offset
                    acc += jnp.dot(xf[off:off + rows_out, :],
                                   w_ref[kd * 9 + kh * 3 + kw],
                                   preferred_element_type=jnp.float32)
        y = acc + b_ref[...]                                  # conv bias (f32)
        y_ref[0, 0] = y.astype(y_ref.dtype)                   # bf16, lane-dense

        # Partial batch statistics over *valid* voxels only (mask junk columns).
        col = lax.broadcasted_iota(jnp.int32, (rows_out, 1), 0) % wp
        valid = (col < w_sp).astype(jnp.float32)
        ym = y * valid
        s_ref[0] = jnp.sum(ym, axis=0, keepdims=True)
        ss_ref[0] = jnp.sum(ym * ym, axis=0, keepdims=True)

    conv_cost = pl.CostEstimate(
        flops=2 * n * d * 27 * rows_out * cin * coutp,
        transcendentals=0,
        bytes_accessed=int(3 * xflat.size * 2 + w27.size * 2 + bias2d.size * 4
                           + n * d * rows_out * coutp * 2
                           + 2 * n * d * coutp * 4))

    y, psum, psumsq = pl.pallas_call(
        conv_kernel,
        out_shape=(jax.ShapeDtypeStruct((n, d, rows_out, coutp), jnp.bfloat16),
                   jax.ShapeDtypeStruct((n * d, 1, coutp), jnp.float32),
                   jax.ShapeDtypeStruct((n * d, 1, coutp), jnp.float32)),
        grid_spec=pltpu.PrefetchScalarGridSpec(
            num_scalar_prefetch=0,
            grid=(n, d),
            in_specs=[
                # Three overlapping depth slabs d, d+1, d+2 of the padded input.
                pl.BlockSpec((1, 1, rows_in, cin), lambda i, j: (i, j, 0, 0)),
                pl.BlockSpec((1, 1, rows_in, cin), lambda i, j: (i, j + 1, 0, 0)),
                pl.BlockSpec((1, 1, rows_in, cin), lambda i, j: (i, j + 2, 0, 0)),
                pl.BlockSpec((27, cin, coutp), lambda i, j: (0, 0, 0)),  # resident
                pl.BlockSpec((1, coutp), lambda i, j: (0, 0)),           # resident
            ],
            out_specs=(
                pl.BlockSpec((1, 1, rows_out, coutp), lambda i, j: (i, j, 0, 0)),
                pl.BlockSpec((1, 1, coutp), lambda i, j: (i * d + j, 0, 0)),
                pl.BlockSpec((1, 1, coutp), lambda i, j: (i * d + j, 0, 0)),
            )),
        compiler_params=pltpu.CompilerParams(
            dimension_semantics=("parallel", "parallel"),   # megacore-friendly
            vmem_limit_bytes=64 * 1024 * 1024),
        cost_estimate=conv_cost,
    )(xflat, xflat, xflat, w27, bias2d)

    # ---- Finalize BN statistics in JAX (tiny) ----
    count = float(n * d * h * w_sp)
    s = jnp.sum(psum, axis=(0, 1))
    ss = jnp.sum(psumsq, axis=(0, 1))
    mean = s / count
    # Guard the E[y^2] - E[y]^2 cancellation (review correctness concern).
    var = jnp.maximum(ss / count - mean * mean, 0.0)
    inv_std = lax.rsqrt(var + EPS)
    gp = jnp.pad(gamma.astype(jnp.float32), (0, coutp - cout))
    bp = jnp.pad(beta.astype(jnp.float32), (0, coutp - cout))
    scale = (gp * inv_std).reshape(1, coutp)
    shift = (bp - mean * gp * inv_std).reshape(1, coutp)

    # ---- Pass 2: fused BN + LeakyReLU, lane-dense, large row tiles ----
    m_rows = n * d * rows_out
    tile = _row_tile(m_rows)
    bn_cost = pl.CostEstimate(
        flops=2 * m_rows * coutp,
        transcendentals=0,
        bytes_accessed=int(2 * m_rows * coutp * 2 + 2 * coutp * 4))

    act = pl.pallas_call(
        _bn_act_kernel,
        out_shape=jax.ShapeDtypeStruct((m_rows, coutp), jnp.bfloat16),
        grid_spec=pltpu.PrefetchScalarGridSpec(
            num_scalar_prefetch=0,
            grid=(m_rows // tile,),
            in_specs=[pl.BlockSpec((tile, coutp), lambda i: (i, 0)),
                      pl.BlockSpec((1, coutp), lambda i: (0, 0)),
                      pl.BlockSpec((1, coutp), lambda i: (0, 0))],
            out_specs=pl.BlockSpec((tile, coutp), lambda i: (i, 0))),
        compiler_params=pltpu.CompilerParams(
            dimension_semantics=("parallel",),
            vmem_limit_bytes=64 * 1024 * 1024),
        cost_estimate=bn_cost,
    )(y.reshape(m_rows, coutp), scale, shift)

    # Drop the padded-grid junk columns and the channel padding (small copy).
    act = act.reshape(n, d, h, wp, coutp)[:, :, :, :w_sp, :cout]
    return act


def unet_block_forward(x_ncdhw, params):
    """UNetBlock.forward: conv1 -> conv2 (each = Conv3d + BN + LeakyReLU).

    Activations stay NDHWC / bf16 between the two layers; only the block
    entry/exit transposes to/from PyTorch's NCDHW.
    """
    a = jnp.transpose(x_ncdhw, (0, 2, 3, 4, 1))          # NCDHW -> NDHWC
    a = conv_bn_lrelu(a, params["w1"], params["b1"], params["g1"], params["be1"])
    a = conv_bn_lrelu(a, params["w2"], params["b2"], params["g2"], params["be2"])
    return jnp.transpose(a, (0, 4, 1, 2, 3)).astype(jnp.float32)   # -> NCDHW


# --------------------------------------------------------------------------
# Deterministic parameter init (shapes from UNetBlock.__init__)
# --------------------------------------------------------------------------
def init_params(key, cin, cout):
    ks = jax.random.split(key, 8)

    def conv_w(k, ci, co):
        fan_in = ci * 27
        return jax.random.normal(k, (co, ci, 3, 3, 3), jnp.float32) / jnp.sqrt(fan_in)

    return {
        "w1": conv_w(ks[0], cin, cout),
        "b1": 0.1 * jax.random.normal(ks[1], (cout,), jnp.float32),
        "g1": 1.0 + 0.1 * jax.random.normal(ks[2], (cout,), jnp.float32),
        "be1": 0.1 * jax.random.normal(ks[3], (cout,), jnp.float32),
        "w2": conv_w(ks[4], cout, cout),
        "b2": 0.1 * jax.random.normal(ks[5], (cout,), jnp.float32),
        "g2": 1.0 + 0.1 * jax.random.normal(ks[6], (cout,), jnp.float32),
        "be2": 0.1 * jax.random.normal(ks[7], (cout,), jnp.float32),
    }


# Pure-JAX reference (mirrors the PyTorch forward).  Inputs/weights are rounded
# through bf16 to match the MXU operand precision used in the kernels; all math
# is f32.
def reference(x_ncdhw, params):
    def rbf16(t):
        return t.astype(jnp.bfloat16).astype(jnp.float32)

    def layer(x, w, b, g, be):
        y = lax.conv_general_dilated(
            rbf16(x), rbf16(w), window_strides=(1, 1, 1), padding=[(1, 1)] * 3,
            dimension_numbers=("NCDHW", "OIDHW", "NCDHW"),
            precision=lax.Precision.HIGHEST)
        y = y + b.reshape(1, -1, 1, 1, 1)
        mean = jnp.mean(y, axis=(0, 2, 3, 4), keepdims=True)
        var = jnp.mean((y - mean) ** 2, axis=(0, 2, 3, 4), keepdims=True)
        y = (y - mean) / jnp.sqrt(var + EPS)
        y = y * g.reshape(1, -1, 1, 1, 1) + be.reshape(1, -1, 1, 1, 1)
        return jnp.where(y >= 0, y, LEAKY_SLOPE * y)

    x = layer(x_ncdhw, params["w1"], params["b1"], params["g1"], params["be1"])
    x = layer(x, params["w2"], params["b2"], params["g2"], params["be2"])
    return x


if __name__ == "__main__":
    N, CIN, COUT, D, H, W = 2, 4, 8, 8, 8, 8
    key = jax.random.PRNGKey(0)
    k_x, k_p = jax.random.split(key)
    x = jax.random.normal(k_x, (N, CIN, D, H, W), jnp.float32)
    params = init_params(k_p, CIN, COUT)

    fwd = jax.jit(unet_block_forward)
    out = jax.block_until_ready(fwd(x, params))
    assert out.shape == (N, COUT, D, H, W)

    ref = jax.block_until_ready(reference(x, params))
    if jnp.allclose(out, ref, atol=5e-2, rtol=5e-2):
        print("KERNEL_OK")
    else:
        print("mismatch, max abs err:", float(jnp.max(jnp.abs(out - ref))))
</pallas_src>

<mosaic_0001>
module attributes {stable_mosaic.version = 11 : i64} {
  func.func @conv_kernel(%arg0: i32, %arg1: i32, %arg2: memref<1x1x104x4xbf16, #tpu.memory_space<vmem>>, %arg3: memref<1x1x104x4xbf16, #tpu.memory_space<vmem>>, %arg4: memref<1x1x104x4xbf16, #tpu.memory_space<vmem>>, %arg5: memref<27x4x128xbf16, #tpu.memory_space<vmem>>, %arg6: memref<1x128xf32, #tpu.memory_space<vmem>>, %arg7: memref<1x1x80x128xbf16, #tpu.memory_space<vmem>>, %arg8: memref<1x1x128xf32, #tpu.memory_space<vmem>>, %arg9: memref<1x1x128xf32, #tpu.memory_space<vmem>>) attributes {dimension_semantics = [#tpu.dimension_semantics<parallel>, #tpu.dimension_semantics<parallel>], iteration_bounds = array<i64: 2, 8>, scalar_prefetch = 0 : i64, scratch_operands = 0 : i64, tpu.core_type = #tpu.core_type<tc>, window_params = [{transform_indices = @transform_0, window_bounds = array<i64: 1, 1, 104, 4>}, {transform_indices = @transform_1, window_bounds = array<i64: 1, 1, 104, 4>}, {transform_indices = @transform_2, window_bounds = array<i64: 1, 1, 104, 4>}, {pipeline_mode = #tpu.pipeline_mode<synchronous>, transform_indices = @transform_3, window_bounds = array<i64: 27, 4, 128>}, {pipeline_mode = #tpu.pipeline_mode<synchronous>, transform_indices = @transform_4, window_bounds = array<i64: 1, 128>}, {transform_indices = @transform_5, window_bounds = array<i64: 1, 1, 80, 128>}, {transform_indices = @transform_6, window_bounds = array<i64: 1, 1, 128>}, {transform_indices = @transform_7, window_bounds = array<i64: 1, 1, 128>}]} {
    %c0 = arith.constant 0 : index
    %c0_0 = arith.constant 0 : index
    %c0_1 = arith.constant 0 : index
    %c0_2 = arith.constant 0 : index
    %0 = vector.load %arg2[%c0, %c0_0, %c0_1, %c0_2] : memref<1x1x104x4xbf16, #tpu.memory_space<vmem>>, vector<1x1x104x4xbf16>
    %1 = vector.shape_cast %0 : vector<1x1x104x4xbf16> to vector<104x4xbf16>
    %c0_3 = arith.constant 0 : index
    %c0_4 = arith.constant 0 : index
    %c0_5 = arith.constant 0 : index
    %c0_6 = arith.constant 0 : index
    %2 = vector.load %arg3[%c0_3, %c0_4, %c0_5, %c0_6] : memref<1x1x104x4xbf16, #tpu.memory_space<vmem>>, vector<1x1x104x4xbf16>
    %3 = vector.shape_cast %2 : vector<1x1x104x4xbf16> to vector<104x4xbf16>
    %c0_7 = arith.constant 0 : index
    %c0_8 = arith.constant 0 : index
    %c0_9 = arith.constant 0 : index
    %c0_10 = arith.constant 0 : index
    %4 = vector.load %arg4[%c0_7, %c0_8, %c0_9, %c0_10] : memref<1x1x104x4xbf16, #tpu.memory_space<vmem>>, vector<1x1x104x4xbf16>
    %5 = vector.shape_cast %4 : vector<1x1x104x4xbf16> to vector<104x4xbf16>
    %cst = arith.constant 0.000000e+00 : f32
    %6 = vector.broadcast %cst : f32 to vector<80x128xf32>
    %7 = vector.extract_strided_slice %1 {offsets = [0, 0], sizes = [80, 4], strides = [1, 1]} : vector<104x4xbf16> to vector<80x4xbf16>
    %c0_11 = arith.constant 0 : index
    %c0_12 = arith.constant 0 : index
    %c0_13 = arith.constant 0 : index
    %8 = vector.load %arg5[%c0_11, %c0_12, %c0_13] : memref<27x4x128xbf16, #tpu.memory_space<vmem>>, vector<1x4x128xbf16>
    %9 = vector.shape_cast %8 : vector<1x4x128xbf16> to vector<4x128xbf16>
    %cst_14 = arith.constant dense<0.000000e+00> : vector<80x128xf32>
    %10 = tpu.matmul %7, %9, %cst_14 {dimension_numbers = #tpu.dot_dimension_numbers<[1], [0], [0], [1], [0, 0, 1, 1], [], []>} : vector<80x4xbf16>, vector<4x128xbf16>, vector<80x128xf32> -> vector<80x128xf32>
    %11 = arith.addf %6, %10 : vector<80x128xf32>
    %12 = vector.extract_strided_slice %1 {offsets = [1, 0], sizes = [80, 4], strides = [1, 1]} : vector<104x4xbf16> to vector<80x4xbf16>
    %c1 = arith.constant 1 : index
    %c0_15 = arith.constant 0 : index
    %c0_16 = arith.constant 0 : index
    %13 = vector.load %arg5[%c1, %c0_15, %c0_16] : memref<27x4x128xbf16, #tpu.memory_space<vmem>>, vector<1x4x128xbf16>
    %14 = vector.shape_cast %13 : vector<1x4x128xbf16> to vector<4x128xbf16>
    %cst_17 = arith.constant dense<0.000000e+00> : vector<80x128xf32>
    %15 = tpu.matmul %12, %14, %cst_17 {dimension_numbers = #tpu.dot_dimension_numbers<[1], [0], [0], [1], [0, 0, 1, 1], [], []>} : vector<80x4xbf16>, vector<4x128xbf16>, vector<80x128xf32> -> vector<80x128xf32>
    %16 = arith.addf %11, %15 : vector<80x128xf32>
    %17 = vector.extract_strided_slice %1 {offsets = [2, 0], sizes = [80, 4], strides = [1, 1]} : vector<104x4xbf16> to vector<80x4xbf16>
    %c2 = arith.constant 2 : index
    %c0_18 = arith.constant 0 : index
    %c0_19 = arith.constant 0 : index
    %18 = vector.load %arg5[%c2, %c0_18, %c0_19] : memref<27x4x128xbf16, #tpu.memory_space<vmem>>, vector<1x4x128xbf16>
    %19 = vector.shape_cast %18 : vector<1x4x128xbf16> to vector<4x128xbf16>
    %cst_20 = arith.constant dense<0.000000e+00> : vector<80x128xf32>
    %20 = tpu.matmul %17, %19, %cst_20 {dimension_numbers = #tpu.dot_dimension_numbers<[1], [0], [0], [1], [0, 0, 1, 1], [], []>} : vector<80x4xbf16>, vector<4x128xbf16>, vector<80x128xf32> -> vector<80x128xf32>
    %21 = arith.addf %16, %20 : vector<80x128xf32>
    %22 = vector.extract_strided_slice %1 {offsets = [10, 0], sizes = [80, 4], strides = [1, 1]} : vector<104x4xbf16> to vector<80x4xbf16>
    %c3 = arith.constant 3 : index
    %c0_21 = arith.constant 0 : index
    %c0_22 = arith.constant 0 : index
    %23 = vector.load %arg5[%c3, %c0_21, %c0_22] : memref<27x4x128xbf16, #tpu.memory_space<vmem>>, vector<1x4x128xbf16>
    %24 = vector.shape_cast %23 : vector<1x4x128xbf16> to vector<4x128xbf16>
    %cst_23 = arith.constant dense<0.000000e+00> : vector<80x128xf32>
    %25 = tpu.matmul %22, %24, %cst_23 {dimension_numbers = #tpu.dot_dimension_numbers<[1], [0], [0], [1], [0, 0, 1, 1], [], []>} : vector<80x4xbf16>, vector<4x128xbf16>, vector<80x128xf32> -> vector<80x128xf32>
    %26 = arith.addf %21, %25 : vector<80x128xf32>
    %27 = vector.extract_strided_slice %1 {offsets = [11, 0], sizes = [80, 4], strides = [1, 1]} : vector<104x4xbf16> to vector<80x4xbf16>
    %c4 = arith.constant 4 : index
    %c0_24 = arith.constant 0 : index
    %c0_25 = arith.constant 0 : index
    %28 = vector.load %arg5[%c4, %c0_24, %c0_25] : memref<27x4x128xbf16, #tpu.memory_space<vmem>>, vector<1x4x128xbf16>
    %29 = vector.shape_cast %28 : vector<1x4x128xbf16> to vector<4x128xbf16>
    %cst_26 = arith.constant dense<0.000000e+00> : vector<80x128xf32>
    %30 = tpu.matmul %27, %29, %cst_26 {dimension_numbers = #tpu.dot_dimension_numbers<[1], [0], [0], [1], [0, 0, 1, 1], [], []>} : vector<80x4xbf16>, vector<4x128xbf16>, vector<80x128xf32> -> vector<80x128xf32>
    %31 = arith.addf %26, %30 : vector<80x128xf32>
    %32 = vector.extract_strided_slice %1 {offsets = [12, 0], sizes = [80, 4], strides = [1, 1]} : vector<104x4xbf16> to vector<80x4xbf16>
    %c5 = arith.constant 5 : index
    %c0_27 = arith.constant 0 : index
    %c0_28 = arith.constant 0 : index
    %33 = vector.load %arg5[%c5, %c0_27, %c0_28] : memref<27x4x128xbf16, #tpu.memory_space<vmem>>, vector<1x4x128xbf16>
    %34 = vector.shape_cast %33 : vector<1x4x128xbf16> to vector<4x128xbf16>
    %cst_29 = arith.constant dense<0.000000e+00> : vector<80x128xf32>
    %35 = tpu.matmul %32, %34, %cst_29 {dimension_numbers = #tpu.dot_dimension_numbers<[1], [0], [0], [1], [0, 0, 1, 1], [], []>} : vector<80x4xbf16>, vector<4x128xbf16>, vector<80x128xf32> -> vector<80x128xf32>
    %36 = arith.addf %31, %35 : vector<80x128xf32>
    %37 = vector.extract_strided_slice %1 {offsets = [20, 0], sizes = [80, 4], strides = [1, 1]} : vector<104x4xbf16> to vector<80x4xbf16>
    %c6 = arith.constant 6 : index
    %c0_30 = arith.constant 0 : index
    %c0_31 = arith.constant 0 : index
    %38 = vector.load %arg5[%c6, %c0_30, %c0_31] : memref<27x4x128xbf16, #tpu.memory_space<vmem>>, vector<1x4x128xbf16>
    %39 = vector.shape_cast %38 : vector<1x4x128xbf16> to vector<4x128xbf16>
    %cst_32 = arith.constant dense<0.000000e+00> : vector<80x128xf32>
    %40 = tpu.matmul %37, %39, %cst_32 {dimension_numbers = #tpu.dot_dimension_numbers<[1], [0], [0], [1], [0, 0, 1, 1], [], []>} : vector<80x4xbf16>, vector<4x128xbf16>, vector<80x128xf32> -> vector<80x128xf32>
    %41 = arith.addf %36, %40 : vector<80x128xf32>
    %42 = vector.extract_strided_slice %1 {offsets = [21, 0], sizes = [80, 4], strides = [1, 1]} : vector<104x4xbf16> to vector<80x4xbf16>
    %c7 = arith.constant 7 : index
    %c0_33 = arith.constant 0 : index
    %c0_34 = arith.constant 0 : index
    %43 = vector.load %arg5[%c7, %c0_33, %c0_34] : memref<27x4x128xbf16, #tpu.memory_space<vmem>>, vector<1x4x128xbf16>
    %44 = vector.shape_cast %43 : vector<1x4x128xbf16> to vector<4x128xbf16>
    %cst_35 = arith.constant dense<0.000000e+00> : vector<80x128xf32>
    %45 = tpu.matmul %42, %44, %cst_35 {dimension_numbers = #tpu.dot_dimension_numbers<[1], [0], [0], [1], [0, 0, 1, 1], [], []>} : vector<80x4xbf16>, vector<4x128xbf16>, vector<80x128xf32> -> vector<80x128xf32>
    %46 = arith.addf %41, %45 : vector<80x128xf32>
    %47 = vector.extract_strided_slice %1 {offsets = [22, 0], sizes = [80, 4], strides = [1, 1]} : vector<104x4xbf16> to vector<80x4xbf16>
    %c8 = arith.constant 8 : index
    %c0_36 = arith.constant 0 : index
    %c0_37 = arith.constant 0 : index
    %48 = vector.load %arg5[%c8, %c0_36, %c0_37] : memref<27x4x128xbf16, #tpu.memory_space<vmem>>, vector<1x4x128xbf16>
    %49 = vector.shape_cast %48 : vector<1x4x128xbf16> to vector<4x128xbf16>
    %cst_38 = arith.constant dense<0.000000e+00> : vector<80x128xf32>
    %50 = tpu.matmul %47, %49, %cst_38 {dimension_numbers = #tpu.dot_dimension_numbers<[1], [0], [0], [1], [0, 0, 1, 1], [], []>} : vector<80x4xbf16>, vector<4x128xbf16>, vector<80x128xf32> -> vector<80x128xf32>
    %51 = arith.addf %46, %50 : vector<80x128xf32>
    %52 = vector.extract_strided_slice %3 {offsets = [0, 0], sizes = [80, 4], strides = [1, 1]} : vector<104x4xbf16> to vector<80x4xbf16>
    %c9 = arith.constant 9 : index
    %c0_39 = arith.constant 0 : index
    %c0_40 = arith.constant 0 : index
    %53 = vector.load %arg5[%c9, %c0_39, %c0_40] : memref<27x4x128xbf16, #tpu.memory_space<vmem>>, vector<1x4x128xbf16>
    %54 = vector.shape_cast %53 : vector<1x4x128xbf16> to vector<4x128xbf16>
    %cst_41 = arith.constant dense<0.000000e+00> : vector<80x128xf32>
    %55 = tpu.matmul %52, %54, %cst_41 {dimension_numbers = #tpu.dot_dimension_numbers<[1], [0], [0], [1], [0, 0, 1, 1], [], []>} : vector<80x4xbf16>, vector<4x128xbf16>, vector<80x128xf32> -> vector<80x128xf32>
    %56 = arith.addf %51, %55 : vector<80x128xf32>
    %57 = vector.extract_strided_slice %3 {offsets = [1, 0], sizes = [80, 4], strides = [1, 1]} : vector<104x4xbf16> to vector<80x4xbf16>
    %c10 = arith.constant 10 : index
    %c0_42 = arith.constant 0 : index
    %c0_43 = arith.constant 0 : index
    %58 = vector.load %arg5[%c10, %c0_42, %c0_43] : memref<27x4x128xbf16, #tpu.memory_space<vmem>>, vector<1x4x128xbf16>
    %59 = vector.shape_cast %58 : vector<1x4x128xbf16> to vector<4x128xbf16>
    %cst_44 = arith.constant dense<0.000000e+00> : vector<80x128xf32>
    %60 = tpu.matmul %57, %59, %cst_44 {dimension_numbers = #tpu.dot_dimension_numbers<[1], [0], [0], [1], [0, 0, 1, 1], [], []>} : vector<80x4xbf16>, vector<4x128xbf16>, vector<80x128xf32> -> vector<80x128xf32>
    %61 = arith.addf %56, %60 : vector<80x128xf32>
    %62 = vector.extract_strided_slice %3 {offsets = [2, 0], sizes = [80, 4], strides = [1, 1]} : vector<104x4xbf16> to vector<80x4xbf16>
    %c11 = arith.constant 11 : index
    %c0_45 = arith.constant 0 : index
    %c0_46 = arith.constant 0 : index
    %63 = vector.load %arg5[%c11, %c0_45, %c0_46] : memref<27x4x128xbf16, #tpu.memory_space<vmem>>, vector<1x4x128xbf16>
    %64 = vector.shape_cast %63 : vector<1x4x128xbf16> to vector<4x128xbf16>
    %cst_47 = arith.constant dense<0.000000e+00> : vector<80x128xf32>
    %65 = tpu.matmul %62, %64, %cst_47 {dimension_numbers = #tpu.dot_dimension_numbers<[1], [0], [0], [1], [0, 0, 1, 1], [], []>} : vector<80x4xbf16>, vector<4x128xbf16>, vector<80x128xf32> -> vector<80x128xf32>
    %66 = arith.addf %61, %65 : vector<80x128xf32>
    %67 = vector.extract_strided_slice %3 {offsets = [10, 0], sizes = [80, 4], strides = [1, 1]} : vector<104x4xbf16> to vector<80x4xbf16>
    %c12 = arith.constant 12 : index
    %c0_48 = arith.constant 0 : index
    %c0_49 = arith.constant 0 : index
    %68 = vector.load %arg5[%c12, %c0_48, %c0_49] : memref<27x4x128xbf16, #tpu.memory_space<vmem>>, vector<1x4x128xbf16>
    %69 = vector.shape_cast %68 : vector<1x4x128xbf16> to vector<4x128xbf16>
    %cst_50 = arith.constant dense<0.000000e+00> : vector<80x128xf32>
    %70 = tpu.matmul %67, %69, %cst_50 {dimension_numbers = #tpu.dot_dimension_numbers<[1], [0], [0], [1], [0, 0, 1, 1], [], []>} : vector<80x4xbf16>, vector<4x128xbf16>, vector<80x128xf32> -> vector<80x128xf32>
    %71 = arith.addf %66, %70 : vector<80x128xf32>
    %72 = vector.extract_strided_slice %3 {offsets = [11, 0], sizes = [80, 4], strides = [1, 1]} : vector<104x4xbf16> to vector<80x4xbf16>
    %c13 = arith.constant 13 : index
    %c0_51 = arith.constant 0 : index
    %c0_52 = arith.constant 0 : index
    %73 = vector.load %arg5[%c13, %c0_51, %c0_52] : memref<27x4x128xbf16, #tpu.memory_space<vmem>>, vector<1x4x128xbf16>
    %74 = vector.shape_cast %73 : vector<1x4x128xbf16> to vector<4x128xbf16>
    %cst_53 = arith.constant dense<0.000000e+00> : vector<80x128xf32>
    %75 = tpu.matmul %72, %74, %cst_53 {dimension_numbers = #tpu.dot_dimension_numbers<[1], [0], [0], [1], [0, 0, 1, 1], [], []>} : vector<80x4xbf16>, vector<4x128xbf16>, vector<80x128xf32> -> vector<80x128xf32>
    %76 = arith.addf %71, %75 : vector<80x128xf32>
    %77 = vector.extract_strided_slice %3 {offsets = [12, 0], sizes = [80, 4], strides = [1, 1]} : vector<104x4xbf16> to vector<80x4xbf16>
    %c14 = arith.constant 14 : index
    %c0_54 = arith.constant 0 : index
    %c0_55 = arith.constant 0 : index
    %78 = vector.load %arg5[%c14, %c0_54, %c0_55] : memref<27x4x128xbf16, #tpu.memory_space<vmem>>, vector<1x4x128xbf16>
    %79 = vector.shape_cast %78 : vector<1x4x128xbf16> to vector<4x128xbf16>
    %cst_56 = arith.constant dense<0.000000e+00> : vector<80x128xf32>
    %80 = tpu.matmul %77, %79, %cst_56 {dimension_numbers = #tpu.dot_dimension_numbers<[1], [0], [0], [1], [0, 0, 1, 1], [], []>} : vector<80x4xbf16>, vector<4x128xbf16>, vector<80x128xf32> -> vector<80x128xf32>
    %81 = arith.addf %76, %80 : vector<80x128xf32>
    %82 = vector.extract_strided_slice %3 {offsets = [20, 0], sizes = [80, 4], strides = [1, 1]} : vector<104x4xbf16> to vector<80x4xbf16>
    %c15 = arith.constant 15 : index
    %c0_57 = arith.constant 0 : index
    %c0_58 = arith.constant 0 : index
    %83 = vector.load %arg5[%c15, %c0_57, %c0_58] : memref<27x4x128xbf16, #tpu.memory_space<vmem>>, vector<1x4x128xbf16>
    %84 = vector.shape_cast %83 : vector<1x4x128xbf16> to vector<4x128xbf16>
    %cst_59 = arith.constant dense<0.000000e+00> : vector<80x128xf32>
    %85 = tpu.matmul %82, %84, %cst_59 {dimension_numbers = #tpu.dot_dimension_numbers<[1], [0], [0], [1], [0, 0, 1, 1], [], []>} : vector<80x4xbf16>, vector<4x128xbf16>, vector<80x128xf32> -> vector<80x128xf32>
    %86 = arith.addf %81, %85 : vector<80x128xf32>
    %87 = vector.extract_strided_slice %3 {offsets = [21, 0], sizes = [80, 4], strides = [1, 1]} : vector<104x4xbf16> to vector<80x4xbf16>
    %c16 = arith.constant 16 : index
    %c0_60 = arith.constant 0 : index
    %c0_61 = arith.constant 0 : index
    %88 = vector.load %arg5[%c16, %c0_60, %c0_61] : memref<27x4x128xbf16, #tpu.memory_space<vmem>>, vector<1x4x128xbf16>
    %89 = vector.shape_cast %88 : vector<1x4x128xbf16> to vector<4x128xbf16>
    %cst_62 = arith.constant dense<0.000000e+00> : vector<80x128xf32>
    %90 = tpu.matmul %87, %89, %cst_62 {dimension_numbers = #tpu.dot_dimension_numbers<[1], [0], [0], [1], [0, 0, 1, 1], [], []>} : vector<80x4xbf16>, vector<4x128xbf16>, vector<80x128xf32> -> vector<80x128xf32>
    %91 = arith.addf %86, %90 : vector<80x128xf32>
    %92 = vector.extract_strided_slice %3 {offsets = [22, 0], sizes = [80, 4], strides = [1, 1]} : vector<104x4xbf16> to vector<80x4xbf16>
    %c17 = arith.constant 17 : index
    %c0_63 = arith.constant 0 : index
    %c0_64 = arith.constant 0 : index
    %93 = vector.load %arg5[%c17, %c0_63, %c0_64] : memref<27x4x128xbf16, #tpu.memory_space<vmem>>, vector<1x4x128xbf16>
    %94 = vector.shape_cast %93 : vector<1x4x128xbf16> to vector<4x128xbf16>
    %cst_65 = arith.constant dense<0.000000e+00> : vector<80x128xf32>
    %95 = tpu.matmul %92, %94, %cst_65 {dimension_numbers = #tpu.dot_dimension_numbers<[1], [0], [0], [1], [0, 0, 1, 1], [], []>} : vector<80x4xbf16>, vector<4x128xbf16>, vector<80x128xf32> -> vector<80x128xf32>
    %96 = arith.addf %91, %95 : vector<80x128xf32>
    %97 = vector.extract_strided_slice %5 {offsets = [0, 0], sizes = [80, 4], strides = [1, 1]} : vector<104x4xbf16> to vector<80x4xbf16>
    %c18 = arith.constant 18 : index
    %c0_66 = arith.constant 0 : index
    %c0_67 = arith.constant 0 : index
    %98 = vector.load %arg5[%c18, %c0_66, %c0_67] : memref<27x4x128xbf16, #tpu.memory_space<vmem>>, vector<1x4x128xbf16>
    %99 = vector.shape_cast %98 : vector<1x4x128xbf16> to vector<4x128xbf16>
    %cst_68 = arith.constant dense<0.000000e+00> : vector<80x128xf32>
    %100 = tpu.matmul %97, %99, %cst_68 {dimension_numbers = #tpu.dot_dimension_numbers<[1], [0], [0], [1], [0, 0, 1, 1], [], []>} : vector<80x4xbf16>, vector<4x128xbf16>, vector<80x128xf32> -> vector<80x128xf32>
    %101 = arith.addf %96, %100 : vector<80x128xf32>
    %102 = vector.extract_strided_slice %5 {offsets = [1, 0], sizes = [80, 4], strides = [1, 1]} : vector<104x4xbf16> to vector<80x4xbf16>
    %c19 = arith.constant 19 : index
    %c0_69 = arith.constant 0 : index
    %c0_70 = arith.constant 0 : index
    %103 = vector.load %arg5[%c19, %c0_69, %c0_70] : memref<27x4x128xbf16, #tpu.memory_space<vmem>>, vector<1x4x128xbf16>
    %104 = vector.shape_cast %103 : vector<1x4x128xbf16> to vector<4x128xbf16>
    %cst_71 = arith.constant dense<0.000000e+00> : vector<80x128xf32>
    %105 = tpu.matmul %102, %104, %cst_71 {dimension_numbers = #tpu.dot_dimension_numbers<[1], [0], [0], [1], [0, 0, 1, 1], [], []>} : vector<80x4xbf16>, vector<4x128xbf16>, vector<80x128xf32> -> vector<80x128xf32>
    %106 = arith.addf %101, %105 : vector<80x128xf32>
    %107 = vector.extract_strided_slice %5 {offsets = [2, 0], sizes = [80, 4], strides = [1, 1]} : vector<104x4xbf16> to vector<80x4xbf16>
    %c20 = arith.constant 20 : index
    %c0_72 = arith.constant 0 : index
    %c0_73 = arith.constant 0 : index
    %108 = vector.load %arg5[%c20, %c0_72, %c0_73] : memref<27x4x128xbf16, #tpu.memory_space<vmem>>, vector<1x4x128xbf16>
    %109 = vector.shape_cast %108 : vector<1x4x128xbf16> to vector<4x128xbf16>
    %cst_74 = arith.constant dense<0.000000e+00> : vector<80x128xf32>
    %110 = tpu.matmul %107, %109, %cst_74 {dimension_numbers = #tpu.dot_dimension_numbers<[1], [0], [0], [1], [0, 0, 1, 1], [], []>} : vector<80x4xbf16>, vector<4x128xbf16>, vector<80x128xf32> -> vector<80x128xf32>
    %111 = arith.addf %106, %110 : vector<80x128xf32>
    %112 = vector.extract_strided_slice %5 {offsets = [10, 0], sizes = [80, 4], strides = [1, 1]} : vector<104x4xbf16> to vector<80x4xbf16>
    %c21 = arith.constant 21 : index
    %c0_75 = arith.constant 0 : index
    %c0_76 = arith.constant 0 : index
    %113 = vector.load %arg5[%c21, %c0_75, %c0_76] : memref<27x4x128xbf16, #tpu.memory_space<vmem>>, vector<1x4x128xbf16>
    %114 = vector.shape_cast %113 : vector<1x4x128xbf16> to vector<4x128xbf16>
    %cst_77 = arith.constant dense<0.000000e+00> : vector<80x128xf32>
    %115 = tpu.matmul %112, %114, %cst_77 {dimension_numbers = #tpu.dot_dimension_numbers<[1], [0], [0], [1], [0, 0, 1, 1], [], []>} : vector<80x4xbf16>, vector<4x128xbf16>, vector<80x128xf32> -> vector<80x128xf32>
    %116 = arith.addf %111, %115 : vector<80x128xf32>
    %117 = vector.extract_strided_slice %5 {offsets = [11, 0], sizes = [80, 4], strides = [1, 1]} : vector<104x4xbf16> to vector<80x4xbf16>
    %c22 = arith.constant 22 : index
    %c0_78 = arith.constant 0 : index
    %c0_79 = arith.constant 0 : index
    %118 = vector.load %arg5[%c22, %c0_78, %c0_79] : memref<27x4x128xbf16, #tpu.memory_space<vmem>>, vector<1x4x128xbf16>
    %119 = vector.shape_cast %118 : vector<1x4x128xbf16> to vector<4x128xbf16>
    %cst_80 = arith.constant dense<0.000000e+00> : vector<80x128xf32>
    %120 = tpu.matmul %117, %119, %cst_80 {dimension_numbers = #tpu.dot_dimension_numbers<[1], [0], [0], [1], [0, 0, 1, 1], [], []>} : vector<80x4xbf16>, vector<4x128xbf16>, vector<80x128xf32> -> vector<80x128xf32>
    %121 = arith.addf %116, %120 : vector<80x128xf32>
    %122 = vector.extract_strided_slice %5 {offsets = [12, 0], sizes = [80, 4], strides = [1, 1]} : vector<104x4xbf16> to vector<80x4xbf16>
    %c23 = arith.constant 23 : index
    %c0_81 = arith.constant 0 : index
    %c0_82 = arith.constant 0 : index
    %123 = vector.load %arg5[%c23, %c0_81, %c0_82] : memref<27x4x128xbf16, #tpu.memory_space<vmem>>, vector<1x4x128xbf16>
    %124 = vector.shape_cast %123 : vector<1x4x128xbf16> to vector<4x128xbf16>
    %cst_83 = arith.constant dense<0.000000e+00> : vector<80x128xf32>
    %125 = tpu.matmul %122, %124, %cst_83 {dimension_numbers = #tpu.dot_dimension_numbers<[1], [0], [0], [1], [0, 0, 1, 1], [], []>} : vector<80x4xbf16>, vector<4x128xbf16>, vector<80x128xf32> -> vector<80x128xf32>
    %126 = arith.addf %121, %125 : vector<80x128xf32>
    %127 = vector.extract_strided_slice %5 {offsets = [20, 0], sizes = [80, 4], strides = [1, 1]} : vector<104x4xbf16> to vector<80x4xbf16>
    %c24 = arith.constant 24 : index
    %c0_84 = arith.constant 0 : index
    %c0_85 = arith.constant 0 : index
    %128 = vector.load %arg5[%c24, %c0_84, %c0_85] : memref<27x4x128xbf16, #tpu.memory_space<vmem>>, vector<1x4x128xbf16>
    %129 = vector.shape_cast %128 : vector<1x4x128xbf16> to vector<4x128xbf16>
    %cst_86 = arith.constant dense<0.000000e+00> : vector<80x128xf32>
    %130 = tpu.matmul %127, %129, %cst_86 {dimension_numbers = #tpu.dot_dimension_numbers<[1], [0], [0], [1], [0, 0, 1, 1], [], []>} : vector<80x4xbf16>, vector<4x128xbf16>, vector<80x128xf32> -> vector<80x128xf32>
    %131 = arith.addf %126, %130 : vector<80x128xf32>
    %132 = vector.extract_strided_slice %5 {offsets = [21, 0], sizes = [80, 4], strides = [1, 1]} : vector<104x4xbf16> to vector<80x4xbf16>
    %c25 = arith.constant 25 : index
    %c0_87 = arith.constant 0 : index
    %c0_88 = arith.constant 0 : index
    %133 = vector.load %arg5[%c25, %c0_87, %c0_88] : memref<27x4x128xbf16, #tpu.memory_space<vmem>>, vector<1x4x128xbf16>
    %134 = vector.shape_cast %133 : vector<1x4x128xbf16> to vector<4x128xbf16>
    %cst_89 = arith.constant dense<0.000000e+00> : vector<80x128xf32>
    %135 = tpu.matmul %132, %134, %cst_89 {dimension_numbers = #tpu.dot_dimension_numbers<[1], [0], [0], [1], [0, 0, 1, 1], [], []>} : vector<80x4xbf16>, vector<4x128xbf16>, vector<80x128xf32> -> vector<80x128xf32>
    %136 = arith.addf %131, %135 : vector<80x128xf32>
    %137 = vector.extract_strided_slice %5 {offsets = [22, 0], sizes = [80, 4], strides = [1, 1]} : vector<104x4xbf16> to vector<80x4xbf16>
    %c26 = arith.constant 26 : index
    %c0_90 = arith.constant 0 : index
    %c0_91 = arith.constant 0 : index
    %138 = vector.load %arg5[%c26, %c0_90, %c0_91] : memref<27x4x128xbf16, #tpu.memory_space<vmem>>, vector<1x4x128xbf16>
    %139 = vector.shape_cast %138 : vector<1x4x128xbf16> to vector<4x128xbf16>
    %cst_92 = arith.constant dense<0.000000e+00> : vector<80x128xf32>
    %140 = tpu.matmul %137, %139, %cst_92 {dimension_numbers = #tpu.dot_dimension_numbers<[1], [0], [0], [1], [0, 0, 1, 1], [], []>} : vector<80x4xbf16>, vector<4x128xbf16>, vector<80x128xf32> -> vector<80x128xf32>
    %141 = arith.addf %136, %140 : vector<80x128xf32>
    %c0_93 = arith.constant 0 : index
    %c0_94 = arith.constant 0 : index
    %142 = vector.load %arg6[%c0_93, %c0_94] : memref<1x128xf32, #tpu.memory_space<vmem>>, vector<1x128xf32>
    %143 = vector.broadcast %142 : vector<1x128xf32> to vector<80x128xf32>
    %144 = arith.addf %141, %143 : vector<80x128xf32>
    %145 = arith.truncf %144 : vector<80x128xf32> to vector<80x128xbf16>
    %c0_95 = arith.constant 0 : index
    %c0_96 = arith.constant 0 : index
    %c0_97 = arith.constant 0 : index
    %c0_98 = arith.constant 0 : index
    %146 = vector.load %arg7[%c0_95, %c0_96, %c0_97, %c0_98] : memref<1x1x80x128xbf16, #tpu.memory_space<vmem>>, vector<1x1x80x128xbf16>
    %147 = vector.shape_cast %146 : vector<1x1x80x128xbf16> to vector<80x128xbf16>
    %148 = vector.shape_cast %145 : vector<80x128xbf16> to vector<1x1x80x128xbf16>
    tpu.vector_store %arg7[%c0_95, %c0_96, %c0_97, %c0_98], %148 {strides = array<i32>} : memref<1x1x80x128xbf16, #tpu.memory_space<vmem>>, vector<1x1x80x128xbf16>,
    %149 = tpu.iota {dimensions = array<i32: 0>} : vector<80x1xi32>
    %c10_i32 = arith.constant 10 : i32
    %c0_i32 = arith.constant 0 : i32
    %150 = arith.cmpi eq, %c10_i32, %c0_i32 : i32
    %c1_i32 = arith.constant 1 : i32
    %151 = arith.select %150, %c1_i32, %c10_i32 : i32
    %152 = vector.broadcast %151 : i32 to vector<80x1xi32>
    %153 = arith.remsi %149, %152 : vector<80x1xi32>
    %c0_i32_99 = arith.constant 0 : i32
    %154 = vector.broadcast %c0_i32_99 : i32 to vector<80x1xi32>
    %155 = arith.cmpi ne, %153, %154 : vector<80x1xi32>
    %c0_i32_100 = arith.constant 0 : i32
    %156 = vector.broadcast %c0_i32_100 : i32 to vector<80x1xi32>
    %157 = arith.cmpi slt, %153, %156 : vector<80x1xi32>
    %c0_i32_101 = arith.constant 0 : i32
    %158 = arith.cmpi slt, %151, %c0_i32_101 : i32
    %159 = vector.broadcast %158 : i1 to vector<80x1xi1>
    %160 = vector.broadcast %159 : vector<80x1xi1> to vector<80x1xi1>
    %161 = arith.xori %157, %160 : vector<80x1xi1>
    %162 = arith.andi %161, %155 : vector<80x1xi1>
    %163 = vector.broadcast %151 : i32 to vector<80x1xi32>
    %164 = arith.addi %153, %163 : vector<80x1xi32>
    %165 = arith.select %162, %164, %153 : vector<80x1xi1>, vector<80x1xi32>
    %c8_i32 = arith.constant 8 : i32
    %166 = vector.broadcast %c8_i32 : i32 to vector<80x1xi32>
    %167 = arith.cmpi slt, %165, %166 : vector<80x1xi32>
    %168 = arith.extui %167 : vector<80x1xi1> to vector<80x1xi32>
    %169 = arith.sitofp %168 : vector<80x1xi32> to vector<80x1xf32>
    %170 = vector.broadcast %169 : vector<80x1xf32> to vector<80x128xf32>
    %171 = arith.mulf %144, %170 : vector<80x128xf32>
    %cst_102 = arith.constant dense<0.000000e+00> : vector<128xf32>
    %172 = vector.multi_reduction <add>, %171, %cst_102 [0] : vector<80x128xf32> to vector<128xf32>
    %173 = vector.shape_cast %172 : vector<128xf32> to vector<1x128xf32>
    %c0_103 = arith.constant 0 : index
    %c0_104 = arith.constant 0 : index
    %c0_105 = arith.constant 0 : index
    %174 = vector.load %arg8[%c0_103, %c0_104, %c0_105] : memref<1x1x128xf32, #tpu.memory_space<vmem>>, vector<1x1x128xf32>
    %175 = vector.shape_cast %174 : vector<1x1x128xf32> to vector<1x128xf32>
    %176 = vector.shape_cast %173 : vector<1x128xf32> to vector<1x1x128xf32>
    tpu.vector_store %arg8[%c0_103, %c0_104, %c0_105], %176 {strides = array<i32>} : memref<1x1x128xf32, #tpu.memory_space<vmem>>, vector<1x1x128xf32>,
    %177 = arith.mulf %171, %171 : vector<80x128xf32>
    %cst_106 = arith.constant dense<0.000000e+00> : vector<128xf32>
    %178 = vector.multi_reduction <add>, %177, %cst_106 [0] : vector<80x128xf32> to vector<128xf32>
    %179 = vector.shape_cast %178 : vector<128xf32> to vector<1x128xf32>
    %c0_107 = arith.constant 0 : index
    %c0_108 = arith.constant 0 : index
    %c0_109 = arith.constant 0 : index
    %180 = vector.load %arg9[%c0_107, %c0_108, %c0_109] : memref<1x1x128xf32, #tpu.memory_space<vmem>>, vector<1x1x128xf32>
    %181 = vector.shape_cast %180 : vector<1x1x128xf32> to vector<1x128xf32>
    %182 = vector.shape_cast %179 : vector<1x128xf32> to vector<1x1x128xf32>
    tpu.vector_store %arg9[%c0_107, %c0_108, %c0_109], %182 {strides = array<i32>} : memref<1x1x128xf32, #tpu.memory_space<vmem>>, vector<1x1x128xf32>,
    return
  }
  func.func @transform_0(%arg0: i32, %arg1: i32) -> (i32, i32, i32, i32) {
    %c0_i32 = arith.constant 0 : i32
    %c0_i32_0 = arith.constant 0 : i32
    %c0_i32_1 = arith.constant 0 : i32
    return %arg0, %arg1, %c0_i32, %c0_i32_0 : i32, i32, i32, i32
  }
  func.func @transform_1(%arg0: i32, %arg1: i32) -> (i32, i32, i32, i32) {
    %c1_i32 = arith.constant 1 : i32
    %0 = arith.addi %arg1, %c1_i32 : i32
    %c0_i32 = arith.constant 0 : i32
    %c0_i32_0 = arith.constant 0 : i32
    %c0_i32_1 = arith.constant 0 : i32
    return %arg0, %0, %c0_i32, %c0_i32_0 : i32, i32, i32, i32
  }
  func.func @transform_2(%arg0: i32, %arg1: i32) -> (i32, i32, i32, i32) {
    %c2_i32 = arith.constant 2 : i32
    %0 = arith.addi %arg1, %c2_i32 : i32
    %c0_i32 = arith.constant 0 : i32
    %c0_i32_0 = arith.constant 0 : i32
    %c0_i32_1 = arith.constant 0 : i32
    return %arg0, %0, %c0_i32, %c0_i32_0 : i32, i32, i32, i32
  }
  func.func @transform_3(%arg0: i32, %arg1: i32) -> (i32, i32, i32) {
    %c0_i32 = arith.constant 0 : i32
    %c0_i32_0 = arith.constant 0 : i32
    %c0_i32_1 = arith.constant 0 : i32
    %c0_i32_2 = arith.constant 0 : i32
    return %c0_i32, %c0_i32_0, %c0_i32_1 : i32, i32, i32
  }
  func.func @transform_4(%arg0: i32, %arg1: i32) -> (i32, i32) {
    %c0_i32 = arith.constant 0 : i32
    %c0_i32_0 = arith.constant 0 : i32
    %c0_i32_1 = arith.constant 0 : i32
    return %c0_i32, %c0_i32_0 : i32, i32
  }
  func.func @transform_5(%arg0: i32, %arg1: i32) -> (i32, i32, i32, i32) {
    %c0_i32 = arith.constant 0 : i32
    %c0_i32_0 = arith.constant 0 : i32
    %c0_i32_1 = arith.constant 0 : i32
    return %arg0, %arg1, %c0_i32, %c0_i32_0 : i32, i32, i32, i32
  }
  func.func @transform_6(%arg0: i32, %arg1: i32) -> (i32, i32, i32) {
    %c8_i32 = arith.constant 8 : i32
    %0 = arith.muli %arg0, %c8_i32 : i32
    %1 = arith.addi %0, %arg1 : i32
    %c0_i32 = arith.constant 0 : i32
    %c0_i32_0 = arith.constant 0 : i32
    %c0_i32_1 = arith.constant 0 : i32
    return %1, %c0_i32, %c0_i32_0 : i32, i32, i32
  }
  func.func @transform_7(%arg0: i32, %arg1: i32) -> (i32, i32, i32) {
    %c8_i32 = arith.constant 8 : i32
    %0 = arith.muli %arg0, %c8_i32 : i32
    %1 = arith.addi %0, %arg1 : i32
    %c0_i32 = arith.constant 0 : i32
    %c0_i32_0 = arith.constant 0 : i32
    %c0_i32_1 = arith.constant 0 : i32
    return %1, %c0_i32, %c0_i32_0 : i32, i32, i32
  }
}

module attributes {stable_mosaic.version = 11 : i64} {
  func.func @_bn_act_kernel(%arg0: i32, %arg1: memref<1280x128xbf16, #tpu.memory_space<vmem>>, %arg2: memref<1x128xf32, #tpu.memory_space<vmem>>, %arg3: memref<1x128xf32, #tpu.memory_space<vmem>>, %arg4: memref<1280x128xbf16, #tpu.memory_space<vmem>>) attributes {dimension_semantics = [#tpu.dimension_semantics<parallel>], iteration_bounds = array<i64: 1>, scalar_prefetch = 0 : i64, scratch_operands = 0 : i64, tpu.core_type = #tpu.core_type<tc>, window_params = [{transform_indices = @transform_0, window_bounds = array<i64: 1280, 128>}, {pipeline_mode = #tpu.pipeline_mode<synchronous>, transform_indices = @transform_1, window_bounds = array<i64: 1, 128>}, {pipeline_mode = #tpu.pipeline_mode<synchronous>, transform_indices = @transform_2, window_bounds = array<i64: 1, 128>}, {transform_indices = @transform_3, window_bounds = array<i64: 1280, 128>}]} {
    %c0 = arith.constant 0 : index
    %c0_0 = arith.constant 0 : index
    %0 = vector.load %arg1[%c0, %c0_0] : memref<1280x128xbf16, #tpu.memory_space<vmem>>, vector<1280x128xbf16>
    %1 = arith.extf %0 : vector<1280x128xbf16> to vector<1280x128xf32>
    %c0_1 = arith.constant 0 : index
    %c0_2 = arith.constant 0 : index
    %2 = vector.load %arg2[%c0_1, %c0_2] : memref<1x128xf32, #tpu.memory_space<vmem>>, vector<1x128xf32>
    %3 = vector.broadcast %2 : vector<1x128xf32> to vector<1280x128xf32>
    %4 = arith.mulf %1, %3 : vector<1280x128xf32>
    %c0_3 = arith.constant 0 : index
    %c0_4 = arith.constant 0 : index
    %5 = vector.load %arg3[%c0_3, %c0_4] : memref<1x128xf32, #tpu.memory_space<vmem>>, vector<1x128xf32>
    %6 = vector.broadcast %5 : vector<1x128xf32> to vector<1280x128xf32>
    %7 = arith.addf %4, %6 : vector<1280x128xf32>
    %cst = arith.constant 0.000000e+00 : f32
    %8 = vector.broadcast %cst : f32 to vector<1280x128xf32>
    %9 = arith.cmpf oge, %7, %8 : vector<1280x128xf32>
    %cst_5 = arith.constant 0.00999999977 : f32
    %10 = vector.broadcast %cst_5 : f32 to vector<1280x128xf32>
    %11 = arith.mulf %10, %7 : vector<1280x128xf32>
    %12 = arith.select %9, %7, %11 : vector<1280x128xi1>, vector<1280x128xf32>
    %13 = arith.truncf %12 : vector<1280x128xf32> to vector<1280x128xbf16>
    %c0_6 = arith.constant 0 : index
    %c0_7 = arith.constant 0 : index
    %14 = vector.load %arg4[%c0_6, %c0_7] : memref<1280x128xbf16, #tpu.memory_space<vmem>>, vector<1280x128xbf16>
    tpu.vector_store %arg4[%c0_6, %c0_7], %13 {strides = array<i32>} : memref<1280x128xbf16, #tpu.memory_space<vmem>>, vector<1280x128xbf16>,
    return
  }
  func.func @transform_0(%arg0: i32) -> (i32, i32) {
    %c0_i32 = arith.constant 0 : i32
    %c0_i32_0 = arith.constant 0 : i32
    return %arg0, %c0_i32 : i32, i32
  }
  func.func @transform_1(%arg0: i32) -> (i32, i32) {
    %c0_i32 = arith.constant 0 : i32
    %c0_i32_0 = arith.constant 0 : i32
    %c0_i32_1 = arith.constant 0 : i32
    return %c0_i32, %c0_i32_0 : i32, i32
  }
  func.func @transform_2(%arg0: i32) -> (i32, i32) {
    %c0_i32 = arith.constant 0 : i32
    %c0_i32_0 = arith.constant 0 : i32
    %c0_i32_1 = arith.constant 0 : i32
    return %c0_i32, %c0_i32_0 : i32, i32
  }
  func.func @transform_3(%arg0: i32) -> (i32, i32) {
    %c0_i32 = arith.constant 0 : i32
    %c0_i32_0 = arith.constant 0 : i32
    return %arg0, %c0_i32 : i32, i32
  }
}

module attributes {stable_mosaic.version = 11 : i64} {
  func.func @conv_kernel(%arg0: i32, %arg1: i32, %arg2: memref<1x1x104x8xbf16, #tpu.memory_space<vmem>>, %arg3: memref<1x1x104x8xbf16, #tpu.memory_space<vmem>>, %arg4: memref<1x1x104x8xbf16, #tpu.memory_space<vmem>>, %arg5: memref<27x8x128xbf16, #tpu.memory_space<vmem>>, %arg6: memref<1x128xf32, #tpu.memory_space<vmem>>, %arg7: memref<1x1x80x128xbf16, #tpu.memory_space<vmem>>, %arg8: memref<1x1x128xf32, #tpu.memory_space<vmem>>, %arg9: memref<1x1x128xf32, #tpu.memory_space<vmem>>) attributes {dimension_semantics = [#tpu.dimension_semantics<parallel>, #tpu.dimension_semantics<parallel>], iteration_bounds = array<i64: 2, 8>, scalar_prefetch = 0 : i64, scratch_operands = 0 : i64, tpu.core_type = #tpu.core_type<tc>, window_params = [{transform_indices = @transform_0, window_bounds = array<i64: 1, 1, 104, 8>}, {transform_indices = @transform_1, window_bounds = array<i64: 1, 1, 104, 8>}, {transform_indices = @transform_2, window_bounds = array<i64: 1, 1, 104, 8>}, {pipeline_mode = #tpu.pipeline_mode<synchronous>, transform_indices = @transform_3, window_bounds = array<i64: 27, 8, 128>}, {pipeline_mode = #tpu.pipeline_mode<synchronous>, transform_indices = @transform_4, window_bounds = array<i64: 1, 128>}, {transform_indices = @transform_5, window_bounds = array<i64: 1, 1, 80, 128>}, {transform_indices = @transform_6, window_bounds = array<i64: 1, 1, 128>}, {transform_indices = @transform_7, window_bounds = array<i64: 1, 1, 128>}]} {
    %c0 = arith.constant 0 : index
    %c0_0 = arith.constant 0 : index
    %c0_1 = arith.constant 0 : index
    %c0_2 = arith.constant 0 : index
    %0 = vector.load %arg2[%c0, %c0_0, %c0_1, %c0_2] : memref<1x1x104x8xbf16, #tpu.memory_space<vmem>>, vector<1x1x104x8xbf16>
    %1 = vector.shape_cast %0 : vector<1x1x104x8xbf16> to vector<104x8xbf16>
    %c0_3 = arith.constant 0 : index
    %c0_4 = arith.constant 0 : index
    %c0_5 = arith.constant 0 : index
    %c0_6 = arith.constant 0 : index
    %2 = vector.load %arg3[%c0_3, %c0_4, %c0_5, %c0_6] : memref<1x1x104x8xbf16, #tpu.memory_space<vmem>>, vector<1x1x104x8xbf16>
    %3 = vector.shape_cast %2 : vector<1x1x104x8xbf16> to vector<104x8xbf16>
    %c0_7 = arith.constant 0 : index
    %c0_8 = arith.constant 0 : index
    %c0_9 = arith.constant 0 : index
    %c0_10 = arith.constant 0 : index
    %4 = vector.load %arg4[%c0_7, %c0_8, %c0_9, %c0_10] : memref<1x1x104x8xbf16, #tpu.memory_space<vmem>>, vector<1x1x104x8xbf16>
    %5 = vector.shape_cast %4 : vector<1x1x104x8xbf16> to vector<104x8xbf16>
    %cst = arith.constant 0.000000e+00 : f32
    %6 = vector.broadcast %cst : f32 to vector<80x128xf32>
    %7 = vector.extract_strided_slice %1 {offsets = [0, 0], sizes = [80, 8], strides = [1, 1]} : vector<104x8xbf16> to vector<80x8xbf16>
    %c0_11 = arith.constant 0 : index
    %c0_12 = arith.constant 0 : index
    %c0_13 = arith.constant 0 : index
    %8 = vector.load %arg5[%c0_11, %c0_12, %c0_13] : memref<27x8x128xbf16, #tpu.memory_space<vmem>>, vector<1x8x128xbf16>
    %9 = vector.shape_cast %8 : vector<1x8x128xbf16> to vector<8x128xbf16>
    %cst_14 = arith.constant dense<0.000000e+00> : vector<80x128xf32>
    %10 = tpu.matmul %7, %9, %cst_14 {dimension_numbers = #tpu.dot_dimension_numbers<[1], [0], [0], [1], [0, 0, 1, 1], [], []>} : vector<80x8xbf16>, vector<8x128xbf16>, vector<80x128xf32> -> vector<80x128xf32>
    %11 = arith.addf %6, %10 : vector<80x128xf32>
    %12 = vector.extract_strided_slice %1 {offsets = [1, 0], sizes = [80, 8], strides = [1, 1]} : vector<104x8xbf16> to vector<80x8xbf16>
    %c1 = arith.constant 1 : index
    %c0_15 = arith.constant 0 : index
    %c0_16 = arith.constant 0 : index
    %13 = vector.load %arg5[%c1, %c0_15, %c0_16] : memref<27x8x128xbf16, #tpu.memory_space<vmem>>, vector<1x8x128xbf16>
    %14 = vector.shape_cast %13 : vector<1x8x128xbf16> to vector<8x128xbf16>
    %cst_17 = arith.constant dense<0.000000e+00> : vector<80x128xf32>
    %15 = tpu.matmul %12, %14, %cst_17 {dimension_numbers = #tpu.dot_dimension_numbers<[1], [0], [0], [1], [0, 0, 1, 1], [], []>} : vector<80x8xbf16>, vector<8x128xbf16>, vector<80x128xf32> -> vector<80x128xf32>
    %16 = arith.addf %11, %15 : vector<80x128xf32>
    %17 = vector.extract_strided_slice %1 {offsets = [2, 0], sizes = [80, 8], strides = [1, 1]} : vector<104x8xbf16> to vector<80x8xbf16>
    %c2 = arith.constant 2 : index
    %c0_18 = arith.constant 0 : index
    %c0_19 = arith.constant 0 : index
    %18 = vector.load %arg5[%c2, %c0_18, %c0_19] : memref<27x8x128xbf16, #tpu.memory_space<vmem>>, vector<1x8x128xbf16>
    %19 = vector.shape_cast %18 : vector<1x8x128xbf16> to vector<8x128xbf16>
    %cst_20 = arith.constant dense<0.000000e+00> : vector<80x128xf32>
    %20 = tpu.matmul %17, %19, %cst_20 {dimension_numbers = #tpu.dot_dimension_numbers<[1], [0], [0], [1], [0, 0, 1, 1], [], []>} : vector<80x8xbf16>, vector<8x128xbf16>, vector<80x128xf32> -> vector<80x128xf32>
    %21 = arith.addf %16, %20 : vector<80x128xf32>
    %22 = vector.extract_strided_slice %1 {offsets = [10, 0], sizes = [80, 8], strides = [1, 1]} : vector<104x8xbf16> to vector<80x8xbf16>
    %c3 = arith.constant 3 : index
    %c0_21 = arith.constant 0 : index
    %c0_22 = arith.constant 0 : index
    %23 = vector.load %arg5[%c3, %c0_21, %c0_22] : memref<27x8x128xbf16, #tpu.memory_space<vmem>>, vector<1x8x128xbf16>
    %24 = vector.shape_cast %23 : vector<1x8x128xbf16> to vector<8x128xbf16>
    %cst_23 = arith.constant dense<0.000000e+00> : vector<80x128xf32>
    %25 = tpu.matmul %22, %24, %cst_23 {dimension_numbers = #tpu.dot_dimension_numbers<[1], [0], [0], [1], [0, 0, 1, 1], [], []>} : vector<80x8xbf16>, vector<8x128xbf16>, vector<80x128xf32> -> vector<80x128xf32>
    %26 = arith.addf %21, %25 : vector<80x128xf32>
    %27 = vector.extract_strided_slice %1 {offsets = [11, 0], sizes = [80, 8], strides = [1, 1]} : vector<104x8xbf16> to vector<80x8xbf16>
    %c4 = arith.constant 4 : index
    %c0_24 = arith.constant 0 : index
    %c0_25 = arith.constant 0 : index
    %28 = vector.load %arg5[%c4, %c0_24, %c0_25] : memref<27x8x128xbf16, #tpu.memory_space<vmem>>, vector<1x8x128xbf16>
    %29 = vector.shape_cast %28 : vector<1x8x128xbf16> to vector<8x128xbf16>
    %cst_26 = arith.constant dense<0.000000e+00> : vector<80x128xf32>
    %30 = tpu.matmul %27, %29, %cst_26 {dimension_numbers = #tpu.dot_dimension_numbers<[1], [0], [0], [1], [0, 0, 1, 1], [], []>} : vector<80x8xbf16>, vector<8x128xbf16>, vector<80x128xf32> -> vector<80x128xf32>
    %31 = arith.addf %26, %30 : vector<80x128xf32>
    %32 = vector.extract_strided_slice %1 {offsets = [12, 0], sizes = [80, 8], strides = [1, 1]} : vector<104x8xbf16> to vector<80x8xbf16>
    %c5 = arith.constant 5 : index
    %c0_27 = arith.constant 0 : index
    %c0_28 = arith.constant 0 : index
    %33 = vector.load %arg5[%c5, %c0_27, %c0_28] : memref<27x8x128xbf16, #tpu.memory_space<vmem>>, vector<1x8x128xbf16>
    %34 = vector.shape_cast %33 : vector<1x8x128xbf16> to vector<8x128xbf16>
    %cst_29 = arith.constant dense<0.000000e+00> : vector<80x128xf32>
    %35 = tpu.matmul %32, %34, %cst_29 {dimension_numbers = #tpu.dot_dimension_numbers<[1], [0], [0], [1], [0, 0, 1, 1], [], []>} : vector<80x8xbf16>, vector<8x128xbf16>, vector<80x128xf32> -> vector<80x128xf32>
    %36 = arith.addf %31, %35 : vector<80x128xf32>
    %37 = vector.extract_strided_slice %1 {offsets = [20, 0], sizes = [80, 8], strides = [1, 1]} : vector<104x8xbf16> to vector<80x8xbf16>
    %c6 = arith.constant 6 : index
    %c0_30 = arith.constant 0 : index
    %c0_31 = arith.constant 0 : index
    %38 = vector.load %arg5[%c6, %c0_30, %c0_31] : memref<27x8x128xbf16, #tpu.memory_space<vmem>>, vector<1x8x128xbf16>
    %39 = vector.shape_cast %38 : vector<1x8x128xbf16> to vector<8x128xbf16>
    %cst_32 = arith.constant dense<0.000000e+00> : vector<80x128xf32>
    %40 = tpu.matmul %37, %39, %cst_32 {dimension_numbers = #tpu.dot_dimension_numbers<[1], [0], [0], [1], [0, 0, 1, 1], [], []>} : vector<80x8xbf16>, vector<8x128xbf16>, vector<80x128xf32> -> vector<80x128xf32>
    %41 = arith.addf %36, %40 : vector<80x128xf32>
    %42 = vector.extract_strided_slice %1 {offsets = [21, 0], sizes = [80, 8], strides = [1, 1]} : vector<104x8xbf16> to vector<80x8xbf16>
    %c7 = arith.constant 7 : index
    %c0_33 = arith.constant 0 : index
    %c0_34 = arith.constant 0 : index
    %43 = vector.load %arg5[%c7, %c0_33, %c0_34] : memref<27x8x128xbf16, #tpu.memory_space<vmem>>, vector<1x8x128xbf16>
    %44 = vector.shape_cast %43 : vector<1x8x128xbf16> to vector<8x128xbf16>
    %cst_35 = arith.constant dense<0.000000e+00> : vector<80x128xf32>
    %45 = tpu.matmul %42, %44, %cst_35 {dimension_numbers = #tpu.dot_dimension_numbers<[1], [0], [0], [1], [0, 0, 1, 1], [], []>} : vector<80x8xbf16>, vector<8x128xbf16>, vector<80x128xf32> -> vector<80x128xf32>
    %46 = arith.addf %41, %45 : vector<80x128xf32>
    %47 = vector.extract_strided_slice %1 {offsets = [22, 0], sizes = [80, 8], strides = [1, 1]} : vector<104x8xbf16> to vector<80x8xbf16>
    %c8 = arith.constant 8 : index
    %c0_36 = arith.constant 0 : index
    %c0_37 = arith.constant 0 : index
    %48 = vector.load %arg5[%c8, %c0_36, %c0_37] : memref<27x8x128xbf16, #tpu.memory_space<vmem>>, vector<1x8x128xbf16>
    %49 = vector.shape_cast %48 : vector<1x8x128xbf16> to vector<8x128xbf16>
    %cst_38 = arith.constant dense<0.000000e+00> : vector<80x128xf32>
    %50 = tpu.matmul %47, %49, %cst_38 {dimension_numbers = #tpu.dot_dimension_numbers<[1], [0], [0], [1], [0, 0, 1, 1], [], []>} : vector<80x8xbf16>, vector<8x128xbf16>, vector<80x128xf32> -> vector<80x128xf32>
    %51 = arith.addf %46, %50 : vector<80x128xf32>
    %52 = vector.extract_strided_slice %3 {offsets = [0, 0], sizes = [80, 8], strides = [1, 1]} : vector<104x8xbf16> to vector<80x8xbf16>
    %c9 = arith.constant 9 : index
    %c0_39 = arith.constant 0 : index
    %c0_40 = arith.constant 0 : index
    %53 = vector.load %arg5[%c9, %c0_39, %c0_40] : memref<27x8x128xbf16, #tpu.memory_space<vmem>>, vector<1x8x128xbf16>
    %54 = vector.shape_cast %53 : vector<1x8x128xbf16> to vector<8x128xbf16>
    %cst_41 = arith.constant dense<0.000000e+00> : vector<80x128xf32>
    %55 = tpu.matmul %52, %54, %cst_41 {dimension_numbers = #tpu.dot_dimension_numbers<[1], [0], [0], [1], [0, 0, 1, 1], [], []>} : vector<80x8xbf16>, vector<8x128xbf16>, vector<80x128xf32> -> vector<80x128xf32>
    %56 = arith.addf %51, %55 : vector<80x128xf32>
    %57 = vector.extract_strided_slice %3 {offsets = [1, 0], sizes = [80, 8], strides = [1, 1]} : vector<104x8xbf16> to vector<80x8xbf16>
    %c10 = arith.constant 10 : index
    %c0_42 = arith.constant 0 : index
    %c0_43 = arith.constant 0 : index
    %58 = vector.load %arg5[%c10, %c0_42, %c0_43] : memref<27x8x128xbf16, #tpu.memory_space<vmem>>, vector<1x8x128xbf16>
    %59 = vector.shape_cast %58 : vector<1x8x128xbf16> to vector<8x128xbf16>
    %cst_44 = arith.constant dense<0.000000e+00> : vector<80x128xf32>
    %60 = tpu.matmul %57, %59, %cst_44 {dimension_numbers = #tpu.dot_dimension_numbers<[1], [0], [0], [1], [0, 0, 1, 1], [], []>} : vector<80x8xbf16>, vector<8x128xbf16>, vector<80x128xf32> -> vector<80x128xf32>
    %61 = arith.addf %56, %60 : vector<80x128xf32>
    %62 = vector.extract_strided_slice %3 {offsets = [2, 0], sizes = [80, 8], strides = [1, 1]} : vector<104x8xbf16> to vector<80x8xbf16>
    %c11 = arith.constant 11 : index
    %c0_45 = arith.constant 0 : index
    %c0_46 = arith.constant 0 : index
    %63 = vector.load %arg5[%c11, %c0_45, %c0_46] : memref<27x8x128xbf16, #tpu.memory_space<vmem>>, vector<1x8x128xbf16>
    %64 = vector.shape_cast %63 : vector<1x8x128xbf16> to vector<8x128xbf16>
    %cst_47 = arith.constant dense<0.000000e+00> : vector<80x128xf32>
    %65 = tpu.matmul %62, %64, %cst_47 {dimension_numbers = #tpu.dot_dimension_numbers<[1], [0], [0], [1], [0, 0, 1, 1], [], []>} : vector<80x8xbf16>, vector<8x128xbf16>, vector<80x128xf32> -> vector<80x128xf32>
    %66 = arith.addf %61, %65 : vector<80x128xf32>
    %67 = vector.extract_strided_slice %3 {offsets = [10, 0], sizes = [80, 8], strides = [1, 1]} : vector<104x8xbf16> to vector<80x8xbf16>
    %c12 = arith.constant 12 : index
    %c0_48 = arith.constant 0 : index
    %c0_49 = arith.constant 0 : index
    %68 = vector.load %arg5[%c12, %c0_48, %c0_49] : memref<27x8x128xbf16, #tpu.memory_space<vmem>>, vector<1x8x128xbf16>
    %69 = vector.shape_cast %68 : vector<1x8x128xbf16> to vector<8x128xbf16>
    %cst_50 = arith.constant dense<0.000000e+00> : vector<80x128xf32>
    %70 = tpu.matmul %67, %69, %cst_50 {dimension_numbers = #tpu.dot_dimension_numbers<[1], [0], [0], [1], [0, 0, 1, 1], [], []>} : vector<80x8xbf16>, vector<8x128xbf16>, vector<80x128xf32> -> vector<80x128xf32>
    %71 = arith.addf %66, %70 : vector<80x128xf32>
    %72 = vector.extract_strided_slice %3 {offsets = [11, 0], sizes = [80, 8], strides = [1, 1]} : vector<104x8xbf16> to vector<80x8xbf16>
    %c13 = arith.constant 13 : index
    %c0_51 = arith.constant 0 : index
    %c0_52 = arith.constant 0 : index
    %73 = vector.load %arg5[%c13, %c0_51, %c0_52] : memref<27x8x128xbf16, #tpu.memory_space<vmem>>, vector<1x8x128xbf16>
    %74 = vector.shape_cast %73 : vector<1x8x128xbf16> to vector<8x128xbf16>
    %cst_53 = arith.constant dense<0.000000e+00> : vector<80x128xf32>
    %75 = tpu.matmul %72, %74, %cst_53 {dimension_numbers = #tpu.dot_dimension_numbers<[1], [0], [0], [1], [0, 0, 1, 1], [], []>} : vector<80x8xbf16>, vector<8x128xbf16>, vector<80x128xf32> -> vector<80x128xf32>
    %76 = arith.addf %71, %75 : vector<80x128xf32>
    %77 = vector.extract_strided_slice %3 {offsets = [12, 0], sizes = [80, 8], strides = [1, 1]} : vector<104x8xbf16> to vector<80x8xbf16>
    %c14 = arith.constant 14 : index
    %c0_54 = arith.constant 0 : index
    %c0_55 = arith.constant 0 : index
    %78 = vector.load %arg5[%c14, %c0_54, %c0_55] : memref<27x8x128xbf16, #tpu.memory_space<vmem>>, vector<1x8x128xbf16>
    %79 = vector.shape_cast %78 : vector<1x8x128xbf16> to vector<8x128xbf16>
    %cst_56 = arith.constant dense<0.000000e+00> : vector<80x128xf32>
    %80 = tpu.matmul %77, %79, %cst_56 {dimension_numbers = #tpu.dot_dimension_numbers<[1], [0], [0], [1], [0, 0, 1, 1], [], []>} : vector<80x8xbf16>, vector<8x128xbf16>, vector<80x128xf32> -> vector<80x128xf32>
    %81 = arith.addf %76, %80 : vector<80x128xf32>
    %82 = vector.extract_strided_slice %3 {offsets = [20, 0], sizes = [80, 8], strides = [1, 1]} : vector<104x8xbf16> to vector<80x8xbf16>
    %c15 = arith.constant 15 : index
    %c0_57 = arith.constant 0 : index
    %c0_58 = arith.constant 0 : index
    %83 = vector.load %arg5[%c15, %c0_57, %c0_58] : memref<27x8x128xbf16, #tpu.memory_space<vmem>>, vector<1x8x128xbf16>
    %84 = vector.shape_cast %83 : vector<1x8x128xbf16> to vector<8x128xbf16>
    %cst_59 = arith.constant dense<0.000000e+00> : vector<80x128xf32>
    %85 = tpu.matmul %82, %84, %cst_59 {dimension_numbers = #tpu.dot_dimension_numbers<[1], [0], [0], [1], [0, 0, 1, 1], [], []>} : vector<80x8xbf16>, vector<8x128xbf16>, vector<80x128xf32> -> vector<80x128xf32>
    %86 = arith.addf %81, %85 : vector<80x128xf32>
    %87 = vector.extract_strided_slice %3 {offsets = [21, 0], sizes = [80, 8], strides = [1, 1]} : vector<104x8xbf16> to vector<80x8xbf16>
    %c16 = arith.constant 16 : index
    %c0_60 = arith.constant 0 : index
    %c0_61 = arith.constant 0 : index
    %88 = vector.load %arg5[%c16, %c0_60, %c0_61] : memref<27x8x128xbf16, #tpu.memory_space<vmem>>, vector<1x8x128xbf16>
    %89 = vector.shape_cast %88 : vector<1x8x128xbf16> to vector<8x128xbf16>
    %cst_62 = arith.constant dense<0.000000e+00> : vector<80x128xf32>
    %90 = tpu.matmul %87, %89, %cst_62 {dimension_numbers = #tpu.dot_dimension_numbers<[1], [0], [0], [1], [0, 0, 1, 1], [], []>} : vector<80x8xbf16>, vector<8x128xbf16>, vector<80x128xf32> -> vector<80x128xf32>
    %91 = arith.addf %86, %90 : vector<80x128xf32>
    %92 = vector.extract_strided_slice %3 {offsets = [22, 0], sizes = [80, 8], strides = [1, 1]} : vector<104x8xbf16> to vector<80x8xbf16>
    %c17 = arith.constant 17 : index
    %c0_63 = arith.constant 0 : index
    %c0_64 = arith.constant 0 : index
    %93 = vector.load %arg5[%c17, %c0_63, %c0_64] : memref<27x8x128xbf16, #tpu.memory_space<vmem>>, vector<1x8x128xbf16>
    %94 = vector.shape_cast %93 : vector<1x8x128xbf16> to vector<8x128xbf16>
    %cst_65 = arith.constant dense<0.000000e+00> : vector<80x128xf32>
    %95 = tpu.matmul %92, %94, %cst_65 {dimension_numbers = #tpu.dot_dimension_numbers<[1], [0], [0], [1], [0, 0, 1, 1], [], []>} : vector<80x8xbf16>, vector<8x128xbf16>, vector<80x128xf32> -> vector<80x128xf32>
    %96 = arith.addf %91, %95 : vector<80x128xf32>
    %97 = vector.extract_strided_slice %5 {offsets = [0, 0], sizes = [80, 8], strides = [1, 1]} : vector<104x8xbf16> to vector<80x8xbf16>
    %c18 = arith.constant 18 : index
    %c0_66 = arith.constant 0 : index
    %c0_67 = arith.constant 0 : index
    %98 = vector.load %arg5[%c18, %c0_66, %c0_67] : memref<27x8x128xbf16, #tpu.memory_space<vmem>>, vector<1x8x128xbf16>
    %99 = vector.shape_cast %98 : vector<1x8x128xbf16> to vector<8x128xbf16>
    %cst_68 = arith.constant dense<0.000000e+00> : vector<80x128xf32>
    %100 = tpu.matmul %97, %99, %cst_68 {dimension_numbers = #tpu.dot_dimension_numbers<[1], [0], [0], [1], [0, 0, 1, 1], [], []>} : vector<80x8xbf16>, vector<8x128xbf16>, vector<80x128xf32> -> vector<80x128xf32>
    %101 = arith.addf %96, %100 : vector<80x128xf32>
    %102 = vector.extract_strided_slice %5 {offsets = [1, 0], sizes = [80, 8], strides = [1, 1]} : vector<104x8xbf16> to vector<80x8xbf16>
    %c19 = arith.constant 19 : index
    %c0_69 = arith.constant 0 : index
    %c0_70 = arith.constant 0 : index
    %103 = vector.load %arg5[%c19, %c0_69, %c0_70] : memref<27x8x128xbf16, #tpu.memory_space<vmem>>, vector<1x8x128xbf16>
    %104 = vector.shape_cast %103 : vector<1x8x128xbf16> to vector<8x128xbf16>
    %cst_71 = arith.constant dense<0.000000e+00> : vector<80x128xf32>
    %105 = tpu.matmul %102, %104, %cst_71 {dimension_numbers = #tpu.dot_dimension_numbers<[1], [0], [0], [1], [0, 0, 1, 1], [], []>} : vector<80x8xbf16>, vector<8x128xbf16>, vector<80x128xf32> -> vector<80x128xf32>
    %106 = arith.addf %101, %105 : vector<80x128xf32>
    %107 = vector.extract_strided_slice %5 {offsets = [2, 0], sizes = [80, 8], strides = [1, 1]} : vector<104x8xbf16> to vector<80x8xbf16>
    %c20 = arith.constant 20 : index
    %c0_72 = arith.constant 0 : index
    %c0_73 = arith.constant 0 : index
    %108 = vector.load %arg5[%c20, %c0_72, %c0_73] : memref<27x8x128xbf16, #tpu.memory_space<vmem>>, vector<1x8x128xbf16>
    %109 = vector.shape_cast %108 : vector<1x8x128xbf16> to vector<8x128xbf16>
    %cst_74 = arith.constant dense<0.000000e+00> : vector<80x128xf32>
    %110 = tpu.matmul %107, %109, %cst_74 {dimension_numbers = #tpu.dot_dimension_numbers<[1], [0], [0], [1], [0, 0, 1, 1], [], []>} : vector<80x8xbf16>, vector<8x128xbf16>, vector<80x128xf32> -> vector<80x128xf32>
    %111 = arith.addf %106, %110 : vector<80x128xf32>
    %112 = vector.extract_strided_slice %5 {offsets = [10, 0], sizes = [80, 8], strides = [1, 1]} : vector<104x8xbf16> to vector<80x8xbf16>
    %c21 = arith.constant 21 : index
    %c0_75 = arith.constant 0 : index
    %c0_76 = arith.constant 0 : index
    %113 = vector.load %arg5[%c21, %c0_75, %c0_76] : memref<27x8x128xbf16, #tpu.memory_space<vmem>>, vector<1x8x128xbf16>
    %114 = vector.shape_cast %113 : vector<1x8x128xbf16> to vector<8x128xbf16>
    %cst_77 = arith.constant dense<0.000000e+00> : vector<80x128xf32>
    %115 = tpu.matmul %112, %114, %cst_77 {dimension_numbers = #tpu.dot_dimension_numbers<[1], [0], [0], [1], [0, 0, 1, 1], [], []>} : vector<80x8xbf16>, vector<8x128xbf16>, vector<80x128xf32> -> vector<80x128xf32>
    %116 = arith.addf %111, %115 : vector<80x128xf32>
    %117 = vector.extract_strided_slice %5 {offsets = [11, 0], sizes = [80, 8], strides = [1, 1]} : vector<104x8xbf16> to vector<80x8xbf16>
    %c22 = arith.constant 22 : index
    %c0_78 = arith.constant 0 : index
    %c0_79 = arith.constant 0 : index
    %118 = vector.load %arg5[%c22, %c0_78, %c0_79] : memref<27x8x128xbf16, #tpu.memory_space<vmem>>, vector<1x8x128xbf16>
    %119 = vector.shape_cast %118 : vector<1x8x128xbf16> to vector<8x128xbf16>
    %cst_80 = arith.constant dense<0.000000e+00> : vector<80x128xf32>
    %120 = tpu.matmul %117, %119, %cst_80 {dimension_numbers = #tpu.dot_dimension_numbers<[1], [0], [0], [1], [0, 0, 1, 1], [], []>} : vector<80x8xbf16>, vector<8x128xbf16>, vector<80x128xf32> -> vector<80x128xf32>
    %121 = arith.addf %116, %120 : vector<80x128xf32>
    %122 = vector.extract_strided_slice %5 {offsets = [12, 0], sizes = [80, 8], strides = [1, 1]} : vector<104x8xbf16> to vector<80x8xbf16>
    %c23 = arith.constant 23 : index
    %c0_81 = arith.constant 0 : index
    %c0_82 = arith.constant 0 : index
    %123 = vector.load %arg5[%c23, %c0_81, %c0_82] : memref<27x8x128xbf16, #tpu.memory_space<vmem>>, vector<1x8x128xbf16>
    %124 = vector.shape_cast %123 : vector<1x8x128xbf16> to vector<8x128xbf16>
    %cst_83 = arith.constant dense<0.000000e+00> : vector<80x128xf32>
    %125 = tpu.matmul %122, %124, %cst_83 {dimension_numbers = #tpu.dot_dimension_numbers<[1], [0], [0], [1], [0, 0, 1, 1], [], []>} : vector<80x8xbf16>, vector<8x128xbf16>, vector<80x128xf32> -> vector<80x128xf32>
    %126 = arith.addf %121, %125 : vector<80x128xf32>
    %127 = vector.extract_strided_slice %5 {offsets = [20, 0], sizes = [80, 8], strides = [1, 1]} : vector<104x8xbf16> to vector<80x8xbf16>
    %c24 = arith.constant 24 : index
    %c0_84 = arith.constant 0 : index
    %c0_85 = arith.constant 0 : index
    %128 = vector.load %arg5[%c24, %c0_84, %c0_85] : memref<27x8x128xbf16, #tpu.memory_space<vmem>>, vector<1x8x128xbf16>
    %129 = vector.shape_cast %128 : vector<1x8x128xbf16> to vector<8x128xbf16>
    %cst_86 = arith.constant dense<0.000000e+00> : vector<80x128xf32>
    %130 = tpu.matmul %127, %129, %cst_86 {dimension_numbers = #tpu.dot_dimension_numbers<[1], [0], [0], [1], [0, 0, 1, 1], [], []>} : vector<80x8xbf16>, vector<8x128xbf16>, vector<80x128xf32> -> vector<80x128xf32>
    %131 = arith.addf %126, %130 : vector<80x128xf32>
    %132 = vector.extract_strided_slice %5 {offsets = [21, 0], sizes = [80, 8], strides = [1, 1]} : vector<104x8xbf16> to vector<80x8xbf16>
    %c25 = arith.constant 25 : index
    %c0_87 = arith.constant 0 : index
    %c0_88 = arith.constant 0 : index
    %133 = vector.load %arg5[%c25, %c0_87, %c0_88] : memref<27x8x128xbf16, #tpu.memory_space<vmem>>, vector<1x8x128xbf16>
    %134 = vector.shape_cast %133 : vector<1x8x128xbf16> to vector<8x128xbf16>
    %cst_89 = arith.constant dense<0.000000e+00> : vector<80x128xf32>
    %135 = tpu.matmul %132, %134, %cst_89 {dimension_numbers = #tpu.dot_dimension_numbers<[1], [0], [0], [1], [0, 0, 1, 1], [], []>} : vector<80x8xbf16>, vector<8x128xbf16>, vector<80x128xf32> -> vector<80x128xf32>
    %136 = arith.addf %131, %135 : vector<80x128xf32>
    %137 = vector.extract_strided_slice %5 {offsets = [22, 0], sizes = [80, 8], strides = [1, 1]} : vector<104x8xbf16> to vector<80x8xbf16>
    %c26 = arith.constant 26 : index
    %c0_90 = arith.constant 0 : index
    %c0_91 = arith.constant 0 : index
    %138 = vector.load %arg5[%c26, %c0_90, %c0_91] : memref<27x8x128xbf16, #tpu.memory_space<vmem>>, vector<1x8x128xbf16>
    %139 = vector.shape_cast %138 : vector<1x8x128xbf16> to vector<8x128xbf16>
    %cst_92 = arith.constant dense<0.000000e+00> : vector<80x128xf32>
    %140 = tpu.matmul %137, %139, %cst_92 {dimension_numbers = #tpu.dot_dimension_numbers<[1], [0], [0], [1], [0, 0, 1, 1], [], []>} : vector<80x8xbf16>, vector<8x128xbf16>, vector<80x128xf32> -> vector<80x128xf32>
    %141 = arith.addf %136, %140 : vector<80x128xf32>
    %c0_93 = arith.constant 0 : index
    %c0_94 = arith.constant 0 : index
    %142 = vector.load %arg6[%c0_93, %c0_94] : memref<1x128xf32, #tpu.memory_space<vmem>>, vector<1x128xf32>
    %143 = vector.broadcast %142 : vector<1x128xf32> to vector<80x128xf32>
    %144 = arith.addf %141, %143 : vector<80x128xf32>
    %145 = arith.truncf %144 : vector<80x128xf32> to vector<80x128xbf16>
    %c0_95 = arith.constant 0 : index
    %c0_96 = arith.constant 0 : index
    %c0_97 = arith.constant 0 : index
    %c0_98 = arith.constant 0 : index
    %146 = vector.load %arg7[%c0_95, %c0_96, %c0_97, %c0_98] : memref<1x1x80x128xbf16, #tpu.memory_space<vmem>>, vector<1x1x80x128xbf16>
    %147 = vector.shape_cast %146 : vector<1x1x80x128xbf16> to vector<80x128xbf16>
    %148 = vector.shape_cast %145 : vector<80x128xbf16> to vector<1x1x80x128xbf16>
    tpu.vector_store %arg7[%c0_95, %c0_96, %c0_97, %c0_98], %148 {strides = array<i32>} : memref<1x1x80x128xbf16, #tpu.memory_space<vmem>>, vector<1x1x80x128xbf16>,
    %149 = tpu.iota {dimensions = array<i32: 0>} : vector<80x1xi32>
    %c10_i32 = arith.constant 10 : i32
    %c0_i32 = arith.constant 0 : i32
    %150 = arith.cmpi eq, %c10_i32, %c0_i32 : i32
    %c1_i32 = arith.constant 1 : i32
    %151 = arith.select %150, %c1_i32, %c10_i32 : i32
    %152 = vector.broadcast %151 : i32 to vector<80x1xi32>
    %153 = arith.remsi %149, %152 : vector<80x1xi32>
    %c0_i32_99 = arith.constant 0 : i32
    %154 = vector.broadcast %c0_i32_99 : i32 to vector<80x1xi32>
    %155 = arith.cmpi ne, %153, %154 : vector<80x1xi32>
    %c0_i32_100 = arith.constant 0 : i32
    %156 = vector.broadcast %c0_i32_100 : i32 to vector<80x1xi32>
    %157 = arith.cmpi slt, %153, %156 : vector<80x1xi32>
    %c0_i32_101 = arith.constant 0 : i32
    %158 = arith.cmpi slt, %151, %c0_i32_101 : i32
    %159 = vector.broadcast %158 : i1 to vector<80x1xi1>
    %160 = vector.broadcast %159 : vector<80x1xi1> to vector<80x1xi1>
    %161 = arith.xori %157, %160 : vector<80x1xi1>
    %162 = arith.andi %161, %155 : vector<80x1xi1>
    %163 = vector.broadcast %151 : i32 to vector<80x1xi32>
    %164 = arith.addi %153, %163 : vector<80x1xi32>
    %165 = arith.select %162, %164, %153 : vector<80x1xi1>, vector<80x1xi32>
    %c8_i32 = arith.constant 8 : i32
    %166 = vector.broadcast %c8_i32 : i32 to vector<80x1xi32>
    %167 = arith.cmpi slt, %165, %166 : vector<80x1xi32>
    %168 = arith.extui %167 : vector<80x1xi1> to vector<80x1xi32>
    %169 = arith.sitofp %168 : vector<80x1xi32> to vector<80x1xf32>
    %170 = vector.broadcast %169 : vector<80x1xf32> to vector<80x128xf32>
    %171 = arith.mulf %144, %170 : vector<80x128xf32>
    %cst_102 = arith.constant dense<0.000000e+00> : vector<128xf32>
    %172 = vector.multi_reduction <add>, %171, %cst_102 [0] : vector<80x128xf32> to vector<128xf32>
    %173 = vector.shape_cast %172 : vector<128xf32> to vector<1x128xf32>
    %c0_103 = arith.constant 0 : index
    %c0_104 = arith.constant 0 : index
    %c0_105 = arith.constant 0 : index
    %174 = vector.load %arg8[%c0_103, %c0_104, %c0_105] : memref<1x1x128xf32, #tpu.memory_space<vmem>>, vector<1x1x128xf32>
    %175 = vector.shape_cast %174 : vector<1x1x128xf32> to vector<1x128xf32>
    %176 = vector.shape_cast %173 : vector<1x128xf32> to vector<1x1x128xf32>
    tpu.vector_store %arg8[%c0_103, %c0_104, %c0_105], %176 {strides = array<i32>} : memref<1x1x128xf32, #tpu.memory_space<vmem>>, vector<1x1x128xf32>,
    %177 = arith.mulf %171, %171 : vector<80x128xf32>
    %cst_106 = arith.constant dense<0.000000e+00> : vector<128xf32>
    %178 = vector.multi_reduction <add>, %177, %cst_106 [0] : vector<80x128xf32> to vector<128xf32>
    %179 = vector.shape_cast %178 : vector<128xf32> to vector<1x128xf32>
    %c0_107 = arith.constant 0 : index
    %c0_108 = arith.constant 0 : index
    %c0_109 = arith.constant 0 : index
    %180 = vector.load %arg9[%c0_107, %c0_108, %c0_109] : memref<1x1x128xf32, #tpu.memory_space<vmem>>, vector<1x1x128xf32>
    %181 = vector.shape_cast %180 : vector<1x1x128xf32> to vector<1x128xf32>
    %182 = vector.shape_cast %179 : vector<1x128xf32> to vector<1x1x128xf32>
    tpu.vector_store %arg9[%c0_107, %c0_108, %c0_109], %182 {strides = array<i32>} : memref<1x1x128xf32, #tpu.memory_space<vmem>>, vector<1x1x128xf32>,
    return
  }
  func.func @transform_0(%arg0: i32, %arg1: i32) -> (i32, i32, i32, i32) {
    %c0_i32 = arith.constant 0 : i32
    %c0_i32_0 = arith.constant 0 : i32
    %c0_i32_1 = arith.constant 0 : i32
    return %arg0, %arg1, %c0_i32, %c0_i32_0 : i32, i32, i32, i32
  }
  func.func @transform_1(%arg0: i32, %arg1: i32) -> (i32, i32, i32, i32) {
    %c1_i32 = arith.constant 1 : i32
    %0 = arith.addi %arg1, %c1_i32 : i32
    %c0_i32 = arith.constant 0 : i32
    %c0_i32_0 = arith.constant 0 : i32
    %c0_i32_1 = arith.constant 0 : i32
    return %arg0, %0, %c0_i32, %c0_i32_0 : i32, i32, i32, i32
  }
  func.func @transform_2(%arg0: i32, %arg1: i32) -> (i32, i32, i32, i32) {
    %c2_i32 = arith.constant 2 : i32
    %0 = arith.addi %arg1, %c2_i32 : i32
    %c0_i32 = arith.constant 0 : i32
    %c0_i32_0 = arith.constant 0 : i32
    %c0_i32_1 = arith.constant 0 : i32
    return %arg0, %0, %c0_i32, %c0_i32_0 : i32, i32, i32, i32
  }
  func.func @transform_3(%arg0: i32, %arg1: i32) -> (i32, i32, i32) {
    %c0_i32 = arith.constant 0 : i32
    %c0_i32_0 = arith.constant 0 : i32
    %c0_i32_1 = arith.constant 0 : i32
    %c0_i32_2 = arith.constant 0 : i32
    return %c0_i32, %c0_i32_0, %c0_i32_1 : i32, i32, i32
  }
  func.func @transform_4(%arg0: i32, %arg1: i32) -> (i32, i32) {
    %c0_i32 = arith.constant 0 : i32
    %c0_i32_0 = arith.constant 0 : i32
    %c0_i32_1 = arith.constant 0 : i32
    return %c0_i32, %c0_i32_0 : i32, i32
  }
  func.func @transform_5(%arg0: i32, %arg1: i32) -> (i32, i32, i32, i32) {
    %c0_i32 = arith.constant 0 : i32
    %c0_i32_0 = arith.constant 0 : i32
    %c0_i32_1 = arith.constant 0 : i32
    return %arg0, %arg1, %c0_i32, %c0_i32_0 : i32, i32, i32, i32
  }
  func.func @transform_6(%arg0: i32, %arg1: i32) -> (i32, i32, i32) {
    %c8_i32 = arith.constant 8 : i32
    %0 = arith.muli %arg0, %c8_i32 : i32
    %1 = arith.addi %0, %arg1 : i32
    %c0_i32 = arith.constant 0 : i32
    %c0_i32_0 = arith.constant 0 : i32
    %c0_i32_1 = arith.constant 0 : i32
    return %1, %c0_i32, %c0_i32_0 : i32, i32, i32
  }
  func.func @transform_7(%arg0: i32, %arg1: i32) -> (i32, i32, i32) {
    %c8_i32 = arith.constant 8 : i32
    %0 = arith.muli %arg0, %c8_i32 : i32
    %1 = arith.addi %0, %arg1 : i32
    %c0_i32 = arith.constant 0 : i32
    %c0_i32_0 = arith.constant 0 : i32
    %c0_i32_1 = arith.constant 0 : i32
    return %1, %c0_i32, %c0_i32_0 : i32, i32, i32
  }
}

</mosaic_0001>

<llo_original>
// kernel: unet_block_forward.5
$region0: #{unet_block_forward.5}
  #allocation0 [shape = 'u32[]', space=smem, size = 0x4, offset = 0x4, fixed_abs, tag = 'smem constant byte address 0x4 - core index']
  #allocation1 [shape = 'u32[144,128]{1,0:T(1,128)}', space=vmem, size = 0x12000, scoped, tag = 'internal scratch']
  %s0 = inlined_call_operand.hbm [shape: bf16[1280,128], index: 0, kind: input, shape index: {}]
  %s1 = inlined_call_operand.hbm [shape: f32[1,128], index: 1, kind: input, shape index: {}]
  %s2 = inlined_call_operand.hbm [shape: f32[1,128], index: 2, kind: input, shape index: {}]
  %s3 = inlined_call_operand.hbm [shape: bf16[1280,128], index: 3, kind: output, shape index: {}]
  %s4 = sld [smem:[#allocation0]]
  $region34: #{unet_block_forward.5} parent=0
    _
  %s6 = ssub.s32 1, %s4
  %s7 = scalar_select 0, %s6, %s4
  $region1: #{unet_block_forward.5} parent=0
    #allocation2 [shape = 'u8[327680]{0}', space=vmem, size = 0x50000, scoped, tag = 'input window, operand 0, single buffered']
    #allocation3 [shape = 's32[1]{0}', space=sflag, size = 0x4, scoped, tag = 'scoped memory for unet_block_forward.5']
    #allocation4 [shape = 's32[1]{0}', space=sflag, size = 0x4, scoped, tag = 'scoped memory for unet_block_forward.5']
    #allocation5 [shape = 'u8[512]{0}', space=vmem, size = 0x400, scoped, tag = 'input window, operand 1, single buffered']
    #allocation6 [shape = 's32[1]{0}', space=sflag, size = 0x4, scoped, tag = 'scoped memory for unet_block_forward.5']
    #allocation7 [shape = 'u8[512]{0}', space=vmem, size = 0x400, scoped, tag = 'input window, operand 2, single buffered']
    #allocation8 [shape = 'u8[327680]{0}', space=vmem, size = 0x50000, scoped, tag = 'output window, operand 0, single buffered']
    %8 = vsyncpa [#allocation3], 0
    %9 = vsyncpa [#allocation6], 0
    %10 = vsyncpa [#allocation4], 0
    // Predicated region
    $region2: #{unet_block_forward.5} parent=1 // pred_check
      _
    $region3: #{unet_block_forward.5} parent=1 // pred_check_branch
      %12 = sbr.rel (0) target = $region5
    $region4: #{unet_block_forward.5} parent=1 // pred_region
      %s14 = ssub.s32 10240, 10240
      %15 = vsyncadd [#allocation3], %s14
      %s16 = sshll.u32 [#allocation2], 4
      %s17 = int_to_ptr.vmem [resolvable:$true] %s16
      %22 = dma.hbm_to_vmem [thread:$0]  %s0, 10240, %s17, [#allocation3], 64, 64, 4
    $region5: #{unet_block_forward.5} parent=1 // pred_fallthru
      _
    // Predicated region
    $region6: #{unet_block_forward.5} parent=1 // pred_check
      _
    $region7: #{unet_block_forward.5} parent=1 // pred_check_branch
      %24 = sbr.rel (0) target = $region9
    $region8: #{unet_block_forward.5} parent=1 // pred_region
      %s26 = ssub.s32 16, 16
      %27 = vsyncadd [#allocation6], %s26
      %s29 = sshll.u32 [#allocation5], 4
      %s30 = int_to_ptr.vmem [resolvable:$true] %s29
      %32 = dma.hbm_to_vmem [thread:$0]  %s1, 16, %s30, [#allocation6]
    $region9: #{unet_block_forward.5} parent=1 // pred_fallthru
      _
    // Predicated region
    $region10: #{unet_block_forward.5} parent=1 // pred_check
      _
    $region11: #{unet_block_forward.5} parent=1 // pred_check_branch
      %34 = sbr.rel (0) target = $region13
    $region12: #{unet_block_forward.5} parent=1 // pred_region
      %s36 = ssub.s32 16, 16
      %37 = vsyncadd [#allocation6], %s36
      %s39 = sshll.u32 [#allocation7], 4
      %s40 = int_to_ptr.vmem [resolvable:$true] %s39
      %42 = dma.hbm_to_vmem [thread:$0]  %s2, 16, %s40, [#allocation6]
    $region13: #{unet_block_forward.5} parent=1 // pred_fallthru
      _
    // Predicated region
    $region14: #{unet_block_forward.5} parent=1 // pred_check
      _
    $region15: #{unet_block_forward.5} parent=1 // pred_check_branch
      %44 = sbr.rel (0) target = $region17
    $region16: #{unet_block_forward.5} parent=1 // pred_region
      %45 = dma.done [#allocation3], 10240
    $region17: #{unet_block_forward.5} parent=1 // pred_fallthru
      _
    // Predicated region
    $region18: #{unet_block_forward.5} parent=1 // pred_check
      _
    $region19: #{unet_block_forward.5} parent=1 // pred_check_branch
      %47 = sbr.rel (0) target = $region21
    $region20: #{unet_block_forward.5} parent=1 // pred_region
      %48 = dma.done [#allocation6], 16
    $region21: #{unet_block_forward.5} parent=1 // pred_fallthru
      _
    // Predicated region
    $region22: #{unet_block_forward.5} parent=1 // pred_check
      _
    $region23: #{unet_block_forward.5} parent=1 // pred_check_branch
      %50 = sbr.rel (0) target = $region25
    $region24: #{unet_block_forward.5} parent=1 // pred_region
      %51 = dma.done [#allocation6], 16
    $region25: #{unet_block_forward.5} parent=1 // pred_fallthru
      _
    %v52 = vld [vmem:[#allocation2] sm:$0xf]
    %v53 = vld [vmem:[#allocation2 + $0x4] sm:$0xf]
    %v54 = vld [vmem:[#allocation2 + $0x8] sm:$0xf]
    %v55 = vld [vmem:[#allocation2 + $0xc] sm:$0xf]
    %v56 = vld [vmem:[#allocation2 + $0x10] sm:$0xf]
    %v57 = vld [vmem:[#allocation2 + $0x14] sm:$0xf]
    %v58 = vld [vmem:[#allocation2 + $0x18] sm:$0xf]
    %v59 = vld [vmem:[#allocation2 + $0x1c] sm:$0xf]
    %v60 = vld [vmem:[#allocation2 + $0x20] sm:$0xf]
    %v61 = vld [vmem:[#allocation2 + $0x24] sm:$0xf]
    %v62 = vld [vmem:[#allocation2 + $0x28] sm:$0xf]
    %v63 = vld [vmem:[#allocation2 + $0x2c] sm:$0xf]
    %v64 = vld [vmem:[#allocation2 + $0x30] sm:$0xf]
    %v65 = vld [vmem:[#allocation2 + $0x34] sm:$0xf]
    %v66 = vld [vmem:[#allocation2 + $0x38] sm:$0xf]
    %v67 = vld [vmem:[#allocation2 + $0x3c] sm:$0xf]
    %v68 = vld [vmem:[#allocation2 + $0x40] sm:$0xf]
    %v69 = vld [vmem:[#allocation2 + $0x44] sm:$0xf]
    %v70 = vld [vmem:[#allocation2 + $0x48] sm:$0xf]
    %v71 = vld [vmem:[#allocation2 + $0x4c] sm:$0xf]
    %v72 = vld [vmem:[#allocation2 + $0x50] sm:$0xf]
    %v73 = vld [vmem:[#allocation2 + $0x54] sm:$0xf]
    %v74 = vld [vmem:[#allocation2 + $0x58] sm:$0xf]
    %v75 = vld [vmem:[#allocation2 + $0x5c] sm:$0xf]
    %v76 = vld [vmem:[#allocation2 + $0x60] sm:$0xf]
    %v77 = vld [vmem:[#allocation2 + $0x64] sm:$0xf]
    %v78 = vld [vmem:[#allocation2 + $0x68] sm:$0xf]
    %v79 = vld [vmem:[#allocation2 + $0x6c] sm:$0xf]
    %v80 = vld [vmem:[#allocation2 + $0x70] sm:$0xf]
    %v81 = vld [vmem:[#allocation2 + $0x74] sm:$0xf]
    %v82 = vld [vmem:[#allocation2 + $0x78] sm:$0xf]
    %v83 = vld [vmem:[#allocation2 + $0x7c] sm:$0xf]
    %v84 = vld [vmem:[#allocation2 + $0x80] sm:$0xf]
    %v85 = vld [vmem:[#allocation2 + $0x84] sm:$0xf]
    %v86 = vld [vmem:[#allocation2 + $0x88] sm:$0xf]
    %v87 = vld [vmem:[#allocation2 + $0x8c] sm:$0xf]
    %v88 = vld [vmem:[#allocation2 + $0x90] sm:$0xf]
    %v89 = vld [vmem:[#allocation2 + $0x94] sm:$0xf]
    %v90 = vld [vmem:[#allocation2 + $0x98] sm:$0xf]
    %v91 = vld [vmem:[#allocation2 + $0x9c] sm:$0xf]
    %v92 = vld [vmem:[#allocation2 + $0xa0] sm:$0xf]
    %v93 = vld [vmem:[#allocation2 + $0xa4] sm:$0xf]
    %v94 = vld [vmem:[#allocation2 + $0xa8] sm:$0xf]
    %v95 = vld [vmem:[#allocation2 + $0xac] sm:$0xf]
    %v96 = vld [vmem:[#allocation2 + $0xb0] sm:$0xf]
    %v97 = vld [vmem:[#allocation2 + $0xb4] sm:$0xf]
    %v98 = vld [vmem:[#allocation2 + $0xb8] sm:$0xf]
    %v99 = vld [vmem:[#allocation2 + $0xbc] sm:$0xf]
    %v100 = vld [vmem:[#allocation2 + $0xc0] sm:$0xf]
    %v101 = vld [vmem:[#allocation2 + $0xc4] sm:$0xf]
    %v102 = vld [vmem:[#allocation2 + $0xc8] sm:$0xf]
    %v103 = vld [vmem:[#allocation2 + $0xcc] sm:$0xf]
    %v104 = vld [vmem:[#allocation2 + $0xd0] sm:$0xf]
    %v105 = vld [vmem:[#allocation2 + $0xd4] sm:$0xf]
    %v106 = vld [vmem:[#allocation2 + $0xd8] sm:$0xf]
    %v107 = vld [vmem:[#allocation2 + $0xdc] sm:$0xf]
    %v108 = vld [vmem:[#allocation2 + $0xe0] sm:$0xf]
    %v109 = vld [vmem:[#allocation2 + $0xe4] sm:$0xf]
    %v110 = vld [vmem:[#allocation2 + $0xe8] sm:$0xf]
    %v111 = vld [vmem:[#allocation2 + $0xec] sm:$0xf]
    %v112 = vld [vmem:[#allocation2 + $0xf0] sm:$0xf]
    %v113 = vld [vmem:[#allocation2 + $0xf4] sm:$0xf]
    %v114 = vld [vmem:[#allocation2 + $0xf8] sm:$0xf]
    %v115 = vld [vmem:[#allocation2 + $0xfc] sm:$0xf]
    %v116 = vld [vmem:[#allocation2 + $0x100] sm:$0xf]
    %v117 = vld [vmem:[#allocation2 + $0x104] sm:$0xf]
    %v118 = vld [vmem:[#allocation2 + $0x108] sm:$0xf]
    %v119 = vld [vmem:[#allocation2 + $0x10c] sm:$0xf]
    %v120 = vld [vmem:[#allocation2 + $0x110] sm:$0xf]
    %v121 = vld [vmem:[#allocation2 + $0x114] sm:$0xf]
    %v122 = vld [vmem:[#allocation2 + $0x118] sm:$0xf]
    %v123 = vld [vmem:[#allocation2 + $0x11c] sm:$0xf]
    %v124 = vld [vmem:[#allocation2 + $0x120] sm:$0xf]
    %v125 = vld [vmem:[#allocation2 + $0x124] sm:$0xf]
    %v126 = vld [vmem:[#allocation2 + $0x128] sm:$0xf]
    %v127 = vld [vmem:[#allocation2 + $0x12c] sm:$0xf]
    %v128 = vld [vmem:[#allocation2 + $0x130] sm:$0xf]
    %v129 = vld [vmem:[#allocation2 + $0x134] sm:$0xf]
    %v130 = vld [vmem:[#allocation2 + $0x138] sm:$0xf]
    %v131 = vld [vmem:[#allocation2 + $0x13c] sm:$0xf]
    %v132 = vld [vmem:[#allocation2 + $0x140] sm:$0xf]
    %v133 = vld [vmem:[#allocation2 + $0x144] sm:$0xf]
    %v134 = vld [vmem:[#allocation2 + $0x148] sm:$0xf]
    %v135 = vld [vmem:[#allocation2 + $0x14c] sm:$0xf]
    %v136 = vld [vmem:[#allocation2 + $0x150] sm:$0xf]
    %v137 = vld [vmem:[#allocation2 + $0x154] sm:$0xf]
    %v138 = vld [vmem:[#allocation2 + $0x158] sm:$0xf]
    %v139 = vld [vmem:[#allocation2 + $0x15c] sm:$0xf]
    %v140 = vld [vmem:[#allocation2 + $0x160] sm:$0xf]
    %v141 = vld [vmem:[#allocation2 + $0x164] sm:$0xf]
    %v142 = vld [vmem:[#allocation2 + $0x168] sm:$0xf]
    %v143 = vld [vmem:[#allocation2 + $0x16c] sm:$0xf]
    %v144 = vld [vmem:[#allocation2 + $0x170] sm:$0xf]
    %v145 = vld [vmem:[#allocation2 + $0x174] sm:$0xf]
    %v146 = vld [vmem:[#allocation2 + $0x178] sm:$0xf]
    %v147 = vld [vmem:[#allocation2 + $0x17c] sm:$0xf]
    %v148 = vld [vmem:[#allocation2 + $0x180] sm:$0xf]
    %v149 = vld [vmem:[#allocation2 + $0x184] sm:$0xf]
    %v150 = vld [vmem:[#allocation2 + $0x188] sm:$0xf]
    %v151 = vld [vmem:[#allocation2 + $0x18c] sm:$0xf]
    %v152 = vld [vmem:[#allocation2 + $0x190] sm:$0xf]
    %v153 = vld [vmem:[#allocation2 + $0x194] sm:$0xf]
    %v154 = vld [vmem:[#allocation2 + $0x198] sm:$0xf]
    %v155 = vld [vmem:[#allocation2 + $0x19c] sm:$0xf]
    %v156 = vld [vmem:[#allocation2 + $0x1a0] sm:$0xf]
    %v157 = vld [vmem:[#allocation2 + $0x1a4] sm:$0xf]
    %v158 = vld [vmem:[#allocation2 + $0x1a8] sm:$0xf]
    %v159 = vld [vmem:[#allocation2 + $0x1ac] sm:$0xf]
    %v160 = vld [vmem:[#allocation2 + $0x1b0] sm:$0xf]
    %v161 = vld [vmem:[#allocation2 + $0x1b4] sm:$0xf]
    %v162 = vld [vmem:[#allocation2 + $0x1b8] sm:$0xf]
    %v163 = vld [vmem:[#allocation2 + $0x1bc] sm:$0xf]
    %v164 = vld [vmem:[#allocation2 + $0x1c0] sm:$0xf]
    %v165 = vld [vmem:[#allocation2 + $0x1c4] sm:$0xf]
    %v166 = vld [vmem:[#allocation2 + $0x1c8] sm:$0xf]
    %v167 = vld [vmem:[#allocation2 + $0x1cc] sm:$0xf]
    %v168 = vld [vmem:[#allocation2 + $0x1d0] sm:$0xf]
    %v169 = vld [vmem:[#allocation2 + $0x1d4] sm:$0xf]
    %v170 = vld [vmem:[#allocation2 + $0x1d8] sm:$0xf]
    %v171 = vld [vmem:[#allocation2 + $0x1dc] sm:$0xf]
    %v172 = vld [vmem:[#allocation2 + $0x1e0] sm:$0xf]
    %v173 = vld [vmem:[#allocation2 + $0x1e4] sm:$0xf]
    %v174 = vld [vmem:[#allocation2 + $0x1e8] sm:$0xf]
    %v175 = vld [vmem:[#allocation2 + $0x1ec] sm:$0xf]
    %v176 = vld [vmem:[#allocation2 + $0x1f0] sm:$0xf]
    %v177 = vld [vmem:[#allocation2 + $0x1f4] sm:$0xf]
    %v178 = vld [vmem:[#allocation2 + $0x1f8] sm:$0xf]
    %v179 = vld [vmem:[#allocation2 + $0x1fc] sm:$0xf]
    %v180 = vld [vmem:[#allocation2 + $0x200] sm:$0xf]
    %v181 = vld [vmem:[#allocation2 + $0x204] sm:$0xf]
    %v182 = vld [vmem:[#allocation2 + $0x208] sm:$0xf]
    %v183 = vld [vmem:[#allocation2 + $0x20c] sm:$0xf]
    %v184 = vld [vmem:[#allocation2 + $0x210] sm:$0xf]
    %v185 = vld [vmem:[#allocation2 + $0x214] sm:$0xf]
    %v186 = vld [vmem:[#allocation2 + $0x218] sm:$0xf]
    %v187 = vld [vmem:[#allocation2 + $0x21c] sm:$0xf]
    %v188 = vld [vmem:[#allocation2 + $0x220] sm:$0xf]
    %v189 = vld [vmem:[#allocation2 + $0x224] sm:$0xf]
    %v190 = vld [vmem:[#allocation2 + $0x228] sm:$0xf]
    %v191 = vld [vmem:[#allocation2 + $0x22c] sm:$0xf]
    %v192 = vld [vmem:[#allocation2 + $0x230] sm:$0xf]
    %v193 = vld [vmem:[#allocation2 + $0x234] sm:$0xf]
    %v194 = vld [vmem:[#allocation2 + $0x238] sm:$0xf]
    %v195 = vld [vmem:[#allocation2 + $0x23c] sm:$0xf]
    %v196 = vld [vmem:[#allocation2 + $0x240] sm:$0xf]
    %v197 = vld [vmem:[#allocation2 + $0x244] sm:$0xf]
    %v198 = vld [vmem:[#allocation2 + $0x248] sm:$0xf]
    %v199 = vld [vmem:[#allocation2 + $0x24c] sm:$0xf]
    %v200 = vld [vmem:[#allocation2 + $0x250] sm:$0xf]
    %v201 = vld [vmem:[#allocation2 + $0x254] sm:$0xf]
    %v202 = vld [vmem:[#allocation2 + $0x258] sm:$0xf]
    %v203 = vld [vmem:[#allocation2 + $0x25c] sm:$0xf]
    %v204 = vld [vmem:[#allocation2 + $0x260] sm:$0xf]
    %v205 = vld [vmem:[#allocation2 + $0x264] sm:$0xf]
    %v206 = vld [vmem:[#allocation2 + $0x268] sm:$0xf]
    %v207 = vld [vmem:[#allocation2 + $0x26c] sm:$0xf]
    %v208 = vld [vmem:[#allocation2 + $0x270] sm:$0xf]
    %v209 = vld [vmem:[#allocation2 + $0x274] sm:$0xf]
    %v210 = vld [vmem:[#allocation2 + $0x278] sm:$0xf]
    %v211 = vld [vmem:[#allocation2 + $0x27c] sm:$0xf]
    %v212 = vunpack.c.l.bf16 %v52
    %v213 = vunpack.c.l.bf16 %v53
    %v214 = vunpack.c.l.bf16 %v54
    %v215 = vunpack.c.l.bf16 %v55
    %v216 = vunpack.c.l.bf16 %v56
    %v217 = vunpack.c.l.bf16 %v57
    %v218 = vunpack.c.l.bf16 %v58
    %v219 = vunpack.c.l.bf16 %v59
    %v220 = vunpack.c.l.bf16 %v60
    %v221 = vunpack.c.l.bf16 %v61
    %v222 = vunpack.c.l.bf16 %v62
    %v223 = vunpack.c.l.bf16 %v63
    %v224 = vunpack.c.l.bf16 %v64
    %v225 = vunpack.c.l.bf16 %v65
    %v226 = vunpack.c.l.bf16 %v66
    %v227 = vunpack.c.l.bf16 %v67
    %v228 = vunpack.c.l.bf16 %v68
    %v229 = vunpack.c.l.bf16 %v69
    %v230 = vunpack.c.l.bf16 %v70
    %v231 = vunpack.c.l.bf16 %v71
    %v232 = vunpack.c.l.bf16 %v72
    %v233 = vunpack.c.l.bf16 %v73
    %v234 = vunpack.c.l.bf16 %v74
    %v235 = vunpack.c.l.bf16 %v75
    %v236 = vunpack.c.l.bf16 %v76
    %v237 = vunpack.c.l.bf16 %v77
    %v238 = vunpack.c.l.bf16 %v78
    %v239 = vunpack.c.l.bf16 %v79
    %v240 = vunpack.c.l.bf16 %v80
    %v241 = vunpack.c.l.bf16 %v81
    %v242 = vunpack.c.l.bf16 %v82
    %v243 = vunpack.c.l.bf16 %v83
    %v244 = vunpack.c.l.bf16 %v84
    %v245 = vunpack.c.l.bf16 %v85
    %v246 = vunpack.c.l.bf16 %v86
    %v247 = vunpack.c.l.bf16 %v87
    %v248 = vunpack.c.l.bf16 %v88
    %v249 = vunpack.c.l.bf16 %v89
    %v250 = vunpack.c.l.bf16 %v90
    %v251 = vunpack.c.l.bf16 %v91
    %v252 = vunpack.c.l.bf16 %v92
    %v253 = vunpack.c.l.bf16 %v93
    %v254 = vunpack.c.l.bf16 %v94
    %v255 = vunpack.c.l.bf16 %v95
    %v256 = vunpack.c.l.bf16 %v96
    %v257 = vunpack.c.l.bf16 %v97
    %v258 = vunpack.c.l.bf16 %v98
    %v259 = vunpack.c.l.bf16 %v99
    %v260 = vunpack.c.l.bf16 %v100
    %v261 = vunpack.c.l.bf16 %v101
    %v262 = vunpack.c.l.bf16 %v102
    %v263 = vunpack.c.l.bf16 %v103
    %v264 = vunpack.c.l.bf16 %v104
    %v265 = vunpack.c.l.bf16 %v105
    %v266 = vunpack.c.l.bf16 %v106
    %v267 = vunpack.c.l.bf16 %v107
    %v268 = vunpack.c.l.bf16 %v108
    %v269 = vunpack.c.l.bf16 %v109
    %v270 = vunpack.c.l.bf16 %v110
    %v271 = vunpack.c.l.bf16 %v111
    %v272 = vunpack.c.l.bf16 %v112
    %v273 = vunpack.c.l.bf16 %v113
    %v274 = vunpack.c.l.bf16 %v114
    %v275 = vunpack.c.l.bf16 %v115
    %v276 = vunpack.c.l.bf16 %v116
    %v277 = vunpack.c.l.bf16 %v117
    %v278 = vunpack.c.l.bf16 %v118
    %v279 = vunpack.c.l.bf16 %v119
    %v280 = vunpack.c.l.bf16 %v120
    %v281 = vunpack.c.l.bf16 %v121
    %v282 = vunpack.c.l.bf16 %v122
    %v283 = vunpack.c.l.bf16 %v123
    %v284 = vunpack.c.l.bf16 %v124
    %v285 = vunpack.c.l.bf16 %v125
    %v286 = vunpack.c.l.bf16 %v126
    %v287 = vunpack.c.l.bf16 %v127
    %v288 = vunpack.c.l.bf16 %v128
    %v289 = vunpack.c.l.bf16 %v129
    %v290 = vunpack.c.l.bf16 %v130
    %v291 = vunpack.c.l.bf16 %v131
    %v292 = vunpack.c.l.bf16 %v132
    %v293 = vunpack.c.l.bf16 %v133
    %v294 = vunpack.c.l.bf16 %v134
    %v295 = vunpack.c.l.bf16 %v135
    %v296 = vunpack.c.l.bf16 %v136
    %v297 = vunpack.c.l.bf16 %v137
    %v298 = vunpack.c.l.bf16 %v138
    %v299 = vunpack.c.l.bf16 %v139
    %v300 = vunpack.c.l.bf16 %v140
    %v301 = vunpack.c.l.bf16 %v141
    %v302 = vunpack.c.l.bf16 %v142
    %v303 = vunpack.c.l.bf16 %v143
    %v304 = vunpack.c.l.bf16 %v144
    %v305 = vunpack.c.l.bf16 %v145
    %v306 = vunpack.c.l.bf16 %v146
    %v307 = vunpack.c.l.bf16 %v147
    %v308 = vunpack.c.l.bf16 %v148
    %v309 = vunpack.c.l.bf16 %v149
    %v310 = vunpack.c.l.bf16 %v150
    %v311 = vunpack.c.l.bf16 %v151
    %v312 = vunpack.c.l.bf16 %v152
    %v313 = vunpack.c.l.bf16 %v153
    %v314 = vunpack.c.l.bf16 %v154
    %v315 = vunpack.c.l.bf16 %v155
    %v316 = vunpack.c.l.bf16 %v156
    %v317 = vunpack.c.l.bf16 %v157
    %v318 = vunpack.c.l.bf16 %v158
    %v319 = vunpack.c.l.bf16 %v159
    %v320 = vunpack.c.l.bf16 %v160
    %v321 = vunpack.c.l.bf16 %v161
    %v322 = vunpack.c.l.bf16 %v162
    %v323 = vunpack.c.l.bf16 %v163
    %v324 = vunpack.c.l.bf16 %v164
    %v325 = vunpack.c.l.bf16 %v165
    %v326 = vunpack.c.l.bf16 %v166
    %v327 = vunpack.c.l.bf16 %v167
    %v328 = vunpack.c.l.bf16 %v168
    %v329 = vunpack.c.l.bf16 %v169
    %v330 = vunpack.c.l.bf16 %v170
    %v331 = vunpack.c.l.bf16 %v171
    %v332 = vunpack.c.l.bf16 %v172
    %v333 = vunpack.c.l.bf16 %v173
    %v334 = vunpack.c.l.bf16 %v174
    %v335 = vunpack.c.l.bf16 %v175
    %v336 = vunpack.c.l.bf16 %v176
    %v337 = vunpack.c.l.bf16 %v177
    %v338 = vunpack.c.l.bf16 %v178
    %v339 = vunpack.c.l.bf16 %v179
    %v340 = vunpack.c.l.bf16 %v180
    %v341 = vunpack.c.l.bf16 %v181
    %v342 = vunpack.c.l.bf16 %v182
    %v343 = vunpack.c.l.bf16 %v183
    %v344 = vunpack.c.l.bf16 %v184
    %v345 = vunpack.c.l.bf16 %v185
    %v346 = vunpack.c.l.bf16 %v186
    %v347 = vunpack.c.l.bf16 %v187
    %v348 = vunpack.c.l.bf16 %v188
    %v349 = vunpack.c.l.bf16 %v189
    %v350 = vunpack.c.l.bf16 %v190
    %v351 = vunpack.c.l.bf16 %v191
    %v352 = vunpack.c.l.bf16 %v192
    %v353 = vunpack.c.l.bf16 %v193
    %v354 = vunpack.c.l.bf16 %v194
    %v355 = vunpack.c.l.bf16 %v195
    %v356 = vunpack.c.l.bf16 %v196
    %v357 = vunpack.c.l.bf16 %v197
    %v358 = vunpack.c.l.bf16 %v198
    %v359 = vunpack.c.l.bf16 %v199
    %v360 = vunpack.c.l.bf16 %v200
    %v361 = vunpack.c.l.bf16 %v201
    %v362 = vunpack.c.l.bf16 %v202
    %v363 = vunpack.c.l.bf16 %v203
    %v364 = vunpack.c.l.bf16 %v204
    %v365 = vunpack.c.l.bf16 %v205
    %v366 = vunpack.c.l.bf16 %v206
    %v367 = vunpack.c.l.bf16 %v207
    %v368 = vunpack.c.l.bf16 %v208
    %v369 = vunpack.c.l.bf16 %v209
    %v370 = vunpack.c.l.bf16 %v210
    %v371 = vunpack.c.l.bf16 %v211
    %v372 = vld [vmem:[#allocation5] sm:$0x1]
    %v374 = vlaneseq
    %v375 = vshrl.u32 %v374, 7
    %v376 = vsub.s32 0, %v375
    %v377 = vrot.slane %v372, %v376
    %v379 = vmul.f32 %v212, %v377
    %v380 = vmul.f32 %v213, %v377
    %v381 = vmul.f32 %v214, %v377
    %v382 = vmul.f32 %v215, %v377
    %v383 = vmul.f32 %v216, %v377
    %v384 = vmul.f32 %v217, %v377
    %v385 = vmul.f32 %v218, %v377
    %v386 = vmul.f32 %v219, %v377
    %v387 = vmul.f32 %v220, %v377
    %v388 = vmul.f32 %v221, %v377
    %v389 = vmul.f32 %v222, %v377
    %v390 = vmul.f32 %v223, %v377
    %v391 = vmul.f32 %v224, %v377
    %v392 = vmul.f32 %v225, %v377
    %v393 = vmul.f32 %v226, %v377
    %v394 = vmul.f32 %v227, %v377
    %v395 = vmul.f32 %v228, %v377
    %v396 = vmul.f32 %v229, %v377
    %v397 = vmul.f32 %v230, %v377
    %v398 = vmul.f32 %v231, %v377
    %v399 = vmul.f32 %v232, %v377
    %v400 = vmul.f32 %v233, %v377
    %v401 = vmul.f32 %v234, %v377
    %v402 = vmul.f32 %v235, %v377
    %v403 = vmul.f32 %v236, %v377
    %v404 = vmul.f32 %v237, %v377
    %v405 = vmul.f32 %v238, %v377
    %v406 = vmul.f32 %v239, %v377
    %v407 = vmul.f32 %v240, %v377
    %v408 = vmul.f32 %v241, %v377
    %v409 = vmul.f32 %v242, %v377
    %v410 = vmul.f32 %v243, %v377
    %v411 = vmul.f32 %v244, %v377
    %v412 = vmul.f32 %v245, %v377
    %v413 = vmul.f32 %v246, %v377
    %v414 = vmul.f32 %v247, %v377
    %v415 = vmul.f32 %v248, %v377
    %v416 = vmul.f32 %v249, %v377
    %v417 = vmul.f32 %v250, %v377
    %v418 = vmul.f32 %v251, %v377
    %v419 = vmul.f32 %v252, %v377
    %v420 = vmul.f32 %v253, %v377
    %v421 = vmul.f32 %v254, %v377
    %v422 = vmul.f32 %v255, %v377
    %v423 = vmul.f32 %v256, %v377
    %v424 = vmul.f32 %v257, %v377
    %v425 = vmul.f32 %v258, %v377
    %v426 = vmul.f32 %v259, %v377
    %v427 = vmul.f32 %v260, %v377
    %v428 = vmul.f32 %v261, %v377
    %v429 = vmul.f32 %v262, %v377
    %v430 = vmul.f32 %v263, %v377
    %v431 = vmul.f32 %v264, %v377
    %v432 = vmul.f32 %v265, %v377
    %v433 = vmul.f32 %v266, %v377
    %v434 = vmul.f32 %v267, %v377
    %v435 = vmul.f32 %v268, %v377
    %v436 = vmul.f32 %v269, %v377
    %v437 = vmul.f32 %v270, %v377
    %v438 = vmul.f32 %v271, %v377
    %v439 = vmul.f32 %v272, %v377
    %v440 = vmul.f32 %v273, %v377
    %v441 = vmul.f32 %v274, %v377
    %v442 = vmul.f32 %v275, %v377
    %v443 = vmul.f32 %v276, %v377
    %v444 = vmul.f32 %v277, %v377
    %v445 = vmul.f32 %v278, %v377
    %v446 = vmul.f32 %v279, %v377
    %v447 = vmul.f32 %v280, %v377
    %v448 = vmul.f32 %v281, %v377
    %v449 = vmul.f32 %v282, %v377
    %v450 = vmul.f32 %v283, %v377
    %v451 = vmul.f32 %v284, %v377
    %v452 = vmul.f32 %v285, %v377
    %v453 = vmul.f32 %v286, %v377
    %v454 = vmul.f32 %v287, %v377
    %v455 = vmul.f32 %v288, %v377
    %v456 = vmul.f32 %v289, %v377
    %v457 = vmul.f32 %v290, %v377
    %v458 = vmul.f32 %v291, %v377
    %v459 = vmul.f32 %v292, %v377
    %v460 = vmul.f32 %v293, %v377
    %v461 = vmul.f32 %v294, %v377
    %v462 = vmul.f32 %v295, %v377
    %v463 = vmul.f32 %v296, %v377
    %v464 = vmul.f32 %v297, %v377
    %v465 = vmul.f32 %v298, %v377
    %v466 = vmul.f32 %v299, %v377
    %v467 = vmul.f32 %v300, %v377
    %v468 = vmul.f32 %v301, %v377
    %v469 = vmul.f32 %v302, %v377
    %v470 = vmul.f32 %v303, %v377
    %v471 = vmul.f32 %v304, %v377
    %v472 = vmul.f32 %v305, %v377
    %v473 = vmul.f32 %v306, %v377
    %v474 = vmul.f32 %v307, %v377
    %v475 = vmul.f32 %v308, %v377
    %v476 = vmul.f32 %v309, %v377
    %v477 = vmul.f32 %v310, %v377
    %v478 = vmul.f32 %v311, %v377
    %v479 = vmul.f32 %v312, %v377
    %v480 = vmul.f32 %v313, %v377
    %v481 = vmul.f32 %v314, %v377
    %v482 = vmul.f32 %v315, %v377
    %v483 = vmul.f32 %v316, %v377
    %v484 = vmul.f32 %v317, %v377
    %v485 = vmul.f32 %v318, %v377
    %v486 = vmul.f32 %v319, %v377
    %v487 = vmul.f32 %v320, %v377
    %v488 = vmul.f32 %v321, %v377
    %v489 = vmul.f32 %v322, %v377
    %v490 = vmul.f32 %v323, %v377
    %v491 = vmul.f32 %v324, %v377
    %v492 = vmul.f32 %v325, %v377
    %v493 = vmul.f32 %v326, %v377
    %v494 = vmul.f32 %v327, %v377
    %v495 = vmul.f32 %v328, %v377
    %v496 = vmul.f32 %v329, %v377
    %v497 = vmul.f32 %v330, %v377
    %v498 = vmul.f32 %v331, %v377
    %v499 = vmul.f32 %v332, %v377
    %v500 = vmul.f32 %v333, %v377
    %v501 = vmul.f32 %v334, %v377
    %v502 = vmul.f32 %v335, %v377
    %v503 = vmul.f32 %v336, %v377
    %v504 = vmul.f32 %v337, %v377
    %v505 = vmul.f32 %v338, %v377
    %v506 = vmul.f32 %v339, %v377
    %v507 = vmul.f32 %v340, %v377
    %v508 = vmul.f32 %v341, %v377
    %v509 = vmul.f32 %v342, %v377
    %v510 = vmul.f32 %v343, %v377
    %v511 = vmul.f32 %v344, %v377
    %v512 = vmul.f32 %v345, %v377
    %v513 = vmul.f32 %v346, %v377
    %v514 = vmul.f32 %v347, %v377
    %v515 = vmul.f32 %v348, %v377
    %v516 = vmul.f32 %v349, %v377
    %v517 = vmul.f32 %v350, %v377
    %v518 = vmul.f32 %v351, %v377
    %v519 = vmul.f32 %v352, %v377
    %v520 = vmul.f32 %v353, %v377
    %v521 = vmul.f32 %v354, %v377
    %v522 = vmul.f32 %v355, %v377
    %v523 = vmul.f32 %v356, %v377
    %v524 = vmul.f32 %v357, %v377
    %v525 = vmul.f32 %v358, %v377
    %v526 = vmul.f32 %v359, %v377
    %v527 = vmul.f32 %v360, %v377
    %v528 = vmul.f32 %v361, %v377
    %v529 = vmul.f32 %v362, %v377
    %v530 = vmul.f32 %v363, %v377
    %v531 = vmul.f32 %v364, %v377
    %v532 = vmul.f32 %v365, %v377
    %v533 = vmul.f32 %v366, %v377
    %v534 = vmul.f32 %v367, %v377
    %v535 = vmul.f32 %v368, %v377
    %v536 = vmul.f32 %v369, %v377
    %v537 = vmul.f32 %v370, %v377
    %v538 = vmul.f32 %v371, %v377
    %v539 = vld [vmem:[#allocation7] sm:$0x1]
    %v541 = vlaneseq
    %v542 = vshrl.u32 %v541, 7
    %v543 = vsub.s32 0, %v542
    %v544 = vrot.slane %v539, %v543
    %v546 = vadd.f32 %v379, %v544
    %v547 = vadd.f32 %v380, %v544
    %v548 = vadd.f32 %v381, %v544
    %v549 = vadd.f32 %v382, %v544
    %v550 = vadd.f32 %v383, %v544
    %v551 = vadd.f32 %v384, %v544
    %v552 = vadd.f32 %v385, %v544
    %v553 = vadd.f32 %v386, %v544
    %v554 = vadd.f32 %v387, %v544
    %v555 = vadd.f32 %v388, %v544
    %v556 = vadd.f32 %v389, %v544
    %v557 = vadd.f32 %v390, %v544
    %v558 = vadd.f32 %v391, %v544
    %v559 = vadd.f32 %v392, %v544
    %v560 = vadd.f32 %v393, %v544
    %v561 = vadd.f32 %v394, %v544
    %v562 = vadd.f32 %v395, %v544
    %v563 = vadd.f32 %v396, %v544
    %v564 = vadd.f32 %v397, %v544
    %v565 = vadd.f32 %v398, %v544
    %v566 = vadd.f32 %v399, %v544
    %v567 = vadd.f32 %v400, %v544
    %v568 = vadd.f32 %v401, %v544
    %v569 = vadd.f32 %v402, %v544
    %v570 = vadd.f32 %v403, %v544
    %v571 = vadd.f32 %v404, %v544
    %v572 = vadd.f32 %v405, %v544
    %v573 = vadd.f32 %v406, %v544
    %v574 = vadd.f32 %v407, %v544
    %v575 = vadd.f32 %v408, %v544
    %v576 = vadd.f32 %v409, %v544
    %v577 = vadd.f32 %v410, %v544
    %v578 = vadd.f32 %v411, %v544
    %v579 = vadd.f32 %v412, %v544
    %v580 = vadd.f32 %v413, %v544
    %v581 = vadd.f32 %v414, %v544
    %v582 = vadd.f32 %v415, %v544
    %v583 = vadd.f32 %v416, %v544
    %v584 = vadd.f32 %v417, %v544
    %v585 = vadd.f32 %v418, %v544
    %v586 = vadd.f32 %v419, %v544
    %v587 = vadd.f32 %v420, %v544
    %v588 = vadd.f32 %v421, %v544
    %v589 = vadd.f32 %v422, %v544
    %v590 = vadd.f32 %v423, %v544
    %v591 = vadd.f32 %v424, %v544
    %v592 = vadd.f32 %v425, %v544
    %v593 = vadd.f32 %v426, %v544
    %v594 = vadd.f32 %v427, %v544
    %v595 = vadd.f32 %v428, %v544
    %v596 = vadd.f32 %v429, %v544
    %v597 = vadd.f32 %v430, %v544
    %v598 = vadd.f32 %v431, %v544
    %v599 = vadd.f32 %v432, %v544
    %v600 = vadd.f32 %v433, %v544
    %v601 = vadd.f32 %v434, %v544
    %v602 = vadd.f32 %v435, %v544
    %v603 = vadd.f32 %v436, %v544
    %v604 = vadd.f32 %v437, %v544
    %v605 = vadd.f32 %v438, %v544
    %v606 = vadd.f32 %v439, %v544
    %v607 = vadd.f32 %v440, %v544
    %v608 = vadd.f32 %v441, %v544
    %v609 = vadd.f32 %v442, %v544
    %v610 = vadd.f32 %v443, %v544
    %v611 = vadd.f32 %v444, %v544
    %v612 = vadd.f32 %v445, %v544
    %v613 = vadd.f32 %v446, %v544
    %v614 = vadd.f32 %v447, %v544
    %v615 = vadd.f32 %v448, %v544
    %v616 = vadd.f32 %v449, %v544
    %v617 = vadd.f32 %v450, %v544
    %v618 = vadd.f32 %v451, %v544
    %v619 = vadd.f32 %v452, %v544
    %v620 = vadd.f32 %v453, %v544
    %v621 = vadd.f32 %v454, %v544
    %v622 = vadd.f32 %v455, %v544
    %v623 = vadd.f32 %v456, %v544
    %v624 = vadd.f32 %v457, %v544
    %v625 = vadd.f32 %v458, %v544
    %v626 = vadd.f32 %v459, %v544
    %v627 = vadd.f32 %v460, %v544
    %v628 = vadd.f32 %v461, %v544
    %v629 = vadd.f32 %v462, %v544
    %v630 = vadd.f32 %v463, %v544
    %v631 = vadd.f32 %v464, %v544
    %v632 = vadd.f32 %v465, %v544
    %v633 = vadd.f32 %v466, %v544
    %v634 = vadd.f32 %v467, %v544
    %v635 = vadd.f32 %v468, %v544
    %v636 = vadd.f32 %v469, %v544
    %v637 = vadd.f32 %v470, %v544
    %v638 = vadd.f32 %v471, %v544
    %v639 = vadd.f32 %v472, %v544
    %v640 = vadd.f32 %v473, %v544
    %v641 = vadd.f32 %v474, %v544
    %v642 = vadd.f32 %v475, %v544
    %v643 = vadd.f32 %v476, %v544
    %v644 = vadd.f32 %v477, %v544
    %v645 = vadd.f32 %v478, %v544
    %v646 = vadd.f32 %v479, %v544
    %v647 = vadd.f32 %v480, %v544
    %v648 = vadd.f32 %v481, %v544
    %v649 = vadd.f32 %v482, %v544
    %v650 = vadd.f32 %v483, %v544
    %v651 = vadd.f32 %v484, %v544
    %v652 = vadd.f32 %v485, %v544
    %v653 = vadd.f32 %v486, %v544
    %v654 = vadd.f32 %v487, %v544
    %v655 = vadd.f32 %v488, %v544
    %v656 = vadd.f32 %v489, %v544
    %v657 = vadd.f32 %v490, %v544
    %v658 = vadd.f32 %v491, %v544
    %v659 = vadd.f32 %v492, %v544
    %v660 = vadd.f32 %v493, %v544
    %v661 = vadd.f32 %v494, %v544
    %v662 = vadd.f32 %v495, %v544
    %v663 = vadd.f32 %v496, %v544
    %v664 = vadd.f32 %v497, %v544
    %v665 = vadd.f32 %v498, %v544
    %v666 = vadd.f32 %v499, %v544
    %v667 = vadd.f32 %v500, %v544
    %v668 = vadd.f32 %v501, %v544
    %v669 = vadd.f32 %v502, %v544
    %v670 = vadd.f32 %v503, %v544
    %v671 = vadd.f32 %v504, %v544
    %v672 = vadd.f32 %v505, %v544
    %v673 = vadd.f32 %v506, %v544
    %v674 = vadd.f32 %v507, %v544
    %v675 = vadd.f32 %v508, %v544
    %v676 = vadd.f32 %v509, %v544
    %v677 = vadd.f32 %v510, %v544
    %v678 = vadd.f32 %v511, %v544
    %v679 = vadd.f32 %v512, %v544
    %v680 = vadd.f32 %v513, %v544
    %v681 = vadd.f32 %v514, %v544
    %v682 = vadd.f32 %v515, %v544
    %v683 = vadd.f32 %v516, %v544
    %v684 = vadd.f32 %v517, %v544
    %v685 = vadd.f32 %v518, %v544
    %v686 = vadd.f32 %v519, %v544
    %v687 = vadd.f32 %v520, %v544
    %v688 = vadd.f32 %v521, %v544
    %v689 = vadd.f32 %v522, %v544
    %v690 = vadd.f32 %v523, %v544
    %v691 = vadd.f32 %v524, %v544
    %v692 = vadd.f32 %v525, %v544
    %v693 = vadd.f32 %v526, %v544
    %v694 = vadd.f32 %v527, %v544
    %v695 = vadd.f32 %v528, %v544
    %v696 = vadd.f32 %v529, %v544
    %v697 = vadd.f32 %v530, %v544
    %v698 = vadd.f32 %v531, %v544
    %v699 = vadd.f32 %v532, %v544
    %v700 = vadd.f32 %v533, %v544
    %v701 = vadd.f32 %v534, %v544
    %v702 = vadd.f32 %v535, %v544
    %v703 = vadd.f32 %v536, %v544
    %v704 = vadd.f32 %v537, %v544
    %v705 = vadd.f32 %v538, %v544
    %vm706 = vcmp.ge.f32.partialorder %v546, 0.0
    %vm707 = vcmp.ge.f32.partialorder %v547, 0.0
    %vm708 = vcmp.ge.f32.partialorder %v548, 0.0
    %vm709 = vcmp.ge.f32.partialorder %v549, 0.0
    %vm710 = vcmp.ge.f32.partialorder %v550, 0.0
    %vm711 = vcmp.ge.f32.partialorder %v551, 0.0
    %vm712 = vcmp.ge.f32.partialorder %v552, 0.0
    %vm713 = vcmp.ge.f32.partialorder %v553, 0.0
    %vm714 = vcmp.ge.f32.partialorder %v554, 0.0
    %vm715 = vcmp.ge.f32.partialorder %v555, 0.0
    %vm716 = vcmp.ge.f32.partialorder %v556, 0.0
    %vm717 = vcmp.ge.f32.partialorder %v557, 0.0
    %vm718 = vcmp.ge.f32.partialorder %v558, 0.0
    %vm719 = vcmp.ge.f32.partialorder %v559, 0.0
    %vm720 = vcmp.ge.f32.partialorder %v560, 0.0
    %vm721 = vcmp.ge.f32.partialorder %v561, 0.0
    %vm722 = vcmp.ge.f32.partialorder %v562, 0.0
    %vm723 = vcmp.ge.f32.partialorder %v563, 0.0
    %vm724 = vcmp.ge.f32.partialorder %v564, 0.0
    %vm725 = vcmp.ge.f32.partialorder %v565, 0.0
    %vm726 = vcmp.ge.f32.partialorder %v566, 0.0
    %vm727 = vcmp.ge.f32.partialorder %v567, 0.0
    %vm728 = vcmp.ge.f32.partialorder %v568, 0.0
    %vm729 = vcmp.ge.f32.partialorder %v569, 0.0
    %vm730 = vcmp.ge.f32.partialorder %v570, 0.0
    %vm731 = vcmp.ge.f32.partialorder %v571, 0.0
    %vm732 = vcmp.ge.f32.partialorder %v572, 0.0
    %vm733 = vcmp.ge.f32.partialorder %v573, 0.0
    %vm734 = vcmp.ge.f32.partialorder %v574, 0.0
    %vm735 = vcmp.ge.f32.partialorder %v575, 0.0
    %vm736 = vcmp.ge.f32.partialorder %v576, 0.0
    %vm737 = vcmp.ge.f32.partialorder %v577, 0.0
    %vm738 = vcmp.ge.f32.partialorder %v578, 0.0
    %vm739 = vcmp.ge.f32.partialorder %v579, 0.0
    %vm740 = vcmp.ge.f32.partialorder %v580, 0.0
    %vm741 = vcmp.ge.f32.partialorder %v581, 0.0
    %vm742 = vcmp.ge.f32.partialorder %v582, 0.0
    %vm743 = vcmp.ge.f32.partialorder %v583, 0.0
    %vm744 = vcmp.ge.f32.partialorder %v584, 0.0
    %vm745 = vcmp.ge.f32.partialorder %v585, 0.0
    %vm746 = vcmp.ge.f32.partialorder %v586, 0.0
    %vm747 = vcmp.ge.f32.partialorder %v587, 0.0
    %vm748 = vcmp.ge.f32.partialorder %v588, 0.0
    %vm749 = vcmp.ge.f32.partialorder %v589, 0.0
    %vm750 = vcmp.ge.f32.partialorder %v590, 0.0
    %vm751 = vcmp.ge.f32.partialorder %v591, 0.0
    %vm752 = vcmp.ge.f32.partialorder %v592, 0.0
    %vm753 = vcmp.ge.f32.partialorder %v593, 0.0
    %vm754 = vcmp.ge.f32.partialorder %v594, 0.0
    %vm755 = vcmp.ge.f32.partialorder %v595, 0.0
    %vm756 = vcmp.ge.f32.partialorder %v596, 0.0
    %vm757 = vcmp.ge.f32.partialorder %v597, 0.0
    %vm758 = vcmp.ge.f32.partialorder %v598, 0.0
    %vm759 = vcmp.ge.f32.partialorder %v599, 0.0
    %vm760 = vcmp.ge.f32.partialorder %v600, 0.0
    %vm761 = vcmp.ge.f32.partialorder %v601, 0.0
    %vm762 = vcmp.ge.f32.partialorder %v602, 0.0
    %vm763 = vcmp.ge.f32.partialorder %v603, 0.0
    %vm764 = vcmp.ge.f32.partialorder %v604, 0.0
    %vm765 = vcmp.ge.f32.partialorder %v605, 0.0
    %vm766 = vcmp.ge.f32.partialorder %v606, 0.0
    %vm767 = vcmp.ge.f32.partialorder %v607, 0.0
    %vm768 = vcmp.ge.f32.partialorder %v608, 0.0
    %vm769 = vcmp.ge.f32.partialorder %v609, 0.0
    %vm770 = vcmp.ge.f32.partialorder %v610, 0.0
    %vm771 = vcmp.ge.f32.partialorder %v611, 0.0
    %vm772 = vcmp.ge.f32.partialorder %v612, 0.0
    %vm773 = vcmp.ge.f32.partialorder %v613, 0.0
    %vm774 = vcmp.ge.f32.partialorder %v614, 0.0
    %vm775 = vcmp.ge.f32.partialorder %v615, 0.0
    %vm776 = vcmp.ge.f32.partialorder %v616, 0.0
    %vm777 = vcmp.ge.f32.partialorder %v617, 0.0
    %vm778 = vcmp.ge.f32.partialorder %v618, 0.0
    %vm779 = vcmp.ge.f32.partialorder %v619, 0.0
    %vm780 = vcmp.ge.f32.partialorder %v620, 0.0
    %vm781 = vcmp.ge.f32.partialorder %v621, 0.0
    %vm782 = vcmp.ge.f32.partialorder %v622, 0.0
    %vm783 = vcmp.ge.f32.partialorder %v623, 0.0
    %vm784 = vcmp.ge.f32.partialorder %v624, 0.0
    %vm785 = vcmp.ge.f32.partialorder %v625, 0.0
    %vm786 = vcmp.ge.f32.partialorder %v626, 0.0
    %vm787 = vcmp.ge.f32.partialorder %v627, 0.0
    %vm788 = vcmp.ge.f32.partialorder %v628, 0.0
    %vm789 = vcmp.ge.f32.partialorder %v629, 0.0
    %vm790 = vcmp.ge.f32.partialorder %v630, 0.0
    %vm791 = vcmp.ge.f32.partialorder %v631, 0.0
    %vm792 = vcmp.ge.f32.partialorder %v632, 0.0
    %vm793 = vcmp.ge.f32.partialorder %v633, 0.0
    %vm794 = vcmp.ge.f32.partialorder %v634, 0.0
    %vm795 = vcmp.ge.f32.partialorder %v635, 0.0
    %vm796 = vcmp.ge.f32.partialorder %v636, 0.0
    %vm797 = vcmp.ge.f32.partialorder %v637, 0.0
    %vm798 = vcmp.ge.f32.partialorder %v638, 0.0
    %vm799 = vcmp.ge.f32.partialorder %v639, 0.0
    %vm800 = vcmp.ge.f32.partialorder %v640, 0.0
    %vm801 = vcmp.ge.f32.partialorder %v641, 0.0
    %vm802 = vcmp.ge.f32.partialorder %v642, 0.0
    %vm803 = vcmp.ge.f32.partialorder %v643, 0.0
    %vm804 = vcmp.ge.f32.partialorder %v644, 0.0
    %vm805 = vcmp.ge.f32.partialorder %v645, 0.0
    %vm806 = vcmp.ge.f32.partialorder %v646, 0.0
    %vm807 = vcmp.ge.f32.partialorder %v647, 0.0
    %vm808 = vcmp.ge.f32.partialorder %v648, 0.0
    %vm809 = vcmp.ge.f32.partialorder %v649, 0.0
    %vm810 = vcmp.ge.f32.partialorder %v650, 0.0
    %vm811 = vcmp.ge.f32.partialorder %v651, 0.0
    %vm812 = vcmp.ge.f32.partialorder %v652, 0.0
    %vm813 = vcmp.ge.f32.partialorder %v653, 0.0
    %vm814 = vcmp.ge.f32.partialorder %v654, 0.0
    %vm815 = vcmp.ge.f32.partialorder %v655, 0.0
    %vm816 = vcmp.ge.f32.partialorder %v656, 0.0
    %vm817 = vcmp.ge.f32.partialorder %v657, 0.0
    %vm818 = vcmp.ge.f32.partialorder %v658, 0.0
    %vm819 = vcmp.ge.f32.partialorder %v659, 0.0
    %vm820 = vcmp.ge.f32.partialorder %v660, 0.0
    %vm821 = vcmp.ge.f32.partialorder %v661, 0.0
    %vm822 = vcmp.ge.f32.partialorder %v662, 0.0
    %vm823 = vcmp.ge.f32.partialorder %v663, 0.0
    %vm824 = vcmp.ge.f32.partialorder %v664, 0.0
    %vm825 = vcmp.ge.f32.partialorder %v665, 0.0
    %vm826 = vcmp.ge.f32.partialorder %v666, 0.0
    %vm827 = vcmp.ge.f32.partialorder %v667, 0.0
    %vm828 = vcmp.ge.f32.partialorder %v668, 0.0
    %vm829 = vcmp.ge.f32.partialorder %v669, 0.0
    %vm830 = vcmp.ge.f32.partialorder %v670, 0.0
    %vm831 = vcmp.ge.f32.partialorder %v671, 0.0
    %vm832 = vcmp.ge.f32.partialorder %v672, 0.0
    %vm833 = vcmp.ge.f32.partialorder %v673, 0.0
    %vm834 = vcmp.ge.f32.partialorder %v674, 0.0
    %vm835 = vcmp.ge.f32.partialorder %v675, 0.0
    %vm836 = vcmp.ge.f32.partialorder %v676, 0.0
    %vm837 = vcmp.ge.f32.partialorder %v677, 0.0
    %vm838 = vcmp.ge.f32.partialorder %v678, 0.0
    %vm839 = vcmp.ge.f32.partialorder %v679, 0.0
    %vm840 = vcmp.ge.f32.partialorder %v680, 0.0
    %vm841 = vcmp.ge.f32.partialorder %v681, 0.0
    %vm842 = vcmp.ge.f32.partialorder %v682, 0.0
    %vm843 = vcmp.ge.f32.partialorder %v683, 0.0
    %vm844 = vcmp.ge.f32.partialorder %v684, 0.0
    %vm845 = vcmp.ge.f32.partialorder %v685, 0.0
    %vm846 = vcmp.ge.f32.partialorder %v686, 0.0
    %vm847 = vcmp.ge.f32.partialorder %v687, 0.0
    %vm848 = vcmp.ge.f32.partialorder %v688, 0.0
    %vm849 = vcmp.ge.f32.partialorder %v689, 0.0
    %vm850 = vcmp.ge.f32.partialorder %v690, 0.0
    %vm851 = vcmp.ge.f32.partialorder %v691, 0.0
    %vm852 = vcmp.ge.f32.partialorder %v692, 0.0
    %vm853 = vcmp.ge.f32.partialorder %v693, 0.0
    %vm854 = vcmp.ge.f32.partialorder %v694, 0.0
    %vm855 = vcmp.ge.f32.partialorder %v695, 0.0
    %vm856 = vcmp.ge.f32.partialorder %v696, 0.0
    %vm857 = vcmp.ge.f32.partialorder %v697, 0.0
    %vm858 = vcmp.ge.f32.partialorder %v698, 0.0
    %vm859 = vcmp.ge.f32.partialorder %v699, 0.0
    %vm860 = vcmp.ge.f32.partialorder %v700, 0.0
    %vm861 = vcmp.ge.f32.partialorder %v701, 0.0
    %vm862 = vcmp.ge.f32.partialorder %v702, 0.0
    %vm863 = vcmp.ge.f32.partialorder %v703, 0.0
    %vm864 = vcmp.ge.f32.partialorder %v704, 0.0
    %vm865 = vcmp.ge.f32.partialorder %v705, 0.0
    %v866 = vmul.f32 %v546, 0.01
    %v867 = vmul.f32 %v547, 0.01
    %v868 = vmul.f32 %v548, 0.01
    %v869 = vmul.f32 %v549, 0.01
    %v870 = vmul.f32 %v550, 0.01
    %v871 = vmul.f32 %v551, 0.01
    %v872 = vmul.f32 %v552, 0.01
    %v873 = vmul.f32 %v553, 0.01
    %v874 = vmul.f32 %v554, 0.01
    %v875 = vmul.f32 %v555, 0.01
    %v876 = vmul.f32 %v556, 0.01
    %v877 = vmul.f32 %v557, 0.01
    %v878 = vmul.f32 %v558, 0.01
    %v879 = vmul.f32 %v559, 0.01
    %v880 = vmul.f32 %v560, 0.01
    %v881 = vmul.f32 %v561, 0.01
    %v882 = vmul.f32 %v562, 0.01
    %v883 = vmul.f32 %v563, 0.01
    %v884 = vmul.f32 %v564, 0.01
    %v885 = vmul.f32 %v565, 0.01
    %v886 = vmul.f32 %v566, 0.01
    %v887 = vmul.f32 %v567, 0.01
    %v888 = vmul.f32 %v568, 0.01
    %v889 = vmul.f32 %v569, 0.01
    %v890 = vmul.f32 %v570, 0.01
    %v891 = vmul.f32 %v571, 0.01
    %v892 = vmul.f32 %v572, 0.01
    %v893 = vmul.f32 %v573, 0.01
    %v894 = vmul.f32 %v574, 0.01
    %v895 = vmul.f32 %v575, 0.01
    %v896 = vmul.f32 %v576, 0.01
    %v897 = vmul.f32 %v577, 0.01
    %v898 = vmul.f32 %v578, 0.01
    %v899 = vmul.f32 %v579, 0.01
    %v900 = vmul.f32 %v580, 0.01
    %v901 = vmul.f32 %v581, 0.01
    %v902 = vmul.f32 %v582, 0.01
    %v903 = vmul.f32 %v583, 0.01
    %v904 = vmul.f32 %v584, 0.01
    %v905 = vmul.f32 %v585, 0.01
    %v906 = vmul.f32 %v586, 0.01
    %v907 = vmul.f32 %v587, 0.01
    %v908 = vmul.f32 %v588, 0.01
    %v909 = vmul.f32 %v589, 0.01
    %v910 = vmul.f32 %v590, 0.01
    %v911 = vmul.f32 %v591, 0.01
    %v912 = vmul.f32 %v592, 0.01
    %v913 = vmul.f32 %v593, 0.01
    %v914 = vmul.f32 %v594, 0.01
    %v915 = vmul.f32 %v595, 0.01
    %v916 = vmul.f32 %v596, 0.01
    %v917 = vmul.f32 %v597, 0.01
    %v918 = vmul.f32 %v598, 0.01
    %v919 = vmul.f32 %v599, 0.01
    %v920 = vmul.f32 %v600, 0.01
    %v921 = vmul.f32 %v601, 0.01
    %v922 = vmul.f32 %v602, 0.01
    %v923 = vmul.f32 %v603, 0.01
    %v924 = vmul.f32 %v604, 0.01
    %v925 = vmul.f32 %v605, 0.01
    %v926 = vmul.f32 %v606, 0.01
    %v927 = vmul.f32 %v607, 0.01
    %v928 = vmul.f32 %v608, 0.01
    %v929 = vmul.f32 %v609, 0.01
    %v930 = vmul.f32 %v610, 0.01
    %v931 = vmul.f32 %v611, 0.01
    %v932 = vmul.f32 %v612, 0.01
    %v933 = vmul.f32 %v613, 0.01
    %v934 = vmul.f32 %v614, 0.01
    %v935 = vmul.f32 %v615, 0.01
    %v936 = vmul.f32 %v616, 0.01
    %v937 = vmul.f32 %v617, 0.01
    %v938 = vmul.f32 %v618, 0.01
    %v939 = vmul.f32 %v619, 0.01
    %v940 = vmul.f32 %v620, 0.01
    %v941 = vmul.f32 %v621, 0.01
    %v942 = vmul.f32 %v622, 0.01
    %v943 = vmul.f32 %v623, 0.01
    %v944 = vmul.f32 %v624, 0.01
    %v945 = vmul.f32 %v625, 0.01
    %v946 = vmul.f32 %v626, 0.01
    %v947 = vmul.f32 %v627, 0.01
    %v948 = vmul.f32 %v628, 0.01
    %v949 = vmul.f32 %v629, 0.01
    %v950 = vmul.f32 %v630, 0.01
    %v951 = vmul.f32 %v631, 0.01
    %v952 = vmul.f32 %v632, 0.01
    %v953 = vmul.f32 %v633, 0.01
    %v954 = vmul.f32 %v634, 0.01
    %v955 = vmul.f32 %v635, 0.01
    %v956 = vmul.f32 %v636, 0.01
    %v957 = vmul.f32 %v637, 0.01
    %v958 = vmul.f32 %v638, 0.01
    %v959 = vmul.f32 %v639, 0.01
    %v960 = vmul.f32 %v640, 0.01
    %v961 = vmul.f32 %v641, 0.01
    %v962 = vmul.f32 %v642, 0.01
    %v963 = vmul.f32 %v643, 0.01
    %v964 = vmul.f32 %v644, 0.01
    %v965 = vmul.f32 %v645, 0.01
    %v966 = vmul.f32 %v646, 0.01
    %v967 = vmul.f32 %v647, 0.01
    %v968 = vmul.f32 %v648, 0.01
    %v969 = vmul.f32 %v649, 0.01
    %v970 = vmul.f32 %v650, 0.01
    %v971 = vmul.f32 %v651, 0.01
    %v972 = vmul.f32 %v652, 0.01
    %v973 = vmul.f32 %v653, 0.01
    %v974 = vmul.f32 %v654, 0.01
    %v975 = vmul.f32 %v655, 0.01
    %v976 = vmul.f32 %v656, 0.01
    %v977 = vmul.f32 %v657, 0.01
    %v978 = vmul.f32 %v658, 0.01
    %v979 = vmul.f32 %v659, 0.01
    %v980 = vmul.f32 %v660, 0.01
    %v981 = vmul.f32 %v661, 0.01
    %v982 = vmul.f32 %v662, 0.01
    %v983 = vmul.f32 %v663, 0.01
    %v984 = vmul.f32 %v664, 0.01
    %v985 = vmul.f32 %v665, 0.01
    %v986 = vmul.f32 %v666, 0.01
    %v987 = vmul.f32 %v667, 0.01
    %v988 = vmul.f32 %v668, 0.01
    %v989 = vmul.f32 %v669, 0.01
    %v990 = vmul.f32 %v670, 0.01
    %v991 = vmul.f32 %v671, 0.01
    %v992 = vmul.f32 %v672, 0.01
    %v993 = vmul.f32 %v673, 0.01
    %v994 = vmul.f32 %v674, 0.01
    %v995 = vmul.f32 %v675, 0.01
    %v996 = vmul.f32 %v676, 0.01
    %v997 = vmul.f32 %v677, 0.01
    %v998 = vmul.f32 %v678, 0.01
    %v999 = vmul.f32 %v679, 0.01
    %v1000 = vmul.f32 %v680, 0.01
    %v1001 = vmul.f32 %v681, 0.01
    %v1002 = vmul.f32 %v682, 0.01
    %v1003 = vmul.f32 %v683, 0.01
    %v1004 = vmul.f32 %v684, 0.01
    %v1005 = vmul.f32 %v685, 0.01
    %v1006 = vmul.f32 %v686, 0.01
    %v1007 = vmul.f32 %v687, 0.01
    %v1008 = vmul.f32 %v688, 0.01
    %v1009 = vmul.f32 %v689, 0.01
    %v1010 = vmul.f32 %v690, 0.01
    %v1011 = vmul.f32 %v691, 0.01
    %v1012 = vmul.f32 %v692, 0.01
    %v1013 = vmul.f32 %v693, 0.01
    %v1014 = vmul.f32 %v694, 0.01
    %v1015 = vmul.f32 %v695, 0.01
    %v1016 = vmul.f32 %v696, 0.01
    %v1017 = vmul.f32 %v697, 0.01
    %v1018 = vmul.f32 %v698, 0.01
    %v1019 = vmul.f32 %v699, 0.01
    %v1020 = vmul.f32 %v700, 0.01
    %v1021 = vmul.f32 %v701, 0.01
    %v1022 = vmul.f32 %v702, 0.01
    %v1023 = vmul.f32 %v703, 0.01
    %v1024 = vmul.f32 %v704, 0.01
    %v1025 = vmul.f32 %v705, 0.01
    %v1026 = vsel %vm706, %v546, %v866
    %v1027 = vsel %vm707, %v547, %v867
    %v1028 = vsel %vm708, %v548, %v868
    %v1029 = vsel %vm709, %v549, %v869
    %v1030 = vsel %vm710, %v550, %v870
    %v1031 = vsel %vm711, %v551, %v871
    %v1032 = vsel %vm712, %v552, %v872
    %v1033 = vsel %vm713, %v553, %v873
    %v1034 = vsel %vm714, %v554, %v874
    %v1035 = vsel %vm715, %v555, %v875
    %v1036 = vsel %vm716, %v556, %v876
    %v1037 = vsel %vm717, %v557, %v877
    %v1038 = vsel %vm718, %v558, %v878
    %v1039 = vsel %vm719, %v559, %v879
    %v1040 = vsel %vm720, %v560, %v880
    %v1041 = vsel %vm721, %v561, %v881
    %v1042 = vsel %vm722, %v562, %v882
    %v1043 = vsel %vm723, %v563, %v883
    %v1044 = vsel %vm724, %v564, %v884
    %v1045 = vsel %vm725, %v565, %v885
    %v1046 = vsel %vm726, %v566, %v886
    %v1047 = vsel %vm727, %v567, %v887
    %v1048 = vsel %vm728, %v568, %v888
    %v1049 = vsel %vm729, %v569, %v889
    %v1050 = vsel %vm730, %v570, %v890
    %v1051 = vsel %vm731, %v571, %v891
    %v1052 = vsel %vm732, %v572, %v892
    %v1053 = vsel %vm733, %v573, %v893
    %v1054 = vsel %vm734, %v574, %v894
    %v1055 = vsel %vm735, %v575, %v895
    %v1056 = vsel %vm736, %v576, %v896
    %v1057 = vsel %vm737, %v577, %v897
    %v1058 = vsel %vm738, %v578, %v898
    %v1059 = vsel %vm739, %v579, %v899
    %v1060 = vsel %vm740, %v580, %v900
    %v1061 = vsel %vm741, %v581, %v901
    %v1062 = vsel %vm742, %v582, %v902
    %v1063 = vsel %vm743, %v583, %v903
    %v1064 = vsel %vm744, %v584, %v904
    %v1065 = vsel %vm745, %v585, %v905
    %v1066 = vsel %vm746, %v586, %v906
    %v1067 = vsel %vm747, %v587, %v907
    %v1068 = vsel %vm748, %v588, %v908
    %v1069 = vsel %vm749, %v589, %v909
    %v1070 = vsel %vm750, %v590, %v910
    %v1071 = vsel %vm751, %v591, %v911
    %v1072 = vsel %vm752, %v592, %v912
    %v1073 = vsel %vm753, %v593, %v913
    %v1074 = vsel %vm754, %v594, %v914
    %v1075 = vsel %vm755, %v595, %v915
    %v1076 = vsel %vm756, %v596, %v916
    %v1077 = vsel %vm757, %v597, %v917
    %v1078 = vsel %vm758, %v598, %v918
    %v1079 = vsel %vm759, %v599, %v919
    %v1080 = vsel %vm760, %v600, %v920
    %v1081 = vsel %vm761, %v601, %v921
    %v1082 = vsel %vm762, %v602, %v922
    %v1083 = vsel %vm763, %v603, %v923
    %v1084 = vsel %vm764, %v604, %v924
    %v1085 = vsel %vm765, %v605, %v925
    %v1086 = vsel %vm766, %v606, %v926
    %v1087 = vsel %vm767, %v607, %v927
    %v1088 = vsel %vm768, %v608, %v928
    %v1089 = vsel %vm769, %v609, %v929
    %v1090 = vsel %vm770, %v610, %v930
    %v1091 = vsel %vm771, %v611, %v931
    %v1092 = vsel %vm772, %v612, %v932
    %v1093 = vsel %vm773, %v613, %v933
    %v1094 = vsel %vm774, %v614, %v934
    %v1095 = vsel %vm775, %v615, %v935
    %v1096 = vsel %vm776, %v616, %v936
    %v1097 = vsel %vm777, %v617, %v937
    %v1098 = vsel %vm778, %v618, %v938
    %v1099 = vsel %vm779, %v619, %v939
    %v1100 = vsel %vm780, %v620, %v940
    %v1101 = vsel %vm781, %v621, %v941
    %v1102 = vsel %vm782, %v622, %v942
    %v1103 = vsel %vm783, %v623, %v943
    %v1104 = vsel %vm784, %v624, %v944
    %v1105 = vsel %vm785, %v625, %v945
    %v1106 = vsel %vm786, %v626, %v946
    %v1107 = vsel %vm787, %v627, %v947
    %v1108 = vsel %vm788, %v628, %v948
    %v1109 = vsel %vm789, %v629, %v949
    %v1110 = vsel %vm790, %v630, %v950
    %v1111 = vsel %vm791, %v631, %v951
    %v1112 = vsel %vm792, %v632, %v952
    %v1113 = vsel %vm793, %v633, %v953
    %v1114 = vsel %vm794, %v634, %v954
    %v1115 = vsel %vm795, %v635, %v955
    %v1116 = vsel %vm796, %v636, %v956
    %v1117 = vsel %vm797, %v637, %v957
    %v1118 = vsel %vm798, %v638, %v958
    %v1119 = vsel %vm799, %v639, %v959
    %v1120 = vsel %vm800, %v640, %v960
    %v1121 = vsel %vm801, %v641, %v961
    %v1122 = vsel %vm802, %v642, %v962
    %v1123 = vsel %vm803, %v643, %v963
    %v1124 = vsel %vm804, %v644, %v964
    %v1125 = vsel %vm805, %v645, %v965
    %v1126 = vsel %vm806, %v646, %v966
    %v1127 = vsel %vm807, %v647, %v967
    %v1128 = vsel %vm808, %v648, %v968
    %v1129 = vsel %vm809, %v649, %v969
    %v1130 = vsel %vm810, %v650, %v970
    %v1131 = vsel %vm811, %v651, %v971
    %v1132 = vsel %vm812, %v652, %v972
    %v1133 = vsel %vm813, %v653, %v973
    %v1134 = vsel %vm814, %v654, %v974
    %v1135 = vsel %vm815, %v655, %v975
    %v1136 = vsel %vm816, %v656, %v976
    %v1137 = vsel %vm817, %v657, %v977
    %v1138 = vsel %vm818, %v658, %v978
    %v1139 = vsel %vm819, %v659, %v979
    %v1140 = vsel %vm820, %v660, %v980
    %v1141 = vsel %vm821, %v661, %v981
    %v1142 = vsel %vm822, %v662, %v982
    %v1143 = vsel %vm823, %v663, %v983
    %v1144 = vsel %vm824, %v664, %v984
    %v1145 = vsel %vm825, %v665, %v985
    %v1146 = vsel %vm826, %v666, %v986
    %v1147 = vsel %vm827, %v667, %v987
    %v1148 = vsel %vm828, %v668, %v988
    %v1149 = vsel %vm829, %v669, %v989
    %v1150 = vsel %vm830, %v670, %v990
    %v1151 = vsel %vm831, %v671, %v991
    %v1152 = vsel %vm832, %v672, %v992
    %v1153 = vsel %vm833, %v673, %v993
    %v1154 = vsel %vm834, %v674, %v994
    %v1155 = vsel %vm835, %v675, %v995
    %v1156 = vsel %vm836, %v676, %v996
    %v1157 = vsel %vm837, %v677, %v997
    %v1158 = vsel %vm838, %v678, %v998
    %v1159 = vsel %vm839, %v679, %v999
    %v1160 = vsel %vm840, %v680, %v1000
    %v1161 = vsel %vm841, %v681, %v1001
    %v1162 = vsel %vm842, %v682, %v1002
    %v1163 = vsel %vm843, %v683, %v1003
    %v1164 = vsel %vm844, %v684, %v1004
    %v1165 = vsel %vm845, %v685, %v1005
    %v1166 = vsel %vm846, %v686, %v1006
    %v1167 = vsel %vm847, %v687, %v1007
    %v1168 = vsel %vm848, %v688, %v1008
    %v1169 = vsel %vm849, %v689, %v1009
    %v1170 = vsel %vm850, %v690, %v1010
    %v1171 = vsel %vm851, %v691, %v1011
    %v1172 = vsel %vm852, %v692, %v1012
    %v1173 = vsel %vm853, %v693, %v1013
    %v1174 = vsel %vm854, %v694, %v1014
    %v1175 = vsel %vm855, %v695, %v1015
    %v1176 = vsel %vm856, %v696, %v1016
    %v1177 = vsel %vm857, %v697, %v1017
    %v1178 = vsel %vm858, %v698, %v1018
    %v1179 = vsel %vm859, %v699, %v1019
    %v1180 = vsel %vm860, %v700, %v1020
    %v1181 = vsel %vm861, %v701, %v1021
    %v1182 = vsel %vm862, %v702, %v1022
    %v1183 = vsel %vm863, %v703, %v1023
    %v1184 = vsel %vm864, %v704, %v1024
    %v1185 = vsel %vm865, %v705, %v1025
    %v1186 = vpack.c.bf16 %v1027, %v1026
    %v1187 = vpack.c.bf16 %v1029, %v1028
    %v1188 = vpack.c.bf16 %v1031, %v1030
    %v1189 = vpack.c.bf16 %v1033, %v1032
    %v1190 = vpack.c.bf16 %v1035, %v1034
    %v1191 = vpack.c.bf16 %v1037, %v1036
    %v1192 = vpack.c.bf16 %v1039, %v1038
    %v1193 = vpack.c.bf16 %v1041, %v1040
    %v1194 = vpack.c.bf16 %v1043, %v1042
    %v1195 = vpack.c.bf16 %v1045, %v1044
    %v1196 = vpack.c.bf16 %v1047, %v1046
    %v1197 = vpack.c.bf16 %v1049, %v1048
    %v1198 = vpack.c.bf16 %v1051, %v1050
    %v1199 = vpack.c.bf16 %v1053, %v1052
    %v1200 = vpack.c.bf16 %v1055, %v1054
    %v1201 = vpack.c.bf16 %v1057, %v1056
    %v1202 = vpack.c.bf16 %v1059, %v1058
    %v1203 = vpack.c.bf16 %v1061, %v1060
    %v1204 = vpack.c.bf16 %v1063, %v1062
    %v1205 = vpack.c.bf16 %v1065, %v1064
    %v1206 = vpack.c.bf16 %v1067, %v1066
    %v1207 = vpack.c.bf16 %v1069, %v1068
    %v1208 = vpack.c.bf16 %v1071, %v1070
    %v1209 = vpack.c.bf16 %v1073, %v1072
    %v1210 = vpack.c.bf16 %v1075, %v1074
    %v1211 = vpack.c.bf16 %v1077, %v1076
    %v1212 = vpack.c.bf16 %v1079, %v1078
    %v1213 = vpack.c.bf16 %v1081, %v1080
    %v1214 = vpack.c.bf16 %v1083, %v1082
    %v1215 = vpack.c.bf16 %v1085, %v1084
    %v1216 = vpack.c.bf16 %v1087, %v1086
    %v1217 = vpack.c.bf16 %v1089, %v1088
    %v1218 = vpack.c.bf16 %v1091, %v1090
    %v1219 = vpack.c.bf16 %v1093, %v1092
    %v1220 = vpack.c.bf16 %v1095, %v1094
    %v1221 = vpack.c.bf16 %v1097, %v1096
    %v1222 = vpack.c.bf16 %v1099, %v1098
    %v1223 = vpack.c.bf16 %v1101, %v1100
    %v1224 = vpack.c.bf16 %v1103, %v1102
    %v1225 = vpack.c.bf16 %v1105, %v1104
    %v1226 = vpack.c.bf16 %v1107, %v1106
    %v1227 = vpack.c.bf16 %v1109, %v1108
    %v1228 = vpack.c.bf16 %v1111, %v1110
    %v1229 = vpack.c.bf16 %v1113, %v1112
    %v1230 = vpack.c.bf16 %v1115, %v1114
    %v1231 = vpack.c.bf16 %v1117, %v1116
    %v1232 = vpack.c.bf16 %v1119, %v1118
    %v1233 = vpack.c.bf16 %v1121, %v1120
    %v1234 = vpack.c.bf16 %v1123, %v1122
    %v1235 = vpack.c.bf16 %v1125, %v1124
    %v1236 = vpack.c.bf16 %v1127, %v1126
    %v1237 = vpack.c.bf16 %v1129, %v1128
    %v1238 = vpack.c.bf16 %v1131, %v1130
    %v1239 = vpack.c.bf16 %v1133, %v1132
    %v1240 = vpack.c.bf16 %v1135, %v1134
    %v1241 = vpack.c.bf16 %v1137, %v1136
    %v1242 = vpack.c.bf16 %v1139, %v1138
    %v1243 = vpack.c.bf16 %v1141, %v1140
    %v1244 = vpack.c.bf16 %v1143, %v1142
    %v1245 = vpack.c.bf16 %v1145, %v1144
    %v1246 = vpack.c.bf16 %v1147, %v1146
    %v1247 = vpack.c.bf16 %v1149, %v1148
    %v1248 = vpack.c.bf16 %v1151, %v1150
    %v1249 = vpack.c.bf16 %v1153, %v1152
    %v1250 = vpack.c.bf16 %v1155, %v1154
    %v1251 = vpack.c.bf16 %v1157, %v1156
    %v1252 = vpack.c.bf16 %v1159, %v1158
    %v1253 = vpack.c.bf16 %v1161, %v1160
    %v1254 = vpack.c.bf16 %v1163, %v1162
    %v1255 = vpack.c.bf16 %v1165, %v1164
    %v1256 = vpack.c.bf16 %v1167, %v1166
    %v1257 = vpack.c.bf16 %v1169, %v1168
    %v1258 = vpack.c.bf16 %v1171, %v1170
    %v1259 = vpack.c.bf16 %v1173, %v1172
    %v1260 = vpack.c.bf16 %v1175, %v1174
    %v1261 = vpack.c.bf16 %v1177, %v1176
    %v1262 = vpack.c.bf16 %v1179, %v1178
    %v1263 = vpack.c.bf16 %v1181, %v1180
    %v1264 = vpack.c.bf16 %v1183, %v1182
    %v1265 = vpack.c.bf16 %v1185, %v1184
    %v1346 = vunpack.c.l.b16 %v1186
    %v1347 = vunpack.c.h.b16 %v1186
    %v1348 = vunpack.c.l.b16 %v1187
    %v1349 = vunpack.c.h.b16 %v1187
    %v1350 = vunpack.c.l.b16 %v1188
    %v1351 = vunpack.c.h.b16 %v1188
    %v1352 = vunpack.c.l.b16 %v1189
    %v1353 = vunpack.c.h.b16 %v1189
    %v1354 = vunpack.c.l.b16 %v1190
    %v1355 = vunpack.c.h.b16 %v1190
    %v1356 = vunpack.c.l.b16 %v1191
    %v1357 = vunpack.c.h.b16 %v1191
    %v1358 = vunpack.c.l.b16 %v1192
    %v1359 = vunpack.c.h.b16 %v1192
    %v1360 = vunpack.c.l.b16 %v1193
    %v1361 = vunpack.c.h.b16 %v1193
    %v1362 = vunpack.c.l.b16 %v1194
    %v1363 = vunpack.c.h.b16 %v1194
    %v1364 = vunpack.c.l.b16 %v1195
    %v1365 = vunpack.c.h.b16 %v1195
    %v1366 = vunpack.c.l.b16 %v1196
    %v1367 = vunpack.c.h.b16 %v1196
    %v1368 = vunpack.c.l.b16 %v1197
    %v1369 = vunpack.c.h.b16 %v1197
    %v1370 = vunpack.c.l.b16 %v1198
    %v1371 = vunpack.c.h.b16 %v1198
    %v1372 = vunpack.c.l.b16 %v1199
    %v1373 = vunpack.c.h.b16 %v1199
    %v1374 = vunpack.c.l.b16 %v1200
    %v1375 = vunpack.c.h.b16 %v1200
    %v1376 = vunpack.c.l.b16 %v1201
    %v1377 = vunpack.c.h.b16 %v1201
    %v1378 = vunpack.c.l.b16 %v1202
    %v1379 = vunpack.c.h.b16 %v1202
    %v1380 = vunpack.c.l.b16 %v1203
    %v1381 = vunpack.c.h.b16 %v1203
    %v1382 = vunpack.c.l.b16 %v1204
    %v1383 = vunpack.c.h.b16 %v1204
    %v1384 = vunpack.c.l.b16 %v1205
    %v1385 = vunpack.c.h.b16 %v1205
    %v1386 = vunpack.c.l.b16 %v1206
    %v1387 = vunpack.c.h.b16 %v1206
    %v1388 = vunpack.c.l.b16 %v1207
    %v1389 = vunpack.c.h.b16 %v1207
    %v1390 = vunpack.c.l.b16 %v1208
    %v1391 = vunpack.c.h.b16 %v1208
    %v1392 = vunpack.c.l.b16 %v1209
    %v1393 = vunpack.c.h.b16 %v1209
    %v1394 = vunpack.c.l.b16 %v1210
    %v1395 = vunpack.c.h.b16 %v1210
    %v1396 = vunpack.c.l.b16 %v1211
    %v1397 = vunpack.c.h.b16 %v1211
    %v1398 = vunpack.c.l.b16 %v1212
    %v1399 = vunpack.c.h.b16 %v1212
    %v1400 = vunpack.c.l.b16 %v1213
    %v1401 = vunpack.c.h.b16 %v1213
    %v1402 = vunpack.c.l.b16 %v1214
    %v1403 = vunpack.c.h.b16 %v1214
    %v1404 = vunpack.c.l.b16 %v1215
    %v1405 = vunpack.c.h.b16 %v1215
    %v1406 = vunpack.c.l.b16 %v1216
    %v1407 = vunpack.c.h.b16 %v1216
    %v1408 = vunpack.c.l.b16 %v1217
    %v1409 = vunpack.c.h.b16 %v1217
    %v1410 = vunpack.c.l.b16 %v1218
    %v1411 = vunpack.c.h.b16 %v1218
    %v1412 = vunpack.c.l.b16 %v1219
    %v1413 = vunpack.c.h.b16 %v1219
    %v1414 = vunpack.c.l.b16 %v1220
    %v1415 = vunpack.c.h.b16 %v1220
    %v1416 = vunpack.c.l.b16 %v1221
    %v1417 = vunpack.c.h.b16 %v1221
    %v1418 = vunpack.c.l.b16 %v1222
    %v1419 = vunpack.c.h.b16 %v1222
    %v1420 = vunpack.c.l.b16 %v1223
    %v1421 = vunpack.c.h.b16 %v1223
    %v1422 = vunpack.c.l.b16 %v1224
    %v1423 = vunpack.c.h.b16 %v1224
    %v1424 = vunpack.c.l.b16 %v1225
    %v1425 = vunpack.c.h.b16 %v1225
    %v1426 = vunpack.c.l.b16 %v1226
    %v1427 = vunpack.c.h.b16 %v1226
    %v1428 = vunpack.c.l.b16 %v1227
    %v1429 = vunpack.c.h.b16 %v1227
    %v1430 = vunpack.c.l.b16 %v1228
    %v1431 = vunpack.c.h.b16 %v1228
    %v1432 = vunpack.c.l.b16 %v1229
    %v1433 = vunpack.c.h.b16 %v1229
    %v1434 = vunpack.c.l.b16 %v1230
    %v1435 = vunpack.c.h.b16 %v1230
    %v1436 = vunpack.c.l.b16 %v1231
    %v1437 = vunpack.c.h.b16 %v1231
    %v1438 = vunpack.c.l.b16 %v1232
    %v1439 = vunpack.c.h.b16 %v1232
    %v1440 = vunpack.c.l.b16 %v1233
    %v1441 = vunpack.c.h.b16 %v1233
    %v1442 = vunpack.c.l.b16 %v1234
    %v1443 = vunpack.c.h.b16 %v1234
    %v1444 = vunpack.c.l.b16 %v1235
    %v1445 = vunpack.c.h.b16 %v1235
    %v1446 = vunpack.c.l.b16 %v1236
    %v1447 = vunpack.c.h.b16 %v1236
    %v1448 = vunpack.c.l.b16 %v1237
    %v1449 = vunpack.c.h.b16 %v1237
    %v1450 = vunpack.c.l.b16 %v1238
    %v1451 = vunpack.c.h.b16 %v1238
    %v1452 = vunpack.c.l.b16 %v1239
    %v1453 = vunpack.c.h.b16 %v1239
    %v1454 = vunpack.c.l.b16 %v1240
    %v1455 = vunpack.c.h.b16 %v1240
    %v1456 = vunpack.c.l.b16 %v1241
    %v1457 = vunpack.c.h.b16 %v1241
    %v1458 = vunpack.c.l.b16 %v1242
    %v1459 = vunpack.c.h.b16 %v1242
    %v1460 = vunpack.c.l.b16 %v1243
    %v1461 = vunpack.c.h.b16 %v1243
    %v1462 = vunpack.c.l.b16 %v1244
    %v1463 = vunpack.c.h.b16 %v1244
    %v1464 = vunpack.c.l.b16 %v1245
    %v1465 = vunpack.c.h.b16 %v1245
    %v1466 = vunpack.c.l.b16 %v1246
    %v1467 = vunpack.c.h.b16 %v1246
    %v1468 = vunpack.c.l.b16 %v1247
    %v1469 = vunpack.c.h.b16 %v1247
    %v1470 = vunpack.c.l.b16 %v1248
    %v1471 = vunpack.c.h.b16 %v1248
    %v1472 = vunpack.c.l.b16 %v1249
    %v1473 = vunpack.c.h.b16 %v1249
    %v1474 = vunpack.c.l.b16 %v1250
    %v1475 = vunpack.c.h.b16 %v1250
    %v1476 = vunpack.c.l.b16 %v1251
    %v1477 = vunpack.c.h.b16 %v1251
    %v1478 = vunpack.c.l.b16 %v1252
    %v1479 = vunpack.c.h.b16 %v1252
    %v1480 = vunpack.c.l.b16 %v1253
    %v1481 = vunpack.c.h.b16 %v1253
    %v1482 = vunpack.c.l.b16 %v1254
    %v1483 = vunpack.c.h.b16 %v1254
    %v1484 = vunpack.c.l.b16 %v1255
    %v1485 = vunpack.c.h.b16 %v1255
    %v1486 = vunpack.c.l.b16 %v1256
    %v1487 = vunpack.c.h.b16 %v1256
    %v1488 = vunpack.c.l.b16 %v1257
    %v1489 = vunpack.c.h.b16 %v1257
    %v1490 = vunpack.c.l.b16 %v1258
    %v1491 = vunpack.c.h.b16 %v1258
    %v1492 = vunpack.c.l.b16 %v1259
    %v1493 = vunpack.c.h.b16 %v1259
    %v1494 = vunpack.c.l.b16 %v1260
    %v1495 = vunpack.c.h.b16 %v1260
    %v1496 = vunpack.c.l.b16 %v1261
    %v1497 = vunpack.c.h.b16 %v1261
    %v1498 = vunpack.c.l.b16 %v1262
    %v1499 = vunpack.c.h.b16 %v1262
    %v1500 = vunpack.c.l.b16 %v1263
    %v1501 = vunpack.c.h.b16 %v1263
    %v1502 = vunpack.c.l.b16 %v1264
    %v1503 = vunpack.c.h.b16 %v1264
    %v1504 = vunpack.c.l.b16 %v1265
    %v1505 = vunpack.c.h.b16 %v1265
    %v1506 = vpack.c.b16 %v1346, %v1346
    %v1507 = vpack.c.b16 %v1347, %v1347
    %v1508 = vpack.c.b16 %v1348, %v1348
    %v1509 = vpack.c.b16 %v1349, %v1349
    %v1510 = vpack.c.b16 %v1350, %v1350
    %v1511 = vpack.c.b16 %v1351, %v1351
    %v1512 = vpack.c.b16 %v1352, %v1352
    %v1513 = vpack.c.b16 %v1353, %v1353
    %v1514 = vpack.c.b16 %v1354, %v1354
    %v1515 = vpack.c.b16 %v1355, %v1355
    %v1516 = vpack.c.b16 %v1356, %v1356
    %v1517 = vpack.c.b16 %v1357, %v1357
    %v1518 = vpack.c.b16 %v1358, %v1358
    %v1519 = vpack.c.b16 %v1359, %v1359
    %v1520 = vpack.c.b16 %v1360, %v1360
    %v1521 = vpack.c.b16 %v1361, %v1361
    %v1522 = vpack.c.b16 %v1362, %v1362
    %v1523 = vpack.c.b16 %v1363, %v1363
    %v1524 = vpack.c.b16 %v1364, %v1364
    %v1525 = vpack.c.b16 %v1365, %v1365
    %v1526 = vpack.c.b16 %v1366, %v1366
    %v1527 = vpack.c.b16 %v1367, %v1367
    %v1528 = vpack.c.b16 %v1368, %v1368
    %v1529 = vpack.c.b16 %v1369, %v1369
    %v1530 = vpack.c.b16 %v1370, %v1370
    %v1531 = vpack.c.b16 %v1371, %v1371
    %v1532 = vpack.c.b16 %v1372, %v1372
    %v1533 = vpack.c.b16 %v1373, %v1373
    %v1534 = vpack.c.b16 %v1374, %v1374
    %v1535 = vpack.c.b16 %v1375, %v1375
    %v1536 = vpack.c.b16 %v1376, %v1376
    %v1537 = vpack.c.b16 %v1377, %v1377
    %v1538 = vpack.c.b16 %v1378, %v1378
    %v1539 = vpack.c.b16 %v1379, %v1379
    %v1540 = vpack.c.b16 %v1380, %v1380
    %v1541 = vpack.c.b16 %v1381, %v1381
    %v1542 = vpack.c.b16 %v1382, %v1382
    %v1543 = vpack.c.b16 %v1383, %v1383
    %v1544 = vpack.c.b16 %v1384, %v1384
    %v1545 = vpack.c.b16 %v1385, %v1385
    %v1546 = vpack.c.b16 %v1386, %v1386
    %v1547 = vpack.c.b16 %v1387, %v1387
    %v1548 = vpack.c.b16 %v1388, %v1388
    %v1549 = vpack.c.b16 %v1389, %v1389
    %v1550 = vpack.c.b16 %v1390, %v1390
    %v1551 = vpack.c.b16 %v1391, %v1391
    %v1552 = vpack.c.b16 %v1392, %v1392
    %v1553 = vpack.c.b16 %v1393, %v1393
    %v1554 = vpack.c.b16 %v1394, %v1394
    %v1555 = vpack.c.b16 %v1395, %v1395
    %v1556 = vpack.c.b16 %v1396, %v1396
    %v1557 = vpack.c.b16 %v1397, %v1397
    %v1558 = vpack.c.b16 %v1398, %v1398
    %v1559 = vpack.c.b16 %v1399, %v1399
    %v1560 = vpack.c.b16 %v1400, %v1400
    %v1561 = vpack.c.b16 %v1401, %v1401
    %v1562 = vpack.c.b16 %v1402, %v1402
    %v1563 = vpack.c.b16 %v1403, %v1403
    %v1564 = vpack.c.b16 %v1404, %v1404
    %v1565 = vpack.c.b16 %v1405, %v1405
    %v1566 = vpack.c.b16 %v1406, %v1406
    %v1567 = vpack.c.b16 %v1407, %v1407
    %v1568 = vpack.c.b16 %v1408, %v1408
    %v1569 = vpack.c.b16 %v1409, %v1409
    %v1570 = vpack.c.b16 %v1410, %v1410
    %v1571 = vpack.c.b16 %v1411, %v1411
    %v1572 = vpack.c.b16 %v1412, %v1412
    %v1573 = vpack.c.b16 %v1413, %v1413
    %v1574 = vpack.c.b16 %v1414, %v1414
    %v1575 = vpack.c.b16 %v1415, %v1415
    %v1576 = vpack.c.b16 %v1416, %v1416
    %v1577 = vpack.c.b16 %v1417, %v1417
    %v1578 = vpack.c.b16 %v1418, %v1418
    %v1579 = vpack.c.b16 %v1419, %v1419
    %v1580 = vpack.c.b16 %v1420, %v1420
    %v1581 = vpack.c.b16 %v1421, %v1421
    %v1582 = vpack.c.b16 %v1422, %v1422
    %v1583 = vpack.c.b16 %v1423, %v1423
    %v1584 = vpack.c.b16 %v1424, %v1424
    %v1585 = vpack.c.b16 %v1425, %v1425
    %v1586 = vpack.c.b16 %v1426, %v1426
    %v1587 = vpack.c.b16 %v1427, %v1427
    %v1588 = vpack.c.b16 %v1428, %v1428
    %v1589 = vpack.c.b16 %v1429, %v1429
    %v1590 = vpack.c.b16 %v1430, %v1430
    %v1591 = vpack.c.b16 %v1431, %v1431
    %v1592 = vpack.c.b16 %v1432, %v1432
    %v1593 = vpack.c.b16 %v1433, %v1433
    %v1594 = vpack.c.b16 %v1434, %v1434
    %v1595 = vpack.c.b16 %v1435, %v1435
    %v1596 = vpack.c.b16 %v1436, %v1436
    %v1597 = vpack.c.b16 %v1437, %v1437
    %v1598 = vpack.c.b16 %v1438, %v1438
    %v1599 = vpack.c.b16 %v1439, %v1439
    %v1600 = vpack.c.b16 %v1440, %v1440
    %v1601 = vpack.c.b16 %v1441, %v1441
    %v1602 = vpack.c.b16 %v1442, %v1442
    %v1603 = vpack.c.b16 %v1443, %v1443
    %v1604 = vpack.c.b16 %v1444, %v1444
    %v1605 = vpack.c.b16 %v1445, %v1445
    %v1606 = vpack.c.b16 %v1446, %v1446
    %v1607 = vpack.c.b16 %v1447, %v1447
    %v1608 = vpack.c.b16 %v1448, %v1448
    %v1609 = vpack.c.b16 %v1449, %v1449
    %v1610 = vpack.c.b16 %v1450, %v1450
    %v1611 = vpack.c.b16 %v1451, %v1451
    %v1612 = vpack.c.b16 %v1452, %v1452
    %v1613 = vpack.c.b16 %v1453, %v1453
    %v1614 = vpack.c.b16 %v1454, %v1454
    %v1615 = vpack.c.b16 %v1455, %v1455
    %v1616 = vpack.c.b16 %v1456, %v1456
    %v1617 = vpack.c.b16 %v1457, %v1457
    %v1618 = vpack.c.b16 %v1458, %v1458
    %v1619 = vpack.c.b16 %v1459, %v1459
    %v1620 = vpack.c.b16 %v1460, %v1460
    %v1621 = vpack.c.b16 %v1461, %v1461
    %v1622 = vpack.c.b16 %v1462, %v1462
    %v1623 = vpack.c.b16 %v1463, %v1463
    %v1624 = vpack.c.b16 %v1464, %v1464
    %v1625 = vpack.c.b16 %v1465, %v1465
    %v1626 = vpack.c.b16 %v1466, %v1466
    %v1627 = vpack.c.b16 %v1467, %v1467
    %v1628 = vpack.c.b16 %v1468, %v1468
    %v1629 = vpack.c.b16 %v1469, %v1469
    %v1630 = vpack.c.b16 %v1470, %v1470
    %v1631 = vpack.c.b16 %v1471, %v1471
    %v1632 = vpack.c.b16 %v1472, %v1472
    %v1633 = vpack.c.b16 %v1473, %v1473
    %v1634 = vpack.c.b16 %v1474, %v1474
    %v1635 = vpack.c.b16 %v1475, %v1475
    %v1636 = vpack.c.b16 %v1476, %v1476
    %v1637 = vpack.c.b16 %v1477, %v1477
    %v1638 = vpack.c.b16 %v1478, %v1478
    %v1639 = vpack.c.b16 %v1479, %v1479
    %v1640 = vpack.c.b16 %v1480, %v1480
    %v1641 = vpack.c.b16 %v1481, %v1481
    %v1642 = vpack.c.b16 %v1482, %v1482
    %v1643 = vpack.c.b16 %v1483, %v1483
    %v1644 = vpack.c.b16 %v1484, %v1484
    %v1645 = vpack.c.b16 %v1485, %v1485
    %v1646 = vpack.c.b16 %v1486, %v1486
    %v1647 = vpack.c.b16 %v1487, %v1487
    %v1648 = vpack.c.b16 %v1488, %v1488
    %v1649 = vpack.c.b16 %v1489, %v1489
    %v1650 = vpack.c.b16 %v1490, %v1490
    %v1651 = vpack.c.b16 %v1491, %v1491
    %v1652 = vpack.c.b16 %v1492, %v1492
    %v1653 = vpack.c.b16 %v1493, %v1493
    %v1654 = vpack.c.b16 %v1494, %v1494
    %v1655 = vpack.c.b16 %v1495, %v1495
    %v1656 = vpack.c.b16 %v1496, %v1496
    %v1657 = vpack.c.b16 %v1497, %v1497
    %v1658 = vpack.c.b16 %v1498, %v1498
    %v1659 = vpack.c.b16 %v1499, %v1499
    %v1660 = vpack.c.b16 %v1500, %v1500
    %v1661 = vpack.c.b16 %v1501, %v1501
    %v1662 = vpack.c.b16 %v1502, %v1502
    %v1663 = vpack.c.b16 %v1503, %v1503
    %v1664 = vpack.c.b16 %v1504, %v1504
    %v1665 = vpack.c.b16 %v1505, %v1505
    %1826 = vst [vmem:[#allocation8] sm:$0xf] %v1506
    %1827 = vst [vmem:[#allocation8 + $0x4] sm:$0xf] %v1507
    %1828 = vst [vmem:[#allocation8 + $0x8] sm:$0xf] %v1508
    %1829 = vst [vmem:[#allocation8 + $0xc] sm:$0xf] %v1509
    %1830 = vst [vmem:[#allocation8 + $0x10] sm:$0xf] %v1510
    %1831 = vst [vmem:[#allocation8 + $0x14] sm:$0xf] %v1511
    %1832 = vst [vmem:[#allocation8 + $0x18] sm:$0xf] %v1512
    %1833 = vst [vmem:[#allocation8 + $0x1c] sm:$0xf] %v1513
    %1834 = vst [vmem:[#allocation8 + $0x20] sm:$0xf] %v1514
    %1835 = vst [vmem:[#allocation8 + $0x24] sm:$0xf] %v1515
    %1836 = vst [vmem:[#allocation8 + $0x28] sm:$0xf] %v1516
    %1837 = vst [vmem:[#allocation8 + $0x2c] sm:$0xf] %v1517
    %1838 = vst [vmem:[#allocation8 + $0x30] sm:$0xf] %v1518
    %1839 = vst [vmem:[#allocation8 + $0x34] sm:$0xf] %v1519
    %1840 = vst [vmem:[#allocation8 + $0x38] sm:$0xf] %v1520
    %1841 = vst [vmem:[#allocation8 + $0x3c] sm:$0xf] %v1521
    %1842 = vst [vmem:[#allocation8 + $0x40] sm:$0xf] %v1522
    %1843 = vst [vmem:[#allocation8 + $0x44] sm:$0xf] %v1523
    %1844 = vst [vmem:[#allocation8 + $0x48] sm:$0xf] %v1524
    %1845 = vst [vmem:[#allocation8 + $0x4c] sm:$0xf] %v1525
    %1846 = vst [vmem:[#allocation8 + $0x50] sm:$0xf] %v1526
    %1847 = vst [vmem:[#allocation8 + $0x54] sm:$0xf] %v1527
    %1848 = vst [vmem:[#allocation8 + $0x58] sm:$0xf] %v1528
    %1849 = vst [vmem:[#allocation8 + $0x5c] sm:$0xf] %v1529
    %1850 = vst [vmem:[#allocation8 + $0x60] sm:$0xf] %v1530
    %1851 = vst [vmem:[#allocation8 + $0x64] sm:$0xf] %v1531
    %1852 = vst [vmem:[#allocation8 + $0x68] sm:$0xf] %v1532
    %1853 = vst [vmem:[#allocation8 + $0x6c] sm:$0xf] %v1533
    %1854 = vst [vmem:[#allocation8 + $0x70] sm:$0xf] %v1534
    %1855 = vst [vmem:[#allocation8 + $0x74] sm:$0xf] %v1535
    %1856 = vst [vmem:[#allocation8 + $0x78] sm:$0xf] %v1536
    %1857 = vst [vmem:[#allocation8 + $0x7c] sm:$0xf] %v1537
    %1858 = vst [vmem:[#allocation8 + $0x80] sm:$0xf] %v1538
    %1859 = vst [vmem:[#allocation8 + $0x84] sm:$0xf] %v1539
    %1860 = vst [vmem:[#allocation8 + $0x88] sm:$0xf] %v1540
    %1861 = vst [vmem:[#allocation8 + $0x8c] sm:$0xf] %v1541
    %1862 = vst [vmem:[#allocation8 + $0x90] sm:$0xf] %v1542
    %1863 = vst [vmem:[#allocation8 + $0x94] sm:$0xf] %v1543
    %1864 = vst [vmem:[#allocation8 + $0x98] sm:$0xf] %v1544
    %1865 = vst [vmem:[#allocation8 + $0x9c] sm:$0xf] %v1545
    %1866 = vst [vmem:[#allocation8 + $0xa0] sm:$0xf] %v1546
    %1867 = vst [vmem:[#allocation8 + $0xa4] sm:$0xf] %v1547
    %1868 = vst [vmem:[#allocation8 + $0xa8] sm:$0xf] %v1548
    %1869 = vst [vmem:[#allocation8 + $0xac] sm:$0xf] %v1549
    %1870 = vst [vmem:[#allocation8 + $0xb0] sm:$0xf] %v1550
    %1871 = vst [vmem:[#allocation8 + $0xb4] sm:$0xf] %v1551
    %1872 = vst [vmem:[#allocation8 + $0xb8] sm:$0xf] %v1552
    %1873 = vst [vmem:[#allocation8 + $0xbc] sm:$0xf] %v1553
    %1874 = vst [vmem:[#allocation8 + $0xc0] sm:$0xf] %v1554
    %1875 = vst [vmem:[#allocation8 + $0xc4] sm:$0xf] %v1555
    %1876 = vst [vmem:[#allocation8 + $0xc8] sm:$0xf] %v1556
    %1877 = vst [vmem:[#allocation8 + $0xcc] sm:$0xf] %v1557
    %1878 = vst [vmem:[#allocation8 + $0xd0] sm:$0xf] %v1558
    %1879 = vst [vmem:[#allocation8 + $0xd4] sm:$0xf] %v1559
    %1880 = vst [vmem:[#allocation8 + $0xd8] sm:$0xf] %v1560
    %1881 = vst [vmem:[#allocation8 + $0xdc] sm:$0xf] %v1561
    %1882 = vst [vmem:[#allocation8 + $0xe0] sm:$0xf] %v1562
    %1883 = vst [vmem:[#allocation8 + $0xe4] sm:$0xf] %v1563
    %1884 = vst [vmem:[#allocation8 + $0xe8] sm:$0xf] %v1564
    %1885 = vst [vmem:[#allocation8 + $0xec] sm:$0xf] %v1565
    %1886 = vst [vmem:[#allocation8 + $0xf0] sm:$0xf] %v1566
    %1887 = vst [vmem:[#allocation8 + $0xf4] sm:$0xf] %v1567
    %1888 = vst [vmem:[#allocation8 + $0xf8] sm:$0xf] %v1568
    %1889 = vst [vmem:[#allocation8 + $0xfc] sm:$0xf] %v1569
    %1890 = vst [vmem:[#allocation8 + $0x100] sm:$0xf] %v1570
    %1891 = vst [vmem:[#allocation8 + $0x104] sm:$0xf] %v1571
    %1892 = vst [vmem:[#allocation8 + $0x108] sm:$0xf] %v1572
    %1893 = vst [vmem:[#allocation8 + $0x10c] sm:$0xf] %v1573
    %1894 = vst [vmem:[#allocation8 + $0x110] sm:$0xf] %v1574
    %1895 = vst [vmem:[#allocation8 + $0x114] sm:$0xf] %v1575
    %1896 = vst [vmem:[#allocation8 + $0x118] sm:$0xf] %v1576
    %1897 = vst [vmem:[#allocation8 + $0x11c] sm:$0xf] %v1577
    %1898 = vst [vmem:[#allocation8 + $0x120] sm:$0xf] %v1578
    %1899 = vst [vmem:[#allocation8 + $0x124] sm:$0xf] %v1579
    %1900 = vst [vmem:[#allocation8 + $0x128] sm:$0xf] %v1580
    %1901 = vst [vmem:[#allocation8 + $0x12c] sm:$0xf] %v1581
    %1902 = vst [vmem:[#allocation8 + $0x130] sm:$0xf] %v1582
    %1903 = vst [vmem:[#allocation8 + $0x134] sm:$0xf] %v1583
    %1904 = vst [vmem:[#allocation8 + $0x138] sm:$0xf] %v1584
    %1905 = vst [vmem:[#allocation8 + $0x13c] sm:$0xf] %v1585
    %1906 = vst [vmem:[#allocation8 + $0x140] sm:$0xf] %v1586
    %1907 = vst [vmem:[#allocation8 + $0x144] sm:$0xf] %v1587
    %1908 = vst [vmem:[#allocation8 + $0x148] sm:$0xf] %v1588
    %1909 = vst [vmem:[#allocation8 + $0x14c] sm:$0xf] %v1589
    %1910 = vst [vmem:[#allocation8 + $0x150] sm:$0xf] %v1590
    %1911 = vst [vmem:[#allocation8 + $0x154] sm:$0xf] %v1591
    %1912 = vst [vmem:[#allocation8 + $0x158] sm:$0xf] %v1592
    %1913 = vst [vmem:[#allocation8 + $0x15c] sm:$0xf] %v1593
    %1914 = vst [vmem:[#allocation8 + $0x160] sm:$0xf] %v1594
    %1915 = vst [vmem:[#allocation8 + $0x164] sm:$0xf] %v1595
    %1916 = vst [vmem:[#allocation8 + $0x168] sm:$0xf] %v1596
    %1917 = vst [vmem:[#allocation8 + $0x16c] sm:$0xf] %v1597
    %1918 = vst [vmem:[#allocation8 + $0x170] sm:$0xf] %v1598
    %1919 = vst [vmem:[#allocation8 + $0x174] sm:$0xf] %v1599
    %1920 = vst [vmem:[#allocation8 + $0x178] sm:$0xf] %v1600
    %1921 = vst [vmem:[#allocation8 + $0x17c] sm:$0xf] %v1601
    %1922 = vst [vmem:[#allocation8 + $0x180] sm:$0xf] %v1602
    %1923 = vst [vmem:[#allocation8 + $0x184] sm:$0xf] %v1603
    %1924 = vst [vmem:[#allocation8 + $0x188] sm:$0xf] %v1604
    %1925 = vst [vmem:[#allocation8 + $0x18c] sm:$0xf] %v1605
    %1926 = vst [vmem:[#allocation8 + $0x190] sm:$0xf] %v1606
    %1927 = vst [vmem:[#allocation8 + $0x194] sm:$0xf] %v1607
    %1928 = vst [vmem:[#allocation8 + $0x198] sm:$0xf] %v1608
    %1929 = vst [vmem:[#allocation8 + $0x19c] sm:$0xf] %v1609
    %1930 = vst [vmem:[#allocation8 + $0x1a0] sm:$0xf] %v1610
    %1931 = vst [vmem:[#allocation8 + $0x1a4] sm:$0xf] %v1611
    %1932 = vst [vmem:[#allocation8 + $0x1a8] sm:$0xf] %v1612
    %1933 = vst [vmem:[#allocation8 + $0x1ac] sm:$0xf] %v1613
    %1934 = vst [vmem:[#allocation8 + $0x1b0] sm:$0xf] %v1614
    %1935 = vst [vmem:[#allocation8 + $0x1b4] sm:$0xf] %v1615
    %1936 = vst [vmem:[#allocation8 + $0x1b8] sm:$0xf] %v1616
    %1937 = vst [vmem:[#allocation8 + $0x1bc] sm:$0xf] %v1617
    %1938 = vst [vmem:[#allocation8 + $0x1c0] sm:$0xf] %v1618
    %1939 = vst [vmem:[#allocation8 + $0x1c4] sm:$0xf] %v1619
    %1940 = vst [vmem:[#allocation8 + $0x1c8] sm:$0xf] %v1620
    %1941 = vst [vmem:[#allocation8 + $0x1cc] sm:$0xf] %v1621
    %1942 = vst [vmem:[#allocation8 + $0x1d0] sm:$0xf] %v1622
    %1943 = vst [vmem:[#allocation8 + $0x1d4] sm:$0xf] %v1623
    %1944 = vst [vmem:[#allocation8 + $0x1d8] sm:$0xf] %v1624
    %1945 = vst [vmem:[#allocation8 + $0x1dc] sm:$0xf] %v1625
    %1946 = vst [vmem:[#allocation8 + $0x1e0] sm:$0xf] %v1626
    %1947 = vst [vmem:[#allocation8 + $0x1e4] sm:$0xf] %v1627
    %1948 = vst [vmem:[#allocation8 + $0x1e8] sm:$0xf] %v1628
    %1949 = vst [vmem:[#allocation8 + $0x1ec] sm:$0xf] %v1629
    %1950 = vst [vmem:[#allocation8 + $0x1f0] sm:$0xf] %v1630
    %1951 = vst [vmem:[#allocation8 + $0x1f4] sm:$0xf] %v1631
    %1952 = vst [vmem:[#allocation8 + $0x1f8] sm:$0xf] %v1632
    %1953 = vst [vmem:[#allocation8 + $0x1fc] sm:$0xf] %v1633
    %1954 = vst [vmem:[#allocation8 + $0x200] sm:$0xf] %v1634
    %1955 = vst [vmem:[#allocation8 + $0x204] sm:$0xf] %v1635
    %1956 = vst [vmem:[#allocation8 + $0x208] sm:$0xf] %v1636
    %1957 = vst [vmem:[#allocation8 + $0x20c] sm:$0xf] %v1637
    %1958 = vst [vmem:[#allocation8 + $0x210] sm:$0xf] %v1638
    %1959 = vst [vmem:[#allocation8 + $0x214] sm:$0xf] %v1639
    %1960 = vst [vmem:[#allocation8 + $0x218] sm:$0xf] %v1640
    %1961 = vst [vmem:[#allocation8 + $0x21c] sm:$0xf] %v1641
    %1962 = vst [vmem:[#allocation8 + $0x220] sm:$0xf] %v1642
    %1963 = vst [vmem:[#allocation8 + $0x224] sm:$0xf] %v1643
    %1964 = vst [vmem:[#allocation8 + $0x228] sm:$0xf] %v1644
    %1965 = vst [vmem:[#allocation8 + $0x22c] sm:$0xf] %v1645
    %1966 = vst [vmem:[#allocation8 + $0x230] sm:$0xf] %v1646
    %1967 = vst [vmem:[#allocation8 + $0x234] sm:$0xf] %v1647
    %1968 = vst [vmem:[#allocation8 + $0x238] sm:$0xf] %v1648
    %1969 = vst [vmem:[#allocation8 + $0x23c] sm:$0xf] %v1649
    %1970 = vst [vmem:[#allocation8 + $0x240] sm:$0xf] %v1650
    %1971 = vst [vmem:[#allocation8 + $0x244] sm:$0xf] %v1651
    %1972 = vst [vmem:[#allocation8 + $0x248] sm:$0xf] %v1652
    %1973 = vst [vmem:[#allocation8 + $0x24c] sm:$0xf] %v1653
    %1974 = vst [vmem:[#allocation8 + $0x250] sm:$0xf] %v1654
    %1975 = vst [vmem:[#allocation8 + $0x254] sm:$0xf] %v1655
    %1976 = vst [vmem:[#allocation8 + $0x258] sm:$0xf] %v1656
    %1977 = vst [vmem:[#allocation8 + $0x25c] sm:$0xf] %v1657
    %1978 = vst [vmem:[#allocation8 + $0x260] sm:$0xf] %v1658
    %1979 = vst [vmem:[#allocation8 + $0x264] sm:$0xf] %v1659
    %1980 = vst [vmem:[#allocation8 + $0x268] sm:$0xf] %v1660
    %1981 = vst [vmem:[#allocation8 + $0x26c] sm:$0xf] %v1661
    %1982 = vst [vmem:[#allocation8 + $0x270] sm:$0xf] %v1662
    %1983 = vst [vmem:[#allocation8 + $0x274] sm:$0xf] %v1663
    %1984 = vst [vmem:[#allocation8 + $0x278] sm:$0xf] %v1664
    %1985 = vst [vmem:[#allocation8 + $0x27c] sm:$0xf] %v1665
    // Predicated region
    $region26: #{unet_block_forward.5} parent=1 // pred_check
      _
    $region27: #{unet_block_forward.5} parent=1 // pred_check_branch
      %1987 = sbr.rel (0) target = $region29
    $region28: #{unet_block_forward.5} parent=1 // pred_region
      %s1989 = ssub.s32 10240, 10240
      %1990 = vsyncadd [#allocation4], %s1989
      %s1991 = sshll.u32 [#allocation8], 4
      %s1992 = int_to_ptr.vmem [resolvable:$true] %s1991
      %1997 = dma.vmem_to_hbm [thread:$0]  %s1992, 10240, %s3, [#allocation4], 64, 64, 4
    $region29: #{unet_block_forward.5} parent=1 // pred_fallthru
      _
    // Predicated region
    $region30: #{unet_block_forward.5} parent=1 // pred_check
      _
    $region31: #{unet_block_forward.5} parent=1 // pred_check_branch
      %1999 = sbr.rel (0) target = $region33
    $region32: #{unet_block_forward.5} parent=1 // pred_region
      %2000 = dma.done [#allocation4], 10240
    $region33: #{unet_block_forward.5} parent=1 // pred_fallthru
      _
    %2001 = vsyncpa [#allocation3], 1
    %2002 = vsyncpa [#allocation6], 1
    %2003 = vsyncpa [#allocation4], 1

// kernel: unet_block_forward.4
$region0: #{unet_block_forward.4}
  #allocation0 [shape = 'u32[]', space=smem, size = 0x4, offset = 0x4, fixed_abs, tag = 'smem constant byte address 0x4 - core index']
  #allocation1 [shape = 'u32[144,128]{1,0:T(1,128)}', space=vmem, size = 0x12000, scoped, tag = 'internal scratch']
  %s0 = inlined_call_operand.hbm [shape: bf16[2,10,104,4], index: 0, kind: input, shape index: {}, may-alias: {0,1,2}]
  %s1 = inlined_call_operand.hbm [shape: bf16[2,10,104,4], index: 1, kind: input, shape index: {}, may-alias: {0,1,2}]
  %s2 = inlined_call_operand.hbm [shape: bf16[2,10,104,4], index: 2, kind: input, shape index: {}, may-alias: {0,1,2}]
  %s3 = inlined_call_operand.hbm [shape: bf16[27,4,128], index: 3, kind: input, shape index: {}]
  %s4 = inlined_call_operand.hbm [shape: f32[1,128], index: 4, kind: input, shape index: {}]
  %s5 = inlined_call_operand.hbm [shape: bf16[2,8,80,128], index: 5, kind: output, shape index: {0}]
  %s6 = inlined_call_operand.hbm [shape: f32[16,1,128], index: 6, kind: output, shape index: {1}]
  %s7 = inlined_call_operand.hbm [shape: f32[16,1,128], index: 7, kind: output, shape index: {2}]
  %8 = xla_tuple %s5, %s6, %s7
  %s9 = sld [smem:[#allocation0]]
  $region89: #{unet_block_forward.4} parent=0
    _
  %s11 = ssub.s32 1, %s9
  %s12 = scalar_select 0, %s11, %s9
  $region1: #{unet_block_forward.4} parent=0
    #allocation2 [shape = 'u8[53248]{0}', space=vmem, size = 0xd000, scoped, tag = 'input window, operand 0']
    #allocation3 [shape = 's32[2]{0}', space=sflag, size = 0x8, scoped, tag = 'scoped memory for unet_block_forward.4']
    #allocation4 [shape = 's32[2]{0}', space=sflag, size = 0x8, scoped, tag = 'scoped memory for unet_block_forward.4']
    #allocation5 [shape = 'u8[53248]{0}', space=vmem, size = 0xd000, scoped, tag = 'input window, operand 1']
    #allocation6 [shape = 's32[2]{0}', space=sflag, size = 0x8, scoped, tag = 'scoped memory for unet_block_forward.4']
    #allocation7 [shape = 'u8[53248]{0}', space=vmem, size = 0xd000, scoped, tag = 'input window, operand 2']
    #allocation8 [shape = 'u8[27648]{0}', space=vmem, size = 0x6c00, scoped, tag = 'input window, operand 3, single buffered']
    #allocation9 [shape = 's32[1]{0}', space=sflag, size = 0x4, scoped, tag = 'scoped memory for unet_block_forward.4']
    #allocation10 [shape = 'u8[512]{0}', space=vmem, size = 0x400, scoped, tag = 'input window, operand 4, single buffered']
    #allocation11 [shape = 'u8[40960]{0}', space=vmem, size = 0xa000, scoped, tag = 'output window, operand 0']
    #allocation12 [shape = 'u8[1024]{0}', space=vmem, size = 0x400, scoped, tag = 'output window, operand 1']
    #allocation13 [shape = 's32[2]{0}', space=sflag, size = 0x8, scoped, tag = 'scoped memory for unet_block_forward.4']
    #allocation14 [shape = 'u8[1024]{0}', space=vmem, size = 0x400, scoped, tag = 'output window, operand 2']
    %13 = vsyncpa [#allocation3], 0
    %s14 = scalar_lea.sflag [#allocation3], 1
    %15 = vsyncpa %s14, 0
    %16 = vsyncpa [#allocation6], 0
    %s17 = scalar_lea.sflag [#allocation6], 1
    %18 = vsyncpa %s17, 0
    %19 = vsyncpa [#allocation9], 0
    %20 = vsyncpa [#allocation4], 0
    %s21 = scalar_lea.sflag [#allocation4], 1
    %22 = vsyncpa %s21, 0
    %23 = vsyncpa [#allocation13], 0
    %s24 = scalar_lea.sflag [#allocation13], 1
    %25 = vsyncpa %s24, 0
    loop: start=0, step=1, limit=18
    $region2: #{unet_block_forward.4} parent=1 // loop_pre_header
      _
    $region3: #{unet_block_forward.4} parent=1 // loop_header
      %s27 = sphi 0, %s31
      %p28 = scmp.ge.s32.totalorder %s27, 18
      %s34 = sphi 0, %s46
      %s35 = sphi 0, %s42
      %s36 = sphi 0, %s34
      %s37 = sphi 0, %s35
      %s38 = sphi 0, %s36
      %s39 = sphi 0, %s37
      %s51 = sphi 0, %s53
      %s54 = sphi 0, %s51
      %s55 = sphi 0, %s54
      %s71 = sphi 0, %s55
      %s81 = sphi 0, %s83
      %s84 = sphi 0, %s81
      %s85 = sphi 0, %s84
      %s101 = sphi 0, %s85
      %s111 = sphi 0, %s113
      %s114 = sphi 0, %s111
      %s115 = sphi 0, %s114
      %s131 = sphi 0, %s115
      %s135 = sphi 0, %s135
      %s137 = sphi 0, %s135
      %s138 = sphi 0, %s137
      %s152 = sphi 0, %s138
      %s156 = sphi 0, %s156
      %s158 = sphi 0, %s156
      %s159 = sphi 0, %s158
      %s173 = sphi 0, %s159
      %s181 = sphi 0, %s183
      %s184 = sphi 0, %s181
      %s185 = sphi 0, %s184
      %s201 = sphi 0, %s185
      %s211 = sphi 0, %s213
      %s214 = sphi 0, %s211
      %s215 = sphi 0, %s214
      %s231 = sphi 0, %s215
      %s241 = sphi 0, %s243
      %s244 = sphi 0, %s241
      %s245 = sphi 0, %s244
      %s261 = sphi 0, %s245
    $region4: #{unet_block_forward.4} parent=1 // loop_header_branch
      %30 = sbr.rel (%p28) target = $region8
    $region5: #{unet_block_forward.4} parent=1 // loop_body
      %s32 = ssub.s32 %s27, 1
      %s33 = ssub.s32 %s27, 2
      %s40 = sadd.s32 1, %s35
      %p41 = scmp.ge.s32.totalorder %s40, 8
      %s42 = scalar_select %p41, 0, %s40
      %s43 = sadd.s32 1, %s34
      %s44 = scalar_select %p41, %s43, %s34
      %p45 = scmp.ge.s32.totalorder %s44, 2
      %s46 = scalar_select %p45, 0, %s44
      %s47 = ssub.s32 %s34, %s46
      %s48 = ssub.s32 %s35, %s42
      %s49 = sor.u32 %s47, %s48
      %p50 = scmp.eq.s32.totalorder %s49, 0
      %s52 = sadd.s32 %s51, 1
      %s53 = scalar_select %p50, %s51, %s52
      %p56 = pneg %p50
      %p57 = scmp.eq.s32.totalorder %s27, 15
      %p58 = por %p56, %p57
      %p59 = scmp.ne.s32.totalorder %s51, %s54
      %p60 = scmp.eq.s32.totalorder %s27, 0
      %p61 = por %p59, %p60
      %p62 = scmp.ne.s32.totalorder %s51, %s54
      %p63 = scmp.eq.s32.totalorder %s32, 15
      %p64 = por %p62, %p63
      %p65 = scmp.ne.s32.totalorder %s54, %s55
      %p66 = scmp.eq.s32.totalorder %s32, 0
      %p67 = por %p65, %p66
      %p68 = scmp.ne.s32.totalorder %s54, %s55
      %p69 = scmp.eq.s32.totalorder %s33, 15
      %p70 = por %p68, %p69
      %p72 = scmp.ne.s32.totalorder %s55, %s71
      %p73 = scmp.eq.s32.totalorder %s33, 0
      %p74 = por %p72, %p73
      %s75 = sadd.s32 %s35, 1
      %s76 = sadd.s32 %s42, 1
      %s77 = ssub.s32 %s34, %s46
      %s78 = ssub.s32 %s75, %s76
      %s79 = sor.u32 %s77, %s78
      %p80 = scmp.eq.s32.totalorder %s79, 0
      %s82 = sadd.s32 %s81, 1
      %s83 = scalar_select %p80, %s81, %s82
      %p86 = pneg %p80
      %p87 = scmp.eq.s32.totalorder %s27, 15
      %p88 = por %p86, %p87
      %p89 = scmp.ne.s32.totalorder %s81, %s84
      %p90 = scmp.eq.s32.totalorder %s27, 0
      %p91 = por %p89, %p90
      %p92 = scmp.ne.s32.totalorder %s81, %s84
      %p93 = scmp.eq.s32.totalorder %s32, 15
      %p94 = por %p92, %p93
      %p95 = scmp.ne.s32.totalorder %s84, %s85
      %p96 = scmp.eq.s32.totalorder %s32, 0
      %p97 = por %p95, %p96
      %p98 = scmp.ne.s32.totalorder %s84, %s85
      %p99 = scmp.eq.s32.totalorder %s33, 15
      %p100 = por %p98, %p99
      %p102 = scmp.ne.s32.totalorder %s85, %s101
      %p103 = scmp.eq.s32.totalorder %s33, 0
      %p104 = por %p102, %p103
      %s105 = sadd.s32 %s35, 2
      %s106 = sadd.s32 %s42, 2
      %s107 = ssub.s32 %s34, %s46
      %s108 = ssub.s32 %s105, %s106
      %s109 = sor.u32 %s107, %s108
      %p110 = scmp.eq.s32.totalorder %s109, 0
      %s112 = sadd.s32 %s111, 1
      %s113 = scalar_select %p110, %s111, %s112
      %p116 = pneg %p110
      %p117 = scmp.eq.s32.totalorder %s27, 15
      %p118 = por %p116, %p117
      %p119 = scmp.ne.s32.totalorder %s111, %s114
      %p120 = scmp.eq.s32.totalorder %s27, 0
      %p121 = por %p119, %p120
      %p122 = scmp.ne.s32.totalorder %s111, %s114
      %p123 = scmp.eq.s32.totalorder %s32, 15
      %p124 = por %p122, %p123
      %p125 = scmp.ne.s32.totalorder %s114, %s115
      %p126 = scmp.eq.s32.totalorder %s32, 0
      %p127 = por %p125, %p126
      %p128 = scmp.ne.s32.totalorder %s114, %s115
      %p129 = scmp.eq.s32.totalorder %s33, 15
      %p130 = por %p128, %p129
      %p132 = scmp.ne.s32.totalorder %s115, %s131
      %p133 = scmp.eq.s32.totalorder %s33, 0
      %p134 = por %p132, %p133
      %s136 = sadd.s32 %s135, 1
      %p139 = scmp.eq.s32.totalorder %s27, 15
      %p140 = scmp.ne.s32.totalorder %s135, %s137
      %p141 = scmp.eq.s32.totalorder %s27, 0
      %p142 = por %p140, %p141
      %p143 = scmp.ne.s32.totalorder %s135, %s137
      %p144 = scmp.eq.s32.totalorder %s32, 15
      %p145 = por %p143, %p144
      %p146 = scmp.ne.s32.totalorder %s137, %s138
      %p147 = scmp.eq.s32.totalorder %s32, 0
      %p148 = por %p146, %p147
      %p149 = scmp.ne.s32.totalorder %s137, %s138
      %p150 = scmp.eq.s32.totalorder %s33, 15
      %p151 = por %p149, %p150
      %p153 = scmp.ne.s32.totalorder %s138, %s152
      %p154 = scmp.eq.s32.totalorder %s33, 0
      %p155 = por %p153, %p154
      %s157 = sadd.s32 %s156, 1
      %p160 = scmp.eq.s32.totalorder %s27, 15
      %p161 = scmp.ne.s32.totalorder %s156, %s158
      %p162 = scmp.eq.s32.totalorder %s27, 0
      %p163 = por %p161, %p162
      %p164 = scmp.ne.s32.totalorder %s156, %s158
      %p165 = scmp.eq.s32.totalorder %s32, 15
      %p166 = por %p164, %p165
      %p167 = scmp.ne.s32.totalorder %s158, %s159
      %p168 = scmp.eq.s32.totalorder %s32, 0
      %p169 = por %p167, %p168
      %p170 = scmp.ne.s32.totalorder %s158, %s159
      %p171 = scmp.eq.s32.totalorder %s33, 15
      %p172 = por %p170, %p171
      %p174 = scmp.ne.s32.totalorder %s159, %s173
      %p175 = scmp.eq.s32.totalorder %s33, 0
      %p176 = por %p174, %p175
      %s177 = ssub.s32 %s34, %s46
      %s178 = ssub.s32 %s35, %s42
      %s179 = sor.u32 %s177, %s178
      %p180 = scmp.eq.s32.totalorder %s179, 0
      %s182 = sadd.s32 %s181, 1
      %s183 = scalar_select %p180, %s181, %s182
      %p186 = pneg %p180
      %p187 = scmp.eq.s32.totalorder %s27, 15
      %p188 = por %p186, %p187
      %p189 = scmp.ne.s32.totalorder %s181, %s184
      %p190 = scmp.eq.s32.totalorder %s27, 0
      %p191 = por %p189, %p190
      %p192 = scmp.ne.s32.totalorder %s181, %s184
      %p193 = scmp.eq.s32.totalorder %s32, 15
      %p194 = por %p192, %p193
      %p195 = scmp.ne.s32.totalorder %s184, %s185
      %p196 = scmp.eq.s32.totalorder %s32, 0
      %p197 = por %p195, %p196
      %p198 = scmp.ne.s32.totalorder %s184, %s185
      %p199 = scmp.eq.s32.totalorder %s33, 15
      %p200 = por %p198, %p199
      %p202 = scmp.ne.s32.totalorder %s185, %s201
      %p203 = scmp.eq.s32.totalorder %s33, 0
      %p204 = por %p202, %p203
      %s205 = smul.u32 %s34, 8
      %s206 = sadd.s32 %s205, %s35
      %s207 = smul.u32 %s46, 8
      %s208 = sadd.s32 %s207, %s42
      %s209 = ssub.s32 %s206, %s208
      %p210 = scmp.eq.s32.totalorder %s209, 0
      %s212 = sadd.s32 %s211, 1
      %s213 = scalar_select %p210, %s211, %s212
      %p216 = pneg %p210
      %p217 = scmp.eq.s32.totalorder %s27, 15
      %p218 = por %p216, %p217
      %p219 = scmp.ne.s32.totalorder %s211, %s214
      %p220 = scmp.eq.s32.totalorder %s27, 0
      %p221 = por %p219, %p220
      %p222 = scmp.ne.s32.totalorder %s211, %s214
      %p223 = scmp.eq.s32.totalorder %s32, 15
      %p224 = por %p222, %p223
      %p225 = scmp.ne.s32.totalorder %s214, %s215
      %p226 = scmp.eq.s32.totalorder %s32, 0
      %p227 = por %p225, %p226
      %p228 = scmp.ne.s32.totalorder %s214, %s215
      %p229 = scmp.eq.s32.totalorder %s33, 15
      %p230 = por %p228, %p229
      %p232 = scmp.ne.s32.totalorder %s215, %s231
      %p233 = scmp.eq.s32.totalorder %s33, 0
      %p234 = por %p232, %p233
      %s235 = smul.u32 %s34, 8
      %s236 = sadd.s32 %s235, %s35
      %s237 = smul.u32 %s46, 8
      %s238 = sadd.s32 %s237, %s42
      %s239 = ssub.s32 %s236, %s238
      %p240 = scmp.eq.s32.totalorder %s239, 0
      %s242 = sadd.s32 %s241, 1
      %s243 = scalar_select %p240, %s241, %s242
      %p246 = pneg %p240
      %p247 = scmp.eq.s32.totalorder %s27, 15
      %p248 = por %p246, %p247
      %p249 = scmp.ne.s32.totalorder %s241, %s244
      %p250 = scmp.eq.s32.totalorder %s27, 0
      %p251 = por %p249, %p250
      %p252 = scmp.ne.s32.totalorder %s241, %s244
      %p253 = scmp.eq.s32.totalorder %s32, 15
      %p254 = por %p252, %p253
      %p255 = scmp.ne.s32.totalorder %s244, %s245
      %p256 = scmp.eq.s32.totalorder %s32, 0
      %p257 = por %p255, %p256
      %p258 = scmp.ne.s32.totalorder %s244, %s245
      %p259 = scmp.eq.s32.totalorder %s33, 15
      %p260 = por %p258, %p259
      %p262 = scmp.ne.s32.totalorder %s245, %s261
      %p263 = scmp.eq.s32.totalorder %s33, 0
      %p264 = por %p262, %p263
      %p265 = scmp.le.s32.totalorder 1, %s27
      %p266 = scmp.lt.s32.totalorder %s27, 17
      %p267 = pnand %p265, %p266
      %p268 = pneg %p267
      // Predicated region
      $region9: #{unet_block_forward.4} parent=5 // pred_check
        _
      $region10: #{unet_block_forward.4} parent=5 // pred_check_branch
        %270 = sbr.rel (%p267) target = $region12
      $region11: #{unet_block_forward.4} parent=5 // pred_region
        %s271 = ssub.s32 %s27, 1
        // Predicated region
        $region13: #{unet_block_forward.4} parent=11 // pred_check
          %p272 = pneg %p148
        $region14: #{unet_block_forward.4} parent=11 // pred_check_branch
          %274 = sbr.rel (%p272) target = $region16
        $region15: #{unet_block_forward.4} parent=11 // pred_region
          %s276 = ssub.s32 864, 864
          %277 = vsyncadd [#allocation9], %s276
          %s278 = sshll.u32 [#allocation8], 4
          %s279 = int_to_ptr.vmem [resolvable:$true] %s278
          %284 = dma.hbm_to_vmem [thread:$0]  %s3, 864, %s279, [#allocation9], 32, 32, 2
        $region16: #{unet_block_forward.4} parent=11 // pred_fallthru
          _
        // Predicated region
        $region17: #{unet_block_forward.4} parent=11 // pred_check
          %p285 = pneg %p169
        $region18: #{unet_block_forward.4} parent=11 // pred_check_branch
          %287 = sbr.rel (%p285) target = $region20
        $region19: #{unet_block_forward.4} parent=11 // pred_region
          %s289 = ssub.s32 16, 16
          %290 = vsyncadd [#allocation9], %s289
          %s292 = sshll.u32 [#allocation10], 4
          %s293 = int_to_ptr.vmem [resolvable:$true] %s292
          %295 = dma.hbm_to_vmem [thread:$0]  %s4, 16, %s293, [#allocation9]
        $region20: #{unet_block_forward.4} parent=11 // pred_fallthru
          _
      $region12: #{unet_block_forward.4} parent=5 // pred_fallthru
        _
      %p296 = scmp.lt.s32.totalorder %s27, 16
      // Predicated region
      $region21: #{unet_block_forward.4} parent=5 // pred_check
        %p297 = pneg %p296
      $region22: #{unet_block_forward.4} parent=5 // pred_check_branch
        %299 = sbr.rel (%p297) target = $region24
      $region23: #{unet_block_forward.4} parent=5 // pred_region
        // Predicated region
        $region25: #{unet_block_forward.4} parent=23 // pred_check
          %p300 = pneg %p61
        $region26: #{unet_block_forward.4} parent=23 // pred_check_branch
          %302 = sbr.rel (%p300) target = $region28
        $region27: #{unet_block_forward.4} parent=23 // pred_region
          %s303 = sand.u32 %s51, 1
          %s304 = scalar_lea.sflag [#allocation3], %s303
          %s305 = sand.u32 %s51, 1
          %s306 = smul.addr %s305, 52
          %s307 = scalar_lea.vmem [#allocation2], %s306
          %s309 = ssub.s32 832, 832
          %310 = vsyncadd %s304, %s309
          %s311 = smul.addr %s35, 13
          %s312 = smul.addr %s34, 130
          %s313 = sadd.s32 %s311, %s312
          %s314 = smul.addr %s313, 64
          %s315 = scalar_lea.hbm %s0, %s314
          %s316 = sshll.u32 %s307, 4
          %s317 = int_to_ptr.vmem [resolvable:$true] %s316
          %322 = dma.hbm_to_vmem [thread:$0]  %s315, 832, %s317, %s304, 64, 64, 4
        $region28: #{unet_block_forward.4} parent=23 // pred_fallthru
          _
        // Predicated region
        $region29: #{unet_block_forward.4} parent=23 // pred_check
          %p323 = pneg %p91
        $region30: #{unet_block_forward.4} parent=23 // pred_check_branch
          %325 = sbr.rel (%p323) target = $region32
        $region31: #{unet_block_forward.4} parent=23 // pred_region
          %s326 = sand.u32 %s27, 1
          %s327 = scalar_lea.sflag [#allocation6], %s326
          %s328 = sand.u32 %s81, 1
          %s329 = smul.addr %s328, 52
          %s330 = scalar_lea.vmem [#allocation5], %s329
          %s331 = sadd.s32 %s35, 1
          %s333 = ssub.s32 832, 832
          %334 = vsyncadd %s327, %s333
          %s335 = smul.addr %s331, 13
          %s336 = smul.addr %s34, 130
          %s337 = sadd.s32 %s335, %s336
          %s338 = smul.addr %s337, 64
          %s339 = scalar_lea.hbm %s1, %s338
          %s340 = sshll.u32 %s330, 4
          %s341 = int_to_ptr.vmem [resolvable:$true] %s340
          %346 = dma.hbm_to_vmem [thread:$0]  %s339, 832, %s341, %s327, 64, 64, 4
        $region32: #{unet_block_forward.4} parent=23 // pred_fallthru
          _
        // Predicated region
        $region33: #{unet_block_forward.4} parent=23 // pred_check
          %p347 = pneg %p121
        $region34: #{unet_block_forward.4} parent=23 // pred_check_branch
          %349 = sbr.rel (%p347) target = $region36
        $region35: #{unet_block_forward.4} parent=23 // pred_region
          %s350 = sand.u32 %s27, 1
          %s351 = scalar_lea.sflag [#allocation6], %s350
          %s352 = sand.u32 %s111, 1
          %s353 = smul.addr %s352, 52
          %s354 = scalar_lea.vmem [#allocation7], %s353
          %s355 = sadd.s32 %s35, 2
          %s357 = ssub.s32 832, 832
          %358 = vsyncadd %s351, %s357
          %s359 = smul.addr %s355, 13
          %s360 = smul.addr %s34, 130
          %s361 = sadd.s32 %s359, %s360
          %s362 = smul.addr %s361, 64
          %s363 = scalar_lea.hbm %s2, %s362
          %s364 = sshll.u32 %s354, 4
          %s365 = int_to_ptr.vmem [resolvable:$true] %s364
          %370 = dma.hbm_to_vmem [thread:$0]  %s363, 832, %s365, %s351, 64, 64, 4
        $region36: #{unet_block_forward.4} parent=23 // pred_fallthru
          _
      $region24: #{unet_block_forward.4} parent=5 // pred_fallthru
        _
      %p371 = scmp.le.s32.totalorder 1, %s27
      %p372 = scmp.lt.s32.totalorder %s27, 17
      %p373 = pnand %p371, %p372
      %p374 = pneg %p373
      // Predicated region
      $region37: #{unet_block_forward.4} parent=5 // pred_check
        _
      $region38: #{unet_block_forward.4} parent=5 // pred_check_branch
        %376 = sbr.rel (%p373) target = $region40
      $region39: #{unet_block_forward.4} parent=5 // pred_region
        %s377 = ssub.s32 %s27, 1
        %s378 = sand.u32 %s54, 1
        %s379 = scalar_lea.sflag [#allocation3], %s378
        %s380 = sand.u32 %s54, 1
        %s381 = smul.addr %s380, 52
        %s382 = scalar_lea.vmem [#allocation2], %s381
        // Predicated region
        $region41: #{unet_block_forward.4} parent=39 // pred_check
          %p383 = pneg %p67
        $region42: #{unet_block_forward.4} parent=39 // pred_check_branch
          %385 = sbr.rel (%p383) target = $region44
        $region43: #{unet_block_forward.4} parent=39 // pred_region
          %386 = dma.done %s379, 832
        $region44: #{unet_block_forward.4} parent=39 // pred_fallthru
          _
        %s387 = sand.u32 %s32, 1
        %s388 = scalar_lea.sflag [#allocation6], %s387
        %s389 = sand.u32 %s84, 1
        %s390 = smul.addr %s389, 52
        %s391 = scalar_lea.vmem [#allocation5], %s390
        // Predicated region
        $region45: #{unet_block_forward.4} parent=39 // pred_check
          %p392 = pneg %p97
        $region46: #{unet_block_forward.4} parent=39 // pred_check_branch
          %394 = sbr.rel (%p392) target = $region48
        $region47: #{unet_block_forward.4} parent=39 // pred_region
          %395 = dma.done %s388, 832
        $region48: #{unet_block_forward.4} parent=39 // pred_fallthru
          _
        %s396 = sand.u32 %s32, 1
        %s397 = scalar_lea.sflag [#allocation6], %s396
        %s398 = sand.u32 %s114, 1
        %s399 = smul.addr %s398, 52
        %s400 = scalar_lea.vmem [#allocation7], %s399
        // Predicated region
        $region49: #{unet_block_forward.4} parent=39 // pred_check
          %p401 = pneg %p127
        $region50: #{unet_block_forward.4} parent=39 // pred_check_branch
          %403 = sbr.rel (%p401) target = $region52
        $region51: #{unet_block_forward.4} parent=39 // pred_region
          %404 = dma.done %s397, 832
        $region52: #{unet_block_forward.4} parent=39 // pred_fallthru
          _
        // Predicated region
        $region53: #{unet_block_forward.4} parent=39 // pred_check
          %p405 = pneg %p148
        $region54: #{unet_block_forward.4} parent=39 // pred_check_branch
          %407 = sbr.rel (%p405) target = $region56
        $region55: #{unet_block_forward.4} parent=39 // pred_region
          %408 = dma.done [#allocation9], 864
        $region56: #{unet_block_forward.4} parent=39 // pred_fallthru
          _
        // Predicated region
        $region57: #{unet_block_forward.4} parent=39 // pred_check
          %p409 = pneg %p169
        $region58: #{unet_block_forward.4} parent=39 // pred_check_branch
          %411 = sbr.rel (%p409) target = $region60
        $region59: #{unet_block_forward.4} parent=39 // pred_region
          %412 = dma.done [#allocation9], 16
        $region60: #{unet_block_forward.4} parent=39 // pred_fallthru
          _
        %s413 = sand.u32 %s54, 1
        %s414 = scalar_lea.sflag [#allocation3], %s413
        %s415 = sand.u32 %s54, 1
        %s416 = smul.addr %s415, 52
        %s417 = scalar_lea.vmem [#allocation2], %s416
        %p418 = pneg %p67
        %p419 = pneg %p64
        %s420 = sand.u32 %s32, 1
        %s421 = scalar_lea.sflag [#allocation6], %s420
        %s422 = sand.u32 %s84, 1
        %s423 = smul.addr %s422, 52
        %s424 = scalar_lea.vmem [#allocation5], %s423
        %p425 = pneg %p97
        %p426 = pneg %p94
        %s427 = sand.u32 %s32, 1
        %s428 = scalar_lea.sflag [#allocation6], %s427
        %s429 = sand.u32 %s114, 1
        %s430 = smul.addr %s429, 52
        %s431 = scalar_lea.vmem [#allocation7], %s430
        %p432 = pneg %p127
        %p433 = pneg %p124
        %p434 = pneg %p148
        %p435 = pneg %p145
        %p436 = pneg %p169
        %p437 = pneg %p166
        %p438 = pneg %p197
        %p439 = pneg %p194
        %s440 = sand.u32 %s184, 1
        %s441 = scalar_lea.sflag [#allocation4], %s440
        %s442 = sand.u32 %s184, 1
        %s443 = smul.addr %s442, 40
        %s444 = scalar_lea.vmem [#allocation11], %s443
        %p445 = pneg %p227
        %p446 = pneg %p224
        %s447 = sand.u32 %s32, 1
        %s448 = scalar_lea.sflag [#allocation13], %s447
        %s449 = sand.u32 %s214, 1
        %s450 = scalar_lea.vmem [#allocation12], %s449
        %p451 = pneg %p257
        %p452 = pneg %p254
        %s453 = sand.u32 %s32, 1
        %s454 = scalar_lea.sflag [#allocation13], %s453
        %s455 = sand.u32 %s244, 1
        %s456 = scalar_lea.vmem [#allocation14], %s455
        %s457 = sadd.s32 %s37, 1
        %s458 = sadd.s32 %s37, 2
        %s459 = smul.u32 %s36, 8
        %s460 = sadd.s32 %s459, %s37
        %s461 = smul.u32 %s36, 8
        %s462 = sadd.s32 %s461, %s37
        %v464 = vld [vmem:[%s382] sm:$0xf]
        %v465 = vld [vmem:[%s382 + $0x4] sm:$0xf]
        %v466 = vld [vmem:[%s382 + $0x8] sm:$0xf]
        %v467 = vld [vmem:[%s382 + $0xc] sm:$0xf]
        %v468 = vld [vmem:[%s382 + $0x10] sm:$0xf]
        %v469 = vld [vmem:[%s382 + $0x14] sm:$0xf]
        %v470 = vld [vmem:[%s382 + $0x18] sm:$0xf]
        %v471 = vld [vmem:[%s382 + $0x1c] sm:$0xf]
        %v472 = vld [vmem:[%s382 + $0x20] sm:$0xf]
        %v473 = vld [vmem:[%s382 + $0x24] sm:$0xf]
        %v474 = vld [vmem:[%s382 + $0x28] sm:$0xf]
        %v475 = vld [vmem:[%s382 + $0x2c] sm:$0xf]
        %v476 = vld [vmem:[%s382 + $0x30] sm:$0xf]
        %v477 = vld [vmem:[%s391] sm:$0xf]
        %v478 = vld [vmem:[%s391 + $0x4] sm:$0xf]
        %v479 = vld [vmem:[%s391 + $0x8] sm:$0xf]
        %v480 = vld [vmem:[%s391 + $0xc] sm:$0xf]
        %v481 = vld [vmem:[%s391 + $0x10] sm:$0xf]
        %v482 = vld [vmem:[%s391 + $0x14] sm:$0xf]
        %v483 = vld [vmem:[%s391 + $0x18] sm:$0xf]
        %v484 = vld [vmem:[%s391 + $0x1c] sm:$0xf]
        %v485 = vld [vmem:[%s391 + $0x20] sm:$0xf]
        %v486 = vld [vmem:[%s391 + $0x24] sm:$0xf]
        %v487 = vld [vmem:[%s391 + $0x28] sm:$0xf]
        %v488 = vld [vmem:[%s391 + $0x2c] sm:$0xf]
        %v489 = vld [vmem:[%s391 + $0x30] sm:$0xf]
        %v490 = vld [vmem:[%s400] sm:$0xf]
        %v491 = vld [vmem:[%s400 + $0x4] sm:$0xf]
        %v492 = vld [vmem:[%s400 + $0x8] sm:$0xf]
        %v493 = vld [vmem:[%s400 + $0xc] sm:$0xf]
        %v494 = vld [vmem:[%s400 + $0x10] sm:$0xf]
        %v495 = vld [vmem:[%s400 + $0x14] sm:$0xf]
        %v496 = vld [vmem:[%s400 + $0x18] sm:$0xf]
        %v497 = vld [vmem:[%s400 + $0x1c] sm:$0xf]
        %v498 = vld [vmem:[%s400 + $0x20] sm:$0xf]
        %v499 = vld [vmem:[%s400 + $0x24] sm:$0xf]
        %v500 = vld [vmem:[%s400 + $0x28] sm:$0xf]
        %v501 = vld [vmem:[%s400 + $0x2c] sm:$0xf]
        %v502 = vld [vmem:[%s400 + $0x30] sm:$0xf]
        %v503 = vld [vmem:[#allocation8] sm:$0x3]
        %s504 = scalar_lea.vmem [#allocation8], 2
        %v505 = vld [vmem:[%s504] sm:$0x3]
        %v517 = vunpack.c.l.b16 %v464
        %v518 = vunpack.c.l.b16 %v465
        %v519 = vunpack.c.l.b16 %v466
        %v520 = vunpack.c.l.b16 %v467
        %v521 = vunpack.c.l.b16 %v468
        %v522 = vunpack.c.l.b16 %v469
        %v523 = vunpack.c.l.b16 %v470
        %v524 = vunpack.c.l.b16 %v471
        %v525 = vunpack.c.l.b16 %v472
        %v526 = vunpack.c.l.b16 %v473
        %v527 = vunpack.c.l.b16 %v474
        %v528 = vpack.c.b16 %v518, %v517
        %v529 = vpack.c.b16 %v520, %v519
        %v530 = vpack.c.b16 %v522, %v521
        %v531 = vpack.c.b16 %v524, %v523
        %v532 = vpack.c.b16 %v526, %v525
        %v533 = vpack.c.b16 %v527, %v527
        %vm534 = vsmask.f32 7424
        %v536 = vshrl.u32 %v528, 16
        %v538 = vshll.u32 %v528, 16
        %v540 = vrot.slane %v538, 1
        %v541 = vor.u32 %v536, %v540
        %v543 = vshll.u32 %v529, 16
        %v545 = vrot.slane %v543, 1
        %v546 = vsel %vm534, %v541, %v545
        %v547 = vshrl.u32 %v529, 16
        %v549 = vor.u32 %v547, %v545
        %v551 = vshll.u32 %v530, 16
        %v553 = vrot.slane %v551, 1
        %v554 = vsel %vm534, %v549, %v553
        %v555 = vshrl.u32 %v530, 16
        %v557 = vor.u32 %v555, %v553
        %v559 = vshll.u32 %v531, 16
        %v561 = vrot.slane %v559, 1
        %v562 = vsel %vm534, %v557, %v561
        %v563 = vshrl.u32 %v531, 16
        %v565 = vor.u32 %v563, %v561
        %v567 = vshll.u32 %v532, 16
        %v569 = vrot.slane %v567, 1
        %v570 = vsel %vm534, %v565, %v569
        %v571 = vshrl.u32 %v532, 16
        %v573 = vor.u32 %v571, %v569
        %v575 = vshll.u32 %v533, 16
        %v577 = vrot.slane %v575, 1
        %v578 = vsel %vm534, %v573, %v577
        %vm579 = vcmask 31744
        %v581 = vsel %vm579, %v546, 0
        %v584 = vsel %vm579, %v554, 0
        %v587 = vsel %vm579, %v562, 0
        %v590 = vsel %vm579, %v570, 0
        %v593 = vsel %vm579, %v578, 0
        %vm595 = vcmask 1041408
        %v597 = vsel %vm595, %v505, 0
        %599 = vmatprep.subr.bf16.mxu0 0
        %600 = vmatpush1.bf16.msra.mxu0 %v597
        %601 = vmatprep.subr.bf16.mxu0 0
        %602 = vmatpush1.bf16.msra.mxu0 0
        %603 = vmatprep.subr.bf16.mxu0 0
        %604 = vmatpush1.bf16.msra.mxu0 0
        %605 = vmatprep.subr.bf16.mxu0 0
        %606 = vmatpush1.bf16.msra.mxu0 0
        %607 = vmatprep.subr.bf16.mxu0 0
        %608 = vmatpush1.bf16.msra.mxu0 0
        %609 = vmatprep.subr.bf16.mxu0 0
        %610 = vmatpush1.bf16.msra.mxu0 0
        %611 = vmatprep.subr.bf16.mxu0 0
        %612 = vmatpush1.bf16.msra.mxu0 0
        %613 = vmatprep.subr.bf16.mxu0 0
        %614 = vmatpush1.bf16.msra.mxu0 0
        %615 = vmatprep.subr.bf16.mxu0 0
        %616 = vmatpush1.bf16.msra.mxu0 0
        %617 = vmatprep.subr.bf16.mxu0 0
        %618 = vmatpush1.bf16.msra.mxu0 0
        %619 = vmatprep.subr.bf16.mxu0 0
        %620 = vmatpush1.bf16.msra.mxu0 0
        %621 = vmatprep.subr.bf16.mxu0 0
        %622 = vmatpush1.bf16.msra.mxu0 0
        %623 = vmatprep.subr.bf16.mxu0 0
        %624 = vmatpush1.bf16.msra.mxu0 0
        %625 = vmatprep.subr.bf16.mxu0 0
        %626 = vmatpush1.bf16.msra.mxu0 0
        %627 = vmatprep.subr.bf16.mxu0 0
        %628 = vmatpush1.bf16.msra.mxu0 0
        %629 = vmatprep.subr.bf16.mxu0 0
        %630 = vmatpush1.bf16.msra.mxu0 0
        %631 = vmatprep.mubr.bf16.mxu0 0
        %632 = vmatmul.mubr.bf16.gmra.mrb[0].mxu0 %v581
        %v633 = vpop.f32.mrb[0].mxu0
        %v634 = vadd.f32 0.0, %v633
        %v635 = vpop.f32.mrb[0].mxu0
        %v636 = vpop.f32.mrb[0].mxu0
        %v637 = vadd.f32 0.0, %v636
        %v638 = vpop.f32.mrb[0].mxu0
        %639 = vmatprep.mubr.bf16.mxu0 0
        %640 = vmatmul.mubr.bf16.gmra.mrb[0].mxu0 %v584
        %v641 = vpop.f32.mrb[0].mxu0
        %v642 = vadd.f32 0.0, %v641
        %v643 = vpop.f32.mrb[0].mxu0
        %v644 = vpop.f32.mrb[0].mxu0
        %v645 = vadd.f32 0.0, %v644
        %v646 = vpop.f32.mrb[0].mxu0
        %647 = vmatprep.mubr.bf16.mxu0 0
        %648 = vmatmul.mubr.bf16.gmra.mrb[0].mxu0 %v587
        %v649 = vpop.f32.mrb[0].mxu0
        %v650 = vadd.f32 0.0, %v649
        %v651 = vpop.f32.mrb[0].mxu0
        %v652 = vpop.f32.mrb[0].mxu0
        %v653 = vadd.f32 0.0, %v652
        %v654 = vpop.f32.mrb[0].mxu0
        %655 = vmatprep.mubr.bf16.mxu0 0
        %656 = vmatmul.mubr.bf16.gmra.mrb[0].mxu0 %v590
        %v657 = vpop.f32.mrb[0].mxu0
        %v658 = vadd.f32 0.0, %v657
        %v659 = vpop.f32.mrb[0].mxu0
        %v660 = vpop.f32.mrb[0].mxu0
        %v661 = vadd.f32 0.0, %v660
        %v662 = vpop.f32.mrb[0].mxu0
        %663 = vmatprep.mubr.bf16.mxu0 0
        %664 = vmatmul.mubr.bf16.gmra.mrb[0].mxu0 %v593
        %v665 = vpop.f32.mrb[0].mxu0
        %v666 = vadd.f32 0.0, %v665
        %v667 = vpop.f32.mrb[0].mxu0
        %v668 = vpop.f32.mrb[0].mxu0
        %v669 = vadd.f32 0.0, %v668
        %v670 = vpop.f32.mrb[0].mxu0
        %671 = vdwg.mxu0
        %v672 = vsel %vm579, %v528, 0
        %v674 = vsel %vm579, %v529, 0
        %v676 = vsel %vm579, %v530, 0
        %v678 = vsel %vm579, %v531, 0
        %v680 = vsel %vm579, %v532, 0
        %v683 = vsel %vm595, %v503, 0
        %685 = vmatprep.subr.bf16.mxu0 0
        %686 = vmatpush1.bf16.msra.mxu0 %v683
        %687 = vmatprep.subr.bf16.mxu0 0
        %688 = vmatpush1.bf16.msra.mxu0 0
        %689 = vmatprep.subr.bf16.mxu0 0
        %690 = vmatpush1.bf16.msra.mxu0 0
        %691 = vmatprep.subr.bf16.mxu0 0
        %692 = vmatpush1.bf16.msra.mxu0 0
        %693 = vmatprep.subr.bf16.mxu0 0
        %694 = vmatpush1.bf16.msra.mxu0 0
        %695 = vmatprep.subr.bf16.mxu0 0
        %696 = vmatpush1.bf16.msra.mxu0 0
        %697 = vmatprep.subr.bf16.mxu0 0
        %698 = vmatpush1.bf16.msra.mxu0 0
        %699 = vmatprep.subr.bf16.mxu0 0
        %700 = vmatpush1.bf16.msra.mxu0 0
        %701 = vmatprep.subr.bf16.mxu0 0
        %702 = vmatpush1.bf16.msra.mxu0 0
        %703 = vmatprep.subr.bf16.mxu0 0
        %704 = vmatpush1.bf16.msra.mxu0 0
        %705 = vmatprep.subr.bf16.mxu0 0
        %706 = vmatpush1.bf16.msra.mxu0 0
        %707 = vmatprep.subr.bf16.mxu0 0
        %708 = vmatpush1.bf16.msra.mxu0 0
        %709 = vmatprep.subr.bf16.mxu0 0
        %710 = vmatpush1.bf16.msra.mxu0 0
        %711 = vmatprep.subr.bf16.mxu0 0
        %712 = vmatpush1.bf16.msra.mxu0 0
        %713 = vmatprep.subr.bf16.mxu0 0
        %714 = vmatpush1.bf16.msra.mxu0 0
        %715 = vmatprep.subr.bf16.mxu0 0
        %716 = vmatpush1.bf16.msra.mxu0 0
        %717 = vmatprep.mubr.bf16.mxu0 0
        %718 = vmatmul.mubr.bf16.gmra.mrb[0].mxu0 %v672
        %v719 = vpop.f32.mrb[0].mxu0
        %v720 = vadd.f32 %v634, %v719
        %v721 = vpop.f32.mrb[0].mxu0
        %v722 = vpop.f32.mrb[0].mxu0
        %v723 = vadd.f32 %v637, %v722
        %v724 = vpop.f32.mrb[0].mxu0
        %725 = vmatprep.mubr.bf16.mxu0 0
        %726 = vmatmul.mubr.bf16.gmra.mrb[0].mxu0 %v674
        %v727 = vpop.f32.mrb[0].mxu0
        %v728 = vadd.f32 %v642, %v727
        %v729 = vpop.f32.mrb[0].mxu0
        %v730 = vpop.f32.mrb[0].mxu0
        %v731 = vadd.f32 %v645, %v730
        %v732 = vpop.f32.mrb[0].mxu0
        %733 = vmatprep.mubr.bf16.mxu0 0
        %734 = vmatmul.mubr.bf16.gmra.mrb[0].mxu0 %v676
        %v735 = vpop.f32.mrb[0].mxu0
        %v736 = vadd.f32 %v650, %v735
        %v737 = vpop.f32.mrb[0].mxu0
        %v738 = vpop.f32.mrb[0].mxu0
        %v739 = vadd.f32 %v653, %v738
        %v740 = vpop.f32.mrb[0].mxu0
        %741 = vmatprep.mubr.bf16.mxu0 0
        %742 = vmatmul.mubr.bf16.gmra.mrb[0].mxu0 %v678
        %v743 = vpop.f32.mrb[0].mxu0
        %v744 = vadd.f32 %v658, %v743
        %v745 = vpop.f32.mrb[0].mxu0
        %v746 = vpop.f32.mrb[0].mxu0
        %v747 = vadd.f32 %v661, %v746
        %v748 = vpop.f32.mrb[0].mxu0
        %749 = vmatprep.mubr.bf16.mxu0 0
        %750 = vmatmul.mubr.bf16.gmra.mrb[0].mxu0 %v680
        %v751 = vpop.f32.mrb[0].mxu0
        %v752 = vadd.f32 %v666, %v751
        %v753 = vpop.f32.mrb[0].mxu0
        %v754 = vpop.f32.mrb[0].mxu0
        %v755 = vadd.f32 %v669, %v754
        %v756 = vpop.f32.mrb[0].mxu0
        %757 = vdwg.mxu0
        %s758 = scalar_lea.vmem [#allocation8], 4
        %v759 = vld [vmem:[%s758] sm:$0x3]
        %vm760 = vcmask 1046528
        %v761 = vrot.slane %v528, 1
        %v762 = vrot.slane %v529, 1
        %v763 = vsel %vm760, %v761, %v762
        %v764 = vrot.slane %v530, 1
        %v765 = vsel %vm760, %v762, %v764
        %v766 = vrot.slane %v531, 1
        %v767 = vsel %vm760, %v764, %v766
        %v768 = vrot.slane %v532, 1
        %v769 = vsel %vm760, %v766, %v768
        %v770 = vrot.slane %v533, 1
        %v771 = vsel %vm760, %v768, %v770
        %v773 = vsel %vm579, %v763, 0
        %v776 = vsel %vm579, %v765, 0
        %v779 = vsel %vm579, %v767, 0
        %v782 = vsel %vm579, %v769, 0
        %v785 = vsel %vm579, %v771, 0
        %v788 = vsel %vm595, %v759, 0
        %790 = vmatprep.subr.bf16.mxu0 0
        %791 = vmatpush1.bf16.msra.mxu0 %v788
        %792 = vmatprep.subr.bf16.mxu0 0
        %793 = vmatpush1.bf16.msra.mxu0 0
        %794 = vmatprep.subr.bf16.mxu0 0
        %795 = vmatpush1.bf16.msra.mxu0 0
        %796 = vmatprep.subr.bf16.mxu0 0
        %797 = vmatpush1.bf16.msra.mxu0 0
        %798 = vmatprep.subr.bf16.mxu0 0
        %799 = vmatpush1.bf16.msra.mxu0 0
        %800 = vmatprep.subr.bf16.mxu0 0
        %801 = vmatpush1.bf16.msra.mxu0 0
        %802 = vmatprep.subr.bf16.mxu0 0
        %803 = vmatpush1.bf16.msra.mxu0 0
        %804 = vmatprep.subr.bf16.mxu0 0
        %805 = vmatpush1.bf16.msra.mxu0 0
        %806 = vmatprep.subr.bf16.mxu0 0
        %807 = vmatpush1.bf16.msra.mxu0 0
        %808 = vmatprep.subr.bf16.mxu0 0
        %809 = vmatpush1.bf16.msra.mxu0 0
        %810 = vmatprep.subr.bf16.mxu0 0
        %811 = vmatpush1.bf16.msra.mxu0 0
        %812 = vmatprep.subr.bf16.mxu0 0
        %813 = vmatpush1.bf16.msra.mxu0 0
        %814 = vmatprep.subr.bf16.mxu0 0
        %815 = vmatpush1.bf16.msra.mxu0 0
        %816 = vmatprep.subr.bf16.mxu0 0
        %817 = vmatpush1.bf16.msra.mxu0 0
        %818 = vmatprep.subr.bf16.mxu0 0
        %819 = vmatpush1.bf16.msra.mxu0 0
        %820 = vmatprep.subr.bf16.mxu0 0
        %821 = vmatpush1.bf16.msra.mxu0 0
        %822 = vmatprep.mubr.bf16.mxu0 0
        %823 = vmatmul.mubr.bf16.gmra.mrb[0].mxu0 %v773
        %v824 = vpop.f32.mrb[0].mxu0
        %v825 = vadd.f32 0.0, %v824
        %v826 = vpop.f32.mrb[0].mxu0
        %v827 = vpop.f32.mrb[0].mxu0
        %v828 = vadd.f32 0.0, %v827
        %v829 = vpop.f32.mrb[0].mxu0
        %830 = vmatprep.mubr.bf16.mxu0 0
        %831 = vmatmul.mubr.bf16.gmra.mrb[0].mxu0 %v776
        %v832 = vpop.f32.mrb[0].mxu0
        %v833 = vadd.f32 0.0, %v832
        %v834 = vpop.f32.mrb[0].mxu0
        %v835 = vpop.f32.mrb[0].mxu0
        %v836 = vadd.f32 0.0, %v835
        %v837 = vpop.f32.mrb[0].mxu0
        %838 = vmatprep.mubr.bf16.mxu0 0
        %839 = vmatmul.mubr.bf16.gmra.mrb[0].mxu0 %v779
        %v840 = vpop.f32.mrb[0].mxu0
        %v841 = vadd.f32 0.0, %v840
        %v842 = vpop.f32.mrb[0].mxu0
        %v843 = vpop.f32.mrb[0].mxu0
        %v844 = vadd.f32 0.0, %v843
        %v845 = vpop.f32.mrb[0].mxu0
        %846 = vmatprep.mubr.bf16.mxu0 0
        %847 = vmatmul.mubr.bf16.gmra.mrb[0].mxu0 %v782
        %v848 = vpop.f32.mrb[0].mxu0
        %v849 = vadd.f32 0.0, %v848
        %v850 = vpop.f32.mrb[0].mxu0
        %v851 = vpop.f32.mrb[0].mxu0
        %v852 = vadd.f32 0.0, %v851
        %v853 = vpop.f32.mrb[0].mxu0
        %854 = vmatprep.mubr.bf16.mxu0 0
        %855 = vmatmul.mubr.bf16.gmra.mrb[0].mxu0 %v785
        %v856 = vpop.f32.mrb[0].mxu0
        %v857 = vadd.f32 0.0, %v856
        %v858 = vpop.f32.mrb[0].mxu0
        %v859 = vpop.f32.mrb[0].mxu0
        %v860 = vadd.f32 0.0, %v859
        %v861 = vpop.f32.mrb[0].mxu0
        %862 = vdwg.mxu0
        %v863 = vadd.f32 %v720, %v825
        %v864 = vadd.f32 %v723, %v828
        %v865 = vadd.f32 %v728, %v833
        %v866 = vadd.f32 %v731, %v836
        %v867 = vadd.f32 %v736, %v841
        %v868 = vadd.f32 %v739, %v844
        %v869 = vadd.f32 %v744, %v849
        %v870 = vadd.f32 %v747, %v852
        %v871 = vadd.f32 %v752, %v857
        %v872 = vadd.f32 %v755, %v860
        %s873 = scalar_lea.vmem [#allocation8], 6
        %v874 = vld [vmem:[%s873] sm:$0x3]
        %v876 = vunpack.c.l.b16 %v475
        %v877 = vpack.c.b16 %v519, %v518
        %v878 = vpack.c.b16 %v521, %v520
        %v879 = vpack.c.b16 %v523, %v522
        %v880 = vpack.c.b16 %v525, %v524
        %v881 = vpack.c.b16 %v527, %v526
        %v882 = vpack.c.b16 %v876, %v876
        %v883 = vrot.slane %v877, 1
        %v884 = vrot.slane %v878, 1
        %v885 = vsel %vm760, %v883, %v884
        %v886 = vrot.slane %v879, 1
        %v887 = vsel %vm760, %v884, %v886
        %v888 = vrot.slane %v880, 1
        %v889 = vsel %vm760, %v886, %v888
        %v890 = vrot.slane %v881, 1
        %v891 = vsel %vm760, %v888, %v890
        %v892 = vrot.slane %v882, 1
        %v893 = vsel %vm760, %v890, %v892
        %v895 = vsel %vm579, %v885, 0
        %v898 = vsel %vm579, %v887, 0
        %v901 = vsel %vm579, %v889, 0
        %v904 = vsel %vm579, %v891, 0
        %v907 = vsel %vm579, %v893, 0
        %v910 = vsel %vm595, %v874, 0
        %912 = vmatprep.subr.bf16.mxu0 0
        %913 = vmatpush1.bf16.msra.mxu0 %v910
        %914 = vmatprep.subr.bf16.mxu0 0
        %915 = vmatpush1.bf16.msra.mxu0 0
        %916 = vmatprep.subr.bf16.mxu0 0
        %917 = vmatpush1.bf16.msra.mxu0 0
        %918 = vmatprep.subr.bf16.mxu0 0
        %919 = vmatpush1.bf16.msra.mxu0 0
        %920 = vmatprep.subr.bf16.mxu0 0
        %921 = vmatpush1.bf16.msra.mxu0 0
        %922 = vmatprep.subr.bf16.mxu0 0
        %923 = vmatpush1.bf16.msra.mxu0 0
        %924 = vmatprep.subr.bf16.mxu0 0
        %925 = vmatpush1.bf16.msra.mxu0 0
        %926 = vmatprep.subr.bf16.mxu0 0
        %927 = vmatpush1.bf16.msra.mxu0 0
        %928 = vmatprep.subr.bf16.mxu0 0
        %929 = vmatpush1.bf16.msra.mxu0 0
        %930 = vmatprep.subr.bf16.mxu0 0
        %931 = vmatpush1.bf16.msra.mxu0 0
        %932 = vmatprep.subr.bf16.mxu0 0
        %933 = vmatpush1.bf16.msra.mxu0 0
        %934 = vmatprep.subr.bf16.mxu0 0
        %935 = vmatpush1.bf16.msra.mxu0 0
        %936 = vmatprep.subr.bf16.mxu0 0
        %937 = vmatpush1.bf16.msra.mxu0 0
        %938 = vmatprep.subr.bf16.mxu0 0
        %939 = vmatpush1.bf16.msra.mxu0 0
        %940 = vmatprep.subr.bf16.mxu0 0
        %941 = vmatpush1.bf16.msra.mxu0 0
        %942 = vmatprep.subr.bf16.mxu0 0
        %943 = vmatpush1.bf16.msra.mxu0 0
        %944 = vmatprep.mubr.bf16.mxu0 0
        %945 = vmatmul.mubr.bf16.gmra.mrb[0].mxu0 %v895
        %v946 = vpop.f32.mrb[0].mxu0
        %v947 = vadd.f32 0.0, %v946
        %v948 = vpop.f32.mrb[0].mxu0
        %v949 = vpop.f32.mrb[0].mxu0
        %v950 = vadd.f32 0.0, %v949
        %v951 = vpop.f32.mrb[0].mxu0
        %952 = vmatprep.mubr.bf16.mxu0 0
        %953 = vmatmul.mubr.bf16.gmra.mrb[0].mxu0 %v898
        %v954 = vpop.f32.mrb[0].mxu0
        %v955 = vadd.f32 0.0, %v954
        %v956 = vpop.f32.mrb[0].mxu0
        %v957 = vpop.f32.mrb[0].mxu0
        %v958 = vadd.f32 0.0, %v957
        %v959 = vpop.f32.mrb[0].mxu0
        %960 = vmatprep.mubr.bf16.mxu0 0
        %961 = vmatmul.mubr.bf16.gmra.mrb[0].mxu0 %v901
        %v962 = vpop.f32.mrb[0].mxu0
        %v963 = vadd.f32 0.0, %v962
        %v964 = vpop.f32.mrb[0].mxu0
        %v965 = vpop.f32.mrb[0].mxu0
        %v966 = vadd.f32 0.0, %v965
        %v967 = vpop.f32.mrb[0].mxu0
        %968 = vmatprep.mubr.bf16.mxu0 0
        %969 = vmatmul.mubr.bf16.gmra.mrb[0].mxu0 %v904
        %v970 = vpop.f32.mrb[0].mxu0
        %v971 = vadd.f32 0.0, %v970
        %v972 = vpop.f32.mrb[0].mxu0
        %v973 = vpop.f32.mrb[0].mxu0
        %v974 = vadd.f32 0.0, %v973
        %v975 = vpop.f32.mrb[0].mxu0
        %976 = vmatprep.mubr.bf16.mxu0 0
        %977 = vmatmul.mubr.bf16.gmra.mrb[0].mxu0 %v907
        %v978 = vpop.f32.mrb[0].mxu0
        %v979 = vadd.f32 0.0, %v978
        %v980 = vpop.f32.mrb[0].mxu0
        %v981 = vpop.f32.mrb[0].mxu0
        %v982 = vadd.f32 0.0, %v981
        %v983 = vpop.f32.mrb[0].mxu0
        %984 = vdwg.mxu0
        %v985 = vadd.f32 %v863, %v947
        %v986 = vadd.f32 %v864, %v950
        %v987 = vadd.f32 %v865, %v955
        %v988 = vadd.f32 %v866, %v958
        %v989 = vadd.f32 %v867, %v963
        %v990 = vadd.f32 %v868, %v966
        %v991 = vadd.f32 %v869, %v971
        %v992 = vadd.f32 %v870, %v974
        %v993 = vadd.f32 %v871, %v979
        %v994 = vadd.f32 %v872, %v982
        %s995 = scalar_lea.vmem [#allocation8], 8
        %v996 = vld [vmem:[%s995] sm:$0x3]
        %vm997 = vsmask.f32 6400
        %v999 = vshrl.u32 %v877, 16
        %v1001 = vrot.slane %v999, 1
        %v1002 = vshll.u32 %v877, 16
        %v1004 = vrot.slane %v1002, 2
        %v1005 = vor.u32 %v1001, %v1004
        %v1007 = vshrl.u32 %v878, 16
        %v1009 = vrot.slane %v1007, 1
        %v1010 = vshll.u32 %v878, 16
        %v1012 = vrot.slane %v1010, 2
        %v1013 = vor.u32 %v1009, %v1012
        %v1014 = vsel %vm997, %v1005, %v1013
        %v1016 = vshrl.u32 %v879, 16
        %v1018 = vrot.slane %v1016, 1
        %v1019 = vshll.u32 %v879, 16
        %v1021 = vrot.slane %v1019, 2
        %v1022 = vor.u32 %v1018, %v1021
        %v1023 = vsel %vm997, %v1013, %v1022
        %v1025 = vshrl.u32 %v880, 16
        %v1027 = vrot.slane %v1025, 1
        %v1028 = vshll.u32 %v880, 16
        %v1030 = vrot.slane %v1028, 2
        %v1031 = vor.u32 %v1027, %v1030
        %v1032 = vsel %vm997, %v1022, %v1031
        %v1034 = vshrl.u32 %v881, 16
        %v1036 = vrot.slane %v1034, 1
        %v1037 = vshll.u32 %v881, 16
        %v1039 = vrot.slane %v1037, 2
        %v1040 = vor.u32 %v1036, %v1039
        %v1041 = vsel %vm997, %v1031, %v1040
        %v1043 = vshrl.u32 %v882, 16
        %v1045 = vrot.slane %v1043, 1
        %v1046 = vshll.u32 %v882, 16
        %v1048 = vrot.slane %v1046, 2
        %v1049 = vor.u32 %v1045, %v1048
        %v1050 = vsel %vm997, %v1040, %v1049
        %v1052 = vsel %vm579, %v1014, 0
        %v1055 = vsel %vm579, %v1023, 0
        %v1058 = vsel %vm579, %v1032, 0
        %v1061 = vsel %vm579, %v1041, 0
        %v1064 = vsel %vm579, %v1050, 0
        %v1067 = vsel %vm595, %v996, 0
        %1069 = vmatprep.subr.bf16.mxu0 0
        %1070 = vmatpush1.bf16.msra.mxu0 %v1067
        %1071 = vmatprep.subr.bf16.mxu0 0
        %1072 = vmatpush1.bf16.msra.mxu0 0
        %1073 = vmatprep.subr.bf16.mxu0 0
        %1074 = vmatpush1.bf16.msra.mxu0 0
        %1075 = vmatprep.subr.bf16.mxu0 0
        %1076 = vmatpush1.bf16.msra.mxu0 0
        %1077 = vmatprep.subr.bf16.mxu0 0
        %1078 = vmatpush1.bf16.msra.mxu0 0
        %1079 = vmatprep.subr.bf16.mxu0 0
        %1080 = vmatpush1.bf16.msra.mxu0 0
        %1081 = vmatprep.subr.bf16.mxu0 0
        %1082 = vmatpush1.bf16.msra.mxu0 0
        %1083 = vmatprep.subr.bf16.mxu0 0
        %1084 = vmatpush1.bf16.msra.mxu0 0
        %1085 = vmatprep.subr.bf16.mxu0 0
        %1086 = vmatpush1.bf16.msra.mxu0 0
        %1087 = vmatprep.subr.bf16.mxu0 0
        %1088 = vmatpush1.bf16.msra.mxu0 0
        %1089 = vmatprep.subr.bf16.mxu0 0
        %1090 = vmatpush1.bf16.msra.mxu0 0
        %1091 = vmatprep.subr.bf16.mxu0 0
        %1092 = vmatpush1.bf16.msra.mxu0 0
        %1093 = vmatprep.subr.bf16.mxu0 0
        %1094 = vmatpush1.bf16.msra.mxu0 0
        %1095 = vmatprep.subr.bf16.mxu0 0
        %1096 = vmatpush1.bf16.msra.mxu0 0
        %1097 = vmatprep.subr.bf16.mxu0 0
        %1098 = vmatpush1.bf16.msra.mxu0 0
        %1099 = vmatprep.subr.bf16.mxu0 0
        %1100 = vmatpush1.bf16.msra.mxu0 0
        %1101 = vmatprep.mubr.bf16.mxu0 0
        %1102 = vmatmul.mubr.bf16.gmra.mrb[0].mxu0 %v1052
        %v1103 = vpop.f32.mrb[0].mxu0
        %v1104 = vadd.f32 0.0, %v1103
        %v1105 = vpop.f32.mrb[0].mxu0
        %v1106 = vpop.f32.mrb[0].mxu0
        %v1107 = vadd.f32 0.0, %v1106
        %v1108 = vpop.f32.mrb[0].mxu0
        %1109 = vmatprep.mubr.bf16.mxu0 0
        %1110 = vmatmul.mubr.bf16.gmra.mrb[0].mxu0 %v1055
        %v1111 = vpop.f32.mrb[0].mxu0
        %v1112 = vadd.f32 0.0, %v1111
        %v1113 = vpop.f32.mrb[0].mxu0
        %v1114 = vpop.f32.mrb[0].mxu0
        %v1115 = vadd.f32 0.0, %v1114
        %v1116 = vpop.f32.mrb[0].mxu0
        %1117 = vmatprep.mubr.bf16.mxu0 0
        %1118 = vmatmul.mubr.bf16.gmra.mrb[0].mxu0 %v1058
        %v1119 = vpop.f32.mrb[0].mxu0
        %v1120 = vadd.f32 0.0, %v1119
        %v1121 = vpop.f32.mrb[0].mxu0
        %v1122 = vpop.f32.mrb[0].mxu0
        %v1123 = vadd.f32 0.0, %v1122
        %v1124 = vpop.f32.mrb[0].mxu0
        %1125 = vmatprep.mubr.bf16.mxu0 0
        %1126 = vmatmul.mubr.bf16.gmra.mrb[0].mxu0 %v1061
        %v1127 = vpop.f32.mrb[0].mxu0
        %v1128 = vadd.f32 0.0, %v1127
        %v1129 = vpop.f32.mrb[0].mxu0
        %v1130 = vpop.f32.mrb[0].mxu0
        %v1131 = vadd.f32 0.0, %v1130
        %v1132 = vpop.f32.mrb[0].mxu0
        %1133 = vmatprep.mubr.bf16.mxu0 0
        %1134 = vmatmul.mubr.bf16.gmra.mrb[0].mxu0 %v1064
        %v1135 = vpop.f32.mrb[0].mxu0
        %v1136 = vadd.f32 0.0, %v1135
        %v1137 = vpop.f32.mrb[0].mxu0
        %v1138 = vpop.f32.mrb[0].mxu0
        %v1139 = vadd.f32 0.0, %v1138
        %v1140 = vpop.f32.mrb[0].mxu0
        %1141 = vdwg.mxu0
        %v1142 = vadd.f32 %v985, %v1104
        %v1143 = vadd.f32 %v986, %v1107
        %v1144 = vadd.f32 %v987, %v1112
        %v1145 = vadd.f32 %v988, %v1115
        %v1146 = vadd.f32 %v989, %v1120
        %v1147 = vadd.f32 %v990, %v1123
        %v1148 = vadd.f32 %v991, %v1128
        %v1149 = vadd.f32 %v992, %v1131
        %v1150 = vadd.f32 %v993, %v1136
        %v1151 = vadd.f32 %v994, %v1139
        %s1152 = scalar_lea.vmem [#allocation8], 10
        %v1153 = vld [vmem:[%s1152] sm:$0x3]
        %vm1154 = vcmask 1045504
        %v1155 = vrot.slane %v877, 2
        %v1156 = vrot.slane %v878, 2
        %v1157 = vsel %vm1154, %v1155, %v1156
        %v1158 = vrot.slane %v879, 2
        %v1159 = vsel %vm1154, %v1156, %v1158
        %v1160 = vrot.slane %v880, 2
        %v1161 = vsel %vm1154, %v1158, %v1160
        %v1162 = vrot.slane %v881, 2
        %v1163 = vsel %vm1154, %v1160, %v1162
        %v1164 = vrot.slane %v882, 2
        %v1165 = vsel %vm1154, %v1162, %v1164
        %v1167 = vsel %vm579, %v1157, 0
        %v1170 = vsel %vm579, %v1159, 0
        %v1173 = vsel %vm579, %v1161, 0
        %v1176 = vsel %vm579, %v1163, 0
        %v1179 = vsel %vm579, %v1165, 0
        %v1182 = vsel %vm595, %v1153, 0
        %1184 = vmatprep.subr.bf16.mxu0 0
        %1185 = vmatpush1.bf16.msra.mxu0 %v1182
        %1186 = vmatprep.subr.bf16.mxu0 0
        %1187 = vmatpush1.bf16.msra.mxu0 0
        %1188 = vmatprep.subr.bf16.mxu0 0
        %1189 = vmatpush1.bf16.msra.mxu0 0
        %1190 = vmatprep.subr.bf16.mxu0 0
        %1191 = vmatpush1.bf16.msra.mxu0 0
        %1192 = vmatprep.subr.bf16.mxu0 0
        %1193 = vmatpush1.bf16.msra.mxu0 0
        %1194 = vmatprep.subr.bf16.mxu0 0
        %1195 = vmatpush1.bf16.msra.mxu0 0
        %1196 = vmatprep.subr.bf16.mxu0 0
        %1197 = vmatpush1.bf16.msra.mxu0 0
        %1198 = vmatprep.subr.bf16.mxu0 0
        %1199 = vmatpush1.bf16.msra.mxu0 0
        %1200 = vmatprep.subr.bf16.mxu0 0
        %1201 = vmatpush1.bf16.msra.mxu0 0
        %1202 = vmatprep.subr.bf16.mxu0 0
        %1203 = vmatpush1.bf16.msra.mxu0 0
        %1204 = vmatprep.subr.bf16.mxu0 0
        %1205 = vmatpush1.bf16.msra.mxu0 0
        %1206 = vmatprep.subr.bf16.mxu0 0
        %1207 = vmatpush1.bf16.msra.mxu0 0
        %1208 = vmatprep.subr.bf16.mxu0 0
        %1209 = vmatpush1.bf16.msra.mxu0 0
        %1210 = vmatprep.subr.bf16.mxu0 0
        %1211 = vmatpush1.bf16.msra.mxu0 0
        %1212 = vmatprep.subr.bf16.mxu0 0
        %1213 = vmatpush1.bf16.msra.mxu0 0
        %1214 = vmatprep.subr.bf16.mxu0 0
        %1215 = vmatpush1.bf16.msra.mxu0 0
        %1216 = vmatprep.mubr.bf16.mxu0 0
        %1217 = vmatmul.mubr.bf16.gmra.mrb[0].mxu0 %v1167
        %v1218 = vpop.f32.mrb[0].mxu0
        %v1219 = vadd.f32 0.0, %v1218
        %v1220 = vpop.f32.mrb[0].mxu0
        %v1221 = vpop.f32.mrb[0].mxu0
        %v1222 = vadd.f32 0.0, %v1221
        %v1223 = vpop.f32.mrb[0].mxu0
        %1224 = vmatprep.mubr.bf16.mxu0 0
        %1225 = vmatmul.mubr.bf16.gmra.mrb[0].mxu0 %v1170
        %v1226 = vpop.f32.mrb[0].mxu0
        %v1227 = vadd.f32 0.0, %v1226
        %v1228 = vpop.f32.mrb[0].mxu0
        %v1229 = vpop.f32.mrb[0].mxu0
        %v1230 = vadd.f32 0.0, %v1229
        %v1231 = vpop.f32.mrb[0].mxu0
        %1232 = vmatprep.mubr.bf16.mxu0 0
        %1233 = vmatmul.mubr.bf16.gmra.mrb[0].mxu0 %v1173
        %v1234 = vpop.f32.mrb[0].mxu0
        %v1235 = vadd.f32 0.0, %v1234
        %v1236 = vpop.f32.mrb[0].mxu0
        %v1237 = vpop.f32.mrb[0].mxu0
        %v1238 = vadd.f32 0.0, %v1237
        %v1239 = vpop.f32.mrb[0].mxu0
        %1240 = vmatprep.mubr.bf16.mxu0 0
        %1241 = vmatmul.mubr.bf16.gmra.mrb[0].mxu0 %v1176
        %v1242 = vpop.f32.mrb[0].mxu0
        %v1243 = vadd.f32 0.0, %v1242
        %v1244 = vpop.f32.mrb[0].mxu0
        %v1245 = vpop.f32.mrb[0].mxu0
        %v1246 = vadd.f32 0.0, %v1245
        %v1247 = vpop.f32.mrb[0].mxu0
        %1248 = vmatprep.mubr.bf16.mxu0 0
        %1249 = vmatmul.mubr.bf16.gmra.mrb[0].mxu0 %v1179
        %v1250 = vpop.f32.mrb[0].mxu0
        %v1251 = vadd.f32 0.0, %v1250
        %v1252 = vpop.f32.mrb[0].mxu0
        %v1253 = vpop.f32.mrb[0].mxu0
        %v1254 = vadd.f32 0.0, %v1253
        %v1255 = vpop.f32.mrb[0].mxu0
        %1256 = vdwg.mxu0
        %v1257 = vadd.f32 %v1142, %v1219
        %v1258 = vadd.f32 %v1143, %v1222
        %v1259 = vadd.f32 %v1144, %v1227
        %v1260 = vadd.f32 %v1145, %v1230
        %v1261 = vadd.f32 %v1146, %v1235
        %v1262 = vadd.f32 %v1147, %v1238
        %v1263 = vadd.f32 %v1148, %v1243
        %v1264 = vadd.f32 %v1149, %v1246
        %v1265 = vadd.f32 %v1150, %v1251
        %v1266 = vadd.f32 %v1151, %v1254
        %s1267 = scalar_lea.vmem [#allocation8], 12
        %v1268 = vld [vmem:[%s1267] sm:$0x3]
        %v1270 = vunpack.c.l.b16 %v476
        %v1271 = vpack.c.b16 %v876, %v527
        %v1272 = vpack.c.b16 %v1270, %v1270
        %v1273 = vrot.slane %v529, 2
        %v1274 = vrot.slane %v530, 2
        %v1275 = vsel %vm1154, %v1273, %v1274
        %v1276 = vrot.slane %v531, 2
        %v1277 = vsel %vm1154, %v1274, %v1276
        %v1278 = vrot.slane %v532, 2
        %v1279 = vsel %vm1154, %v1276, %v1278
        %v1280 = vrot.slane %v1271, 2
        %v1281 = vsel %vm1154, %v1278, %v1280
        %v1282 = vrot.slane %v1272, 2
        %v1283 = vsel %vm1154, %v1280, %v1282
        %v1285 = vsel %vm579, %v1275, 0
        %v1288 = vsel %vm579, %v1277, 0
        %v1291 = vsel %vm579, %v1279, 0
        %v1294 = vsel %vm579, %v1281, 0
        %v1297 = vsel %vm579, %v1283, 0
        %v1300 = vsel %vm595, %v1268, 0
        %1302 = vmatprep.subr.bf16.mxu0 0
        %1303 = vmatpush1.bf16.msra.mxu0 %v1300
        %1304 = vmatprep.subr.bf16.mxu0 0
        %1305 = vmatpush1.bf16.msra.mxu0 0
        %1306 = vmatprep.subr.bf16.mxu0 0
        %1307 = vmatpush1.bf16.msra.mxu0 0
        %1308 = vmatprep.subr.bf16.mxu0 0
        %1309 = vmatpush1.bf16.msra.mxu0 0
        %1310 = vmatprep.subr.bf16.mxu0 0
        %1311 = vmatpush1.bf16.msra.mxu0 0
        %1312 = vmatprep.subr.bf16.mxu0 0
        %1313 = vmatpush1.bf16.msra.mxu0 0
        %1314 = vmatprep.subr.bf16.mxu0 0
        %1315 = vmatpush1.bf16.msra.mxu0 0
        %1316 = vmatprep.subr.bf16.mxu0 0
        %1317 = vmatpush1.bf16.msra.mxu0 0
        %1318 = vmatprep.subr.bf16.mxu0 0
        %1319 = vmatpush1.bf16.msra.mxu0 0
        %1320 = vmatprep.subr.bf16.mxu0 0
        %1321 = vmatpush1.bf16.msra.mxu0 0
        %1322 = vmatprep.subr.bf16.mxu0 0
        %1323 = vmatpush1.bf16.msra.mxu0 0
        %1324 = vmatprep.subr.bf16.mxu0 0
        %1325 = vmatpush1.bf16.msra.mxu0 0
        %1326 = vmatprep.subr.bf16.mxu0 0
        %1327 = vmatpush1.bf16.msra.mxu0 0
        %1328 = vmatprep.subr.bf16.mxu0 0
        %1329 = vmatpush1.bf16.msra.mxu0 0
        %1330 = vmatprep.subr.bf16.mxu0 0
        %1331 = vmatpush1.bf16.msra.mxu0 0
        %1332 = vmatprep.subr.bf16.mxu0 0
        %1333 = vmatpush1.bf16.msra.mxu0 0
        %1334 = vmatprep.mubr.bf16.mxu0 0
        %1335 = vmatmul.mubr.bf16.gmra.mrb[0].mxu0 %v1285
        %v1336 = vpop.f32.mrb[0].mxu0
        %v1337 = vadd.f32 0.0, %v1336
        %v1338 = vpop.f32.mrb[0].mxu0
        %v1339 = vpop.f32.mrb[0].mxu0
        %v1340 = vadd.f32 0.0, %v1339
        %v1341 = vpop.f32.mrb[0].mxu0
        %1342 = vmatprep.mubr.bf16.mxu0 0
        %1343 = vmatmul.mubr.bf16.gmra.mrb[0].mxu0 %v1288
        %v1344 = vpop.f32.mrb[0].mxu0
        %v1345 = vadd.f32 0.0, %v1344
        %v1346 = vpop.f32.mrb[0].mxu0
        %v1347 = vpop.f32.mrb[0].mxu0
        %v1348 = vadd.f32 0.0, %v1347
        %v1349 = vpop.f32.mrb[0].mxu0
        %1350 = vmatprep.mubr.bf16.mxu0 0
        %1351 = vmatmul.mubr.bf16.gmra.mrb[0].mxu0 %v1291
        %v1352 = vpop.f32.mrb[0].mxu0
        %v1353 = vadd.f32 0.0, %v1352
        %v1354 = vpop.f32.mrb[0].mxu0
        %v1355 = vpop.f32.mrb[0].mxu0
        %v1356 = vadd.f32 0.0, %v1355
        %v1357 = vpop.f32.mrb[0].mxu0
        %1358 = vmatprep.mubr.bf16.mxu0 0
        %1359 = vmatmul.mubr.bf16.gmra.mrb[0].mxu0 %v1294
        %v1360 = vpop.f32.mrb[0].mxu0
        %v1361 = vadd.f32 0.0, %v1360
        %v1362 = vpop.f32.mrb[0].mxu0
        %v1363 = vpop.f32.mrb[0].mxu0
        %v1364 = vadd.f32 0.0, %v1363
        %v1365 = vpop.f32.mrb[0].mxu0
        %1366 = vmatprep.mubr.bf16.mxu0 0
        %1367 = vmatmul.mubr.bf16.gmra.mrb[0].mxu0 %v1297
        %v1368 = vpop.f32.mrb[0].mxu0
        %v1369 = vadd.f32 0.0, %v1368
        %v1370 = vpop.f32.mrb[0].mxu0
        %v1371 = vpop.f32.mrb[0].mxu0
        %v1372 = vadd.f32 0.0, %v1371
        %v1373 = vpop.f32.mrb[0].mxu0
        %1374 = vdwg.mxu0
        %v1375 = vadd.f32 %v1257, %v1337
        %v1376 = vadd.f32 %v1258, %v1340
        %v1377 = vadd.f32 %v1259, %v1345
        %v1378 = vadd.f32 %v1260, %v1348
        %v1379 = vadd.f32 %v1261, %v1353
        %v1380 = vadd.f32 %v1262, %v1356
        %v1381 = vadd.f32 %v1263, %v1361
        %v1382 = vadd.f32 %v1264, %v1364
        %v1383 = vadd.f32 %v1265, %v1369
        %v1384 = vadd.f32 %v1266, %v1372
        %s1385 = scalar_lea.vmem [#allocation8], 14
        %v1386 = vld [vmem:[%s1385] sm:$0x3]
        %vm1387 = vsmask.f32 5376
        %v1388 = vrot.slane %v547, 2
        %v1389 = vrot.slane %v543, 3
        %v1390 = vor.u32 %v1388, %v1389
        %v1391 = vrot.slane %v555, 2
        %v1392 = vrot.slane %v551, 3
        %v1393 = vor.u32 %v1391, %v1392
        %v1394 = vsel %vm1387, %v1390, %v1393
        %v1395 = vrot.slane %v563, 2
        %v1396 = vrot.slane %v559, 3
        %v1397 = vor.u32 %v1395, %v1396
        %v1398 = vsel %vm1387, %v1393, %v1397
        %v1399 = vrot.slane %v571, 2
        %v1400 = vrot.slane %v567, 3
        %v1401 = vor.u32 %v1399, %v1400
        %v1402 = vsel %vm1387, %v1397, %v1401
        %v1404 = vshrl.u32 %v1271, 16
        %v1406 = vrot.slane %v1404, 2
        %v1407 = vshll.u32 %v1271, 16
        %v1409 = vrot.slane %v1407, 3
        %v1410 = vor.u32 %v1406, %v1409
        %v1411 = vsel %vm1387, %v1401, %v1410
        %v1413 = vshrl.u32 %v1272, 16
        %v1415 = vrot.slane %v1413, 2
        %v1416 = vshll.u32 %v1272, 16
        %v1418 = vrot.slane %v1416, 3
        %v1419 = vor.u32 %v1415, %v1418
        %v1420 = vsel %vm1387, %v1410, %v1419
        %v1422 = vsel %vm579, %v1394, 0
        %v1425 = vsel %vm579, %v1398, 0
        %v1428 = vsel %vm579, %v1402, 0
        %v1431 = vsel %vm579, %v1411, 0
        %v1434 = vsel %vm579, %v1420, 0
        %v1437 = vsel %vm595, %v1386, 0
        %1439 = vmatprep.subr.bf16.mxu0 0
        %1440 = vmatpush1.bf16.msra.mxu0 %v1437
        %1441 = vmatprep.subr.bf16.mxu0 0
        %1442 = vmatpush1.bf16.msra.mxu0 0
        %1443 = vmatprep.subr.bf16.mxu0 0
        %1444 = vmatpush1.bf16.msra.mxu0 0
        %1445 = vmatprep.subr.bf16.mxu0 0
        %1446 = vmatpush1.bf16.msra.mxu0 0
        %1447 = vmatprep.subr.bf16.mxu0 0
        %1448 = vmatpush1.bf16.msra.mxu0 0
        %1449 = vmatprep.subr.bf16.mxu0 0
        %1450 = vmatpush1.bf16.msra.mxu0 0
        %1451 = vmatprep.subr.bf16.mxu0 0
        %1452 = vmatpush1.bf16.msra.mxu0 0
        %1453 = vmatprep.subr.bf16.mxu0 0
        %1454 = vmatpush1.bf16.msra.mxu0 0
        %1455 = vmatprep.subr.bf16.mxu0 0
        %1456 = vmatpush1.bf16.msra.mxu0 0
        %1457 = vmatprep.subr.bf16.mxu0 0
        %1458 = vmatpush1.bf16.msra.mxu0 0
        %1459 = vmatprep.subr.bf16.mxu0 0
        %1460 = vmatpush1.bf16.msra.mxu0 0
        %1461 = vmatprep.subr.bf16.mxu0 0
        %1462 = vmatpush1.bf16.msra.mxu0 0
        %1463 = vmatprep.subr.bf16.mxu0 0
        %1464 = vmatpush1.bf16.msra.mxu0 0
        %1465 = vmatprep.subr.bf16.mxu0 0
        %1466 = vmatpush1.bf16.msra.mxu0 0
        %1467 = vmatprep.subr.bf16.mxu0 0
        %1468 = vmatpush1.bf16.msra.mxu0 0
        %1469 = vmatprep.subr.bf16.mxu0 0
        %1470 = vmatpush1.bf16.msra.mxu0 0
        %1471 = vmatprep.mubr.bf16.mxu0 0
        %1472 = vmatmul.mubr.bf16.gmra.mrb[0].mxu0 %v1422
        %v1473 = vpop.f32.mrb[0].mxu0
        %v1474 = vadd.f32 0.0, %v1473
        %v1475 = vpop.f32.mrb[0].mxu0
        %v1476 = vpop.f32.mrb[0].mxu0
        %v1477 = vadd.f32 0.0, %v1476
        %v1478 = vpop.f32.mrb[0].mxu0
        %1479 = vmatprep.mubr.bf16.mxu0 0
        %1480 = vmatmul.mubr.bf16.gmra.mrb[0].mxu0 %v1425
        %v1481 = vpop.f32.mrb[0].mxu0
        %v1482 = vadd.f32 0.0, %v1481
        %v1483 = vpop.f32.mrb[0].mxu0
        %v1484 = vpop.f32.mrb[0].mxu0
        %v1485 = vadd.f32 0.0, %v1484
        %v1486 = vpop.f32.mrb[0].mxu0
        %1487 = vmatprep.mubr.bf16.mxu0 0
        %1488 = vmatmul.mubr.bf16.gmra.mrb[0].mxu0 %v1428
        %v1489 = vpop.f32.mrb[0].mxu0
        %v1490 = vadd.f32 0.0, %v1489
        %v1491 = vpop.f32.mrb[0].mxu0
        %v1492 = vpop.f32.mrb[0].mxu0
        %v1493 = vadd.f32 0.0, %v1492
        %v1494 = vpop.f32.mrb[0].mxu0
        %1495 = vmatprep.mubr.bf16.mxu0 0
        %1496 = vmatmul.mubr.bf16.gmra.mrb[0].mxu0 %v1431
        %v1497 = vpop.f32.mrb[0].mxu0
        %v1498 = vadd.f32 0.0, %v1497
        %v1499 = vpop.f32.mrb[0].mxu0
        %v1500 = vpop.f32.mrb[0].mxu0
        %v1501 = vadd.f32 0.0, %v1500
        %v1502 = vpop.f32.mrb[0].mxu0
        %1503 = vmatprep.mubr.bf16.mxu0 0
        %1504 = vmatmul.mubr.bf16.gmra.mrb[0].mxu0 %v1434
        %v1505 = vpop.f32.mrb[0].mxu0
        %v1506 = vadd.f32 0.0, %v1505
        %v1507 = vpop.f32.mrb[0].mxu0
        %v1508 = vpop.f32.mrb[0].mxu0
        %v1509 = vadd.f32 0.0, %v1508
        %v1510 = vpop.f32.mrb[0].mxu0
        %1511 = vdwg.mxu0
        %v1512 = vadd.f32 %v1375, %v1474
        %v1513 = vadd.f32 %v1376, %v1477
        %v1514 = vadd.f32 %v1377, %v1482
        %v1515 = vadd.f32 %v1378, %v1485
        %v1516 = vadd.f32 %v1379, %v1490
        %v1517 = vadd.f32 %v1380, %v1493
        %v1518 = vadd.f32 %v1381, %v1498
        %v1519 = vadd.f32 %v1382, %v1501
        %v1520 = vadd.f32 %v1383, %v1506
        %v1521 = vadd.f32 %v1384, %v1509
        %s1522 = scalar_lea.vmem [#allocation8], 16
        %v1523 = vld [vmem:[%s1522] sm:$0x3]
        %vm1524 = vcmask 1044480
        %v1525 = vrot.slane %v529, 3
        %v1526 = vrot.slane %v530, 3
        %v1527 = vsel %vm1524, %v1525, %v1526
        %v1528 = vrot.slane %v531, 3
        %v1529 = vsel %vm1524, %v1526, %v1528
        %v1530 = vrot.slane %v532, 3
        %v1531 = vsel %vm1524, %v1528, %v1530
        %v1532 = vrot.slane %v1271, 3
        %v1533 = vsel %vm1524, %v1530, %v1532
        %v1534 = vrot.slane %v1272, 3
        %v1535 = vsel %vm1524, %v1532, %v1534
        %v1537 = vsel %vm579, %v1527, 0
        %v1540 = vsel %vm579, %v1529, 0
        %v1543 = vsel %vm579, %v1531, 0
        %v1546 = vsel %vm579, %v1533, 0
        %v1549 = vsel %vm579, %v1535, 0
        %v1552 = vsel %vm595, %v1523, 0
        %1554 = vmatprep.subr.bf16.mxu0 0
        %1555 = vmatpush1.bf16.msra.mxu0 %v1552
        %1556 = vmatprep.subr.bf16.mxu0 0
        %1557 = vmatpush1.bf16.msra.mxu0 0
        %1558 = vmatprep.subr.bf16.mxu0 0
        %1559 = vmatpush1.bf16.msra.mxu0 0
        %1560 = vmatprep.subr.bf16.mxu0 0
        %1561 = vmatpush1.bf16.msra.mxu0 0
        %1562 = vmatprep.subr.bf16.mxu0 0
        %1563 = vmatpush1.bf16.msra.mxu0 0
        %1564 = vmatprep.subr.bf16.mxu0 0
        %1565 = vmatpush1.bf16.msra.mxu0 0
        %1566 = vmatprep.subr.bf16.mxu0 0
        %1567 = vmatpush1.bf16.msra.mxu0 0
        %1568 = vmatprep.subr.bf16.mxu0 0
        %1569 = vmatpush1.bf16.msra.mxu0 0
        %1570 = vmatprep.subr.bf16.mxu0 0
        %1571 = vmatpush1.bf16.msra.mxu0 0
        %1572 = vmatprep.subr.bf16.mxu0 0
        %1573 = vmatpush1.bf16.msra.mxu0 0
        %1574 = vmatprep.subr.bf16.mxu0 0
        %1575 = vmatpush1.bf16.msra.mxu0 0
        %1576 = vmatprep.subr.bf16.mxu0 0
        %1577 = vmatpush1.bf16.msra.mxu0 0
        %1578 = vmatprep.subr.bf16.mxu0 0
        %1579 = vmatpush1.bf16.msra.mxu0 0
        %1580 = vmatprep.subr.bf16.mxu0 0
        %1581 = vmatpush1.bf16.msra.mxu0 0
        %1582 = vmatprep.subr.bf16.mxu0 0
        %1583 = vmatpush1.bf16.msra.mxu0 0
        %1584 = vmatprep.subr.bf16.mxu0 0
        %1585 = vmatpush1.bf16.msra.mxu0 0
        %1586 = vmatprep.mubr.bf16.mxu0 0
        %1587 = vmatmul.mubr.bf16.gmra.mrb[0].mxu0 %v1537
        %v1588 = vpop.f32.mrb[0].mxu0
        %v1589 = vadd.f32 0.0, %v1588
        %v1590 = vpop.f32.mrb[0].mxu0
        %v1591 = vpop.f32.mrb[0].mxu0
        %v1592 = vadd.f32 0.0, %v1591
        %v1593 = vpop.f32.mrb[0].mxu0
        %1594 = vmatprep.mubr.bf16.mxu0 0
        %1595 = vmatmul.mubr.bf16.gmra.mrb[0].mxu0 %v1540
        %v1596 = vpop.f32.mrb[0].mxu0
        %v1597 = vadd.f32 0.0, %v1596
        %v1598 = vpop.f32.mrb[0].mxu0
        %v1599 = vpop.f32.mrb[0].mxu0
        %v1600 = vadd.f32 0.0, %v1599
        %v1601 = vpop.f32.mrb[0].mxu0
        %1602 = vmatprep.mubr.bf16.mxu0 0
        %1603 = vmatmul.mubr.bf16.gmra.mrb[0].mxu0 %v1543
        %v1604 = vpop.f32.mrb[0].mxu0
        %v1605 = vadd.f32 0.0, %v1604
        %v1606 = vpop.f32.mrb[0].mxu0
        %v1607 = vpop.f32.mrb[0].mxu0
        %v1608 = vadd.f32 0.0, %v1607
        %v1609 = vpop.f32.mrb[0].mxu0
        %1610 = vmatprep.mubr.bf16.mxu0 0
        %1611 = vmatmul.mubr.bf16.gmra.mrb[0].mxu0 %v1546
        %v1612 = vpop.f32.mrb[0].mxu0
        %v1613 = vadd.f32 0.0, %v1612
        %v1614 = vpop.f32.mrb[0].mxu0
        %v1615 = vpop.f32.mrb[0].mxu0
        %v1616 = vadd.f32 0.0, %v1615
        %v1617 = vpop.f32.mrb[0].mxu0
        %1618 = vmatprep.mubr.bf16.mxu0 0
        %1619 = vmatmul.mubr.bf16.gmra.mrb[0].mxu0 %v1549
        %v1620 = vpop.f32.mrb[0].mxu0
        %v1621 = vadd.f32 0.0, %v1620
        %v1622 = vpop.f32.mrb[0].mxu0
        %v1623 = vpop.f32.mrb[0].mxu0
        %v1624 = vadd.f32 0.0, %v1623
        %v1625 = vpop.f32.mrb[0].mxu0
        %1626 = vdwg.mxu0
        %v1627 = vadd.f32 %v1512, %v1589
        %v1628 = vadd.f32 %v1513, %v1592
        %v1629 = vadd.f32 %v1514, %v1597
        %v1630 = vadd.f32 %v1515, %v1600
        %v1631 = vadd.f32 %v1516, %v1605
        %v1632 = vadd.f32 %v1517, %v1608
        %v1633 = vadd.f32 %v1518, %v1613
        %v1634 = vadd.f32 %v1519, %v1616
        %v1635 = vadd.f32 %v1520, %v1621
        %v1636 = vadd.f32 %v1521, %v1624
        %s1637 = scalar_lea.vmem [#allocation8], 18
        %v1638 = vld [vmem:[%s1637] sm:$0x3]
        %v1649 = vunpack.c.l.b16 %v477
        %v1650 = vunpack.c.l.b16 %v478
        %v1651 = vunpack.c.l.b16 %v479
        %v1652 = vunpack.c.l.b16 %v480
        %v1653 = vunpack.c.l.b16 %v481
        %v1654 = vunpack.c.l.b16 %v482
        %v1655 = vunpack.c.l.b16 %v483
        %v1656 = vunpack.c.l.b16 %v484
        %v1657 = vunpack.c.l.b16 %v485
        %v1658 = vunpack.c.l.b16 %v486
        %v1659 = vpack.c.b16 %v1650, %v1649
        %v1660 = vpack.c.b16 %v1652, %v1651
        %v1661 = vpack.c.b16 %v1654, %v1653
        %v1662 = vpack.c.b16 %v1656, %v1655
        %v1663 = vpack.c.b16 %v1658, %v1657
        %v1665 = vsel %vm579, %v1659, 0
        %v1668 = vsel %vm579, %v1660, 0
        %v1671 = vsel %vm579, %v1661, 0
        %v1674 = vsel %vm579, %v1662, 0
        %v1677 = vsel %vm579, %v1663, 0
        %v1680 = vsel %vm595, %v1638, 0
        %1682 = vmatprep.subr.bf16.mxu0 0
        %1683 = vmatpush1.bf16.msra.mxu0 %v1680
        %1684 = vmatprep.subr.bf16.mxu0 0
        %1685 = vmatpush1.bf16.msra.mxu0 0
        %1686 = vmatprep.subr.bf16.mxu0 0
        %1687 = vmatpush1.bf16.msra.mxu0 0
        %1688 = vmatprep.subr.bf16.mxu0 0
        %1689 = vmatpush1.bf16.msra.mxu0 0
        %1690 = vmatprep.subr.bf16.mxu0 0
        %1691 = vmatpush1.bf16.msra.mxu0 0
        %1692 = vmatprep.subr.bf16.mxu0 0
        %1693 = vmatpush1.bf16.msra.mxu0 0
        %1694 = vmatprep.subr.bf16.mxu0 0
        %1695 = vmatpush1.bf16.msra.mxu0 0
        %1696 = vmatprep.subr.bf16.mxu0 0
        %1697 = vmatpush1.bf16.msra.mxu0 0
        %1698 = vmatprep.subr.bf16.mxu0 0
        %1699 = vmatpush1.bf16.msra.mxu0 0
        %1700 = vmatprep.subr.bf16.mxu0 0
        %1701 = vmatpush1.bf16.msra.mxu0 0
        %1702 = vmatprep.subr.bf16.mxu0 0
        %1703 = vmatpush1.bf16.msra.mxu0 0
        %1704 = vmatprep.subr.bf16.mxu0 0
        %1705 = vmatpush1.bf16.msra.mxu0 0
        %1706 = vmatprep.subr.bf16.mxu0 0
        %1707 = vmatpush1.bf16.msra.mxu0 0
        %1708 = vmatprep.subr.bf16.mxu0 0
        %1709 = vmatpush1.bf16.msra.mxu0 0
        %1710 = vmatprep.subr.bf16.mxu0 0
        %1711 = vmatpush1.bf16.msra.mxu0 0
        %1712 = vmatprep.subr.bf16.mxu0 0
        %1713 = vmatpush1.bf16.msra.mxu0 0
        %1714 = vmatprep.mubr.bf16.mxu0 0
        %1715 = vmatmul.mubr.bf16.gmra.mrb[0].mxu0 %v1665
        %v1716 = vpop.f32.mrb[0].mxu0
        %v1717 = vadd.f32 0.0, %v1716
        %v1718 = vpop.f32.mrb[0].mxu0
        %v1719 = vpop.f32.mrb[0].mxu0
        %v1720 = vadd.f32 0.0, %v1719
        %v1721 = vpop.f32.mrb[0].mxu0
        %1722 = vmatprep.mubr.bf16.mxu0 0
        %1723 = vmatmul.mubr.bf16.gmra.mrb[0].mxu0 %v1668
        %v1724 = vpop.f32.mrb[0].mxu0
        %v1725 = vadd.f32 0.0, %v1724
        %v1726 = vpop.f32.mrb[0].mxu0
        %v1727 = vpop.f32.mrb[0].mxu0
        %v1728 = vadd.f32 0.0, %v1727
        %v1729 = vpop.f32.mrb[0].mxu0
        %1730 = vmatprep.mubr.bf16.mxu0 0
        %1731 = vmatmul.mubr.bf16.gmra.mrb[0].mxu0 %v1671
        %v1732 = vpop.f32.mrb[0].mxu0
        %v1733 = vadd.f32 0.0, %v1732
        %v1734 = vpop.f32.mrb[0].mxu0
        %v1735 = vpop.f32.mrb[0].mxu0
        %v1736 = vadd.f32 0.0, %v1735
        %v1737 = vpop.f32.mrb[0].mxu0
        %1738 = vmatprep.mubr.bf16.mxu0 0
        %1739 = vmatmul.mubr.bf16.gmra.mrb[0].mxu0 %v1674
        %v1740 = vpop.f32.mrb[0].mxu0
        %v1741 = vadd.f32 0.0, %v1740
        %v1742 = vpop.f32.mrb[0].mxu0
        %v1743 = vpop.f32.mrb[0].mxu0
        %v1744 = vadd.f32 0.0, %v1743
        %v1745 = vpop.f32.mrb[0].mxu0
        %1746 = vmatprep.mubr.bf16.mxu0 0
        %1747 = vmatmul.mubr.bf16.gmra.mrb[0].mxu0 %v1677
        %v1748 = vpop.f32.mrb[0].mxu0
        %v1749 = vadd.f32 0.0, %v1748
        %v1750 = vpop.f32.mrb[0].mxu0
        %v1751 = vpop.f32.mrb[0].mxu0
        %v1752 = vadd.f32 0.0, %v1751
        %v1753 = vpop.f32.mrb[0].mxu0
        %1754 = vdwg.mxu0
        %v1755 = vadd.f32 %v1627, %v1717
        %v1756 = vadd.f32 %v1628, %v1720
        %v1757 = vadd.f32 %v1629, %v1725
        %v1758 = vadd.f32 %v1630, %v1728
        %v1759 = vadd.f32 %v1631, %v1733
        %v1760 = vadd.f32 %v1632, %v1736
        %v1761 = vadd.f32 %v1633, %v1741
        %v1762 = vadd.f32 %v1634, %v1744
        %v1763 = vadd.f32 %v1635, %v1749
        %v1764 = vadd.f32 %v1636, %v1752
        %s1765 = scalar_lea.vmem [#allocation8], 20
        %v1766 = vld [vmem:[%s1765] sm:$0x3]
        %v1768 = vunpack.c.l.b16 %v487
        %v1769 = vpack.c.b16 %v1768, %v1768
        %v1770 = vshrl.u32 %v1659, 16
        %v1772 = vshll.u32 %v1659, 16
        %v1774 = vrot.slane %v1772, 1
        %v1775 = vor.u32 %v1770, %v1774
        %v1776 = vshll.u32 %v1660, 16
        %v1778 = vrot.slane %v1776, 1
        %v1779 = vsel %vm534, %v1775, %v1778
        %v1780 = vshrl.u32 %v1660, 16
        %v1782 = vor.u32 %v1780, %v1778
        %v1783 = vshll.u32 %v1661, 16
        %v1785 = vrot.slane %v1783, 1
        %v1786 = vsel %vm534, %v1782, %v1785
        %v1787 = vshrl.u32 %v1661, 16
        %v1789 = vor.u32 %v1787, %v1785
        %v1790 = vshll.u32 %v1662, 16
        %v1792 = vrot.slane %v1790, 1
        %v1793 = vsel %vm534, %v1789, %v1792
        %v1794 = vshrl.u32 %v1662, 16
        %v1796 = vor.u32 %v1794, %v1792
        %v1797 = vshll.u32 %v1663, 16
        %v1799 = vrot.slane %v1797, 1
        %v1800 = vsel %vm534, %v1796, %v1799
        %v1801 = vshrl.u32 %v1663, 16
        %v1803 = vor.u32 %v1801, %v1799
        %v1805 = vshll.u32 %v1769, 16
        %v1807 = vrot.slane %v1805, 1
        %v1808 = vsel %vm534, %v1803, %v1807
        %v1810 = vsel %vm579, %v1779, 0
        %v1813 = vsel %vm579, %v1786, 0
        %v1816 = vsel %vm579, %v1793, 0
        %v1819 = vsel %vm579, %v1800, 0
        %v1822 = vsel %vm579, %v1808, 0
        %v1825 = vsel %vm595, %v1766, 0
        %1827 = vmatprep.subr.bf16.mxu0 0
        %1828 = vmatpush1.bf16.msra.mxu0 %v1825
        %1829 = vmatprep.subr.bf16.mxu0 0
        %1830 = vmatpush1.bf16.msra.mxu0 0
        %1831 = vmatprep.subr.bf16.mxu0 0
        %1832 = vmatpush1.bf16.msra.mxu0 0
        %1833 = vmatprep.subr.bf16.mxu0 0
        %1834 = vmatpush1.bf16.msra.mxu0 0
        %1835 = vmatprep.subr.bf16.mxu0 0
        %1836 = vmatpush1.bf16.msra.mxu0 0
        %1837 = vmatprep.subr.bf16.mxu0 0
        %1838 = vmatpush1.bf16.msra.mxu0 0
        %1839 = vmatprep.subr.bf16.mxu0 0
        %1840 = vmatpush1.bf16.msra.mxu0 0
        %1841 = vmatprep.subr.bf16.mxu0 0
        %1842 = vmatpush1.bf16.msra.mxu0 0
        %1843 = vmatprep.subr.bf16.mxu0 0
        %1844 = vmatpush1.bf16.msra.mxu0 0
        %1845 = vmatprep.subr.bf16.mxu0 0
        %1846 = vmatpush1.bf16.msra.mxu0 0
        %1847 = vmatprep.subr.bf16.mxu0 0
        %1848 = vmatpush1.bf16.msra.mxu0 0
        %1849 = vmatprep.subr.bf16.mxu0 0
        %1850 = vmatpush1.bf16.msra.mxu0 0
        %1851 = vmatprep.subr.bf16.mxu0 0
        %1852 = vmatpush1.bf16.msra.mxu0 0
        %1853 = vmatprep.subr.bf16.mxu0 0
        %1854 = vmatpush1.bf16.msra.mxu0 0
        %1855 = vmatprep.subr.bf16.mxu0 0
        %1856 = vmatpush1.bf16.msra.mxu0 0
        %1857 = vmatprep.subr.bf16.mxu0 0
        %1858 = vmatpush1.bf16.msra.mxu0 0
        %1859 = vmatprep.mubr.bf16.mxu0 0
        %1860 = vmatmul.mubr.bf16.gmra.mrb[0].mxu0 %v1810
        %v1861 = vpop.f32.mrb[0].mxu0
        %v1862 = vadd.f32 0.0, %v1861
        %v1863 = vpop.f32.mrb[0].mxu0
        %v1864 = vpop.f32.mrb[0].mxu0
        %v1865 = vadd.f32 0.0, %v1864
        %v1866 = vpop.f32.mrb[0].mxu0
        %1867 = vmatprep.mubr.bf16.mxu0 0
        %1868 = vmatmul.mubr.bf16.gmra.mrb[0].mxu0 %v1813
        %v1869 = vpop.f32.mrb[0].mxu0
        %v1870 = vadd.f32 0.0, %v1869
        %v1871 = vpop.f32.mrb[0].mxu0
        %v1872 = vpop.f32.mrb[0].mxu0
        %v1873 = vadd.f32 0.0, %v1872
        %v1874 = vpop.f32.mrb[0].mxu0
        %1875 = vmatprep.mubr.bf16.mxu0 0
        %1876 = vmatmul.mubr.bf16.gmra.mrb[0].mxu0 %v1816
        %v1877 = vpop.f32.mrb[0].mxu0
        %v1878 = vadd.f32 0.0, %v1877
        %v1879 = vpop.f32.mrb[0].mxu0
        %v1880 = vpop.f32.mrb[0].mxu0
        %v1881 = vadd.f32 0.0, %v1880
        %v1882 = vpop.f32.mrb[0].mxu0
        %1883 = vmatprep.mubr.bf16.mxu0 0
        %1884 = vmatmul.mubr.bf16.gmra.mrb[0].mxu0 %v1819
        %v1885 = vpop.f32.mrb[0].mxu0
        %v1886 = vadd.f32 0.0, %v1885
        %v1887 = vpop.f32.mrb[0].mxu0
        %v1888 = vpop.f32.mrb[0].mxu0
        %v1889 = vadd.f32 0.0, %v1888
        %v1890 = vpop.f32.mrb[0].mxu0
        %1891 = vmatprep.mubr.bf16.mxu0 0
        %1892 = vmatmul.mubr.bf16.gmra.mrb[0].mxu0 %v1822
        %v1893 = vpop.f32.mrb[0].mxu0
        %v1894 = vadd.f32 0.0, %v1893
        %v1895 = vpop.f32.mrb[0].mxu0
        %v1896 = vpop.f32.mrb[0].mxu0
        %v1897 = vadd.f32 0.0, %v1896
        %v1898 = vpop.f32.mrb[0].mxu0
        %1899 = vdwg.mxu0
        %v1900 = vadd.f32 %v1755, %v1862
        %v1901 = vadd.f32 %v1756, %v1865
        %v1902 = vadd.f32 %v1757, %v1870
        %v1903 = vadd.f32 %v1758, %v1873
        %v1904 = vadd.f32 %v1759, %v1878
        %v1905 = vadd.f32 %v1760, %v1881
        %v1906 = vadd.f32 %v1761, %v1886
        %v1907 = vadd.f32 %v1762, %v1889
        %v1908 = vadd.f32 %v1763, %v1894
        %v1909 = vadd.f32 %v1764, %v1897
        %s1910 = scalar_lea.vmem [#allocation8], 22
        %v1911 = vld [vmem:[%s1910] sm:$0x3]
        %v1912 = vrot.slane %v1659, 1
        %v1913 = vrot.slane %v1660, 1
        %v1914 = vsel %vm760, %v1912, %v1913
        %v1915 = vrot.slane %v1661, 1
        %v1916 = vsel %vm760, %v1913, %v1915
        %v1917 = vrot.slane %v1662, 1
        %v1918 = vsel %vm760, %v1915, %v1917
        %v1919 = vrot.slane %v1663, 1
        %v1920 = vsel %vm760, %v1917, %v1919
        %v1921 = vrot.slane %v1769, 1
        %v1922 = vsel %vm760, %v1919, %v1921
        %v1924 = vsel %vm579, %v1914, 0
        %v1927 = vsel %vm579, %v1916, 0
        %v1930 = vsel %vm579, %v1918, 0
        %v1933 = vsel %vm579, %v1920, 0
        %v1936 = vsel %vm579, %v1922, 0
        %v1939 = vsel %vm595, %v1911, 0
        %1941 = vmatprep.subr.bf16.mxu0 0
        %1942 = vmatpush1.bf16.msra.mxu0 %v1939
        %1943 = vmatprep.subr.bf16.mxu0 0
        %1944 = vmatpush1.bf16.msra.mxu0 0
        %1945 = vmatprep.subr.bf16.mxu0 0
        %1946 = vmatpush1.bf16.msra.mxu0 0
        %1947 = vmatprep.subr.bf16.mxu0 0
        %1948 = vmatpush1.bf16.msra.mxu0 0
        %1949 = vmatprep.subr.bf16.mxu0 0
        %1950 = vmatpush1.bf16.msra.mxu0 0
        %1951 = vmatprep.subr.bf16.mxu0 0
        %1952 = vmatpush1.bf16.msra.mxu0 0
        %1953 = vmatprep.subr.bf16.mxu0 0
        %1954 = vmatpush1.bf16.msra.mxu0 0
        %1955 = vmatprep.subr.bf16.mxu0 0
        %1956 = vmatpush1.bf16.msra.mxu0 0
        %1957 = vmatprep.subr.bf16.mxu0 0
        %1958 = vmatpush1.bf16.msra.mxu0 0
        %1959 = vmatprep.subr.bf16.mxu0 0
        %1960 = vmatpush1.bf16.msra.mxu0 0
        %1961 = vmatprep.subr.bf16.mxu0 0
        %1962 = vmatpush1.bf16.msra.mxu0 0
        %1963 = vmatprep.subr.bf16.mxu0 0
        %1964 = vmatpush1.bf16.msra.mxu0 0
        %1965 = vmatprep.subr.bf16.mxu0 0
        %1966 = vmatpush1.bf16.msra.mxu0 0
        %1967 = vmatprep.subr.bf16.mxu0 0
        %1968 = vmatpush1.bf16.msra.mxu0 0
        %1969 = vmatprep.subr.bf16.mxu0 0
        %1970 = vmatpush1.bf16.msra.mxu0 0
        %1971 = vmatprep.subr.bf16.mxu0 0
        %1972 = vmatpush1.bf16.msra.mxu0 0
        %1973 = vmatprep.mubr.bf16.mxu0 0
        %1974 = vmatmul.mubr.bf16.gmra.mrb[0].mxu0 %v1924
        %v1975 = vpop.f32.mrb[0].mxu0
        %v1976 = vadd.f32 0.0, %v1975
        %v1977 = vpop.f32.mrb[0].mxu0
        %v1978 = vpop.f32.mrb[0].mxu0
        %v1979 = vadd.f32 0.0, %v1978
        %v1980 = vpop.f32.mrb[0].mxu0
        %1981 = vmatprep.mubr.bf16.mxu0 0
        %1982 = vmatmul.mubr.bf16.gmra.mrb[0].mxu0 %v1927
        %v1983 = vpop.f32.mrb[0].mxu0
        %v1984 = vadd.f32 0.0, %v1983
        %v1985 = vpop.f32.mrb[0].mxu0
        %v1986 = vpop.f32.mrb[0].mxu0
        %v1987 = vadd.f32 0.0, %v1986
        %v1988 = vpop.f32.mrb[0].mxu0
        %1989 = vmatprep.mubr.bf16.mxu0 0
        %1990 = vmatmul.mubr.bf16.gmra.mrb[0].mxu0 %v1930
        %v1991 = vpop.f32.mrb[0].mxu0
        %v1992 = vadd.f32 0.0, %v1991
        %v1993 = vpop.f32.mrb[0].mxu0
        %v1994 = vpop.f32.mrb[0].mxu0
        %v1995 = vadd.f32 0.0, %v1994
        %v1996 = vpop.f32.mrb[0].mxu0
        %1997 = vmatprep.mubr.bf16.mxu0 0
        %1998 = vmatmul.mubr.bf16.gmra.mrb[0].mxu0 %v1933
        %v1999 = vpop.f32.mrb[0].mxu0
        %v2000 = vadd.f32 0.0, %v1999
        %v2001 = vpop.f32.mrb[0].mxu0
        %v2002 = vpop.f32.mrb[0].mxu0
        %v2003 = vadd.f32 0.0, %v2002
        %v2004 = vpop.f32.mrb[0].mxu0
        %2005 = vmatprep.mubr.bf16.mxu0 0
        %2006 = vmatmul.mubr.bf16.gmra.mrb[0].mxu0 %v1936
        %v2007 = vpop.f32.mrb[0].mxu0
        %v2008 = vadd.f32 0.0, %v2007
        %v2009 = vpop.f32.mrb[0].mxu0
        %v2010 = vpop.f32.mrb[0].mxu0
        %v2011 = vadd.f32 0.0, %v2010
        %v2012 = vpop.f32.mrb[0].mxu0
        %2013 = vdwg.mxu0
        %v2014 = vadd.f32 %v1900, %v1976
        %v2015 = vadd.f32 %v1901, %v1979
        %v2016 = vadd.f32 %v1902, %v1984
        %v2017 = vadd.f32 %v1903, %v1987
        %v2018 = vadd.f32 %v1904, %v1992
        %v2019 = vadd.f32 %v1905, %v1995
        %v2020 = vadd.f32 %v1906, %v2000
        %v2021 = vadd.f32 %v1907, %v2003
        %v2022 = vadd.f32 %v1908, %v2008
        %v2023 = vadd.f32 %v1909, %v2011
        %s2024 = scalar_lea.vmem [#allocation8], 24
        %v2025 = vld [vmem:[%s2024] sm:$0x3]
        %v2027 = vunpack.c.l.b16 %v488
        %v2028 = vpack.c.b16 %v1651, %v1650
        %v2029 = vpack.c.b16 %v1653, %v1652
        %v2030 = vpack.c.b16 %v1655, %v1654
        %v2031 = vpack.c.b16 %v1657, %v1656
        %v2032 = vpack.c.b16 %v1768, %v1658
        %v2033 = vpack.c.b16 %v2027, %v2027
        %v2034 = vrot.slane %v2028, 1
        %v2035 = vrot.slane %v2029, 1
        %v2036 = vsel %vm760, %v2034, %v2035
        %v2037 = vrot.slane %v2030, 1
        %v2038 = vsel %vm760, %v2035, %v2037
        %v2039 = vrot.slane %v2031, 1
        %v2040 = vsel %vm760, %v2037, %v2039
        %v2041 = vrot.slane %v2032, 1
        %v2042 = vsel %vm760, %v2039, %v2041
        %v2043 = vrot.slane %v2033, 1
        %v2044 = vsel %vm760, %v2041, %v2043
        %v2046 = vsel %vm579, %v2036, 0
        %v2049 = vsel %vm579, %v2038, 0
        %v2052 = vsel %vm579, %v2040, 0
        %v2055 = vsel %vm579, %v2042, 0
        %v2058 = vsel %vm579, %v2044, 0
        %v2061 = vsel %vm595, %v2025, 0
        %2063 = vmatprep.subr.bf16.mxu0 0
        %2064 = vmatpush1.bf16.msra.mxu0 %v2061
        %2065 = vmatprep.subr.bf16.mxu0 0
        %2066 = vmatpush1.bf16.msra.mxu0 0
        %2067 = vmatprep.subr.bf16.mxu0 0
        %2068 = vmatpush1.bf16.msra.mxu0 0
        %2069 = vmatprep.subr.bf16.mxu0 0
        %2070 = vmatpush1.bf16.msra.mxu0 0
        %2071 = vmatprep.subr.bf16.mxu0 0
        %2072 = vmatpush1.bf16.msra.mxu0 0
        %2073 = vmatprep.subr.bf16.mxu0 0
        %2074 = vmatpush1.bf16.msra.mxu0 0
        %2075 = vmatprep.subr.bf16.mxu0 0
        %2076 = vmatpush1.bf16.msra.mxu0 0
        %2077 = vmatprep.subr.bf16.mxu0 0
        %2078 = vmatpush1.bf16.msra.mxu0 0
        %2079 = vmatprep.subr.bf16.mxu0 0
        %2080 = vmatpush1.bf16.msra.mxu0 0
        %2081 = vmatprep.subr.bf16.mxu0 0
        %2082 = vmatpush1.bf16.msra.mxu0 0
        %2083 = vmatprep.subr.bf16.mxu0 0
        %2084 = vmatpush1.bf16.msra.mxu0 0
        %2085 = vmatprep.subr.bf16.mxu0 0
        %2086 = vmatpush1.bf16.msra.mxu0 0
        %2087 = vmatprep.subr.bf16.mxu0 0
        %2088 = vmatpush1.bf16.msra.mxu0 0
        %2089 = vmatprep.subr.bf16.mxu0 0
        %2090 = vmatpush1.bf16.msra.mxu0 0
        %2091 = vmatprep.subr.bf16.mxu0 0
        %2092 = vmatpush1.bf16.msra.mxu0 0
        %2093 = vmatprep.subr.bf16.mxu0 0
        %2094 = vmatpush1.bf16.msra.mxu0 0
        %2095 = vmatprep.mubr.bf16.mxu0 0
        %2096 = vmatmul.mubr.bf16.gmra.mrb[0].mxu0 %v2046
        %v2097 = vpop.f32.mrb[0].mxu0
        %v2098 = vadd.f32 0.0, %v2097
        %v2099 = vpop.f32.mrb[0].mxu0
        %v2100 = vpop.f32.mrb[0].mxu0
        %v2101 = vadd.f32 0.0, %v2100
        %v2102 = vpop.f32.mrb[0].mxu0
        %2103 = vmatprep.mubr.bf16.mxu0 0
        %2104 = vmatmul.mubr.bf16.gmra.mrb[0].mxu0 %v2049
        %v2105 = vpop.f32.mrb[0].mxu0
        %v2106 = vadd.f32 0.0, %v2105
        %v2107 = vpop.f32.mrb[0].mxu0
        %v2108 = vpop.f32.mrb[0].mxu0
        %v2109 = vadd.f32 0.0, %v2108
        %v2110 = vpop.f32.mrb[0].mxu0
        %2111 = vmatprep.mubr.bf16.mxu0 0
        %2112 = vmatmul.mubr.bf16.gmra.mrb[0].mxu0 %v2052
        %v2113 = vpop.f32.mrb[0].mxu0
        %v2114 = vadd.f32 0.0, %v2113
        %v2115 = vpop.f32.mrb[0].mxu0
        %v2116 = vpop.f32.mrb[0].mxu0
        %v2117 = vadd.f32 0.0, %v2116
        %v2118 = vpop.f32.mrb[0].mxu0
        %2119 = vmatprep.mubr.bf16.mxu0 0
        %2120 = vmatmul.mubr.bf16.gmra.mrb[0].mxu0 %v2055
        %v2121 = vpop.f32.mrb[0].mxu0
        %v2122 = vadd.f32 0.0, %v2121
        %v2123 = vpop.f32.mrb[0].mxu0
        %v2124 = vpop.f32.mrb[0].mxu0
        %v2125 = vadd.f32 0.0, %v2124
        %v2126 = vpop.f32.mrb[0].mxu0
        %2127 = vmatprep.mubr.bf16.mxu0 0
        %2128 = vmatmul.mubr.bf16.gmra.mrb[0].mxu0 %v2058
        %v2129 = vpop.f32.mrb[0].mxu0
        %v2130 = vadd.f32 0.0, %v2129
        %v2131 = vpop.f32.mrb[0].mxu0
        %v2132 = vpop.f32.mrb[0].mxu0
        %v2133 = vadd.f32 0.0, %v2132
        %v2134 = vpop.f32.mrb[0].mxu0
        %2135 = vdwg.mxu0
        %v2136 = vadd.f32 %v2014, %v2098
        %v2137 = vadd.f32 %v2015, %v2101
        %v2138 = vadd.f32 %v2016, %v2106
        %v2139 = vadd.f32 %v2017, %v2109
        %v2140 = vadd.f32 %v2018, %v2114
        %v2141 = vadd.f32 %v2019, %v2117
        %v2142 = vadd.f32 %v2020, %v2122
        %v2143 = vadd.f32 %v2021, %v2125
        %v2144 = vadd.f32 %v2022, %v2130
        %v2145 = vadd.f32 %v2023, %v2133
        %s2146 = scalar_lea.vmem [#allocation8], 26
        %v2147 = vld [vmem:[%s2146] sm:$0x3]
        %v2149 = vshrl.u32 %v2028, 16
        %v2151 = vrot.slane %v2149, 1
        %v2152 = vshll.u32 %v2028, 16
        %v2154 = vrot.slane %v2152, 2
        %v2155 = vor.u32 %v2151, %v2154
        %v2157 = vshrl.u32 %v2029, 16
        %v2159 = vrot.slane %v2157, 1
        %v2160 = vshll.u32 %v2029, 16
        %v2162 = vrot.slane %v2160, 2
        %v2163 = vor.u32 %v2159, %v2162
        %v2164 = vsel %vm997, %v2155, %v2163
        %v2166 = vshrl.u32 %v2030, 16
        %v2168 = vrot.slane %v2166, 1
        %v2169 = vshll.u32 %v2030, 16
        %v2171 = vrot.slane %v2169, 2
        %v2172 = vor.u32 %v2168, %v2171
        %v2173 = vsel %vm997, %v2163, %v2172
        %v2175 = vshrl.u32 %v2031, 16
        %v2177 = vrot.slane %v2175, 1
        %v2178 = vshll.u32 %v2031, 16
        %v2180 = vrot.slane %v2178, 2
        %v2181 = vor.u32 %v2177, %v2180
        %v2182 = vsel %vm997, %v2172, %v2181
        %v2184 = vshrl.u32 %v2032, 16
        %v2186 = vrot.slane %v2184, 1
        %v2187 = vshll.u32 %v2032, 16
        %v2189 = vrot.slane %v2187, 2
        %v2190 = vor.u32 %v2186, %v2189
        %v2191 = vsel %vm997, %v2181, %v2190
        %v2193 = vshrl.u32 %v2033, 16
        %v2195 = vrot.slane %v2193, 1
        %v2196 = vshll.u32 %v2033, 16
        %v2198 = vrot.slane %v2196, 2
        %v2199 = vor.u32 %v2195, %v2198
        %v2200 = vsel %vm997, %v2190, %v2199
        %v2202 = vsel %vm579, %v2164, 0
        %v2205 = vsel %vm579, %v2173, 0
        %v2208 = vsel %vm579, %v2182, 0
        %v2211 = vsel %vm579, %v2191, 0
        %v2214 = vsel %vm579, %v2200, 0
        %v2217 = vsel %vm595, %v2147, 0
        %2219 = vmatprep.subr.bf16.mxu0 0
        %2220 = vmatpush1.bf16.msra.mxu0 %v2217
        %2221 = vmatprep.subr.bf16.mxu0 0
        %2222 = vmatpush1.bf16.msra.mxu0 0
        %2223 = vmatprep.subr.bf16.mxu0 0
        %2224 = vmatpush1.bf16.msra.mxu0 0
        %2225 = vmatprep.subr.bf16.mxu0 0
        %2226 = vmatpush1.bf16.msra.mxu0 0
        %2227 = vmatprep.subr.bf16.mxu0 0
        %2228 = vmatpush1.bf16.msra.mxu0 0
        %2229 = vmatprep.subr.bf16.mxu0 0
        %2230 = vmatpush1.bf16.msra.mxu0 0
        %2231 = vmatprep.subr.bf16.mxu0 0
        %2232 = vmatpush1.bf16.msra.mxu0 0
        %2233 = vmatprep.subr.bf16.mxu0 0
        %2234 = vmatpush1.bf16.msra.mxu0 0
        %2235 = vmatprep.subr.bf16.mxu0 0
        %2236 = vmatpush1.bf16.msra.mxu0 0
        %2237 = vmatprep.subr.bf16.mxu0 0
        %2238 = vmatpush1.bf16.msra.mxu0 0
        %2239 = vmatprep.subr.bf16.mxu0 0
        %2240 = vmatpush1.bf16.msra.mxu0 0
        %2241 = vmatprep.subr.bf16.mxu0 0
        %2242 = vmatpush1.bf16.msra.mxu0 0
        %2243 = vmatprep.subr.bf16.mxu0 0
        %2244 = vmatpush1.bf16.msra.mxu0 0
        %2245 = vmatprep.subr.bf16.mxu0 0
        %2246 = vmatpush1.bf16.msra.mxu0 0
        %2247 = vmatprep.subr.bf16.mxu0 0
        %2248 = vmatpush1.bf16.msra.mxu0 0
        %2249 = vmatprep.subr.bf16.mxu0 0
        %2250 = vmatpush1.bf16.msra.mxu0 0
        %2251 = vmatprep.mubr.bf16.mxu0 0
        %2252 = vmatmul.mubr.bf16.gmra.mrb[0].mxu0 %v2202
        %v2253 = vpop.f32.mrb[0].mxu0
        %v2254 = vadd.f32 0.0, %v2253
        %v2255 = vpop.f32.mrb[0].mxu0
        %v2256 = vpop.f32.mrb[0].mxu0
        %v2257 = vadd.f32 0.0, %v2256
        %v2258 = vpop.f32.mrb[0].mxu0
        %2259 = vmatprep.mubr.bf16.mxu0 0
        %2260 = vmatmul.mubr.bf16.gmra.mrb[0].mxu0 %v2205
        %v2261 = vpop.f32.mrb[0].mxu0
        %v2262 = vadd.f32 0.0, %v2261
        %v2263 = vpop.f32.mrb[0].mxu0
        %v2264 = vpop.f32.mrb[0].mxu0
        %v2265 = vadd.f32 0.0, %v2264
        %v2266 = vpop.f32.mrb[0].mxu0
        %2267 = vmatprep.mubr.bf16.mxu0 0
        %2268 = vmatmul.mubr.bf16.gmra.mrb[0].mxu0 %v2208
        %v2269 = vpop.f32.mrb[0].mxu0
        %v2270 = vadd.f32 0.0, %v2269
        %v2271 = vpop.f32.mrb[0].mxu0
        %v2272 = vpop.f32.mrb[0].mxu0
        %v2273 = vadd.f32 0.0, %v2272
        %v2274 = vpop.f32.mrb[0].mxu0
        %2275 = vmatprep.mubr.bf16.mxu0 0
        %2276 = vmatmul.mubr.bf16.gmra.mrb[0].mxu0 %v2211
        %v2277 = vpop.f32.mrb[0].mxu0
        %v2278 = vadd.f32 0.0, %v2277
        %v2279 = vpop.f32.mrb[0].mxu0
        %v2280 = vpop.f32.mrb[0].mxu0
        %v2281 = vadd.f32 0.0, %v2280
        %v2282 = vpop.f32.mrb[0].mxu0
        %2283 = vmatprep.mubr.bf16.mxu0 0
        %2284 = vmatmul.mubr.bf16.gmra.mrb[0].mxu0 %v2214
        %v2285 = vpop.f32.mrb[0].mxu0
        %v2286 = vadd.f32 0.0, %v2285
        %v2287 = vpop.f32.mrb[0].mxu0
        %v2288 = vpop.f32.mrb[0].mxu0
        %v2289 = vadd.f32 0.0, %v2288
        %v2290 = vpop.f32.mrb[0].mxu0
        %2291 = vdwg.mxu0
        %v2292 = vadd.f32 %v2136, %v2254
        %v2293 = vadd.f32 %v2137, %v2257
        %v2294 = vadd.f32 %v2138, %v2262
        %v2295 = vadd.f32 %v2139, %v2265
        %v2296 = vadd.f32 %v2140, %v2270
        %v2297 = vadd.f32 %v2141, %v2273
        %v2298 = vadd.f32 %v2142, %v2278
        %v2299 = vadd.f32 %v2143, %v2281
        %v2300 = vadd.f32 %v2144, %v2286
        %v2301 = vadd.f32 %v2145, %v2289
        %s2302 = scalar_lea.vmem [#allocation8], 28
        %v2303 = vld [vmem:[%s2302] sm:$0x3]
        %v2304 = vrot.slane %v2028, 2
        %v2305 = vrot.slane %v2029, 2
        %v2306 = vsel %vm1154, %v2304, %v2305
        %v2307 = vrot.slane %v2030, 2
        %v2308 = vsel %vm1154, %v2305, %v2307
        %v2309 = vrot.slane %v2031, 2
        %v2310 = vsel %vm1154, %v2307, %v2309
        %v2311 = vrot.slane %v2032, 2
        %v2312 = vsel %vm1154, %v2309, %v2311
        %v2313 = vrot.slane %v2033, 2
        %v2314 = vsel %vm1154, %v2311, %v2313
        %v2316 = vsel %vm579, %v2306, 0
        %v2319 = vsel %vm579, %v2308, 0
        %v2322 = vsel %vm579, %v2310, 0
        %v2325 = vsel %vm579, %v2312, 0
        %v2328 = vsel %vm579, %v2314, 0
        %v2331 = vsel %vm595, %v2303, 0
        %2333 = vmatprep.subr.bf16.mxu0 0
        %2334 = vmatpush1.bf16.msra.mxu0 %v2331
        %2335 = vmatprep.subr.bf16.mxu0 0
        %2336 = vmatpush1.bf16.msra.mxu0 0
        %2337 = vmatprep.subr.bf16.mxu0 0
        %2338 = vmatpush1.bf16.msra.mxu0 0
        %2339 = vmatprep.subr.bf16.mxu0 0
        %2340 = vmatpush1.bf16.msra.mxu0 0
        %2341 = vmatprep.subr.bf16.mxu0 0
        %2342 = vmatpush1.bf16.msra.mxu0 0
        %2343 = vmatprep.subr.bf16.mxu0 0
        %2344 = vmatpush1.bf16.msra.mxu0 0
        %2345 = vmatprep.subr.bf16.mxu0 0
        %2346 = vmatpush1.bf16.msra.mxu0 0
        %2347 = vmatprep.subr.bf16.mxu0 0
        %2348 = vmatpush1.bf16.msra.mxu0 0
        %2349 = vmatprep.subr.bf16.mxu0 0
        %2350 = vmatpush1.bf16.msra.mxu0 0
        %2351 = vmatprep.subr.bf16.mxu0 0
        %2352 = vmatpush1.bf16.msra.mxu0 0
        %2353 = vmatprep.subr.bf16.mxu0 0
        %2354 = vmatpush1.bf16.msra.mxu0 0
        %2355 = vmatprep.subr.bf16.mxu0 0
        %2356 = vmatpush1.bf16.msra.mxu0 0
        %2357 = vmatprep.subr.bf16.mxu0 0
        %2358 = vmatpush1.bf16.msra.mxu0 0
        %2359 = vmatprep.subr.bf16.mxu0 0
        %2360 = vmatpush1.bf16.msra.mxu0 0
        %2361 = vmatprep.subr.bf16.mxu0 0
        %2362 = vmatpush1.bf16.msra.mxu0 0
        %2363 = vmatprep.subr.bf16.mxu0 0
        %2364 = vmatpush1.bf16.msra.mxu0 0
        %2365 = vmatprep.mubr.bf16.mxu0 0
        %2366 = vmatmul.mubr.bf16.gmra.mrb[0].mxu0 %v2316
        %v2367 = vpop.f32.mrb[0].mxu0
        %v2368 = vadd.f32 0.0, %v2367
        %v2369 = vpop.f32.mrb[0].mxu0
        %v2370 = vpop.f32.mrb[0].mxu0
        %v2371 = vadd.f32 0.0, %v2370
        %v2372 = vpop.f32.mrb[0].mxu0
        %2373 = vmatprep.mubr.bf16.mxu0 0
        %2374 = vmatmul.mubr.bf16.gmra.mrb[0].mxu0 %v2319
        %v2375 = vpop.f32.mrb[0].mxu0
        %v2376 = vadd.f32 0.0, %v2375
        %v2377 = vpop.f32.mrb[0].mxu0
        %v2378 = vpop.f32.mrb[0].mxu0
        %v2379 = vadd.f32 0.0, %v2378
        %v2380 = vpop.f32.mrb[0].mxu0
        %2381 = vmatprep.mubr.bf16.mxu0 0
        %2382 = vmatmul.mubr.bf16.gmra.mrb[0].mxu0 %v2322
        %v2383 = vpop.f32.mrb[0].mxu0
        %v2384 = vadd.f32 0.0, %v2383
        %v2385 = vpop.f32.mrb[0].mxu0
        %v2386 = vpop.f32.mrb[0].mxu0
        %v2387 = vadd.f32 0.0, %v2386
        %v2388 = vpop.f32.mrb[0].mxu0
        %2389 = vmatprep.mubr.bf16.mxu0 0
        %2390 = vmatmul.mubr.bf16.gmra.mrb[0].mxu0 %v2325
        %v2391 = vpop.f32.mrb[0].mxu0
        %v2392 = vadd.f32 0.0, %v2391
        %v2393 = vpop.f32.mrb[0].mxu0
        %v2394 = vpop.f32.mrb[0].mxu0
        %v2395 = vadd.f32 0.0, %v2394
        %v2396 = vpop.f32.mrb[0].mxu0
        %2397 = vmatprep.mubr.bf16.mxu0 0
        %2398 = vmatmul.mubr.bf16.gmra.mrb[0].mxu0 %v2328
        %v2399 = vpop.f32.mrb[0].mxu0
        %v2400 = vadd.f32 0.0, %v2399
        %v2401 = vpop.f32.mrb[0].mxu0
        %v2402 = vpop.f32.mrb[0].mxu0
        %v2403 = vadd.f32 0.0, %v2402
        %v2404 = vpop.f32.mrb[0].mxu0
        %2405 = vdwg.mxu0
        %v2406 = vadd.f32 %v2292, %v2368
        %v2407 = vadd.f32 %v2293, %v2371
        %v2408 = vadd.f32 %v2294, %v2376
        %v2409 = vadd.f32 %v2295, %v2379
        %v2410 = vadd.f32 %v2296, %v2384
        %v2411 = vadd.f32 %v2297, %v2387
        %v2412 = vadd.f32 %v2298, %v2392
        %v2413 = vadd.f32 %v2299, %v2395
        %v2414 = vadd.f32 %v2300, %v2400
        %v2415 = vadd.f32 %v2301, %v2403
        %s2416 = scalar_lea.vmem [#allocation8], 30
        %v2417 = vld [vmem:[%s2416] sm:$0x3]
        %v2419 = vunpack.c.l.b16 %v489
        %v2420 = vpack.c.b16 %v2027, %v1768
        %v2421 = vpack.c.b16 %v2419, %v2419
        %v2422 = vrot.slane %v1660, 2
        %v2423 = vrot.slane %v1661, 2
        %v2424 = vsel %vm1154, %v2422, %v2423
        %v2425 = vrot.slane %v1662, 2
        %v2426 = vsel %vm1154, %v2423, %v2425
        %v2427 = vrot.slane %v1663, 2
        %v2428 = vsel %vm1154, %v2425, %v2427
        %v2429 = vrot.slane %v2420, 2
        %v2430 = vsel %vm1154, %v2427, %v2429
        %v2431 = vrot.slane %v2421, 2
        %v2432 = vsel %vm1154, %v2429, %v2431
        %v2434 = vsel %vm579, %v2424, 0
        %v2437 = vsel %vm579, %v2426, 0
        %v2440 = vsel %vm579, %v2428, 0
        %v2443 = vsel %vm579, %v2430, 0
        %v2446 = vsel %vm579, %v2432, 0
        %v2449 = vsel %vm595, %v2417, 0
        %2451 = vmatprep.subr.bf16.mxu0 0
        %2452 = vmatpush1.bf16.msra.mxu0 %v2449
        %2453 = vmatprep.subr.bf16.mxu0 0
        %2454 = vmatpush1.bf16.msra.mxu0 0
        %2455 = vmatprep.subr.bf16.mxu0 0
        %2456 = vmatpush1.bf16.msra.mxu0 0
        %2457 = vmatprep.subr.bf16.mxu0 0
        %2458 = vmatpush1.bf16.msra.mxu0 0
        %2459 = vmatprep.subr.bf16.mxu0 0
        %2460 = vmatpush1.bf16.msra.mxu0 0
        %2461 = vmatprep.subr.bf16.mxu0 0
        %2462 = vmatpush1.bf16.msra.mxu0 0
        %2463 = vmatprep.subr.bf16.mxu0 0
        %2464 = vmatpush1.bf16.msra.mxu0 0
        %2465 = vmatprep.subr.bf16.mxu0 0
        %2466 = vmatpush1.bf16.msra.mxu0 0
        %2467 = vmatprep.subr.bf16.mxu0 0
        %2468 = vmatpush1.bf16.msra.mxu0 0
        %2469 = vmatprep.subr.bf16.mxu0 0
        %2470 = vmatpush1.bf16.msra.mxu0 0
        %2471 = vmatprep.subr.bf16.mxu0 0
        %2472 = vmatpush1.bf16.msra.mxu0 0
        %2473 = vmatprep.subr.bf16.mxu0 0
        %2474 = vmatpush1.bf16.msra.mxu0 0
        %2475 = vmatprep.subr.bf16.mxu0 0
        %2476 = vmatpush1.bf16.msra.mxu0 0
        %2477 = vmatprep.subr.bf16.mxu0 0
        %2478 = vmatpush1.bf16.msra.mxu0 0
        %2479 = vmatprep.subr.bf16.mxu0 0
        %2480 = vmatpush1.bf16.msra.mxu0 0
        %2481 = vmatprep.subr.bf16.mxu0 0
        %2482 = vmatpush1.bf16.msra.mxu0 0
        %2483 = vmatprep.mubr.bf16.mxu0 0
        %2484 = vmatmul.mubr.bf16.gmra.mrb[0].mxu0 %v2434
        %v2485 = vpop.f32.mrb[0].mxu0
        %v2486 = vadd.f32 0.0, %v2485
        %v2487 = vpop.f32.mrb[0].mxu0
        %v2488 = vpop.f32.mrb[0].mxu0
        %v2489 = vadd.f32 0.0, %v2488
        %v2490 = vpop.f32.mrb[0].mxu0
        %2491 = vmatprep.mubr.bf16.mxu0 0
        %2492 = vmatmul.mubr.bf16.gmra.mrb[0].mxu0 %v2437
        %v2493 = vpop.f32.mrb[0].mxu0
        %v2494 = vadd.f32 0.0, %v2493
        %v2495 = vpop.f32.mrb[0].mxu0
        %v2496 = vpop.f32.mrb[0].mxu0
        %v2497 = vadd.f32 0.0, %v2496
        %v2498 = vpop.f32.mrb[0].mxu0
        %2499 = vmatprep.mubr.bf16.mxu0 0
        %2500 = vmatmul.mubr.bf16.gmra.mrb[0].mxu0 %v2440
        %v2501 = vpop.f32.mrb[0].mxu0
        %v2502 = vadd.f32 0.0, %v2501
        %v2503 = vpop.f32.mrb[0].mxu0
        %v2504 = vpop.f32.mrb[0].mxu0
        %v2505 = vadd.f32 0.0, %v2504
        %v2506 = vpop.f32.mrb[0].mxu0
        %2507 = vmatprep.mubr.bf16.mxu0 0
        %2508 = vmatmul.mubr.bf16.gmra.mrb[0].mxu0 %v2443
        %v2509 = vpop.f32.mrb[0].mxu0
        %v2510 = vadd.f32 0.0, %v2509
        %v2511 = vpop.f32.mrb[0].mxu0
        %v2512 = vpop.f32.mrb[0].mxu0
        %v2513 = vadd.f32 0.0, %v2512
        %v2514 = vpop.f32.mrb[0].mxu0
        %2515 = vmatprep.mubr.bf16.mxu0 0
        %2516 = vmatmul.mubr.bf16.gmra.mrb[0].mxu0 %v2446
        %v2517 = vpop.f32.mrb[0].mxu0
        %v2518 = vadd.f32 0.0, %v2517
        %v2519 = vpop.f32.mrb[0].mxu0
        %v2520 = vpop.f32.mrb[0].mxu0
        %v2521 = vadd.f32 0.0, %v2520
        %v2522 = vpop.f32.mrb[0].mxu0
        %2523 = vdwg.mxu0
        %v2524 = vadd.f32 %v2406, %v2486
        %v2525 = vadd.f32 %v2407, %v2489
        %v2526 = vadd.f32 %v2408, %v2494
        %v2527 = vadd.f32 %v2409, %v2497
        %v2528 = vadd.f32 %v2410, %v2502
        %v2529 = vadd.f32 %v2411, %v2505
        %v2530 = vadd.f32 %v2412, %v2510
        %v2531 = vadd.f32 %v2413, %v2513
        %v2532 = vadd.f32 %v2414, %v2518
        %v2533 = vadd.f32 %v2415, %v2521
        %s2534 = scalar_lea.vmem [#allocation8], 32
        %v2535 = vld [vmem:[%s2534] sm:$0x3]
        %v2536 = vrot.slane %v1780, 2
        %v2537 = vrot.slane %v1776, 3
        %v2538 = vor.u32 %v2536, %v2537
        %v2539 = vrot.slane %v1787, 2
        %v2540 = vrot.slane %v1783, 3
        %v2541 = vor.u32 %v2539, %v2540
        %v2542 = vsel %vm1387, %v2538, %v2541
        %v2543 = vrot.slane %v1794, 2
        %v2544 = vrot.slane %v1790, 3
        %v2545 = vor.u32 %v2543, %v2544
        %v2546 = vsel %vm1387, %v2541, %v2545
        %v2547 = vrot.slane %v1801, 2
        %v2548 = vrot.slane %v1797, 3
        %v2549 = vor.u32 %v2547, %v2548
        %v2550 = vsel %vm1387, %v2545, %v2549
        %v2552 = vshrl.u32 %v2420, 16
        %v2554 = vrot.slane %v2552, 2
        %v2555 = vshll.u32 %v2420, 16
        %v2557 = vrot.slane %v2555, 3
        %v2558 = vor.u32 %v2554, %v2557
        %v2559 = vsel %vm1387, %v2549, %v2558
        %v2561 = vshrl.u32 %v2421, 16
        %v2563 = vrot.slane %v2561, 2
        %v2564 = vshll.u32 %v2421, 16
        %v2566 = vrot.slane %v2564, 3
        %v2567 = vor.u32 %v2563, %v2566
        %v2568 = vsel %vm1387, %v2558, %v2567
        %v2570 = vsel %vm579, %v2542, 0
        %v2573 = vsel %vm579, %v2546, 0
        %v2576 = vsel %vm579, %v2550, 0
        %v2579 = vsel %vm579, %v2559, 0
        %v2582 = vsel %vm579, %v2568, 0
        %v2585 = vsel %vm595, %v2535, 0
        %2587 = vmatprep.subr.bf16.mxu0 0
        %2588 = vmatpush1.bf16.msra.mxu0 %v2585
        %2589 = vmatprep.subr.bf16.mxu0 0
        %2590 = vmatpush1.bf16.msra.mxu0 0
        %2591 = vmatprep.subr.bf16.mxu0 0
        %2592 = vmatpush1.bf16.msra.mxu0 0
        %2593 = vmatprep.subr.bf16.mxu0 0
        %2594 = vmatpush1.bf16.msra.mxu0 0
        %2595 = vmatprep.subr.bf16.mxu0 0
        %2596 = vmatpush1.bf16.msra.mxu0 0
        %2597 = vmatprep.subr.bf16.mxu0 0
        %2598 = vmatpush1.bf16.msra.mxu0 0
        %2599 = vmatprep.subr.bf16.mxu0 0
        %2600 = vmatpush1.bf16.msra.mxu0 0
        %2601 = vmatprep.subr.bf16.mxu0 0
        %2602 = vmatpush1.bf16.msra.mxu0 0
        %2603 = vmatprep.subr.bf16.mxu0 0
        %2604 = vmatpush1.bf16.msra.mxu0 0
        %2605 = vmatprep.subr.bf16.mxu0 0
        %2606 = vmatpush1.bf16.msra.mxu0 0
        %2607 = vmatprep.subr.bf16.mxu0 0
        %2608 = vmatpush1.bf16.msra.mxu0 0
        %2609 = vmatprep.subr.bf16.mxu0 0
        %2610 = vmatpush1.bf16.msra.mxu0 0
        %2611 = vmatprep.subr.bf16.mxu0 0
        %2612 = vmatpush1.bf16.msra.mxu0 0
        %2613 = vmatprep.subr.bf16.mxu0 0
        %2614 = vmatpush1.bf16.msra.mxu0 0
        %2615 = vmatprep.subr.bf16.mxu0 0
        %2616 = vmatpush1.bf16.msra.mxu0 0
        %2617 = vmatprep.subr.bf16.mxu0 0
        %2618 = vmatpush1.bf16.msra.mxu0 0
        %2619 = vmatprep.mubr.bf16.mxu0 0
        %2620 = vmatmul.mubr.bf16.gmra.mrb[0].mxu0 %v2570
        %v2621 = vpop.f32.mrb[0].mxu0
        %v2622 = vadd.f32 0.0, %v2621
        %v2623 = vpop.f32.mrb[0].mxu0
        %v2624 = vpop.f32.mrb[0].mxu0
        %v2625 = vadd.f32 0.0, %v2624
        %v2626 = vpop.f32.mrb[0].mxu0
        %2627 = vmatprep.mubr.bf16.mxu0 0
        %2628 = vmatmul.mubr.bf16.gmra.mrb[0].mxu0 %v2573
        %v2629 = vpop.f32.mrb[0].mxu0
        %v2630 = vadd.f32 0.0, %v2629
        %v2631 = vpop.f32.mrb[0].mxu0
        %v2632 = vpop.f32.mrb[0].mxu0
        %v2633 = vadd.f32 0.0, %v2632
        %v2634 = vpop.f32.mrb[0].mxu0
        %2635 = vmatprep.mubr.bf16.mxu0 0
        %2636 = vmatmul.mubr.bf16.gmra.mrb[0].mxu0 %v2576
        %v2637 = vpop.f32.mrb[0].mxu0
        %v2638 = vadd.f32 0.0, %v2637
        %v2639 = vpop.f32.mrb[0].mxu0
        %v2640 = vpop.f32.mrb[0].mxu0
        %v2641 = vadd.f32 0.0, %v2640
        %v2642 = vpop.f32.mrb[0].mxu0
        %2643 = vmatprep.mubr.bf16.mxu0 0
        %2644 = vmatmul.mubr.bf16.gmra.mrb[0].mxu0 %v2579
        %v2645 = vpop.f32.mrb[0].mxu0
        %v2646 = vadd.f32 0.0, %v2645
        %v2647 = vpop.f32.mrb[0].mxu0
        %v2648 = vpop.f32.mrb[0].mxu0
        %v2649 = vadd.f32 0.0, %v2648
        %v2650 = vpop.f32.mrb[0].mxu0
        %2651 = vmatprep.mubr.bf16.mxu0 0
        %2652 = vmatmul.mubr.bf16.gmra.mrb[0].mxu0 %v2582
        %v2653 = vpop.f32.mrb[0].mxu0
        %v2654 = vadd.f32 0.0, %v2653
        %v2655 = vpop.f32.mrb[0].mxu0
        %v2656 = vpop.f32.mrb[0].mxu0
        %v2657 = vadd.f32 0.0, %v2656
        %v2658 = vpop.f32.mrb[0].mxu0
        %2659 = vdwg.mxu0
        %v2660 = vadd.f32 %v2524, %v2622
        %v2661 = vadd.f32 %v2525, %v2625
        %v2662 = vadd.f32 %v2526, %v2630
        %v2663 = vadd.f32 %v2527, %v2633
        %v2664 = vadd.f32 %v2528, %v2638
        %v2665 = vadd.f32 %v2529, %v2641
        %v2666 = vadd.f32 %v2530, %v2646
        %v2667 = vadd.f32 %v2531, %v2649
        %v2668 = vadd.f32 %v2532, %v2654
        %v2669 = vadd.f32 %v2533, %v2657
        %s2670 = scalar_lea.vmem [#allocation8], 34
        %v2671 = vld [vmem:[%s2670] sm:$0x3]
        %v2672 = vrot.slane %v1660, 3
        %v2673 = vrot.slane %v1661, 3
        %v2674 = vsel %vm1524, %v2672, %v2673
        %v2675 = vrot.slane %v1662, 3
        %v2676 = vsel %vm1524, %v2673, %v2675
        %v2677 = vrot.slane %v1663, 3
        %v2678 = vsel %vm1524, %v2675, %v2677
        %v2679 = vrot.slane %v2420, 3
        %v2680 = vsel %vm1524, %v2677, %v2679
        %v2681 = vrot.slane %v2421, 3
        %v2682 = vsel %vm1524, %v2679, %v2681
        %v2684 = vsel %vm579, %v2674, 0
        %v2687 = vsel %vm579, %v2676, 0
        %v2690 = vsel %vm579, %v2678, 0
        %v2693 = vsel %vm579, %v2680, 0
        %v2696 = vsel %vm579, %v2682, 0
        %v2699 = vsel %vm595, %v2671, 0
        %2701 = vmatprep.subr.bf16.mxu0 0
        %2702 = vmatpush1.bf16.msra.mxu0 %v2699
        %2703 = vmatprep.subr.bf16.mxu0 0
        %2704 = vmatpush1.bf16.msra.mxu0 0
        %2705 = vmatprep.subr.bf16.mxu0 0
        %2706 = vmatpush1.bf16.msra.mxu0 0
        %2707 = vmatprep.subr.bf16.mxu0 0
        %2708 = vmatpush1.bf16.msra.mxu0 0
        %2709 = vmatprep.subr.bf16.mxu0 0
        %2710 = vmatpush1.bf16.msra.mxu0 0
        %2711 = vmatprep.subr.bf16.mxu0 0
        %2712 = vmatpush1.bf16.msra.mxu0 0
        %2713 = vmatprep.subr.bf16.mxu0 0
        %2714 = vmatpush1.bf16.msra.mxu0 0
        %2715 = vmatprep.subr.bf16.mxu0 0
        %2716 = vmatpush1.bf16.msra.mxu0 0
        %2717 = vmatprep.subr.bf16.mxu0 0
        %2718 = vmatpush1.bf16.msra.mxu0 0
        %2719 = vmatprep.subr.bf16.mxu0 0
        %2720 = vmatpush1.bf16.msra.mxu0 0
        %2721 = vmatprep.subr.bf16.mxu0 0
        %2722 = vmatpush1.bf16.msra.mxu0 0
        %2723 = vmatprep.subr.bf16.mxu0 0
        %2724 = vmatpush1.bf16.msra.mxu0 0
        %2725 = vmatprep.subr.bf16.mxu0 0
        %2726 = vmatpush1.bf16.msra.mxu0 0
        %2727 = vmatprep.subr.bf16.mxu0 0
        %2728 = vmatpush1.bf16.msra.mxu0 0
        %2729 = vmatprep.subr.bf16.mxu0 0
        %2730 = vmatpush1.bf16.msra.mxu0 0
        %2731 = vmatprep.subr.bf16.mxu0 0
        %2732 = vmatpush1.bf16.msra.mxu0 0
        %2733 = vmatprep.mubr.bf16.mxu0 0
        %2734 = vmatmul.mubr.bf16.gmra.mrb[0].mxu0 %v2684
        %v2735 = vpop.f32.mrb[0].mxu0
        %v2736 = vadd.f32 0.0, %v2735
        %v2737 = vpop.f32.mrb[0].mxu0
        %v2738 = vpop.f32.mrb[0].mxu0
        %v2739 = vadd.f32 0.0, %v2738
        %v2740 = vpop.f32.mrb[0].mxu0
        %2741 = vmatprep.mubr.bf16.mxu0 0
        %2742 = vmatmul.mubr.bf16.gmra.mrb[0].mxu0 %v2687
        %v2743 = vpop.f32.mrb[0].mxu0
        %v2744 = vadd.f32 0.0, %v2743
        %v2745 = vpop.f32.mrb[0].mxu0
        %v2746 = vpop.f32.mrb[0].mxu0
        %v2747 = vadd.f32 0.0, %v2746
        %v2748 = vpop.f32.mrb[0].mxu0
        %2749 = vmatprep.mubr.bf16.mxu0 0
        %2750 = vmatmul.mubr.bf16.gmra.mrb[0].mxu0 %v2690
        %v2751 = vpop.f32.mrb[0].mxu0
        %v2752 = vadd.f32 0.0, %v2751
        %v2753 = vpop.f32.mrb[0].mxu0
        %v2754 = vpop.f32.mrb[0].mxu0
        %v2755 = vadd.f32 0.0, %v2754
        %v2756 = vpop.f32.mrb[0].mxu0
        %2757 = vmatprep.mubr.bf16.mxu0 0
        %2758 = vmatmul.mubr.bf16.gmra.mrb[0].mxu0 %v2693
        %v2759 = vpop.f32.mrb[0].mxu0
        %v2760 = vadd.f32 0.0, %v2759
        %v2761 = vpop.f32.mrb[0].mxu0
        %v2762 = vpop.f32.mrb[0].mxu0
        %v2763 = vadd.f32 0.0, %v2762
        %v2764 = vpop.f32.mrb[0].mxu0
        %2765 = vmatprep.mubr.bf16.mxu0 0
        %2766 = vmatmul.mubr.bf16.gmra.mrb[0].mxu0 %v2696
        %v2767 = vpop.f32.mrb[0].mxu0
        %v2768 = vadd.f32 0.0, %v2767
        %v2769 = vpop.f32.mrb[0].mxu0
        %v2770 = vpop.f32.mrb[0].mxu0
        %v2771 = vadd.f32 0.0, %v2770
        %v2772 = vpop.f32.mrb[0].mxu0
        %2773 = vdwg.mxu0
        %v2774 = vadd.f32 %v2660, %v2736
        %v2775 = vadd.f32 %v2661, %v2739
        %v2776 = vadd.f32 %v2662, %v2744
        %v2777 = vadd.f32 %v2663, %v2747
        %v2778 = vadd.f32 %v2664, %v2752
        %v2779 = vadd.f32 %v2665, %v2755
        %v2780 = vadd.f32 %v2666, %v2760
        %v2781 = vadd.f32 %v2667, %v2763
        %v2782 = vadd.f32 %v2668, %v2768
        %v2783 = vadd.f32 %v2669, %v2771
        %s2784 = scalar_lea.vmem [#allocation8], 36
        %v2785 = vld [vmem:[%s2784] sm:$0x3]
        %v2796 = vunpack.c.l.b16 %v490
        %v2797 = vunpack.c.l.b16 %v491
        %v2798 = vunpack.c.l.b16 %v492
        %v2799 = vunpack.c.l.b16 %v493
        %v2800 = vunpack.c.l.b16 %v494
        %v2801 = vunpack.c.l.b16 %v495
        %v2802 = vunpack.c.l.b16 %v496
        %v2803 = vunpack.c.l.b16 %v497
        %v2804 = vunpack.c.l.b16 %v498
        %v2805 = vunpack.c.l.b16 %v499
        %v2806 = vpack.c.b16 %v2797, %v2796
        %v2807 = vpack.c.b16 %v2799, %v2798
        %v2808 = vpack.c.b16 %v2801, %v2800
        %v2809 = vpack.c.b16 %v2803, %v2802
        %v2810 = vpack.c.b16 %v2805, %v2804
        %v2812 = vsel %vm579, %v2806, 0
        %v2815 = vsel %vm579, %v2807, 0
        %v2818 = vsel %vm579, %v2808, 0
        %v2821 = vsel %vm579, %v2809, 0
        %v2824 = vsel %vm579, %v2810, 0
        %v2827 = vsel %vm595, %v2785, 0
        %2829 = vmatprep.subr.bf16.mxu0 0
        %2830 = vmatpush1.bf16.msra.mxu0 %v2827
        %2831 = vmatprep.subr.bf16.mxu0 0
        %2832 = vmatpush1.bf16.msra.mxu0 0
        %2833 = vmatprep.subr.bf16.mxu0 0
        %2834 = vmatpush1.bf16.msra.mxu0 0
        %2835 = vmatprep.subr.bf16.mxu0 0
        %2836 = vmatpush1.bf16.msra.mxu0 0
        %2837 = vmatprep.subr.bf16.mxu0 0
        %2838 = vmatpush1.bf16.msra.mxu0 0
        %2839 = vmatprep.subr.bf16.mxu0 0
        %2840 = vmatpush1.bf16.msra.mxu0 0
        %2841 = vmatprep.subr.bf16.mxu0 0
        %2842 = vmatpush1.bf16.msra.mxu0 0
        %2843 = vmatprep.subr.bf16.mxu0 0
        %2844 = vmatpush1.bf16.msra.mxu0 0
        %2845 = vmatprep.subr.bf16.mxu0 0
        %2846 = vmatpush1.bf16.msra.mxu0 0
        %2847 = vmatprep.subr.bf16.mxu0 0
        %2848 = vmatpush1.bf16.msra.mxu0 0
        %2849 = vmatprep.subr.bf16.mxu0 0
        %2850 = vmatpush1.bf16.msra.mxu0 0
        %2851 = vmatprep.subr.bf16.mxu0 0
        %2852 = vmatpush1.bf16.msra.mxu0 0
        %2853 = vmatprep.subr.bf16.mxu0 0
        %2854 = vmatpush1.bf16.msra.mxu0 0
        %2855 = vmatprep.subr.bf16.mxu0 0
        %2856 = vmatpush1.bf16.msra.mxu0 0
        %2857 = vmatprep.subr.bf16.mxu0 0
        %2858 = vmatpush1.bf16.msra.mxu0 0
        %2859 = vmatprep.subr.bf16.mxu0 0
        %2860 = vmatpush1.bf16.msra.mxu0 0
        %2861 = vmatprep.mubr.bf16.mxu0 0
        %2862 = vmatmul.mubr.bf16.gmra.mrb[0].mxu0 %v2812
        %v2863 = vpop.f32.mrb[0].mxu0
        %v2864 = vadd.f32 0.0, %v2863
        %v2865 = vpop.f32.mrb[0].mxu0
        %v2866 = vpop.f32.mrb[0].mxu0
        %v2867 = vadd.f32 0.0, %v2866
        %v2868 = vpop.f32.mrb[0].mxu0
        %2869 = vmatprep.mubr.bf16.mxu0 0
        %2870 = vmatmul.mubr.bf16.gmra.mrb[0].mxu0 %v2815
        %v2871 = vpop.f32.mrb[0].mxu0
        %v2872 = vadd.f32 0.0, %v2871
        %v2873 = vpop.f32.mrb[0].mxu0
        %v2874 = vpop.f32.mrb[0].mxu0
        %v2875 = vadd.f32 0.0, %v2874
        %v2876 = vpop.f32.mrb[0].mxu0
        %2877 = vmatprep.mubr.bf16.mxu0 0
        %2878 = vmatmul.mubr.bf16.gmra.mrb[0].mxu0 %v2818
        %v2879 = vpop.f32.mrb[0].mxu0
        %v2880 = vadd.f32 0.0, %v2879
        %v2881 = vpop.f32.mrb[0].mxu0
        %v2882 = vpop.f32.mrb[0].mxu0
        %v2883 = vadd.f32 0.0, %v2882
        %v2884 = vpop.f32.mrb[0].mxu0
        %2885 = vmatprep.mubr.bf16.mxu0 0
        %2886 = vmatmul.mubr.bf16.gmra.mrb[0].mxu0 %v2821
        %v2887 = vpop.f32.mrb[0].mxu0
        %v2888 = vadd.f32 0.0, %v2887
        %v2889 = vpop.f32.mrb[0].mxu0
        %v2890 = vpop.f32.mrb[0].mxu0
        %v2891 = vadd.f32 0.0, %v2890
        %v2892 = vpop.f32.mrb[0].mxu0
        %2893 = vmatprep.mubr.bf16.mxu0 0
        %2894 = vmatmul.mubr.bf16.gmra.mrb[0].mxu0 %v2824
        %v2895 = vpop.f32.mrb[0].mxu0
        %v2896 = vadd.f32 0.0, %v2895
        %v2897 = vpop.f32.mrb[0].mxu0
        %v2898 = vpop.f32.mrb[0].mxu0
        %v2899 = vadd.f32 0.0, %v2898
        %v2900 = vpop.f32.mrb[0].mxu0
        %2901 = vdwg.mxu0
        %v2902 = vadd.f32 %v2774, %v2864
        %v2903 = vadd.f32 %v2775, %v2867
        %v2904 = vadd.f32 %v2776, %v2872
        %v2905 = vadd.f32 %v2777, %v2875
        %v2906 = vadd.f32 %v2778, %v2880
        %v2907 = vadd.f32 %v2779, %v2883
        %v2908 = vadd.f32 %v2780, %v2888
        %v2909 = vadd.f32 %v2781, %v2891
        %v2910 = vadd.f32 %v2782, %v2896
        %v2911 = vadd.f32 %v2783, %v2899
        %s2912 = scalar_lea.vmem [#allocation8], 38
        %v2913 = vld [vmem:[%s2912] sm:$0x3]
        %v2915 = vunpack.c.l.b16 %v500
        %v2916 = vpack.c.b16 %v2915, %v2915
        %v2917 = vshrl.u32 %v2806, 16
        %v2919 = vshll.u32 %v2806, 16
        %v2921 = vrot.slane %v2919, 1
        %v2922 = vor.u32 %v2917, %v2921
        %v2923 = vshll.u32 %v2807, 16
        %v2925 = vrot.slane %v2923, 1
        %v2926 = vsel %vm534, %v2922, %v2925
        %v2927 = vshrl.u32 %v2807, 16
        %v2929 = vor.u32 %v2927, %v2925
        %v2930 = vshll.u32 %v2808, 16
        %v2932 = vrot.slane %v2930, 1
        %v2933 = vsel %vm534, %v2929, %v2932
        %v2934 = vshrl.u32 %v2808, 16
        %v2936 = vor.u32 %v2934, %v2932
        %v2937 = vshll.u32 %v2809, 16
        %v2939 = vrot.slane %v2937, 1
        %v2940 = vsel %vm534, %v2936, %v2939
        %v2941 = vshrl.u32 %v2809, 16
        %v2943 = vor.u32 %v2941, %v2939
        %v2944 = vshll.u32 %v2810, 16
        %v2946 = vrot.slane %v2944, 1
        %v2947 = vsel %vm534, %v2943, %v2946
        %v2948 = vshrl.u32 %v2810, 16
        %v2950 = vor.u32 %v2948, %v2946
        %v2952 = vshll.u32 %v2916, 16
        %v2954 = vrot.slane %v2952, 1
        %v2955 = vsel %vm534, %v2950, %v2954
        %v2957 = vsel %vm579, %v2926, 0
        %v2960 = vsel %vm579, %v2933, 0
        %v2963 = vsel %vm579, %v2940, 0
        %v2966 = vsel %vm579, %v2947, 0
        %v2969 = vsel %vm579, %v2955, 0
        %v2972 = vsel %vm595, %v2913, 0
        %2974 = vmatprep.subr.bf16.mxu0 0
        %2975 = vmatpush1.bf16.msra.mxu0 %v2972
        %2976 = vmatprep.subr.bf16.mxu0 0
        %2977 = vmatpush1.bf16.msra.mxu0 0
        %2978 = vmatprep.subr.bf16.mxu0 0
        %2979 = vmatpush1.bf16.msra.mxu0 0
        %2980 = vmatprep.subr.bf16.mxu0 0
        %2981 = vmatpush1.bf16.msra.mxu0 0
        %2982 = vmatprep.subr.bf16.mxu0 0
        %2983 = vmatpush1.bf16.msra.mxu0 0
        %2984 = vmatprep.subr.bf16.mxu0 0
        %2985 = vmatpush1.bf16.msra.mxu0 0
        %2986 = vmatprep.subr.bf16.mxu0 0
        %2987 = vmatpush1.bf16.msra.mxu0 0
        %2988 = vmatprep.subr.bf16.mxu0 0
        %2989 = vmatpush1.bf16.msra.mxu0 0
        %2990 = vmatprep.subr.bf16.mxu0 0
        %2991 = vmatpush1.bf16.msra.mxu0 0
        %2992 = vmatprep.subr.bf16.mxu0 0
        %2993 = vmatpush1.bf16.msra.mxu0 0
        %2994 = vmatprep.subr.bf16.mxu0 0
        %2995 = vmatpush1.bf16.msra.mxu0 0
        %2996 = vmatprep.subr.bf16.mxu0 0
        %2997 = vmatpush1.bf16.msra.mxu0 0
        %2998 = vmatprep.subr.bf16.mxu0 0
        %2999 = vmatpush1.bf16.msra.mxu0 0
        %3000 = vmatprep.subr.bf16.mxu0 0
        %3001 = vmatpush1.bf16.msra.mxu0 0
        %3002 = vmatprep.subr.bf16.mxu0 0
        %3003 = vmatpush1.bf16.msra.mxu0 0
        %3004 = vmatprep.subr.bf16.mxu0 0
        %3005 = vmatpush1.bf16.msra.mxu0 0
        %3006 = vmatprep.mubr.bf16.mxu0 0
        %3007 = vmatmul.mubr.bf16.gmra.mrb[0].mxu0 %v2957
        %v3008 = vpop.f32.mrb[0].mxu0
        %v3009 = vadd.f32 0.0, %v3008
        %v3010 = vpop.f32.mrb[0].mxu0
        %v3011 = vpop.f32.mrb[0].mxu0
        %v3012 = vadd.f32 0.0, %v3011
        %v3013 = vpop.f32.mrb[0].mxu0
        %3014 = vmatprep.mubr.bf16.mxu0 0
        %3015 = vmatmul.mubr.bf16.gmra.mrb[0].mxu0 %v2960
        %v3016 = vpop.f32.mrb[0].mxu0
        %v3017 = vadd.f32 0.0, %v3016
        %v3018 = vpop.f32.mrb[0].mxu0
        %v3019 = vpop.f32.mrb[0].mxu0
        %v3020 = vadd.f32 0.0, %v3019
        %v3021 = vpop.f32.mrb[0].mxu0
        %3022 = vmatprep.mubr.bf16.mxu0 0
        %3023 = vmatmul.mubr.bf16.gmra.mrb[0].mxu0 %v2963
        %v3024 = vpop.f32.mrb[0].mxu0
        %v3025 = vadd.f32 0.0, %v3024
        %v3026 = vpop.f32.mrb[0].mxu0
        %v3027 = vpop.f32.mrb[0].mxu0
        %v3028 = vadd.f32 0.0, %v3027
        %v3029 = vpop.f32.mrb[0].mxu0
        %3030 = vmatprep.mubr.bf16.mxu0 0
        %3031 = vmatmul.mubr.bf16.gmra.mrb[0].mxu0 %v2966
        %v3032 = vpop.f32.mrb[0].mxu0
        %v3033 = vadd.f32 0.0, %v3032
        %v3034 = vpop.f32.mrb[0].mxu0
        %v3035 = vpop.f32.mrb[0].mxu0
        %v3036 = vadd.f32 0.0, %v3035
        %v3037 = vpop.f32.mrb[0].mxu0
        %3038 = vmatprep.mubr.bf16.mxu0 0
        %3039 = vmatmul.mubr.bf16.gmra.mrb[0].mxu0 %v2969
        %v3040 = vpop.f32.mrb[0].mxu0
        %v3041 = vadd.f32 0.0, %v3040
        %v3042 = vpop.f32.mrb[0].mxu0
        %v3043 = vpop.f32.mrb[0].mxu0
        %v3044 = vadd.f32 0.0, %v3043
        %v3045 = vpop.f32.mrb[0].mxu0
        %3046 = vdwg.mxu0
        %v3047 = vadd.f32 %v2902, %v3009
        %v3048 = vadd.f32 %v2903, %v3012
        %v3049 = vadd.f32 %v2904, %v3017
        %v3050 = vadd.f32 %v2905, %v3020
        %v3051 = vadd.f32 %v2906, %v3025
        %v3052 = vadd.f32 %v2907, %v3028
        %v3053 = vadd.f32 %v2908, %v3033
        %v3054 = vadd.f32 %v2909, %v3036
        %v3055 = vadd.f32 %v2910, %v3041
        %v3056 = vadd.f32 %v2911, %v3044
        %s3057 = scalar_lea.vmem [#allocation8], 40
        %v3058 = vld [vmem:[%s3057] sm:$0x3]
        %v3059 = vrot.slane %v2806, 1
        %v3060 = vrot.slane %v2807, 1
        %v3061 = vsel %vm760, %v3059, %v3060
        %v3062 = vrot.slane %v2808, 1
        %v3063 = vsel %vm760, %v3060, %v3062
        %v3064 = vrot.slane %v2809, 1
        %v3065 = vsel %vm760, %v3062, %v3064
        %v3066 = vrot.slane %v2810, 1
        %v3067 = vsel %vm760, %v3064, %v3066
        %v3068 = vrot.slane %v2916, 1
        %v3069 = vsel %vm760, %v3066, %v3068
        %v3071 = vsel %vm579, %v3061, 0
        %v3074 = vsel %vm579, %v3063, 0
        %v3077 = vsel %vm579, %v3065, 0
        %v3080 = vsel %vm579, %v3067, 0
        %v3083 = vsel %vm579, %v3069, 0
        %v3086 = vsel %vm595, %v3058, 0
        %3088 = vmatprep.subr.bf16.mxu0 0
        %3089 = vmatpush1.bf16.msra.mxu0 %v3086
        %3090 = vmatprep.subr.bf16.mxu0 0
        %3091 = vmatpush1.bf16.msra.mxu0 0
        %3092 = vmatprep.subr.bf16.mxu0 0
        %3093 = vmatpush1.bf16.msra.mxu0 0
        %3094 = vmatprep.subr.bf16.mxu0 0
        %3095 = vmatpush1.bf16.msra.mxu0 0
        %3096 = vmatprep.subr.bf16.mxu0 0
        %3097 = vmatpush1.bf16.msra.mxu0 0
        %3098 = vmatprep.subr.bf16.mxu0 0
        %3099 = vmatpush1.bf16.msra.mxu0 0
        %3100 = vmatprep.subr.bf16.mxu0 0
        %3101 = vmatpush1.bf16.msra.mxu0 0
        %3102 = vmatprep.subr.bf16.mxu0 0
        %3103 = vmatpush1.bf16.msra.mxu0 0
        %3104 = vmatprep.subr.bf16.mxu0 0
        %3105 = vmatpush1.bf16.msra.mxu0 0
        %3106 = vmatprep.subr.bf16.mxu0 0
        %3107 = vmatpush1.bf16.msra.mxu0 0
        %3108 = vmatprep.subr.bf16.mxu0 0
        %3109 = vmatpush1.bf16.msra.mxu0 0
        %3110 = vmatprep.subr.bf16.mxu0 0
        %3111 = vmatpush1.bf16.msra.mxu0 0
        %3112 = vmatprep.subr.bf16.mxu0 0
        %3113 = vmatpush1.bf16.msra.mxu0 0
        %3114 = vmatprep.subr.bf16.mxu0 0
        %3115 = vmatpush1.bf16.msra.mxu0 0
        %3116 = vmatprep.subr.bf16.mxu0 0
        %3117 = vmatpush1.bf16.msra.mxu0 0
        %3118 = vmatprep.subr.bf16.mxu0 0
        %3119 = vmatpush1.bf16.msra.mxu0 0
        %3120 = vmatprep.mubr.bf16.mxu0 0
        %3121 = vmatmul.mubr.bf16.gmra.mrb[0].mxu0 %v3071
        %v3122 = vpop.f32.mrb[0].mxu0
        %v3123 = vadd.f32 0.0, %v3122
        %v3124 = vpop.f32.mrb[0].mxu0
        %v3125 = vpop.f32.mrb[0].mxu0
        %v3126 = vadd.f32 0.0, %v3125
        %v3127 = vpop.f32.mrb[0].mxu0
        %3128 = vmatprep.mubr.bf16.mxu0 0
        %3129 = vmatmul.mubr.bf16.gmra.mrb[0].mxu0 %v3074
        %v3130 = vpop.f32.mrb[0].mxu0
        %v3131 = vadd.f32 0.0, %v3130
        %v3132 = vpop.f32.mrb[0].mxu0
        %v3133 = vpop.f32.mrb[0].mxu0
        %v3134 = vadd.f32 0.0, %v3133
        %v3135 = vpop.f32.mrb[0].mxu0
        %3136 = vmatprep.mubr.bf16.mxu0 0
        %3137 = vmatmul.mubr.bf16.gmra.mrb[0].mxu0 %v3077
        %v3138 = vpop.f32.mrb[0].mxu0
        %v3139 = vadd.f32 0.0, %v3138
        %v3140 = vpop.f32.mrb[0].mxu0
        %v3141 = vpop.f32.mrb[0].mxu0
        %v3142 = vadd.f32 0.0, %v3141
        %v3143 = vpop.f32.mrb[0].mxu0
        %3144 = vmatprep.mubr.bf16.mxu0 0
        %3145 = vmatmul.mubr.bf16.gmra.mrb[0].mxu0 %v3080
        %v3146 = vpop.f32.mrb[0].mxu0
        %v3147 = vadd.f32 0.0, %v3146
        %v3148 = vpop.f32.mrb[0].mxu0
        %v3149 = vpop.f32.mrb[0].mxu0
        %v3150 = vadd.f32 0.0, %v3149
        %v3151 = vpop.f32.mrb[0].mxu0
        %3152 = vmatprep.mubr.bf16.mxu0 0
        %3153 = vmatmul.mubr.bf16.gmra.mrb[0].mxu0 %v3083
        %v3154 = vpop.f32.mrb[0].mxu0
        %v3155 = vadd.f32 0.0, %v3154
        %v3156 = vpop.f32.mrb[0].mxu0
        %v3157 = vpop.f32.mrb[0].mxu0
        %v3158 = vadd.f32 0.0, %v3157
        %v3159 = vpop.f32.mrb[0].mxu0
        %3160 = vdwg.mxu0
        %v3161 = vadd.f32 %v3047, %v3123
        %v3162 = vadd.f32 %v3048, %v3126
        %v3163 = vadd.f32 %v3049, %v3131
        %v3164 = vadd.f32 %v3050, %v3134
        %v3165 = vadd.f32 %v3051, %v3139
        %v3166 = vadd.f32 %v3052, %v3142
        %v3167 = vadd.f32 %v3053, %v3147
        %v3168 = vadd.f32 %v3054, %v3150
        %v3169 = vadd.f32 %v3055, %v3155
        %v3170 = vadd.f32 %v3056, %v3158
        %s3171 = scalar_lea.vmem [#allocation8], 42
        %v3172 = vld [vmem:[%s3171] sm:$0x3]
        %v3174 = vunpack.c.l.b16 %v501
        %v3175 = vpack.c.b16 %v2798, %v2797
        %v3176 = vpack.c.b16 %v2800, %v2799
        %v3177 = vpack.c.b16 %v2802, %v2801
        %v3178 = vpack.c.b16 %v2804, %v2803
        %v3179 = vpack.c.b16 %v2915, %v2805
        %v3180 = vpack.c.b16 %v3174, %v3174
        %v3181 = vrot.slane %v3175, 1
        %v3182 = vrot.slane %v3176, 1
        %v3183 = vsel %vm760, %v3181, %v3182
        %v3184 = vrot.slane %v3177, 1
        %v3185 = vsel %vm760, %v3182, %v3184
        %v3186 = vrot.slane %v3178, 1
        %v3187 = vsel %vm760, %v3184, %v3186
        %v3188 = vrot.slane %v3179, 1
        %v3189 = vsel %vm760, %v3186, %v3188
        %v3190 = vrot.slane %v3180, 1
        %v3191 = vsel %vm760, %v3188, %v3190
        %v3193 = vsel %vm579, %v3183, 0
        %v3196 = vsel %vm579, %v3185, 0
        %v3199 = vsel %vm579, %v3187, 0
        %v3202 = vsel %vm579, %v3189, 0
        %v3205 = vsel %vm579, %v3191, 0
        %v3208 = vsel %vm595, %v3172, 0
        %3210 = vmatprep.subr.bf16.mxu0 0
        %3211 = vmatpush1.bf16.msra.mxu0 %v3208
        %3212 = vmatprep.subr.bf16.mxu0 0
        %3213 = vmatpush1.bf16.msra.mxu0 0
        %3214 = vmatprep.subr.bf16.mxu0 0
        %3215 = vmatpush1.bf16.msra.mxu0 0
        %3216 = vmatprep.subr.bf16.mxu0 0
        %3217 = vmatpush1.bf16.msra.mxu0 0
        %3218 = vmatprep.subr.bf16.mxu0 0
        %3219 = vmatpush1.bf16.msra.mxu0 0
        %3220 = vmatprep.subr.bf16.mxu0 0
        %3221 = vmatpush1.bf16.msra.mxu0 0
        %3222 = vmatprep.subr.bf16.mxu0 0
        %3223 = vmatpush1.bf16.msra.mxu0 0
        %3224 = vmatprep.subr.bf16.mxu0 0
        %3225 = vmatpush1.bf16.msra.mxu0 0
        %3226 = vmatprep.subr.bf16.mxu0 0
        %3227 = vmatpush1.bf16.msra.mxu0 0
        %3228 = vmatprep.subr.bf16.mxu0 0
        %3229 = vmatpush1.bf16.msra.mxu0 0
        %3230 = vmatprep.subr.bf16.mxu0 0
        %3231 = vmatpush1.bf16.msra.mxu0 0
        %3232 = vmatprep.subr.bf16.mxu0 0
        %3233 = vmatpush1.bf16.msra.mxu0 0
        %3234 = vmatprep.subr.bf16.mxu0 0
        %3235 = vmatpush1.bf16.msra.mxu0 0
        %3236 = vmatprep.subr.bf16.mxu0 0
        %3237 = vmatpush1.bf16.msra.mxu0 0
        %3238 = vmatprep.subr.bf16.mxu0 0
        %3239 = vmatpush1.bf16.msra.mxu0 0
        %3240 = vmatprep.subr.bf16.mxu0 0
        %3241 = vmatpush1.bf16.msra.mxu0 0
        %3242 = vmatprep.mubr.bf16.mxu0 0
        %3243 = vmatmul.mubr.bf16.gmra.mrb[0].mxu0 %v3193
        %v3244 = vpop.f32.mrb[0].mxu0
        %v3245 = vadd.f32 0.0, %v3244
        %v3246 = vpop.f32.mrb[0].mxu0
        %v3247 = vpop.f32.mrb[0].mxu0
        %v3248 = vadd.f32 0.0, %v3247
        %v3249 = vpop.f32.mrb[0].mxu0
        %3250 = vmatprep.mubr.bf16.mxu0 0
        %3251 = vmatmul.mubr.bf16.gmra.mrb[0].mxu0 %v3196
        %v3252 = vpop.f32.mrb[0].mxu0
        %v3253 = vadd.f32 0.0, %v3252
        %v3254 = vpop.f32.mrb[0].mxu0
        %v3255 = vpop.f32.mrb[0].mxu0
        %v3256 = vadd.f32 0.0, %v3255
        %v3257 = vpop.f32.mrb[0].mxu0
        %3258 = vmatprep.mubr.bf16.mxu0 0
        %3259 = vmatmul.mubr.bf16.gmra.mrb[0].mxu0 %v3199
        %v3260 = vpop.f32.mrb[0].mxu0
        %v3261 = vadd.f32 0.0, %v3260
        %v3262 = vpop.f32.mrb[0].mxu0
        %v3263 = vpop.f32.mrb[0].mxu0
        %v3264 = vadd.f32 0.0, %v3263
        %v3265 = vpop.f32.mrb[0].mxu0
        %3266 = vmatprep.mubr.bf16.mxu0 0
        %3267 = vmatmul.mubr.bf16.gmra.mrb[0].mxu0 %v3202
        %v3268 = vpop.f32.mrb[0].mxu0
        %v3269 = vadd.f32 0.0, %v3268
        %v3270 = vpop.f32.mrb[0].mxu0
        %v3271 = vpop.f32.mrb[0].mxu0
        %v3272 = vadd.f32 0.0, %v3271
        %v3273 = vpop.f32.mrb[0].mxu0
        %3274 = vmatprep.mubr.bf16.mxu0 0
        %3275 = vmatmul.mubr.bf16.gmra.mrb[0].mxu0 %v3205
        %v3276 = vpop.f32.mrb[0].mxu0
        %v3277 = vadd.f32 0.0, %v3276
        %v3278 = vpop.f32.mrb[0].mxu0
        %v3279 = vpop.f32.mrb[0].mxu0
        %v3280 = vadd.f32 0.0, %v3279
        %v3281 = vpop.f32.mrb[0].mxu0
        %3282 = vdwg.mxu0
        %v3283 = vadd.f32 %v3161, %v3245
        %v3284 = vadd.f32 %v3162, %v3248
        %v3285 = vadd.f32 %v3163, %v3253
        %v3286 = vadd.f32 %v3164, %v3256
        %v3287 = vadd.f32 %v3165, %v3261
        %v3288 = vadd.f32 %v3166, %v3264
        %v3289 = vadd.f32 %v3167, %v3269
        %v3290 = vadd.f32 %v3168, %v3272
        %v3291 = vadd.f32 %v3169, %v3277
        %v3292 = vadd.f32 %v3170, %v3280
        %s3293 = scalar_lea.vmem [#allocation8], 44
        %v3294 = vld [vmem:[%s3293] sm:$0x3]
        %v3296 = vshrl.u32 %v3175, 16
        %v3298 = vrot.slane %v3296, 1
        %v3299 = vshll.u32 %v3175, 16
        %v3301 = vrot.slane %v3299, 2
        %v3302 = vor.u32 %v3298, %v3301
        %v3304 = vshrl.u32 %v3176, 16
        %v3306 = vrot.slane %v3304, 1
        %v3307 = vshll.u32 %v3176, 16
        %v3309 = vrot.slane %v3307, 2
        %v3310 = vor.u32 %v3306, %v3309
        %v3311 = vsel %vm997, %v3302, %v3310
        %v3313 = vshrl.u32 %v3177, 16
        %v3315 = vrot.slane %v3313, 1
        %v3316 = vshll.u32 %v3177, 16
        %v3318 = vrot.slane %v3316, 2
        %v3319 = vor.u32 %v3315, %v3318
        %v3320 = vsel %vm997, %v3310, %v3319
        %v3322 = vshrl.u32 %v3178, 16
        %v3324 = vrot.slane %v3322, 1
        %v3325 = vshll.u32 %v3178, 16
        %v3327 = vrot.slane %v3325, 2
        %v3328 = vor.u32 %v3324, %v3327
        %v3329 = vsel %vm997, %v3319, %v3328
        %v3331 = vshrl.u32 %v3179, 16
        %v3333 = vrot.slane %v3331, 1
        %v3334 = vshll.u32 %v3179, 16
        %v3336 = vrot.slane %v3334, 2
        %v3337 = vor.u32 %v3333, %v3336
        %v3338 = vsel %vm997, %v3328, %v3337
        %v3340 = vshrl.u32 %v3180, 16
        %v3342 = vrot.slane %v3340, 1
        %v3343 = vshll.u32 %v3180, 16
        %v3345 = vrot.slane %v3343, 2
        %v3346 = vor.u32 %v3342, %v3345
        %v3347 = vsel %vm997, %v3337, %v3346
        %v3349 = vsel %vm579, %v3311, 0
        %v3352 = vsel %vm579, %v3320, 0
        %v3355 = vsel %vm579, %v3329, 0
        %v3358 = vsel %vm579, %v3338, 0
        %v3361 = vsel %vm579, %v3347, 0
        %v3364 = vsel %vm595, %v3294, 0
        %3366 = vmatprep.subr.bf16.mxu0 0
        %3367 = vmatpush1.bf16.msra.mxu0 %v3364
        %3368 = vmatprep.subr.bf16.mxu0 0
        %3369 = vmatpush1.bf16.msra.mxu0 0
        %3370 = vmatprep.subr.bf16.mxu0 0
        %3371 = vmatpush1.bf16.msra.mxu0 0
        %3372 = vmatprep.subr.bf16.mxu0 0
        %3373 = vmatpush1.bf16.msra.mxu0 0
        %3374 = vmatprep.subr.bf16.mxu0 0
        %3375 = vmatpush1.bf16.msra.mxu0 0
        %3376 = vmatprep.subr.bf16.mxu0 0
        %3377 = vmatpush1.bf16.msra.mxu0 0
        %3378 = vmatprep.subr.bf16.mxu0 0
        %3379 = vmatpush1.bf16.msra.mxu0 0
        %3380 = vmatprep.subr.bf16.mxu0 0
        %3381 = vmatpush1.bf16.msra.mxu0 0
        %3382 = vmatprep.subr.bf16.mxu0 0
        %3383 = vmatpush1.bf16.msra.mxu0 0
        %3384 = vmatprep.subr.bf16.mxu0 0
        %3385 = vmatpush1.bf16.msra.mxu0 0
        %3386 = vmatprep.subr.bf16.mxu0 0
        %3387 = vmatpush1.bf16.msra.mxu0 0
        %3388 = vmatprep.subr.bf16.mxu0 0
        %3389 = vmatpush1.bf16.msra.mxu0 0
        %3390 = vmatprep.subr.bf16.mxu0 0
        %3391 = vmatpush1.bf16.msra.mxu0 0
        %3392 = vmatprep.subr.bf16.mxu0 0
        %3393 = vmatpush1.bf16.msra.mxu0 0
        %3394 = vmatprep.subr.bf16.mxu0 0
        %3395 = vmatpush1.bf16.msra.mxu0 0
        %3396 = vmatprep.subr.bf16.mxu0 0
        %3397 = vmatpush1.bf16.msra.mxu0 0
        %3398 = vmatprep.mubr.bf16.mxu0 0
        %3399 = vmatmul.mubr.bf16.gmra.mrb[0].mxu0 %v3349
        %v3400 = vpop.f32.mrb[0].mxu0
        %v3401 = vadd.f32 0.0, %v3400
        %v3402 = vpop.f32.mrb[0].mxu0
        %v3403 = vpop.f32.mrb[0].mxu0
        %v3404 = vadd.f32 0.0, %v3403
        %v3405 = vpop.f32.mrb[0].mxu0
        %3406 = vmatprep.mubr.bf16.mxu0 0
        %3407 = vmatmul.mubr.bf16.gmra.mrb[0].mxu0 %v3352
        %v3408 = vpop.f32.mrb[0].mxu0
        %v3409 = vadd.f32 0.0, %v3408
        %v3410 = vpop.f32.mrb[0].mxu0
        %v3411 = vpop.f32.mrb[0].mxu0
        %v3412 = vadd.f32 0.0, %v3411
        %v3413 = vpop.f32.mrb[0].mxu0
        %3414 = vmatprep.mubr.bf16.mxu0 0
        %3415 = vmatmul.mubr.bf16.gmra.mrb[0].mxu0 %v3355
        %v3416 = vpop.f32.mrb[0].mxu0
        %v3417 = vadd.f32 0.0, %v3416
        %v3418 = vpop.f32.mrb[0].mxu0
        %v3419 = vpop.f32.mrb[0].mxu0
        %v3420 = vadd.f32 0.0, %v3419
        %v3421 = vpop.f32.mrb[0].mxu0
        %3422 = vmatprep.mubr.bf16.mxu0 0
        %3423 = vmatmul.mubr.bf16.gmra.mrb[0].mxu0 %v3358
        %v3424 = vpop.f32.mrb[0].mxu0
        %v3425 = vadd.f32 0.0, %v3424
        %v3426 = vpop.f32.mrb[0].mxu0
        %v3427 = vpop.f32.mrb[0].mxu0
        %v3428 = vadd.f32 0.0, %v3427
        %v3429 = vpop.f32.mrb[0].mxu0
        %3430 = vmatprep.mubr.bf16.mxu0 0
        %3431 = vmatmul.mubr.bf16.gmra.mrb[0].mxu0 %v3361
        %v3432 = vpop.f32.mrb[0].mxu0
        %v3433 = vadd.f32 0.0, %v3432
        %v3434 = vpop.f32.mrb[0].mxu0
        %v3435 = vpop.f32.mrb[0].mxu0
        %v3436 = vadd.f32 0.0, %v3435
        %v3437 = vpop.f32.mrb[0].mxu0
        %3438 = vdwg.mxu0
        %v3439 = vadd.f32 %v3283, %v3401
        %v3440 = vadd.f32 %v3284, %v3404
        %v3441 = vadd.f32 %v3285, %v3409
        %v3442 = vadd.f32 %v3286, %v3412
        %v3443 = vadd.f32 %v3287, %v3417
        %v3444 = vadd.f32 %v3288, %v3420
        %v3445 = vadd.f32 %v3289, %v3425
        %v3446 = vadd.f32 %v3290, %v3428
        %v3447 = vadd.f32 %v3291, %v3433
        %v3448 = vadd.f32 %v3292, %v3436
        %s3449 = scalar_lea.vmem [#allocation8], 46
        %v3450 = vld [vmem:[%s3449] sm:$0x3]
        %v3451 = vrot.slane %v3175, 2
        %v3452 = vrot.slane %v3176, 2
        %v3453 = vsel %vm1154, %v3451, %v3452
        %v3454 = vrot.slane %v3177, 2
        %v3455 = vsel %vm1154, %v3452, %v3454
        %v3456 = vrot.slane %v3178, 2
        %v3457 = vsel %vm1154, %v3454, %v3456
        %v3458 = vrot.slane %v3179, 2
        %v3459 = vsel %vm1154, %v3456, %v3458
        %v3460 = vrot.slane %v3180, 2
        %v3461 = vsel %vm1154, %v3458, %v3460
        %v3463 = vsel %vm579, %v3453, 0
        %v3466 = vsel %vm579, %v3455, 0
        %v3469 = vsel %vm579, %v3457, 0
        %v3472 = vsel %vm579, %v3459, 0
        %v3475 = vsel %vm579, %v3461, 0
        %v3478 = vsel %vm595, %v3450, 0
        %3480 = vmatprep.subr.bf16.mxu0 0
        %3481 = vmatpush1.bf16.msra.mxu0 %v3478
        %3482 = vmatprep.subr.bf16.mxu0 0
        %3483 = vmatpush1.bf16.msra.mxu0 0
        %3484 = vmatprep.subr.bf16.mxu0 0
        %3485 = vmatpush1.bf16.msra.mxu0 0
        %3486 = vmatprep.subr.bf16.mxu0 0
        %3487 = vmatpush1.bf16.msra.mxu0 0
        %3488 = vmatprep.subr.bf16.mxu0 0
        %3489 = vmatpush1.bf16.msra.mxu0 0
        %3490 = vmatprep.subr.bf16.mxu0 0
        %3491 = vmatpush1.bf16.msra.mxu0 0
        %3492 = vmatprep.subr.bf16.mxu0 0
        %3493 = vmatpush1.bf16.msra.mxu0 0
        %3494 = vmatprep.subr.bf16.mxu0 0
        %3495 = vmatpush1.bf16.msra.mxu0 0
        %3496 = vmatprep.subr.bf16.mxu0 0
        %3497 = vmatpush1.bf16.msra.mxu0 0
        %3498 = vmatprep.subr.bf16.mxu0 0
        %3499 = vmatpush1.bf16.msra.mxu0 0
        %3500 = vmatprep.subr.bf16.mxu0 0
        %3501 = vmatpush1.bf16.msra.mxu0 0
        %3502 = vmatprep.subr.bf16.mxu0 0
        %3503 = vmatpush1.bf16.msra.mxu0 0
        %3504 = vmatprep.subr.bf16.mxu0 0
        %3505 = vmatpush1.bf16.msra.mxu0 0
        %3506 = vmatprep.subr.bf16.mxu0 0
        %3507 = vmatpush1.bf16.msra.mxu0 0
        %3508 = vmatprep.subr.bf16.mxu0 0
        %3509 = vmatpush1.bf16.msra.mxu0 0
        %3510 = vmatprep.subr.bf16.mxu0 0
        %3511 = vmatpush1.bf16.msra.mxu0 0
        %3512 = vmatprep.mubr.bf16.mxu0 0
        %3513 = vmatmul.mubr.bf16.gmra.mrb[0].mxu0 %v3463
        %v3514 = vpop.f32.mrb[0].mxu0
        %v3515 = vadd.f32 0.0, %v3514
        %v3516 = vpop.f32.mrb[0].mxu0
        %v3517 = vpop.f32.mrb[0].mxu0
        %v3518 = vadd.f32 0.0, %v3517
        %v3519 = vpop.f32.mrb[0].mxu0
        %3520 = vmatprep.mubr.bf16.mxu0 0
        %3521 = vmatmul.mubr.bf16.gmra.mrb[0].mxu0 %v3466
        %v3522 = vpop.f32.mrb[0].mxu0
        %v3523 = vadd.f32 0.0, %v3522
        %v3524 = vpop.f32.mrb[0].mxu0
        %v3525 = vpop.f32.mrb[0].mxu0
        %v3526 = vadd.f32 0.0, %v3525
        %v3527 = vpop.f32.mrb[0].mxu0
        %3528 = vmatprep.mubr.bf16.mxu0 0
        %3529 = vmatmul.mubr.bf16.gmra.mrb[0].mxu0 %v3469
        %v3530 = vpop.f32.mrb[0].mxu0
        %v3531 = vadd.f32 0.0, %v3530
        %v3532 = vpop.f32.mrb[0].mxu0
        %v3533 = vpop.f32.mrb[0].mxu0
        %v3534 = vadd.f32 0.0, %v3533
        %v3535 = vpop.f32.mrb[0].mxu0
        %3536 = vmatprep.mubr.bf16.mxu0 0
        %3537 = vmatmul.mubr.bf16.gmra.mrb[0].mxu0 %v3472
        %v3538 = vpop.f32.mrb[0].mxu0
        %v3539 = vadd.f32 0.0, %v3538
        %v3540 = vpop.f32.mrb[0].mxu0
        %v3541 = vpop.f32.mrb[0].mxu0
        %v3542 = vadd.f32 0.0, %v3541
        %v3543 = vpop.f32.mrb[0].mxu0
        %3544 = vmatprep.mubr.bf16.mxu0 0
        %3545 = vmatmul.mubr.bf16.gmra.mrb[0].mxu0 %v3475
        %v3546 = vpop.f32.mrb[0].mxu0
        %v3547 = vadd.f32 0.0, %v3546
        %v3548 = vpop.f32.mrb[0].mxu0
        %v3549 = vpop.f32.mrb[0].mxu0
        %v3550 = vadd.f32 0.0, %v3549
        %v3551 = vpop.f32.mrb[0].mxu0
        %3552 = vdwg.mxu0
        %v3553 = vadd.f32 %v3439, %v3515
        %v3554 = vadd.f32 %v3440, %v3518
        %v3555 = vadd.f32 %v3441, %v3523
        %v3556 = vadd.f32 %v3442, %v3526
        %v3557 = vadd.f32 %v3443, %v3531
        %v3558 = vadd.f32 %v3444, %v3534
        %v3559 = vadd.f32 %v3445, %v3539
        %v3560 = vadd.f32 %v3446, %v3542
        %v3561 = vadd.f32 %v3447, %v3547
        %v3562 = vadd.f32 %v3448, %v3550
        %s3563 = scalar_lea.vmem [#allocation8], 48
        %v3564 = vld [vmem:[%s3563] sm:$0x3]
        %v3566 = vunpack.c.l.b16 %v502
        %v3567 = vpack.c.b16 %v3174, %v2915
        %v3568 = vpack.c.b16 %v3566, %v3566
        %v3569 = vrot.slane %v2807, 2
        %v3570 = vrot.slane %v2808, 2
        %v3571 = vsel %vm1154, %v3569, %v3570
        %v3572 = vrot.slane %v2809, 2
        %v3573 = vsel %vm1154, %v3570, %v3572
        %v3574 = vrot.slane %v2810, 2
        %v3575 = vsel %vm1154, %v3572, %v3574
        %v3576 = vrot.slane %v3567, 2
        %v3577 = vsel %vm1154, %v3574, %v3576
        %v3578 = vrot.slane %v3568, 2
        %v3579 = vsel %vm1154, %v3576, %v3578
        %v3581 = vsel %vm579, %v3571, 0
        %v3584 = vsel %vm579, %v3573, 0
        %v3587 = vsel %vm579, %v3575, 0
        %v3590 = vsel %vm579, %v3577, 0
        %v3593 = vsel %vm579, %v3579, 0
        %v3596 = vsel %vm595, %v3564, 0
        %3598 = vmatprep.subr.bf16.mxu0 0
        %3599 = vmatpush1.bf16.msra.mxu0 %v3596
        %3600 = vmatprep.subr.bf16.mxu0 0
        %3601 = vmatpush1.bf16.msra.mxu0 0
        %3602 = vmatprep.subr.bf16.mxu0 0
        %3603 = vmatpush1.bf16.msra.mxu0 0
        %3604 = vmatprep.subr.bf16.mxu0 0
        %3605 = vmatpush1.bf16.msra.mxu0 0
        %3606 = vmatprep.subr.bf16.mxu0 0
        %3607 = vmatpush1.bf16.msra.mxu0 0
        %3608 = vmatprep.subr.bf16.mxu0 0
        %3609 = vmatpush1.bf16.msra.mxu0 0
        %3610 = vmatprep.subr.bf16.mxu0 0
        %3611 = vmatpush1.bf16.msra.mxu0 0
        %3612 = vmatprep.subr.bf16.mxu0 0
        %3613 = vmatpush1.bf16.msra.mxu0 0
        %3614 = vmatprep.subr.bf16.mxu0 0
        %3615 = vmatpush1.bf16.msra.mxu0 0
        %3616 = vmatprep.subr.bf16.mxu0 0
        %3617 = vmatpush1.bf16.msra.mxu0 0
        %3618 = vmatprep.subr.bf16.mxu0 0
        %3619 = vmatpush1.bf16.msra.mxu0 0
        %3620 = vmatprep.subr.bf16.mxu0 0
        %3621 = vmatpush1.bf16.msra.mxu0 0
        %3622 = vmatprep.subr.bf16.mxu0 0
        %3623 = vmatpush1.bf16.msra.mxu0 0
        %3624 = vmatprep.subr.bf16.mxu0 0
        %3625 = vmatpush1.bf16.msra.mxu0 0
        %3626 = vmatprep.subr.bf16.mxu0 0
        %3627 = vmatpush1.bf16.msra.mxu0 0
        %3628 = vmatprep.subr.bf16.mxu0 0
        %3629 = vmatpush1.bf16.msra.mxu0 0
        %3630 = vmatprep.mubr.bf16.mxu0 0
        %3631 = vmatmul.mubr.bf16.gmra.mrb[0].mxu0 %v3581
        %v3632 = vpop.f32.mrb[0].mxu0
        %v3633 = vadd.f32 0.0, %v3632
        %v3634 = vpop.f32.mrb[0].mxu0
        %v3635 = vpop.f32.mrb[0].mxu0
        %v3636 = vadd.f32 0.0, %v3635
        %v3637 = vpop.f32.mrb[0].mxu0
        %3638 = vmatprep.mubr.bf16.mxu0 0
        %3639 = vmatmul.mubr.bf16.gmra.mrb[0].mxu0 %v3584
        %v3640 = vpop.f32.mrb[0].mxu0
        %v3641 = vadd.f32 0.0, %v3640
        %v3642 = vpop.f32.mrb[0].mxu0
        %v3643 = vpop.f32.mrb[0].mxu0
        %v3644 = vadd.f32 0.0, %v3643
        %v3645 = vpop.f32.mrb[0].mxu0
        %3646 = vmatprep.mubr.bf16.mxu0 0
        %3647 = vmatmul.mubr.bf16.gmra.mrb[0].mxu0 %v3587
        %v3648 = vpop.f32.mrb[0].mxu0
        %v3649 = vadd.f32 0.0, %v3648
        %v3650 = vpop.f32.mrb[0].mxu0
        %v3651 = vpop.f32.mrb[0].mxu0
        %v3652 = vadd.f32 0.0, %v3651
        %v3653 = vpop.f32.mrb[0].mxu0
        %3654 = vmatprep.mubr.bf16.mxu0 0
        %3655 = vmatmul.mubr.bf16.gmra.mrb[0].mxu0 %v3590
        %v3656 = vpop.f32.mrb[0].mxu0
        %v3657 = vadd.f32 0.0, %v3656
        %v3658 = vpop.f32.mrb[0].mxu0
        %v3659 = vpop.f32.mrb[0].mxu0
        %v3660 = vadd.f32 0.0, %v3659
        %v3661 = vpop.f32.mrb[0].mxu0
        %3662 = vmatprep.mubr.bf16.mxu0 0
        %3663 = vmatmul.mubr.bf16.gmra.mrb[0].mxu0 %v3593
        %v3664 = vpop.f32.mrb[0].mxu0
        %v3665 = vadd.f32 0.0, %v3664
        %v3666 = vpop.f32.mrb[0].mxu0
        %v3667 = vpop.f32.mrb[0].mxu0
        %v3668 = vadd.f32 0.0, %v3667
        %v3669 = vpop.f32.mrb[0].mxu0
        %3670 = vdwg.mxu0
        %v3671 = vadd.f32 %v3553, %v3633
        %v3672 = vadd.f32 %v3554, %v3636
        %v3673 = vadd.f32 %v3555, %v3641
        %v3674 = vadd.f32 %v3556, %v3644
        %v3675 = vadd.f32 %v3557, %v3649
        %v3676 = vadd.f32 %v3558, %v3652
        %v3677 = vadd.f32 %v3559, %v3657
        %v3678 = vadd.f32 %v3560, %v3660
        %v3679 = vadd.f32 %v3561, %v3665
        %v3680 = vadd.f32 %v3562, %v3668
        %s3681 = scalar_lea.vmem [#allocation8], 50
        %v3682 = vld [vmem:[%s3681] sm:$0x3]
        %v3683 = vrot.slane %v2927, 2
        %v3684 = vrot.slane %v2923, 3
        %v3685 = vor.u32 %v3683, %v3684
        %v3686 = vrot.slane %v2934, 2
        %v3687 = vrot.slane %v2930, 3
        %v3688 = vor.u32 %v3686, %v3687
        %v3689 = vsel %vm1387, %v3685, %v3688
        %v3690 = vrot.slane %v2941, 2
        %v3691 = vrot.slane %v2937, 3
        %v3692 = vor.u32 %v3690, %v3691
        %v3693 = vsel %vm1387, %v3688, %v3692
        %v3694 = vrot.slane %v2948, 2
        %v3695 = vrot.slane %v2944, 3
        %v3696 = vor.u32 %v3694, %v3695
        %v3697 = vsel %vm1387, %v3692, %v3696
        %v3699 = vshrl.u32 %v3567, 16
        %v3701 = vrot.slane %v3699, 2
        %v3702 = vshll.u32 %v3567, 16
        %v3704 = vrot.slane %v3702, 3
        %v3705 = vor.u32 %v3701, %v3704
        %v3706 = vsel %vm1387, %v3696, %v3705
        %v3708 = vshrl.u32 %v3568, 16
        %v3710 = vrot.slane %v3708, 2
        %v3711 = vshll.u32 %v3568, 16
        %v3713 = vrot.slane %v3711, 3
        %v3714 = vor.u32 %v3710, %v3713
        %v3715 = vsel %vm1387, %v3705, %v3714
        %v3717 = vsel %vm579, %v3689, 0
        %v3720 = vsel %vm579, %v3693, 0
        %v3723 = vsel %vm579, %v3697, 0
        %v3726 = vsel %vm579, %v3706, 0
        %v3729 = vsel %vm579, %v3715, 0
        %v3732 = vsel %vm595, %v3682, 0
        %3734 = vmatprep.subr.bf16.mxu0 0
        %3735 = vmatpush1.bf16.msra.mxu0 %v3732
        %3736 = vmatprep.subr.bf16.mxu0 0
        %3737 = vmatpush1.bf16.msra.mxu0 0
        %3738 = vmatprep.subr.bf16.mxu0 0
        %3739 = vmatpush1.bf16.msra.mxu0 0
        %3740 = vmatprep.subr.bf16.mxu0 0
        %3741 = vmatpush1.bf16.msra.mxu0 0
        %3742 = vmatprep.subr.bf16.mxu0 0
        %3743 = vmatpush1.bf16.msra.mxu0 0
        %3744 = vmatprep.subr.bf16.mxu0 0
        %3745 = vmatpush1.bf16.msra.mxu0 0
        %3746 = vmatprep.subr.bf16.mxu0 0
        %3747 = vmatpush1.bf16.msra.mxu0 0
        %3748 = vmatprep.subr.bf16.mxu0 0
        %3749 = vmatpush1.bf16.msra.mxu0 0
        %3750 = vmatprep.subr.bf16.mxu0 0
        %3751 = vmatpush1.bf16.msra.mxu0 0
        %3752 = vmatprep.subr.bf16.mxu0 0
        %3753 = vmatpush1.bf16.msra.mxu0 0
        %3754 = vmatprep.subr.bf16.mxu0 0
        %3755 = vmatpush1.bf16.msra.mxu0 0
        %3756 = vmatprep.subr.bf16.mxu0 0
        %3757 = vmatpush1.bf16.msra.mxu0 0
        %3758 = vmatprep.subr.bf16.mxu0 0
        %3759 = vmatpush1.bf16.msra.mxu0 0
        %3760 = vmatprep.subr.bf16.mxu0 0
        %3761 = vmatpush1.bf16.msra.mxu0 0
        %3762 = vmatprep.subr.bf16.mxu0 0
        %3763 = vmatpush1.bf16.msra.mxu0 0
        %3764 = vmatprep.subr.bf16.mxu0 0
        %3765 = vmatpush1.bf16.msra.mxu0 0
        %3766 = vmatprep.mubr.bf16.mxu0 0
        %3767 = vmatmul.mubr.bf16.gmra.mrb[0].mxu0 %v3717
        %v3768 = vpop.f32.mrb[0].mxu0
        %v3769 = vadd.f32 0.0, %v3768
        %v3770 = vpop.f32.mrb[0].mxu0
        %v3771 = vpop.f32.mrb[0].mxu0
        %v3772 = vadd.f32 0.0, %v3771
        %v3773 = vpop.f32.mrb[0].mxu0
        %3774 = vmatprep.mubr.bf16.mxu0 0
        %3775 = vmatmul.mubr.bf16.gmra.mrb[0].mxu0 %v3720
        %v3776 = vpop.f32.mrb[0].mxu0
        %v3777 = vadd.f32 0.0, %v3776
        %v3778 = vpop.f32.mrb[0].mxu0
        %v3779 = vpop.f32.mrb[0].mxu0
        %v3780 = vadd.f32 0.0, %v3779
        %v3781 = vpop.f32.mrb[0].mxu0
        %3782 = vmatprep.mubr.bf16.mxu0 0
        %3783 = vmatmul.mubr.bf16.gmra.mrb[0].mxu0 %v3723
        %v3784 = vpop.f32.mrb[0].mxu0
        %v3785 = vadd.f32 0.0, %v3784
        %v3786 = vpop.f32.mrb[0].mxu0
        %v3787 = vpop.f32.mrb[0].mxu0
        %v3788 = vadd.f32 0.0, %v3787
        %v3789 = vpop.f32.mrb[0].mxu0
        %3790 = vmatprep.mubr.bf16.mxu0 0
        %3791 = vmatmul.mubr.bf16.gmra.mrb[0].mxu0 %v3726
        %v3792 = vpop.f32.mrb[0].mxu0
        %v3793 = vadd.f32 0.0, %v3792
        %v3794 = vpop.f32.mrb[0].mxu0
        %v3795 = vpop.f32.mrb[0].mxu0
        %v3796 = vadd.f32 0.0, %v3795
        %v3797 = vpop.f32.mrb[0].mxu0
        %3798 = vmatprep.mubr.bf16.mxu0 0
        %3799 = vmatmul.mubr.bf16.gmra.mrb[0].mxu0 %v3729
        %v3800 = vpop.f32.mrb[0].mxu0
        %v3801 = vadd.f32 0.0, %v3800
        %v3802 = vpop.f32.mrb[0].mxu0
        %v3803 = vpop.f32.mrb[0].mxu0
        %v3804 = vadd.f32 0.0, %v3803
        %v3805 = vpop.f32.mrb[0].mxu0
        %3806 = vdwg.mxu0
        %v3807 = vadd.f32 %v3671, %v3769
        %v3808 = vadd.f32 %v3672, %v3772
        %v3809 = vadd.f32 %v3673, %v3777
        %v3810 = vadd.f32 %v3674, %v3780
        %v3811 = vadd.f32 %v3675, %v3785
        %v3812 = vadd.f32 %v3676, %v3788
        %v3813 = vadd.f32 %v3677, %v3793
        %v3814 = vadd.f32 %v3678, %v3796
        %v3815 = vadd.f32 %v3679, %v3801
        %v3816 = vadd.f32 %v3680, %v3804
        %s3817 = scalar_lea.vmem [#allocation8], 52
        %v3818 = vld [vmem:[%s3817] sm:$0x3]
        %v3819 = vrot.slane %v2807, 3
        %v3820 = vrot.slane %v2808, 3
        %v3821 = vsel %vm1524, %v3819, %v3820
        %v3822 = vrot.slane %v2809, 3
        %v3823 = vsel %vm1524, %v3820, %v3822
        %v3824 = vrot.slane %v2810, 3
        %v3825 = vsel %vm1524, %v3822, %v3824
        %v3826 = vrot.slane %v3567, 3
        %v3827 = vsel %vm1524, %v3824, %v3826
        %v3828 = vrot.slane %v3568, 3
        %v3829 = vsel %vm1524, %v3826, %v3828
        %v3831 = vsel %vm579, %v3821, 0
        %v3834 = vsel %vm579, %v3823, 0
        %v3837 = vsel %vm579, %v3825, 0
        %v3840 = vsel %vm579, %v3827, 0
        %v3843 = vsel %vm579, %v3829, 0
        %v3846 = vsel %vm595, %v3818, 0
        %3848 = vmatprep.subr.bf16.mxu0 0
        %3849 = vmatpush1.bf16.msra.mxu0 %v3846
        %3850 = vmatprep.subr.bf16.mxu0 0
        %3851 = vmatpush1.bf16.msra.mxu0 0
        %3852 = vmatprep.subr.bf16.mxu0 0
        %3853 = vmatpush1.bf16.msra.mxu0 0
        %3854 = vmatprep.subr.bf16.mxu0 0
        %3855 = vmatpush1.bf16.msra.mxu0 0
        %3856 = vmatprep.subr.bf16.mxu0 0
        %3857 = vmatpush1.bf16.msra.mxu0 0
        %3858 = vmatprep.subr.bf16.mxu0 0
        %3859 = vmatpush1.bf16.msra.mxu0 0
        %3860 = vmatprep.subr.bf16.mxu0 0
        %3861 = vmatpush1.bf16.msra.mxu0 0
        %3862 = vmatprep.subr.bf16.mxu0 0
        %3863 = vmatpush1.bf16.msra.mxu0 0
        %3864 = vmatprep.subr.bf16.mxu0 0
        %3865 = vmatpush1.bf16.msra.mxu0 0
        %3866 = vmatprep.subr.bf16.mxu0 0
        %3867 = vmatpush1.bf16.msra.mxu0 0
        %3868 = vmatprep.subr.bf16.mxu0 0
        %3869 = vmatpush1.bf16.msra.mxu0 0
        %3870 = vmatprep.subr.bf16.mxu0 0
        %3871 = vmatpush1.bf16.msra.mxu0 0
        %3872 = vmatprep.subr.bf16.mxu0 0
        %3873 = vmatpush1.bf16.msra.mxu0 0
        %3874 = vmatprep.subr.bf16.mxu0 0
        %3875 = vmatpush1.bf16.msra.mxu0 0
        %3876 = vmatprep.subr.bf16.mxu0 0
        %3877 = vmatpush1.bf16.msra.mxu0 0
        %3878 = vmatprep.subr.bf16.mxu0 0
        %3879 = vmatpush1.bf16.msra.mxu0 0
        %3880 = vmatprep.mubr.bf16.mxu0 0
        %3881 = vmatmul.mubr.bf16.gmra.mrb[0].mxu0 %v3831
        %v3882 = vpop.f32.mrb[0].mxu0
        %v3883 = vadd.f32 0.0, %v3882
        %v3884 = vpop.f32.mrb[0].mxu0
        %v3885 = vpop.f32.mrb[0].mxu0
        %v3886 = vadd.f32 0.0, %v3885
        %v3887 = vpop.f32.mrb[0].mxu0
        %3888 = vmatprep.mubr.bf16.mxu0 0
        %3889 = vmatmul.mubr.bf16.gmra.mrb[0].mxu0 %v3834
        %v3890 = vpop.f32.mrb[0].mxu0
        %v3891 = vadd.f32 0.0, %v3890
        %v3892 = vpop.f32.mrb[0].mxu0
        %v3893 = vpop.f32.mrb[0].mxu0
        %v3894 = vadd.f32 0.0, %v3893
        %v3895 = vpop.f32.mrb[0].mxu0
        %3896 = vmatprep.mubr.bf16.mxu0 0
        %3897 = vmatmul.mubr.bf16.gmra.mrb[0].mxu0 %v3837
        %v3898 = vpop.f32.mrb[0].mxu0
        %v3899 = vadd.f32 0.0, %v3898
        %v3900 = vpop.f32.mrb[0].mxu0
        %v3901 = vpop.f32.mrb[0].mxu0
        %v3902 = vadd.f32 0.0, %v3901
        %v3903 = vpop.f32.mrb[0].mxu0
        %3904 = vmatprep.mubr.bf16.mxu0 0
        %3905 = vmatmul.mubr.bf16.gmra.mrb[0].mxu0 %v3840
        %v3906 = vpop.f32.mrb[0].mxu0
        %v3907 = vadd.f32 0.0, %v3906
        %v3908 = vpop.f32.mrb[0].mxu0
        %v3909 = vpop.f32.mrb[0].mxu0
        %v3910 = vadd.f32 0.0, %v3909
        %v3911 = vpop.f32.mrb[0].mxu0
        %3912 = vmatprep.mubr.bf16.mxu0 0
        %3913 = vmatmul.mubr.bf16.gmra.mrb[0].mxu0 %v3843
        %v3914 = vpop.f32.mrb[0].mxu0
        %v3915 = vadd.f32 0.0, %v3914
        %v3916 = vpop.f32.mrb[0].mxu0
        %v3917 = vpop.f32.mrb[0].mxu0
        %v3918 = vadd.f32 0.0, %v3917
        %v3919 = vpop.f32.mrb[0].mxu0
        %3920 = vdwg.mxu0
        %v3921 = vadd.f32 %v3807, %v3883
        %v3922 = vadd.f32 %v3808, %v3886
        %v3923 = vadd.f32 %v3809, %v3891
        %v3924 = vadd.f32 %v3810, %v3894
        %v3925 = vadd.f32 %v3811, %v3899
        %v3926 = vadd.f32 %v3812, %v3902
        %v3927 = vadd.f32 %v3813, %v3907
        %v3928 = vadd.f32 %v3814, %v3910
        %v3929 = vadd.f32 %v3815, %v3915
        %v3930 = vadd.f32 %v3816, %v3918
        %v3931 = vld [vmem:[#allocation10] sm:$0x1]
        %v3933 = vlaneseq
        %v3934 = vshrl.u32 %v3933, 7
        %v3935 = vsub.s32 0, %v3934
        %v3936 = vrot.slane %v3931, %v3935
        %v3938 = vadd.f32 %v3921, %v3936
        %v3939 = vadd.f32 %v3922, %v3936
        %v3940 = vadd.f32 %v3923, %v3936
        %v3941 = vadd.f32 %v3924, %v3936
        %v3942 = vadd.f32 %v3925, %v3936
        %v3943 = vadd.f32 %v3926, %v3936
        %v3944 = vadd.f32 %v3927, %v3936
        %v3945 = vadd.f32 %v3928, %v3936
        %v3946 = vadd.f32 %v3929, %v3936
        %v3947 = vadd.f32 %v3930, %v3936
        %v3948 = vpack.c.bf16 %v3939, %v3938
        %v3949 = vpack.c.bf16 %v3941, %v3940
        %v3950 = vpack.c.bf16 %v3943, %v3942
        %v3951 = vpack.c.bf16 %v3945, %v3944
        %v3952 = vpack.c.bf16 %v3947, %v3946
        %v3958 = vunpack.c.l.b16 %v3948
        %v3959 = vunpack.c.h.b16 %v3948
        %v3960 = vunpack.c.l.b16 %v3949
        %v3961 = vunpack.c.h.b16 %v3949
        %v3962 = vunpack.c.l.b16 %v3950
        %v3963 = vunpack.c.h.b16 %v3950
        %v3964 = vunpack.c.l.b16 %v3951
        %v3965 = vunpack.c.h.b16 %v3951
        %v3966 = vunpack.c.l.b16 %v3952
        %v3967 = vunpack.c.h.b16 %v3952
        %v3968 = vpack.c.b16 %v3958, %v3958
        %v3969 = vpack.c.b16 %v3959, %v3959
        %v3970 = vpack.c.b16 %v3960, %v3960
        %v3971 = vpack.c.b16 %v3961, %v3961
        %v3972 = vpack.c.b16 %v3962, %v3962
        %v3973 = vpack.c.b16 %v3963, %v3963
        %v3974 = vpack.c.b16 %v3964, %v3964
        %v3975 = vpack.c.b16 %v3965, %v3965
        %v3976 = vpack.c.b16 %v3966, %v3966
        %v3977 = vpack.c.b16 %v3967, %v3967
        %3988 = vst [vmem:[%s444] sm:$0xf] %v3968
        %3989 = vst [vmem:[%s444 + $0x4] sm:$0xf] %v3969
        %3990 = vst [vmem:[%s444 + $0x8] sm:$0xf] %v3970
        %3991 = vst [vmem:[%s444 + $0xc] sm:$0xf] %v3971
        %3992 = vst [vmem:[%s444 + $0x10] sm:$0xf] %v3972
        %3993 = vst [vmem:[%s444 + $0x14] sm:$0xf] %v3973
        %3994 = vst [vmem:[%s444 + $0x18] sm:$0xf] %v3974
        %3995 = vst [vmem:[%s444 + $0x1c] sm:$0xf] %v3975
        %3996 = vst [vmem:[%s444 + $0x20] sm:$0xf] %v3976
        %3997 = vst [vmem:[%s444 + $0x24] sm:$0xf] %v3977
        %v3998 = vlaneseq
        %v3999 = vshrl.u32 %v3998, 7
        %v4000 = vadd.s32 %v3999, 8
        %v4001 = vadd.s32 %v3999, 16
        %v4002 = vadd.s32 %v3999, 24
        %v4003 = vadd.s32 %v3999, 32
        %v4004 = vadd.s32 %v3999, 40
        %v4005 = vadd.s32 %v3999, 48
        %v4006 = vadd.s32 %v3999, 56
        %v4007 = vadd.s32 %v3999, 64
        %v4008 = vadd.s32 %v3999, 72
        %vm4009 = vcmp.lt.s32.totalorder %v3999, 0
        %v4010 = vsub.s32 0, %v3999
        %v4011 = vsel %vm4009, %v4010, %v3999
        %v4012 = vmul.u32.u64.compose %v4011, 3435973837
        %v4013 = vextract.low.u32 %v4012
        %v4014 = vextract.high.u32 %v4012
        %v4015 = vshrl.u32 %v4014, 3
        %v4016 = vmul.u32 %v4015, 10
        %v4017 = vsub.s32 %v4011, %v4016
        %v4018 = vsub.s32 0, %v4017
        %v4019 = vsel %vm4009, %v4018, %v4017
        %vm4020 = vcmp.lt.s32.totalorder %v4000, 0
        %v4021 = vsub.s32 0, %v4000
        %v4022 = vsel %vm4020, %v4021, %v4000
        %v4023 = vmul.u32.u64.compose %v4022, 3435973837
        %v4024 = vextract.low.u32 %v4023
        %v4025 = vextract.high.u32 %v4023
        %v4026 = vshrl.u32 %v4025, 3
        %v4027 = vmul.u32 %v4026, 10
        %v4028 = vsub.s32 %v4022, %v4027
        %v4029 = vsub.s32 0, %v4028
        %v4030 = vsel %vm4020, %v4029, %v4028
        %vm4031 = vcmp.lt.s32.totalorder %v4001, 0
        %v4032 = vsub.s32 0, %v4001
        %v4033 = vsel %vm4031, %v4032, %v4001
        %v4034 = vmul.u32.u64.compose %v4033, 3435973837
        %v4035 = vextract.low.u32 %v4034
        %v4036 = vextract.high.u32 %v4034
        %v4037 = vshrl.u32 %v4036, 3
        %v4038 = vmul.u32 %v4037, 10
        %v4039 = vsub.s32 %v4033, %v4038
        %v4040 = vsub.s32 0, %v4039
        %v4041 = vsel %vm4031, %v4040, %v4039
        %vm4042 = vcmp.lt.s32.totalorder %v4002, 0
        %v4043 = vsub.s32 0, %v4002
        %v4044 = vsel %vm4042, %v4043, %v4002
        %v4045 = vmul.u32.u64.compose %v4044, 3435973837
        %v4046 = vextract.low.u32 %v4045
        %v4047 = vextract.high.u32 %v4045
        %v4048 = vshrl.u32 %v4047, 3
        %v4049 = vmul.u32 %v4048, 10
        %v4050 = vsub.s32 %v4044, %v4049
        %v4051 = vsub.s32 0, %v4050
        %v4052 = vsel %vm4042, %v4051, %v4050
        %vm4053 = vcmp.lt.s32.totalorder %v4003, 0
        %v4054 = vsub.s32 0, %v4003
        %v4055 = vsel %vm4053, %v4054, %v4003
        %v4056 = vmul.u32.u64.compose %v4055, 3435973837
        %v4057 = vextract.low.u32 %v4056
        %v4058 = vextract.high.u32 %v4056
        %v4059 = vshrl.u32 %v4058, 3
        %v4060 = vmul.u32 %v4059, 10
        %v4061 = vsub.s32 %v4055, %v4060
        %v4062 = vsub.s32 0, %v4061
        %v4063 = vsel %vm4053, %v4062, %v4061
        %vm4064 = vcmp.lt.s32.totalorder %v4004, 0
        %v4065 = vsub.s32 0, %v4004
        %v4066 = vsel %vm4064, %v4065, %v4004
        %v4067 = vmul.u32.u64.compose %v4066, 3435973837
        %v4068 = vextract.low.u32 %v4067
        %v4069 = vextract.high.u32 %v4067
        %v4070 = vshrl.u32 %v4069, 3
        %v4071 = vmul.u32 %v4070, 10
        %v4072 = vsub.s32 %v4066, %v4071
        %v4073 = vsub.s32 0, %v4072
        %v4074 = vsel %vm4064, %v4073, %v4072
        %vm4075 = vcmp.lt.s32.totalorder %v4005, 0
        %v4076 = vsub.s32 0, %v4005
        %v4077 = vsel %vm4075, %v4076, %v4005
        %v4078 = vmul.u32.u64.compose %v4077, 3435973837
        %v4079 = vextract.low.u32 %v4078
        %v4080 = vextract.high.u32 %v4078
        %v4081 = vshrl.u32 %v4080, 3
        %v4082 = vmul.u32 %v4081, 10
        %v4083 = vsub.s32 %v4077, %v4082
        %v4084 = vsub.s32 0, %v4083
        %v4085 = vsel %vm4075, %v4084, %v4083
        %vm4086 = vcmp.lt.s32.totalorder %v4006, 0
        %v4087 = vsub.s32 0, %v4006
        %v4088 = vsel %vm4086, %v4087, %v4006
        %v4089 = vmul.u32.u64.compose %v4088, 3435973837
        %v4090 = vextract.low.u32 %v4089
        %v4091 = vextract.high.u32 %v4089
        %v4092 = vshrl.u32 %v4091, 3
        %v4093 = vmul.u32 %v4092, 10
        %v4094 = vsub.s32 %v4088, %v4093
        %v4095 = vsub.s32 0, %v4094
        %v4096 = vsel %vm4086, %v4095, %v4094
        %vm4097 = vcmp.lt.s32.totalorder %v4007, 0
        %v4098 = vsub.s32 0, %v4007
        %v4099 = vsel %vm4097, %v4098, %v4007
        %v4100 = vmul.u32.u64.compose %v4099, 3435973837
        %v4101 = vextract.low.u32 %v4100
        %v4102 = vextract.high.u32 %v4100
        %v4103 = vshrl.u32 %v4102, 3
        %v4104 = vmul.u32 %v4103, 10
        %v4105 = vsub.s32 %v4099, %v4104
        %v4106 = vsub.s32 0, %v4105
        %v4107 = vsel %vm4097, %v4106, %v4105
        %vm4108 = vcmp.lt.s32.totalorder %v4008, 0
        %v4109 = vsub.s32 0, %v4008
        %v4110 = vsel %vm4108, %v4109, %v4008
        %v4111 = vmul.u32.u64.compose %v4110, 3435973837
        %v4112 = vextract.low.u32 %v4111
        %v4113 = vextract.high.u32 %v4111
        %v4114 = vshrl.u32 %v4113, 3
        %v4115 = vmul.u32 %v4114, 10
        %v4116 = vsub.s32 %v4110, %v4115
        %v4117 = vsub.s32 0, %v4116
        %v4118 = vsel %vm4108, %v4117, %v4116
        %vm4119 = vcmp.ne.s32.totalorder %v4019, 0
        %vm4120 = vcmp.ne.s32.totalorder %v4030, 0
        %vm4121 = vcmp.ne.s32.totalorder %v4041, 0
        %vm4122 = vcmp.ne.s32.totalorder %v4052, 0
        %vm4123 = vcmp.ne.s32.totalorder %v4063, 0
        %vm4124 = vcmp.ne.s32.totalorder %v4074, 0
        %vm4125 = vcmp.ne.s32.totalorder %v4085, 0
        %vm4126 = vcmp.ne.s32.totalorder %v4096, 0
        %vm4127 = vcmp.ne.s32.totalorder %v4107, 0
        %vm4128 = vcmp.ne.s32.totalorder %v4118, 0
        %vm4129 = vcmp.lt.s32.totalorder %v4019, 0
        %vm4130 = vcmp.lt.s32.totalorder %v4030, 0
        %vm4131 = vcmp.lt.s32.totalorder %v4041, 0
        %vm4132 = vcmp.lt.s32.totalorder %v4052, 0
        %vm4133 = vcmp.lt.s32.totalorder %v4063, 0
        %vm4134 = vcmp.lt.s32.totalorder %v4074, 0
        %vm4135 = vcmp.lt.s32.totalorder %v4085, 0
        %vm4136 = vcmp.lt.s32.totalorder %v4096, 0
        %vm4137 = vcmp.lt.s32.totalorder %v4107, 0
        %vm4138 = vcmp.lt.s32.totalorder %v4118, 0
        %vm4139 = vmand %vm4129, %vm4119
        %vm4140 = vmand %vm4130, %vm4120
        %vm4141 = vmand %vm4131, %vm4121
        %vm4142 = vmand %vm4132, %vm4122
        %vm4143 = vmand %vm4133, %vm4123
        %vm4144 = vmand %vm4134, %vm4124
        %vm4145 = vmand %vm4135, %vm4125
        %vm4146 = vmand %vm4136, %vm4126
        %vm4147 = vmand %vm4137, %vm4127
        %vm4148 = vmand %vm4138, %vm4128
        %v4149 = vadd.s32 %v4019, 10
        %v4150 = vadd.s32 %v4030, 10
        %v4151 = vadd.s32 %v4041, 10
        %v4152 = vadd.s32 %v4052, 10
        %v4153 = vadd.s32 %v4063, 10
        %v4154 = vadd.s32 %v4074, 10
        %v4155 = vadd.s32 %v4085, 10
        %v4156 = vadd.s32 %v4096, 10
        %v4157 = vadd.s32 %v4107, 10
        %v4158 = vadd.s32 %v4118, 10
        %v4159 = vsel %vm4139, %v4149, %v4019
        %v4160 = vsel %vm4140, %v4150, %v4030
        %v4161 = vsel %vm4141, %v4151, %v4041
        %v4162 = vsel %vm4142, %v4152, %v4052
        %v4163 = vsel %vm4143, %v4153, %v4063
        %v4164 = vsel %vm4144, %v4154, %v4074
        %v4165 = vsel %vm4145, %v4155, %v4085
        %v4166 = vsel %vm4146, %v4156, %v4096
        %v4167 = vsel %vm4147, %v4157, %v4107
        %v4168 = vsel %vm4148, %v4158, %v4118
        %vm4169 = vcmp.lt.s32.totalorder %v4159, 8
        %vm4170 = vcmp.lt.s32.totalorder %v4160, 8
        %vm4171 = vcmp.lt.s32.totalorder %v4161, 8
        %vm4172 = vcmp.lt.s32.totalorder %v4162, 8
        %vm4173 = vcmp.lt.s32.totalorder %v4163, 8
        %vm4174 = vcmp.lt.s32.totalorder %v4164, 8
        %vm4175 = vcmp.lt.s32.totalorder %v4165, 8
        %vm4176 = vcmp.lt.s32.totalorder %v4166, 8
        %vm4177 = vcmp.lt.s32.totalorder %v4167, 8
        %vm4178 = vcmp.lt.s32.totalorder %v4168, 8
        %v4179 = vsel %vm4169, 1, 0
        %v4180 = vsel %vm4170, 1, 0
        %v4181 = vsel %vm4171, 1, 0
        %v4182 = vsel %vm4172, 1, 0
        %v4183 = vsel %vm4173, 1, 0
        %v4184 = vsel %vm4174, 1, 0
        %v4185 = vsel %vm4175, 1, 0
        %v4186 = vsel %vm4176, 1, 0
        %v4187 = vsel %vm4177, 1, 0
        %v4188 = vsel %vm4178, 1, 0
        %v4189 = vcvt.s32.f32 %v4179
        %v4190 = vcvt.s32.f32 %v4180
        %v4191 = vcvt.s32.f32 %v4181
        %v4192 = vcvt.s32.f32 %v4182
        %v4193 = vcvt.s32.f32 %v4183
        %v4194 = vcvt.s32.f32 %v4184
        %v4195 = vcvt.s32.f32 %v4185
        %v4196 = vcvt.s32.f32 %v4186
        %v4197 = vcvt.s32.f32 %v4187
        %v4198 = vcvt.s32.f32 %v4188
        %v4199 = vmul.f32 %v3938, %v4189
        %v4200 = vmul.f32 %v3939, %v4190
        %v4201 = vmul.f32 %v3940, %v4191
        %v4202 = vmul.f32 %v3941, %v4192
        %v4203 = vmul.f32 %v3942, %v4193
        %v4204 = vmul.f32 %v3943, %v4194
        %v4205 = vmul.f32 %v3944, %v4195
        %v4206 = vmul.f32 %v3945, %v4196
        %v4207 = vmul.f32 %v3946, %v4197
        %v4208 = vmul.f32 %v3947, %v4198
        %v4209 = vadd.f32 %v4199, %v4200
        %v4210 = vadd.f32 %v4209, %v4201
        %v4211 = vadd.f32 %v4210, %v4202
        %v4212 = vadd.f32 %v4211, %v4203
        %v4213 = vadd.f32 %v4212, %v4204
        %v4214 = vadd.f32 %v4213, %v4205
        %v4215 = vadd.f32 %v4214, %v4206
        %v4216 = vadd.f32 %v4215, %v4207
        %v4217 = vadd.f32 %v4216, %v4208
        %v4218 = vrot.slane %v4217, 4
        %v4219 = vadd.f32 %v4217, %v4218
        %v4220 = vrot.slane %v4219, 2
        %v4221 = vadd.f32 %v4219, %v4220
        %v4222 = vrot.slane %v4221, 1
        %v4223 = vadd.f32 %v4221, %v4222
        %4224 = vst [vmem:[%s450] sm:$0x1] %v4223
        %v4225 = vmul.f32 %v4199, %v4199
        %v4226 = vmul.f32 %v4200, %v4200
        %v4227 = vmul.f32 %v4201, %v4201
        %v4228 = vmul.f32 %v4202, %v4202
        %v4229 = vmul.f32 %v4203, %v4203
        %v4230 = vmul.f32 %v4204, %v4204
        %v4231 = vmul.f32 %v4205, %v4205
        %v4232 = vmul.f32 %v4206, %v4206
        %v4233 = vmul.f32 %v4207, %v4207
        %v4234 = vmul.f32 %v4208, %v4208
        %v4235 = vadd.f32 %v4225, %v4226
        %v4236 = vadd.f32 %v4235, %v4227
        %v4237 = vadd.f32 %v4236, %v4228
        %v4238 = vadd.f32 %v4237, %v4229
        %v4239 = vadd.f32 %v4238, %v4230
        %v4240 = vadd.f32 %v4239, %v4231
        %v4241 = vadd.f32 %v4240, %v4232
        %v4242 = vadd.f32 %v4241, %v4233
        %v4243 = vadd.f32 %v4242, %v4234
        %v4244 = vrot.slane %v4243, 4
        %v4245 = vadd.f32 %v4243, %v4244
        %v4246 = vrot.slane %v4245, 2
        %v4247 = vadd.f32 %v4245, %v4246
        %v4248 = vrot.slane %v4247, 1
        %v4249 = vadd.f32 %v4247, %v4248
        %4250 = vst [vmem:[%s456] sm:$0x1] %v4249
        %s4251 = sand.u32 %s184, 1
        %s4252 = scalar_lea.sflag [#allocation4], %s4251
        %s4253 = sand.u32 %s184, 1
        %s4254 = smul.addr %s4253, 40
        %s4255 = scalar_lea.vmem [#allocation11], %s4254
        %s4256 = sand.u32 %s32, 1
        %s4257 = scalar_lea.sflag [#allocation13], %s4256
        %s4258 = sand.u32 %s214, 1
        %s4259 = scalar_lea.vmem [#allocation12], %s4258
        %s4260 = sand.u32 %s32, 1
        %s4261 = scalar_lea.sflag [#allocation13], %s4260
        %s4262 = sand.u32 %s244, 1
        %s4263 = scalar_lea.vmem [#allocation14], %s4262
        // Predicated region
        $region61: #{unet_block_forward.4} parent=39 // pred_check
          %p4264 = pneg %p194
        $region62: #{unet_block_forward.4} parent=39 // pred_check_branch
          %4266 = sbr.rel (%p4264) target = $region64
        $region63: #{unet_block_forward.4} parent=39 // pred_region
          %s4268 = ssub.s32 640, 640
          %4269 = vsyncadd %s4252, %s4268
          %s4270 = smul.addr %s37, 10
          %s4271 = smul.addr %s36, 80
          %s4272 = sadd.s32 %s4270, %s4271
          %s4273 = smul.addr %s4272, 64
          %s4274 = scalar_lea.hbm %s5, %s4273
          %s4275 = sshll.u32 %s4255, 4
          %s4276 = int_to_ptr.vmem [resolvable:$true] %s4275
          %4281 = dma.vmem_to_hbm [thread:$0]  %s4276, 640, %s4274, %s4252, 64, 64, 4
        $region64: #{unet_block_forward.4} parent=39 // pred_fallthru
          _
        // Predicated region
        $region65: #{unet_block_forward.4} parent=39 // pred_check
          %p4282 = pneg %p224
        $region66: #{unet_block_forward.4} parent=39 // pred_check_branch
          %4284 = sbr.rel (%p4282) target = $region68
        $region67: #{unet_block_forward.4} parent=39 // pred_region
          %s4285 = smul.u32 %s36, 8
          %s4286 = sadd.s32 %s4285, %s37
          %s4288 = ssub.s32 16, 16
          %4289 = vsyncadd %s4257, %s4288
          %s4290 = smul.addr %s4286, 16
          %s4291 = scalar_lea.hbm %s6, %s4290
          %s4293 = sshll.u32 %s4259, 4
          %s4294 = int_to_ptr.vmem [resolvable:$true] %s4293
          %4296 = dma.vmem_to_hbm [thread:$0]  %s4294, 16, %s4291, %s4257
        $region68: #{unet_block_forward.4} parent=39 // pred_fallthru
          _
        // Predicated region
        $region69: #{unet_block_forward.4} parent=39 // pred_check
          %p4297 = pneg %p254
        $region70: #{unet_block_forward.4} parent=39 // pred_check_branch
          %4299 = sbr.rel (%p4297) target = $region72
        $region71: #{unet_block_forward.4} parent=39 // pred_region
          %s4300 = smul.u32 %s36, 8
          %s4301 = sadd.s32 %s4300, %s37
          %s4303 = ssub.s32 16, 16
          %4304 = vsyncadd %s4261, %s4303
          %s4305 = smul.addr %s4301, 16
          %s4306 = scalar_lea.hbm %s7, %s4305
          %s4308 = sshll.u32 %s4263, 4
          %s4309 = int_to_ptr.vmem [resolvable:$true] %s4308
          %4311 = dma.vmem_to_hbm [thread:$0]  %s4309, 16, %s4306, %s4261
        $region72: #{unet_block_forward.4} parent=39 // pred_fallthru
          _
      $region40: #{unet_block_forward.4} parent=5 // pred_fallthru
        _
      %p4312 = scmp.le.s32.totalorder 2, %s27
      // Predicated region
      $region73: #{unet_block_forward.4} parent=5 // pred_check
        %p4313 = pneg %p4312
      $region74: #{unet_block_forward.4} parent=5 // pred_check_branch
        %4315 = sbr.rel (%p4313) target = $region76
      $region75: #{unet_block_forward.4} parent=5 // pred_region
        %s4316 = ssub.s32 %s27, 2
        // Predicated region
        $region77: #{unet_block_forward.4} parent=75 // pred_check
          %p4317 = pneg %p200
        $region78: #{unet_block_forward.4} parent=75 // pred_check_branch
          %4319 = sbr.rel (%p4317) target = $region80
        $region79: #{unet_block_forward.4} parent=75 // pred_region
          %s4320 = sand.u32 %s185, 1
          %s4321 = scalar_lea.sflag [#allocation4], %s4320
          %s4322 = sand.u32 %s185, 1
          %s4323 = smul.addr %s4322, 40
          %s4324 = scalar_lea.vmem [#allocation11], %s4323
          %4325 = dma.done %s4321, 640
        $region80: #{unet_block_forward.4} parent=75 // pred_fallthru
          _
        // Predicated region
        $region81: #{unet_block_forward.4} parent=75 // pred_check
          %p4326 = pneg %p230
        $region82: #{unet_block_forward.4} parent=75 // pred_check_branch
          %4328 = sbr.rel (%p4326) target = $region84
        $region83: #{unet_block_forward.4} parent=75 // pred_region
          %s4329 = sand.u32 %s33, 1
          %s4330 = scalar_lea.sflag [#allocation13], %s4329
          %s4331 = sand.u32 %s215, 1
          %s4332 = scalar_lea.vmem [#allocation12], %s4331
          %4333 = dma.done %s4330, 16
        $region84: #{unet_block_forward.4} parent=75 // pred_fallthru
          _
        // Predicated region
        $region85: #{unet_block_forward.4} parent=75 // pred_check
          %p4334 = pneg %p260
        $region86: #{unet_block_forward.4} parent=75 // pred_check_branch
          %4336 = sbr.rel (%p4334) target = $region88
        $region87: #{unet_block_forward.4} parent=75 // pred_region
          %s4337 = sand.u32 %s33, 1
          %s4338 = scalar_lea.sflag [#allocation13], %s4337
          %s4339 = sand.u32 %s245, 1
          %s4340 = scalar_lea.vmem [#allocation14], %s4339
          %4341 = dma.done %s4338, 16
        $region88: #{unet_block_forward.4} parent=75 // pred_fallthru
          _
      $region76: #{unet_block_forward.4} parent=5 // pred_fallthru
        _
    $region6: #{unet_block_forward.4} parent=1 // loop_footer
      %s31 = sadd.s32 1, %s27
    $region7: #{unet_block_forward.4} parent=1 // loop_footer_branch
      %26 = sbr.rel target = $region3
    $region8: #{unet_block_forward.4} parent=1 // loop_exit
      _
    %4342 = vsyncpa [#allocation3], 1
    %s4343 = scalar_lea.sflag [#allocation3], 1
    %4344 = vsyncpa %s4343, 1
    %4345 = vsyncpa [#allocation6], 1
    %s4346 = scalar_lea.sflag [#allocation6], 1
    %4347 = vsyncpa %s4346, 1
    %4348 = vsyncpa [#allocation9], 1
    %4349 = vsyncpa [#allocation4], 1
    %s4350 = scalar_lea.sflag [#allocation4], 1
    %4351 = vsyncpa %s4350, 1
    %4352 = vsyncpa [#allocation13], 1
    %s4353 = scalar_lea.sflag [#allocation13], 1
    %4354 = vsyncpa %s4353, 1

// kernel: unet_block_forward.6
$region0: #{unet_block_forward.6}
  #allocation0 [shape = 'u32[]', space=smem, size = 0x4, offset = 0x4, fixed_abs, tag = 'smem constant byte address 0x4 - core index']
  #allocation1 [shape = 'u32[144,128]{1,0:T(1,128)}', space=vmem, size = 0x12000, scoped, tag = 'internal scratch']
  %s0 = inlined_call_operand.hbm [shape: bf16[2,10,104,8], index: 0, kind: input, shape index: {}, may-alias: {0,1,2}]
  %s1 = inlined_call_operand.hbm [shape: bf16[2,10,104,8], index: 1, kind: input, shape index: {}, may-alias: {0,1,2}]
  %s2 = inlined_call_operand.hbm [shape: bf16[2,10,104,8], index: 2, kind: input, shape index: {}, may-alias: {0,1,2}]
  %s3 = inlined_call_operand.hbm [shape: bf16[27,8,128], index: 3, kind: input, shape index: {}]
  %s4 = inlined_call_operand.hbm [shape: f32[1,128], index: 4, kind: input, shape index: {}]
  %s5 = inlined_call_operand.hbm [shape: bf16[2,8,80,128], index: 5, kind: output, shape index: {0}]
  %s6 = inlined_call_operand.hbm [shape: f32[16,1,128], index: 6, kind: output, shape index: {1}]
  %s7 = inlined_call_operand.hbm [shape: f32[16,1,128], index: 7, kind: output, shape index: {2}]
  %8 = xla_tuple %s5, %s6, %s7
  %s9 = sld [smem:[#allocation0]]
  $region89: #{unet_block_forward.6} parent=0
    _
  %s11 = ssub.s32 1, %s9
  %s12 = scalar_select 0, %s11, %s9
  $region1: #{unet_block_forward.6} parent=0
    #allocation2 [shape = 'u8[53248]{0}', space=vmem, size = 0xd000, scoped, tag = 'input window, operand 0']
    #allocation3 [shape = 's32[2]{0}', space=sflag, size = 0x8, scoped, tag = 'scoped memory for unet_block_forward.6']
    #allocation4 [shape = 's32[2]{0}', space=sflag, size = 0x8, scoped, tag = 'scoped memory for unet_block_forward.6']
    #allocation5 [shape = 'u8[53248]{0}', space=vmem, size = 0xd000, scoped, tag = 'input window, operand 1']
    #allocation6 [shape = 's32[2]{0}', space=sflag, size = 0x8, scoped, tag = 'scoped memory for unet_block_forward.6']
    #allocation7 [shape = 'u8[53248]{0}', space=vmem, size = 0xd000, scoped, tag = 'input window, operand 2']
    #allocation8 [shape = 'u8[55296]{0}', space=vmem, size = 0xd800, scoped, tag = 'input window, operand 3, single buffered']
    #allocation9 [shape = 's32[1]{0}', space=sflag, size = 0x4, scoped, tag = 'scoped memory for unet_block_forward.6']
    #allocation10 [shape = 'u8[512]{0}', space=vmem, size = 0x400, scoped, tag = 'input window, operand 4, single buffered']
    #allocation11 [shape = 'u8[40960]{0}', space=vmem, size = 0xa000, scoped, tag = 'output window, operand 0']
    #allocation12 [shape = 'u8[1024]{0}', space=vmem, size = 0x400, scoped, tag = 'output window, operand 1']
    #allocation13 [shape = 's32[2]{0}', space=sflag, size = 0x8, scoped, tag = 'scoped memory for unet_block_forward.6']
    #allocation14 [shape = 'u8[1024]{0}', space=vmem, size = 0x400, scoped, tag = 'output window, operand 2']
    %13 = vsyncpa [#allocation3], 0
    %s14 = scalar_lea.sflag [#allocation3], 1
    %15 = vsyncpa %s14, 0
    %16 = vsyncpa [#allocation6], 0
    %s17 = scalar_lea.sflag [#allocation6], 1
    %18 = vsyncpa %s17, 0
    %19 = vsyncpa [#allocation9], 0
    %20 = vsyncpa [#allocation4], 0
    %s21 = scalar_lea.sflag [#allocation4], 1
    %22 = vsyncpa %s21, 0
    %23 = vsyncpa [#allocation13], 0
    %s24 = scalar_lea.sflag [#allocation13], 1
    %25 = vsyncpa %s24, 0
    loop: start=0, step=1, limit=18
    $region2: #{unet_block_forward.6} parent=1 // loop_pre_header
      _
    $region3: #{unet_block_forward.6} parent=1 // loop_header
      %s27 = sphi 0, %s31
      %p28 = scmp.ge.s32.totalorder %s27, 18
      %s34 = sphi 0, %s46
      %s35 = sphi 0, %s42
      %s36 = sphi 0, %s34
      %s37 = sphi 0, %s35
      %s38 = sphi 0, %s36
      %s39 = sphi 0, %s37
      %s51 = sphi 0, %s53
      %s54 = sphi 0, %s51
      %s55 = sphi 0, %s54
      %s71 = sphi 0, %s55
      %s81 = sphi 0, %s83
      %s84 = sphi 0, %s81
      %s85 = sphi 0, %s84
      %s101 = sphi 0, %s85
      %s111 = sphi 0, %s113
      %s114 = sphi 0, %s111
      %s115 = sphi 0, %s114
      %s131 = sphi 0, %s115
      %s135 = sphi 0, %s135
      %s137 = sphi 0, %s135
      %s138 = sphi 0, %s137
      %s152 = sphi 0, %s138
      %s156 = sphi 0, %s156
      %s158 = sphi 0, %s156
      %s159 = sphi 0, %s158
      %s173 = sphi 0, %s159
      %s181 = sphi 0, %s183
      %s184 = sphi 0, %s181
      %s185 = sphi 0, %s184
      %s201 = sphi 0, %s185
      %s211 = sphi 0, %s213
      %s214 = sphi 0, %s211
      %s215 = sphi 0, %s214
      %s231 = sphi 0, %s215
      %s241 = sphi 0, %s243
      %s244 = sphi 0, %s241
      %s245 = sphi 0, %s244
      %s261 = sphi 0, %s245
    $region4: #{unet_block_forward.6} parent=1 // loop_header_branch
      %30 = sbr.rel (%p28) target = $region8
    $region5: #{unet_block_forward.6} parent=1 // loop_body
      %s32 = ssub.s32 %s27, 1
      %s33 = ssub.s32 %s27, 2
      %s40 = sadd.s32 1, %s35
      %p41 = scmp.ge.s32.totalorder %s40, 8
      %s42 = scalar_select %p41, 0, %s40
      %s43 = sadd.s32 1, %s34
      %s44 = scalar_select %p41, %s43, %s34
      %p45 = scmp.ge.s32.totalorder %s44, 2
      %s46 = scalar_select %p45, 0, %s44
      %s47 = ssub.s32 %s34, %s46
      %s48 = ssub.s32 %s35, %s42
      %s49 = sor.u32 %s47, %s48
      %p50 = scmp.eq.s32.totalorder %s49, 0
      %s52 = sadd.s32 %s51, 1
      %s53 = scalar_select %p50, %s51, %s52
      %p56 = pneg %p50
      %p57 = scmp.eq.s32.totalorder %s27, 15
      %p58 = por %p56, %p57
      %p59 = scmp.ne.s32.totalorder %s51, %s54
      %p60 = scmp.eq.s32.totalorder %s27, 0
      %p61 = por %p59, %p60
      %p62 = scmp.ne.s32.totalorder %s51, %s54
      %p63 = scmp.eq.s32.totalorder %s32, 15
      %p64 = por %p62, %p63
      %p65 = scmp.ne.s32.totalorder %s54, %s55
      %p66 = scmp.eq.s32.totalorder %s32, 0
      %p67 = por %p65, %p66
      %p68 = scmp.ne.s32.totalorder %s54, %s55
      %p69 = scmp.eq.s32.totalorder %s33, 15
      %p70 = por %p68, %p69
      %p72 = scmp.ne.s32.totalorder %s55, %s71
      %p73 = scmp.eq.s32.totalorder %s33, 0
      %p74 = por %p72, %p73
      %s75 = sadd.s32 %s35, 1
      %s76 = sadd.s32 %s42, 1
      %s77 = ssub.s32 %s34, %s46
      %s78 = ssub.s32 %s75, %s76
      %s79 = sor.u32 %s77, %s78
      %p80 = scmp.eq.s32.totalorder %s79, 0
      %s82 = sadd.s32 %s81, 1
      %s83 = scalar_select %p80, %s81, %s82
      %p86 = pneg %p80
      %p87 = scmp.eq.s32.totalorder %s27, 15
      %p88 = por %p86, %p87
      %p89 = scmp.ne.s32.totalorder %s81, %s84
      %p90 = scmp.eq.s32.totalorder %s27, 0
      %p91 = por %p89, %p90
      %p92 = scmp.ne.s32.totalorder %s81, %s84
      %p93 = scmp.eq.s32.totalorder %s32, 15
      %p94 = por %p92, %p93
      %p95 = scmp.ne.s32.totalorder %s84, %s85
      %p96 = scmp.eq.s32.totalorder %s32, 0
      %p97 = por %p95, %p96
      %p98 = scmp.ne.s32.totalorder %s84, %s85
      %p99 = scmp.eq.s32.totalorder %s33, 15
      %p100 = por %p98, %p99
      %p102 = scmp.ne.s32.totalorder %s85, %s101
      %p103 = scmp.eq.s32.totalorder %s33, 0
      %p104 = por %p102, %p103
      %s105 = sadd.s32 %s35, 2
      %s106 = sadd.s32 %s42, 2
      %s107 = ssub.s32 %s34, %s46
      %s108 = ssub.s32 %s105, %s106
      %s109 = sor.u32 %s107, %s108
      %p110 = scmp.eq.s32.totalorder %s109, 0
      %s112 = sadd.s32 %s111, 1
      %s113 = scalar_select %p110, %s111, %s112
      %p116 = pneg %p110
      %p117 = scmp.eq.s32.totalorder %s27, 15
      %p118 = por %p116, %p117
      %p119 = scmp.ne.s32.totalorder %s111, %s114
      %p120 = scmp.eq.s32.totalorder %s27, 0
      %p121 = por %p119, %p120
      %p122 = scmp.ne.s32.totalorder %s111, %s114
      %p123 = scmp.eq.s32.totalorder %s32, 15
      %p124 = por %p122, %p123
      %p125 = scmp.ne.s32.totalorder %s114, %s115
      %p126 = scmp.eq.s32.totalorder %s32, 0
      %p127 = por %p125, %p126
      %p128 = scmp.ne.s32.totalorder %s114, %s115
      %p129 = scmp.eq.s32.totalorder %s33, 15
      %p130 = por %p128, %p129
      %p132 = scmp.ne.s32.totalorder %s115, %s131
      %p133 = scmp.eq.s32.totalorder %s33, 0
      %p134 = por %p132, %p133
      %s136 = sadd.s32 %s135, 1
      %p139 = scmp.eq.s32.totalorder %s27, 15
      %p140 = scmp.ne.s32.totalorder %s135, %s137
      %p141 = scmp.eq.s32.totalorder %s27, 0
      %p142 = por %p140, %p141
      %p143 = scmp.ne.s32.totalorder %s135, %s137
      %p144 = scmp.eq.s32.totalorder %s32, 15
      %p145 = por %p143, %p144
      %p146 = scmp.ne.s32.totalorder %s137, %s138
      %p147 = scmp.eq.s32.totalorder %s32, 0
      %p148 = por %p146, %p147
      %p149 = scmp.ne.s32.totalorder %s137, %s138
      %p150 = scmp.eq.s32.totalorder %s33, 15
      %p151 = por %p149, %p150
      %p153 = scmp.ne.s32.totalorder %s138, %s152
      %p154 = scmp.eq.s32.totalorder %s33, 0
      %p155 = por %p153, %p154
      %s157 = sadd.s32 %s156, 1
      %p160 = scmp.eq.s32.totalorder %s27, 15
      %p161 = scmp.ne.s32.totalorder %s156, %s158
      %p162 = scmp.eq.s32.totalorder %s27, 0
      %p163 = por %p161, %p162
      %p164 = scmp.ne.s32.totalorder %s156, %s158
      %p165 = scmp.eq.s32.totalorder %s32, 15
      %p166 = por %p164, %p165
      %p167 = scmp.ne.s32.totalorder %s158, %s159
      %p168 = scmp.eq.s32.totalorder %s32, 0
      %p169 = por %p167, %p168
      %p170 = scmp.ne.s32.totalorder %s158, %s159
      %p171 = scmp.eq.s32.totalorder %s33, 15
      %p172 = por %p170, %p171
      %p174 = scmp.ne.s32.totalorder %s159, %s173
      %p175 = scmp.eq.s32.totalorder %s33, 0
      %p176 = por %p174, %p175
      %s177 = ssub.s32 %s34, %s46
      %s178 = ssub.s32 %s35, %s42
      %s179 = sor.u32 %s177, %s178
      %p180 = scmp.eq.s32.totalorder %s179, 0
      %s182 = sadd.s32 %s181, 1
      %s183 = scalar_select %p180, %s181, %s182
      %p186 = pneg %p180
      %p187 = scmp.eq.s32.totalorder %s27, 15
      %p188 = por %p186, %p187
      %p189 = scmp.ne.s32.totalorder %s181, %s184
      %p190 = scmp.eq.s32.totalorder %s27, 0
      %p191 = por %p189, %p190
      %p192 = scmp.ne.s32.totalorder %s181, %s184
      %p193 = scmp.eq.s32.totalorder %s32, 15
      %p194 = por %p192, %p193
      %p195 = scmp.ne.s32.totalorder %s184, %s185
      %p196 = scmp.eq.s32.totalorder %s32, 0
      %p197 = por %p195, %p196
      %p198 = scmp.ne.s32.totalorder %s184, %s185
      %p199 = scmp.eq.s32.totalorder %s33, 15
      %p200 = por %p198, %p199
      %p202 = scmp.ne.s32.totalorder %s185, %s201
      %p203 = scmp.eq.s32.totalorder %s33, 0
      %p204 = por %p202, %p203
      %s205 = smul.u32 %s34, 8
      %s206 = sadd.s32 %s205, %s35
      %s207 = smul.u32 %s46, 8
      %s208 = sadd.s32 %s207, %s42
      %s209 = ssub.s32 %s206, %s208
      %p210 = scmp.eq.s32.totalorder %s209, 0
      %s212 = sadd.s32 %s211, 1
      %s213 = scalar_select %p210, %s211, %s212
      %p216 = pneg %p210
      %p217 = scmp.eq.s32.totalorder %s27, 15
      %p218 = por %p216, %p217
      %p219 = scmp.ne.s32.totalorder %s211, %s214
      %p220 = scmp.eq.s32.totalorder %s27, 0
      %p221 = por %p219, %p220
      %p222 = scmp.ne.s32.totalorder %s211, %s214
      %p223 = scmp.eq.s32.totalorder %s32, 15
      %p224 = por %p222, %p223
      %p225 = scmp.ne.s32.totalorder %s214, %s215
      %p226 = scmp.eq.s32.totalorder %s32, 0
      %p227 = por %p225, %p226
      %p228 = scmp.ne.s32.totalorder %s214, %s215
      %p229 = scmp.eq.s32.totalorder %s33, 15
      %p230 = por %p228, %p229
      %p232 = scmp.ne.s32.totalorder %s215, %s231
      %p233 = scmp.eq.s32.totalorder %s33, 0
      %p234 = por %p232, %p233
      %s235 = smul.u32 %s34, 8
      %s236 = sadd.s32 %s235, %s35
      %s237 = smul.u32 %s46, 8
      %s238 = sadd.s32 %s237, %s42
      %s239 = ssub.s32 %s236, %s238
      %p240 = scmp.eq.s32.totalorder %s239, 0
      %s242 = sadd.s32 %s241, 1
      %s243 = scalar_select %p240, %s241, %s242
      %p246 = pneg %p240
      %p247 = scmp.eq.s32.totalorder %s27, 15
      %p248 = por %p246, %p247
      %p249 = scmp.ne.s32.totalorder %s241, %s244
      %p250 = scmp.eq.s32.totalorder %s27, 0
      %p251 = por %p249, %p250
      %p252 = scmp.ne.s32.totalorder %s241, %s244
      %p253 = scmp.eq.s32.totalorder %s32, 15
      %p254 = por %p252, %p253
      %p255 = scmp.ne.s32.totalorder %s244, %s245
      %p256 = scmp.eq.s32.totalorder %s32, 0
      %p257 = por %p255, %p256
      %p258 = scmp.ne.s32.totalorder %s244, %s245
      %p259 = scmp.eq.s32.totalorder %s33, 15
      %p260 = por %p258, %p259
      %p262 = scmp.ne.s32.totalorder %s245, %s261
      %p263 = scmp.eq.s32.totalorder %s33, 0
      %p264 = por %p262, %p263
      %p265 = scmp.le.s32.totalorder 1, %s27
      %p266 = scmp.lt.s32.totalorder %s27, 17
      %p267 = pnand %p265, %p266
      %p268 = pneg %p267
      // Predicated region
      $region9: #{unet_block_forward.6} parent=5 // pred_check
        _
      $region10: #{unet_block_forward.6} parent=5 // pred_check_branch
        %270 = sbr.rel (%p267) target = $region12
      $region11: #{unet_block_forward.6} parent=5 // pred_region
        %s271 = ssub.s32 %s27, 1
        // Predicated region
        $region13: #{unet_block_forward.6} parent=11 // pred_check
          %p272 = pneg %p148
        $region14: #{unet_block_forward.6} parent=11 // pred_check_branch
          %274 = sbr.rel (%p272) target = $region16
        $region15: #{unet_block_forward.6} parent=11 // pred_region
          %s276 = ssub.s32 1728, 1728
          %277 = vsyncadd [#allocation9], %s276
          %s278 = sshll.u32 [#allocation8], 4
          %s279 = int_to_ptr.vmem [resolvable:$true] %s278
          %284 = dma.hbm_to_vmem [thread:$0]  %s3, 1728, %s279, [#allocation9], 64, 64, 4
        $region16: #{unet_block_forward.6} parent=11 // pred_fallthru
          _
        // Predicated region
        $region17: #{unet_block_forward.6} parent=11 // pred_check
          %p285 = pneg %p169
        $region18: #{unet_block_forward.6} parent=11 // pred_check_branch
          %287 = sbr.rel (%p285) target = $region20
        $region19: #{unet_block_forward.6} parent=11 // pred_region
          %s289 = ssub.s32 16, 16
          %290 = vsyncadd [#allocation9], %s289
          %s292 = sshll.u32 [#allocation10], 4
          %s293 = int_to_ptr.vmem [resolvable:$true] %s292
          %295 = dma.hbm_to_vmem [thread:$0]  %s4, 16, %s293, [#allocation9]
        $region20: #{unet_block_forward.6} parent=11 // pred_fallthru
          _
      $region12: #{unet_block_forward.6} parent=5 // pred_fallthru
        _
      %p296 = scmp.lt.s32.totalorder %s27, 16
      // Predicated region
      $region21: #{unet_block_forward.6} parent=5 // pred_check
        %p297 = pneg %p296
      $region22: #{unet_block_forward.6} parent=5 // pred_check_branch
        %299 = sbr.rel (%p297) target = $region24
      $region23: #{unet_block_forward.6} parent=5 // pred_region
        // Predicated region
        $region25: #{unet_block_forward.6} parent=23 // pred_check
          %p300 = pneg %p61
        $region26: #{unet_block_forward.6} parent=23 // pred_check_branch
          %302 = sbr.rel (%p300) target = $region28
        $region27: #{unet_block_forward.6} parent=23 // pred_region
          %s303 = sand.u32 %s51, 1
          %s304 = scalar_lea.sflag [#allocation3], %s303
          %s305 = sand.u32 %s51, 1
          %s306 = smul.addr %s305, 52
          %s307 = scalar_lea.vmem [#allocation2], %s306
          %s309 = ssub.s32 832, 832
          %310 = vsyncadd %s304, %s309
          %s311 = smul.addr %s35, 13
          %s312 = smul.addr %s34, 130
          %s313 = sadd.s32 %s311, %s312
          %s314 = smul.addr %s313, 64
          %s315 = scalar_lea.hbm %s0, %s314
          %s316 = sshll.u32 %s307, 4
          %s317 = int_to_ptr.vmem [resolvable:$true] %s316
          %322 = dma.hbm_to_vmem [thread:$0]  %s315, 832, %s317, %s304, 64, 64, 4
        $region28: #{unet_block_forward.6} parent=23 // pred_fallthru
          _
        // Predicated region
        $region29: #{unet_block_forward.6} parent=23 // pred_check
          %p323 = pneg %p91
        $region30: #{unet_block_forward.6} parent=23 // pred_check_branch
          %325 = sbr.rel (%p323) target = $region32
        $region31: #{unet_block_forward.6} parent=23 // pred_region
          %s326 = sand.u32 %s27, 1
          %s327 = scalar_lea.sflag [#allocation6], %s326
          %s328 = sand.u32 %s81, 1
          %s329 = smul.addr %s328, 52
          %s330 = scalar_lea.vmem [#allocation5], %s329
          %s331 = sadd.s32 %s35, 1
          %s333 = ssub.s32 832, 832
          %334 = vsyncadd %s327, %s333
          %s335 = smul.addr %s331, 13
          %s336 = smul.addr %s34, 130
          %s337 = sadd.s32 %s335, %s336
          %s338 = smul.addr %s337, 64
          %s339 = scalar_lea.hbm %s1, %s338
          %s340 = sshll.u32 %s330, 4
          %s341 = int_to_ptr.vmem [resolvable:$true] %s340
          %346 = dma.hbm_to_vmem [thread:$0]  %s339, 832, %s341, %s327, 64, 64, 4
        $region32: #{unet_block_forward.6} parent=23 // pred_fallthru
          _
        // Predicated region
        $region33: #{unet_block_forward.6} parent=23 // pred_check
          %p347 = pneg %p121
        $region34: #{unet_block_forward.6} parent=23 // pred_check_branch
          %349 = sbr.rel (%p347) target = $region36
        $region35: #{unet_block_forward.6} parent=23 // pred_region
          %s350 = sand.u32 %s27, 1
          %s351 = scalar_lea.sflag [#allocation6], %s350
          %s352 = sand.u32 %s111, 1
          %s353 = smul.addr %s352, 52
          %s354 = scalar_lea.vmem [#allocation7], %s353
          %s355 = sadd.s32 %s35, 2
          %s357 = ssub.s32 832, 832
          %358 = vsyncadd %s351, %s357
          %s359 = smul.addr %s355, 13
          %s360 = smul.addr %s34, 130
          %s361 = sadd.s32 %s359, %s360
          %s362 = smul.addr %s361, 64
          %s363 = scalar_lea.hbm %s2, %s362
          %s364 = sshll.u32 %s354, 4
          %s365 = int_to_ptr.vmem [resolvable:$true] %s364
          %370 = dma.hbm_to_vmem [thread:$0]  %s363, 832, %s365, %s351, 64, 64, 4
        $region36: #{unet_block_forward.6} parent=23 // pred_fallthru
          _
      $region24: #{unet_block_forward.6} parent=5 // pred_fallthru
        _
      %p371 = scmp.le.s32.totalorder 1, %s27
      %p372 = scmp.lt.s32.totalorder %s27, 17
      %p373 = pnand %p371, %p372
      %p374 = pneg %p373
      // Predicated region
      $region37: #{unet_block_forward.6} parent=5 // pred_check
        _
      $region38: #{unet_block_forward.6} parent=5 // pred_check_branch
        %376 = sbr.rel (%p373) target = $region40
      $region39: #{unet_block_forward.6} parent=5 // pred_region
        %s377 = ssub.s32 %s27, 1
        %s378 = sand.u32 %s54, 1
        %s379 = scalar_lea.sflag [#allocation3], %s378
        %s380 = sand.u32 %s54, 1
        %s381 = smul.addr %s380, 52
        %s382 = scalar_lea.vmem [#allocation2], %s381
        // Predicated region
        $region41: #{unet_block_forward.6} parent=39 // pred_check
          %p383 = pneg %p67
        $region42: #{unet_block_forward.6} parent=39 // pred_check_branch
          %385 = sbr.rel (%p383) target = $region44
        $region43: #{unet_block_forward.6} parent=39 // pred_region
          %386 = dma.done %s379, 832
        $region44: #{unet_block_forward.6} parent=39 // pred_fallthru
          _
        %s387 = sand.u32 %s32, 1
        %s388 = scalar_lea.sflag [#allocation6], %s387
        %s389 = sand.u32 %s84, 1
        %s390 = smul.addr %s389, 52
        %s391 = scalar_lea.vmem [#allocation5], %s390
        // Predicated region
        $region45: #{unet_block_forward.6} parent=39 // pred_check
          %p392 = pneg %p97
        $region46: #{unet_block_forward.6} parent=39 // pred_check_branch
          %394 = sbr.rel (%p392) target = $region48
        $region47: #{unet_block_forward.6} parent=39 // pred_region
          %395 = dma.done %s388, 832
        $region48: #{unet_block_forward.6} parent=39 // pred_fallthru
          _
        %s396 = sand.u32 %s32, 1
        %s397 = scalar_lea.sflag [#allocation6], %s396
        %s398 = sand.u32 %s114, 1
        %s399 = smul.addr %s398, 52
        %s400 = scalar_lea.vmem [#allocation7], %s399
        // Predicated region
        $region49: #{unet_block_forward.6} parent=39 // pred_check
          %p401 = pneg %p127
        $region50: #{unet_block_forward.6} parent=39 // pred_check_branch
          %403 = sbr.rel (%p401) target = $region52
        $region51: #{unet_block_forward.6} parent=39 // pred_region
          %404 = dma.done %s397, 832
        $region52: #{unet_block_forward.6} parent=39 // pred_fallthru
          _
        // Predicated region
        $region53: #{unet_block_forward.6} parent=39 // pred_check
          %p405 = pneg %p148
        $region54: #{unet_block_forward.6} parent=39 // pred_check_branch
          %407 = sbr.rel (%p405) target = $region56
        $region55: #{unet_block_forward.6} parent=39 // pred_region
          %408 = dma.done [#allocation9], 1728
        $region56: #{unet_block_forward.6} parent=39 // pred_fallthru
          _
        // Predicated region
        $region57: #{unet_block_forward.6} parent=39 // pred_check
          %p409 = pneg %p169
        $region58: #{unet_block_forward.6} parent=39 // pred_check_branch
          %411 = sbr.rel (%p409) target = $region60
        $region59: #{unet_block_forward.6} parent=39 // pred_region
          %412 = dma.done [#allocation9], 16
        $region60: #{unet_block_forward.6} parent=39 // pred_fallthru
          _
        %s413 = sand.u32 %s54, 1
        %s414 = scalar_lea.sflag [#allocation3], %s413
        %s415 = sand.u32 %s54, 1
        %s416 = smul.addr %s415, 52
        %s417 = scalar_lea.vmem [#allocation2], %s416
        %p418 = pneg %p67
        %p419 = pneg %p64
        %s420 = sand.u32 %s32, 1
        %s421 = scalar_lea.sflag [#allocation6], %s420
        %s422 = sand.u32 %s84, 1
        %s423 = smul.addr %s422, 52
        %s424 = scalar_lea.vmem [#allocation5], %s423
        %p425 = pneg %p97
        %p426 = pneg %p94
        %s427 = sand.u32 %s32, 1
        %s428 = scalar_lea.sflag [#allocation6], %s427
        %s429 = sand.u32 %s114, 1
        %s430 = smul.addr %s429, 52
        %s431 = scalar_lea.vmem [#allocation7], %s430
        %p432 = pneg %p127
        %p433 = pneg %p124
        %p434 = pneg %p148
        %p435 = pneg %p145
        %p436 = pneg %p169
        %p437 = pneg %p166
        %p438 = pneg %p197
        %p439 = pneg %p194
        %s440 = sand.u32 %s184, 1
        %s441 = scalar_lea.sflag [#allocation4], %s440
        %s442 = sand.u32 %s184, 1
        %s443 = smul.addr %s442, 40
        %s444 = scalar_lea.vmem [#allocation11], %s443
        %p445 = pneg %p227
        %p446 = pneg %p224
        %s447 = sand.u32 %s32, 1
        %s448 = scalar_lea.sflag [#allocation13], %s447
        %s449 = sand.u32 %s214, 1
        %s450 = scalar_lea.vmem [#allocation12], %s449
        %p451 = pneg %p257
        %p452 = pneg %p254
        %s453 = sand.u32 %s32, 1
        %s454 = scalar_lea.sflag [#allocation13], %s453
        %s455 = sand.u32 %s244, 1
        %s456 = scalar_lea.vmem [#allocation14], %s455
        %s457 = sadd.s32 %s37, 1
        %s458 = sadd.s32 %s37, 2
        %s459 = smul.u32 %s36, 8
        %s460 = sadd.s32 %s459, %s37
        %s461 = smul.u32 %s36, 8
        %s462 = sadd.s32 %s461, %s37
        %v464 = vld [vmem:[%s382] sm:$0xf]
        %v465 = vld [vmem:[%s382 + $0x4] sm:$0xf]
        %v466 = vld [vmem:[%s382 + $0x8] sm:$0xf]
        %v467 = vld [vmem:[%s382 + $0xc] sm:$0xf]
        %v468 = vld [vmem:[%s382 + $0x10] sm:$0xf]
        %v469 = vld [vmem:[%s382 + $0x14] sm:$0xf]
        %v470 = vld [vmem:[%s382 + $0x18] sm:$0xf]
        %v471 = vld [vmem:[%s382 + $0x1c] sm:$0xf]
        %v472 = vld [vmem:[%s382 + $0x20] sm:$0xf]
        %v473 = vld [vmem:[%s382 + $0x24] sm:$0xf]
        %v474 = vld [vmem:[%s382 + $0x28] sm:$0xf]
        %v475 = vld [vmem:[%s382 + $0x2c] sm:$0xf]
        %v476 = vld [vmem:[%s382 + $0x30] sm:$0xf]
        %v477 = vld [vmem:[%s391] sm:$0xf]
        %v478 = vld [vmem:[%s391 + $0x4] sm:$0xf]
        %v479 = vld [vmem:[%s391 + $0x8] sm:$0xf]
        %v480 = vld [vmem:[%s391 + $0xc] sm:$0xf]
        %v481 = vld [vmem:[%s391 + $0x10] sm:$0xf]
        %v482 = vld [vmem:[%s391 + $0x14] sm:$0xf]
        %v483 = vld [vmem:[%s391 + $0x18] sm:$0xf]
        %v484 = vld [vmem:[%s391 + $0x1c] sm:$0xf]
        %v485 = vld [vmem:[%s391 + $0x20] sm:$0xf]
        %v486 = vld [vmem:[%s391 + $0x24] sm:$0xf]
        %v487 = vld [vmem:[%s391 + $0x28] sm:$0xf]
        %v488 = vld [vmem:[%s391 + $0x2c] sm:$0xf]
        %v489 = vld [vmem:[%s391 + $0x30] sm:$0xf]
        %v490 = vld [vmem:[%s400] sm:$0xf]
        %v491 = vld [vmem:[%s400 + $0x4] sm:$0xf]
        %v492 = vld [vmem:[%s400 + $0x8] sm:$0xf]
        %v493 = vld [vmem:[%s400 + $0xc] sm:$0xf]
        %v494 = vld [vmem:[%s400 + $0x10] sm:$0xf]
        %v495 = vld [vmem:[%s400 + $0x14] sm:$0xf]
        %v496 = vld [vmem:[%s400 + $0x18] sm:$0xf]
        %v497 = vld [vmem:[%s400 + $0x1c] sm:$0xf]
        %v498 = vld [vmem:[%s400 + $0x20] sm:$0xf]
        %v499 = vld [vmem:[%s400 + $0x24] sm:$0xf]
        %v500 = vld [vmem:[%s400 + $0x28] sm:$0xf]
        %v501 = vld [vmem:[%s400 + $0x2c] sm:$0xf]
        %v502 = vld [vmem:[%s400 + $0x30] sm:$0xf]
        %v503 = vld [vmem:[#allocation8] sm:$0xf]
        %s504 = scalar_lea.vmem [#allocation8], 4
        %v505 = vld [vmem:[%s504] sm:$0xf]
        %v517 = vunpack.c.l.b16 %v464
        %v518 = vunpack.c.l.b16 %v465
        %v519 = vunpack.c.l.b16 %v466
        %v520 = vunpack.c.l.b16 %v467
        %v521 = vunpack.c.l.b16 %v468
        %v522 = vunpack.c.l.b16 %v469
        %v523 = vunpack.c.l.b16 %v470
        %v524 = vunpack.c.l.b16 %v471
        %v525 = vunpack.c.l.b16 %v472
        %v526 = vunpack.c.l.b16 %v473
        %v527 = vunpack.c.l.b16 %v474
        %v528 = vpack.c.b16 %v518, %v517
        %v529 = vpack.c.b16 %v520, %v519
        %v530 = vpack.c.b16 %v522, %v521
        %v531 = vpack.c.b16 %v524, %v523
        %v532 = vpack.c.b16 %v526, %v525
        %v533 = vpack.c.b16 %v527, %v527
        %vm534 = vsmask.f32 7424
        %v536 = vshrl.u32 %v528, 16
        %v538 = vshll.u32 %v528, 16
        %v540 = vrot.slane %v538, 1
        %v541 = vor.u32 %v536, %v540
        %v543 = vshll.u32 %v529, 16
        %v545 = vrot.slane %v543, 1
        %v546 = vsel %vm534, %v541, %v545
        %v547 = vshrl.u32 %v529, 16
        %v549 = vor.u32 %v547, %v545
        %v551 = vshll.u32 %v530, 16
        %v553 = vrot.slane %v551, 1
        %v554 = vsel %vm534, %v549, %v553
        %v555 = vshrl.u32 %v530, 16
        %v557 = vor.u32 %v555, %v553
        %v559 = vshll.u32 %v531, 16
        %v561 = vrot.slane %v559, 1
        %v562 = vsel %vm534, %v557, %v561
        %v563 = vshrl.u32 %v531, 16
        %v565 = vor.u32 %v563, %v561
        %v567 = vshll.u32 %v532, 16
        %v569 = vrot.slane %v567, 1
        %v570 = vsel %vm534, %v565, %v569
        %v571 = vshrl.u32 %v532, 16
        %v573 = vor.u32 %v571, %v569
        %v575 = vshll.u32 %v533, 16
        %v577 = vrot.slane %v575, 1
        %v578 = vsel %vm534, %v573, %v577
        %vm579 = vcmask 64512
        %v581 = vsel %vm579, %v546, 0
        %v584 = vsel %vm579, %v554, 0
        %v587 = vsel %vm579, %v562, 0
        %v590 = vsel %vm579, %v570, 0
        %v593 = vsel %vm579, %v578, 0
        %vm595 = vcmask 1043456
        %v597 = vsel %vm595, %v505, 0
        %599 = vmatprep.subr.bf16.mxu0 0
        %600 = vmatpush1.bf16.msra.mxu0 %v597
        %601 = vmatprep.subr.bf16.mxu0 0
        %602 = vmatpush1.bf16.msra.mxu0 0
        %603 = vmatprep.subr.bf16.mxu0 0
        %604 = vmatpush1.bf16.msra.mxu0 0
        %605 = vmatprep.subr.bf16.mxu0 0
        %606 = vmatpush1.bf16.msra.mxu0 0
        %607 = vmatprep.subr.bf16.mxu0 0
        %608 = vmatpush1.bf16.msra.mxu0 0
        %609 = vmatprep.subr.bf16.mxu0 0
        %610 = vmatpush1.bf16.msra.mxu0 0
        %611 = vmatprep.subr.bf16.mxu0 0
        %612 = vmatpush1.bf16.msra.mxu0 0
        %613 = vmatprep.subr.bf16.mxu0 0
        %614 = vmatpush1.bf16.msra.mxu0 0
        %615 = vmatprep.subr.bf16.mxu0 0
        %616 = vmatpush1.bf16.msra.mxu0 0
        %617 = vmatprep.subr.bf16.mxu0 0
        %618 = vmatpush1.bf16.msra.mxu0 0
        %619 = vmatprep.subr.bf16.mxu0 0
        %620 = vmatpush1.bf16.msra.mxu0 0
        %621 = vmatprep.subr.bf16.mxu0 0
        %622 = vmatpush1.bf16.msra.mxu0 0
        %623 = vmatprep.subr.bf16.mxu0 0
        %624 = vmatpush1.bf16.msra.mxu0 0
        %625 = vmatprep.subr.bf16.mxu0 0
        %626 = vmatpush1.bf16.msra.mxu0 0
        %627 = vmatprep.subr.bf16.mxu0 0
        %628 = vmatpush1.bf16.msra.mxu0 0
        %629 = vmatprep.subr.bf16.mxu0 0
        %630 = vmatpush1.bf16.msra.mxu0 0
        %631 = vmatprep.mubr.bf16.mxu0 0
        %632 = vmatmul.mubr.bf16.gmra.mrb[0].mxu0 %v581
        %v633 = vpop.f32.mrb[0].mxu0
        %v634 = vadd.f32 0.0, %v633
        %v635 = vpop.f32.mrb[0].mxu0
        %v636 = vpop.f32.mrb[0].mxu0
        %v637 = vadd.f32 0.0, %v636
        %v638 = vpop.f32.mrb[0].mxu0
        %639 = vmatprep.mubr.bf16.mxu0 0
        %640 = vmatmul.mubr.bf16.gmra.mrb[0].mxu0 %v584
        %v641 = vpop.f32.mrb[0].mxu0
        %v642 = vadd.f32 0.0, %v641
        %v643 = vpop.f32.mrb[0].mxu0
        %v644 = vpop.f32.mrb[0].mxu0
        %v645 = vadd.f32 0.0, %v644
        %v646 = vpop.f32.mrb[0].mxu0
        %647 = vmatprep.mubr.bf16.mxu0 0
        %648 = vmatmul.mubr.bf16.gmra.mrb[0].mxu0 %v587
        %v649 = vpop.f32.mrb[0].mxu0
        %v650 = vadd.f32 0.0, %v649
        %v651 = vpop.f32.mrb[0].mxu0
        %v652 = vpop.f32.mrb[0].mxu0
        %v653 = vadd.f32 0.0, %v652
        %v654 = vpop.f32.mrb[0].mxu0
        %655 = vmatprep.mubr.bf16.mxu0 0
        %656 = vmatmul.mubr.bf16.gmra.mrb[0].mxu0 %v590
        %v657 = vpop.f32.mrb[0].mxu0
        %v658 = vadd.f32 0.0, %v657
        %v659 = vpop.f32.mrb[0].mxu0
        %v660 = vpop.f32.mrb[0].mxu0
        %v661 = vadd.f32 0.0, %v660
        %v662 = vpop.f32.mrb[0].mxu0
        %663 = vmatprep.mubr.bf16.mxu0 0
        %664 = vmatmul.mubr.bf16.gmra.mrb[0].mxu0 %v593
        %v665 = vpop.f32.mrb[0].mxu0
        %v666 = vadd.f32 0.0, %v665
        %v667 = vpop.f32.mrb[0].mxu0
        %v668 = vpop.f32.mrb[0].mxu0
        %v669 = vadd.f32 0.0, %v668
        %v670 = vpop.f32.mrb[0].mxu0
        %671 = vdwg.mxu0
        %v672 = vsel %vm579, %v528, 0
        %v674 = vsel %vm579, %v529, 0
        %v676 = vsel %vm579, %v530, 0
        %v678 = vsel %vm579, %v531, 0
        %v680 = vsel %vm579, %v532, 0
        %v683 = vsel %vm595, %v503, 0
        %685 = vmatprep.subr.bf16.mxu0 0
        %686 = vmatpush1.bf16.msra.mxu0 %v683
        %687 = vmatprep.subr.bf16.mxu0 0
        %688 = vmatpush1.bf16.msra.mxu0 0
        %689 = vmatprep.subr.bf16.mxu0 0
        %690 = vmatpush1.bf16.msra.mxu0 0
        %691 = vmatprep.subr.bf16.mxu0 0
        %692 = vmatpush1.bf16.msra.mxu0 0
        %693 = vmatprep.subr.bf16.mxu0 0
        %694 = vmatpush1.bf16.msra.mxu0 0
        %695 = vmatprep.subr.bf16.mxu0 0
        %696 = vmatpush1.bf16.msra.mxu0 0
        %697 = vmatprep.subr.bf16.mxu0 0
        %698 = vmatpush1.bf16.msra.mxu0 0
        %699 = vmatprep.subr.bf16.mxu0 0
        %700 = vmatpush1.bf16.msra.mxu0 0
        %701 = vmatprep.subr.bf16.mxu0 0
        %702 = vmatpush1.bf16.msra.mxu0 0
        %703 = vmatprep.subr.bf16.mxu0 0
        %704 = vmatpush1.bf16.msra.mxu0 0
        %705 = vmatprep.subr.bf16.mxu0 0
        %706 = vmatpush1.bf16.msra.mxu0 0
        %707 = vmatprep.subr.bf16.mxu0 0
        %708 = vmatpush1.bf16.msra.mxu0 0
        %709 = vmatprep.subr.bf16.mxu0 0
        %710 = vmatpush1.bf16.msra.mxu0 0
        %711 = vmatprep.subr.bf16.mxu0 0
        %712 = vmatpush1.bf16.msra.mxu0 0
        %713 = vmatprep.subr.bf16.mxu0 0
        %714 = vmatpush1.bf16.msra.mxu0 0
        %715 = vmatprep.subr.bf16.mxu0 0
        %716 = vmatpush1.bf16.msra.mxu0 0
        %717 = vmatprep.mubr.bf16.mxu0 0
        %718 = vmatmul.mubr.bf16.gmra.mrb[0].mxu0 %v672
        %v719 = vpop.f32.mrb[0].mxu0
        %v720 = vadd.f32 %v634, %v719
        %v721 = vpop.f32.mrb[0].mxu0
        %v722 = vpop.f32.mrb[0].mxu0
        %v723 = vadd.f32 %v637, %v722
        %v724 = vpop.f32.mrb[0].mxu0
        %725 = vmatprep.mubr.bf16.mxu0 0
        %726 = vmatmul.mubr.bf16.gmra.mrb[0].mxu0 %v674
        %v727 = vpop.f32.mrb[0].mxu0
        %v728 = vadd.f32 %v642, %v727
        %v729 = vpop.f32.mrb[0].mxu0
        %v730 = vpop.f32.mrb[0].mxu0
        %v731 = vadd.f32 %v645, %v730
        %v732 = vpop.f32.mrb[0].mxu0
        %733 = vmatprep.mubr.bf16.mxu0 0
        %734 = vmatmul.mubr.bf16.gmra.mrb[0].mxu0 %v676
        %v735 = vpop.f32.mrb[0].mxu0
        %v736 = vadd.f32 %v650, %v735
        %v737 = vpop.f32.mrb[0].mxu0
        %v738 = vpop.f32.mrb[0].mxu0
        %v739 = vadd.f32 %v653, %v738
        %v740 = vpop.f32.mrb[0].mxu0
        %741 = vmatprep.mubr.bf16.mxu0 0
        %742 = vmatmul.mubr.bf16.gmra.mrb[0].mxu0 %v678
        %v743 = vpop.f32.mrb[0].mxu0
        %v744 = vadd.f32 %v658, %v743
        %v745 = vpop.f32.mrb[0].mxu0
        %v746 = vpop.f32.mrb[0].mxu0
        %v747 = vadd.f32 %v661, %v746
        %v748 = vpop.f32.mrb[0].mxu0
        %749 = vmatprep.mubr.bf16.mxu0 0
        %750 = vmatmul.mubr.bf16.gmra.mrb[0].mxu0 %v680
        %v751 = vpop.f32.mrb[0].mxu0
        %v752 = vadd.f32 %v666, %v751
        %v753 = vpop.f32.mrb[0].mxu0
        %v754 = vpop.f32.mrb[0].mxu0
        %v755 = vadd.f32 %v669, %v754
        %v756 = vpop.f32.mrb[0].mxu0
        %757 = vdwg.mxu0
        %s758 = scalar_lea.vmem [#allocation8], 8
        %v759 = vld [vmem:[%s758] sm:$0xf]
        %vm760 = vcmask 1046528
        %v761 = vrot.slane %v528, 1
        %v762 = vrot.slane %v529, 1
        %v763 = vsel %vm760, %v761, %v762
        %v764 = vrot.slane %v530, 1
        %v765 = vsel %vm760, %v762, %v764
        %v766 = vrot.slane %v531, 1
        %v767 = vsel %vm760, %v764, %v766
        %v768 = vrot.slane %v532, 1
        %v769 = vsel %vm760, %v766, %v768
        %v770 = vrot.slane %v533, 1
        %v771 = vsel %vm760, %v768, %v770
        %v773 = vsel %vm579, %v763, 0
        %v776 = vsel %vm579, %v765, 0
        %v779 = vsel %vm579, %v767, 0
        %v782 = vsel %vm579, %v769, 0
        %v785 = vsel %vm579, %v771, 0
        %v788 = vsel %vm595, %v759, 0
        %790 = vmatprep.subr.bf16.mxu0 0
        %791 = vmatpush1.bf16.msra.mxu0 %v788
        %792 = vmatprep.subr.bf16.mxu0 0
        %793 = vmatpush1.bf16.msra.mxu0 0
        %794 = vmatprep.subr.bf16.mxu0 0
        %795 = vmatpush1.bf16.msra.mxu0 0
        %796 = vmatprep.subr.bf16.mxu0 0
        %797 = vmatpush1.bf16.msra.mxu0 0
        %798 = vmatprep.subr.bf16.mxu0 0
        %799 = vmatpush1.bf16.msra.mxu0 0
        %800 = vmatprep.subr.bf16.mxu0 0
        %801 = vmatpush1.bf16.msra.mxu0 0
        %802 = vmatprep.subr.bf16.mxu0 0
        %803 = vmatpush1.bf16.msra.mxu0 0
        %804 = vmatprep.subr.bf16.mxu0 0
        %805 = vmatpush1.bf16.msra.mxu0 0
        %806 = vmatprep.subr.bf16.mxu0 0
        %807 = vmatpush1.bf16.msra.mxu0 0
        %808 = vmatprep.subr.bf16.mxu0 0
        %809 = vmatpush1.bf16.msra.mxu0 0
        %810 = vmatprep.subr.bf16.mxu0 0
        %811 = vmatpush1.bf16.msra.mxu0 0
        %812 = vmatprep.subr.bf16.mxu0 0
        %813 = vmatpush1.bf16.msra.mxu0 0
        %814 = vmatprep.subr.bf16.mxu0 0
        %815 = vmatpush1.bf16.msra.mxu0 0
        %816 = vmatprep.subr.bf16.mxu0 0
        %817 = vmatpush1.bf16.msra.mxu0 0
        %818 = vmatprep.subr.bf16.mxu0 0
        %819 = vmatpush1.bf16.msra.mxu0 0
        %820 = vmatprep.subr.bf16.mxu0 0
        %821 = vmatpush1.bf16.msra.mxu0 0
        %822 = vmatprep.mubr.bf16.mxu0 0
        %823 = vmatmul.mubr.bf16.gmra.mrb[0].mxu0 %v773
        %v824 = vpop.f32.mrb[0].mxu0
        %v825 = vadd.f32 0.0, %v824
        %v826 = vpop.f32.mrb[0].mxu0
        %v827 = vpop.f32.mrb[0].mxu0
        %v828 = vadd.f32 0.0, %v827
        %v829 = vpop.f32.mrb[0].mxu0
        %830 = vmatprep.mubr.bf16.mxu0 0
        %831 = vmatmul.mubr.bf16.gmra.mrb[0].mxu0 %v776
        %v832 = vpop.f32.mrb[0].mxu0
        %v833 = vadd.f32 0.0, %v832
        %v834 = vpop.f32.mrb[0].mxu0
        %v835 = vpop.f32.mrb[0].mxu0
        %v836 = vadd.f32 0.0, %v835
        %v837 = vpop.f32.mrb[0].mxu0
        %838 = vmatprep.mubr.bf16.mxu0 0
        %839 = vmatmul.mubr.bf16.gmra.mrb[0].mxu0 %v779
        %v840 = vpop.f32.mrb[0].mxu0
        %v841 = vadd.f32 0.0, %v840
        %v842 = vpop.f32.mrb[0].mxu0
        %v843 = vpop.f32.mrb[0].mxu0
        %v844 = vadd.f32 0.0, %v843
        %v845 = vpop.f32.mrb[0].mxu0
        %846 = vmatprep.mubr.bf16.mxu0 0
        %847 = vmatmul.mubr.bf16.gmra.mrb[0].mxu0 %v782
        %v848 = vpop.f32.mrb[0].mxu0
        %v849 = vadd.f32 0.0, %v848
        %v850 = vpop.f32.mrb[0].mxu0
        %v851 = vpop.f32.mrb[0].mxu0
        %v852 = vadd.f32 0.0, %v851
        %v853 = vpop.f32.mrb[0].mxu0
        %854 = vmatprep.mubr.bf16.mxu0 0
        %855 = vmatmul.mubr.bf16.gmra.mrb[0].mxu0 %v785
        %v856 = vpop.f32.mrb[0].mxu0
        %v857 = vadd.f32 0.0, %v856
        %v858 = vpop.f32.mrb[0].mxu0
        %v859 = vpop.f32.mrb[0].mxu0
        %v860 = vadd.f32 0.0, %v859
        %v861 = vpop.f32.mrb[0].mxu0
        %862 = vdwg.mxu0
        %v863 = vadd.f32 %v720, %v825
        %v864 = vadd.f32 %v723, %v828
        %v865 = vadd.f32 %v728, %v833
        %v866 = vadd.f32 %v731, %v836
        %v867 = vadd.f32 %v736, %v841
        %v868 = vadd.f32 %v739, %v844
        %v869 = vadd.f32 %v744, %v849
        %v870 = vadd.f32 %v747, %v852
        %v871 = vadd.f32 %v752, %v857
        %v872 = vadd.f32 %v755, %v860
        %s873 = scalar_lea.vmem [#allocation8], 12
        %v874 = vld [vmem:[%s873] sm:$0xf]
        %v876 = vunpack.c.l.b16 %v475
        %v877 = vpack.c.b16 %v519, %v518
        %v878 = vpack.c.b16 %v521, %v520
        %v879 = vpack.c.b16 %v523, %v522
        %v880 = vpack.c.b16 %v525, %v524
        %v881 = vpack.c.b16 %v527, %v526
        %v882 = vpack.c.b16 %v876, %v876
        %v883 = vrot.slane %v877, 1
        %v884 = vrot.slane %v878, 1
        %v885 = vsel %vm760, %v883, %v884
        %v886 = vrot.slane %v879, 1
        %v887 = vsel %vm760, %v884, %v886
        %v888 = vrot.slane %v880, 1
        %v889 = vsel %vm760, %v886, %v888
        %v890 = vrot.slane %v881, 1
        %v891 = vsel %vm760, %v888, %v890
        %v892 = vrot.slane %v882, 1
        %v893 = vsel %vm760, %v890, %v892
        %v895 = vsel %vm579, %v885, 0
        %v898 = vsel %vm579, %v887, 0
        %v901 = vsel %vm579, %v889, 0
        %v904 = vsel %vm579, %v891, 0
        %v907 = vsel %vm579, %v893, 0
        %v910 = vsel %vm595, %v874, 0
        %912 = vmatprep.subr.bf16.mxu0 0
        %913 = vmatpush1.bf16.msra.mxu0 %v910
        %914 = vmatprep.subr.bf16.mxu0 0
        %915 = vmatpush1.bf16.msra.mxu0 0
        %916 = vmatprep.subr.bf16.mxu0 0
        %917 = vmatpush1.bf16.msra.mxu0 0
        %918 = vmatprep.subr.bf16.mxu0 0
        %919 = vmatpush1.bf16.msra.mxu0 0
        %920 = vmatprep.subr.bf16.mxu0 0
        %921 = vmatpush1.bf16.msra.mxu0 0
        %922 = vmatprep.subr.bf16.mxu0 0
        %923 = vmatpush1.bf16.msra.mxu0 0
        %924 = vmatprep.subr.bf16.mxu0 0
        %925 = vmatpush1.bf16.msra.mxu0 0
        %926 = vmatprep.subr.bf16.mxu0 0
        %927 = vmatpush1.bf16.msra.mxu0 0
        %928 = vmatprep.subr.bf16.mxu0 0
        %929 = vmatpush1.bf16.msra.mxu0 0
        %930 = vmatprep.subr.bf16.mxu0 0
        %931 = vmatpush1.bf16.msra.mxu0 0
        %932 = vmatprep.subr.bf16.mxu0 0
        %933 = vmatpush1.bf16.msra.mxu0 0
        %934 = vmatprep.subr.bf16.mxu0 0
        %935 = vmatpush1.bf16.msra.mxu0 0
        %936 = vmatprep.subr.bf16.mxu0 0
        %937 = vmatpush1.bf16.msra.mxu0 0
        %938 = vmatprep.subr.bf16.mxu0 0
        %939 = vmatpush1.bf16.msra.mxu0 0
        %940 = vmatprep.subr.bf16.mxu0 0
        %941 = vmatpush1.bf16.msra.mxu0 0
        %942 = vmatprep.subr.bf16.mxu0 0
        %943 = vmatpush1.bf16.msra.mxu0 0
        %944 = vmatprep.mubr.bf16.mxu0 0
        %945 = vmatmul.mubr.bf16.gmra.mrb[0].mxu0 %v895
        %v946 = vpop.f32.mrb[0].mxu0
        %v947 = vadd.f32 0.0, %v946
        %v948 = vpop.f32.mrb[0].mxu0
        %v949 = vpop.f32.mrb[0].mxu0
        %v950 = vadd.f32 0.0, %v949
        %v951 = vpop.f32.mrb[0].mxu0
        %952 = vmatprep.mubr.bf16.mxu0 0
        %953 = vmatmul.mubr.bf16.gmra.mrb[0].mxu0 %v898
        %v954 = vpop.f32.mrb[0].mxu0
        %v955 = vadd.f32 0.0, %v954
        %v956 = vpop.f32.mrb[0].mxu0
        %v957 = vpop.f32.mrb[0].mxu0
        %v958 = vadd.f32 0.0, %v957
        %v959 = vpop.f32.mrb[0].mxu0
        %960 = vmatprep.mubr.bf16.mxu0 0
        %961 = vmatmul.mubr.bf16.gmra.mrb[0].mxu0 %v901
        %v962 = vpop.f32.mrb[0].mxu0
        %v963 = vadd.f32 0.0, %v962
        %v964 = vpop.f32.mrb[0].mxu0
        %v965 = vpop.f32.mrb[0].mxu0
        %v966 = vadd.f32 0.0, %v965
        %v967 = vpop.f32.mrb[0].mxu0
        %968 = vmatprep.mubr.bf16.mxu0 0
        %969 = vmatmul.mubr.bf16.gmra.mrb[0].mxu0 %v904
        %v970 = vpop.f32.mrb[0].mxu0
        %v971 = vadd.f32 0.0, %v970
        %v972 = vpop.f32.mrb[0].mxu0
        %v973 = vpop.f32.mrb[0].mxu0
        %v974 = vadd.f32 0.0, %v973
        %v975 = vpop.f32.mrb[0].mxu0
        %976 = vmatprep.mubr.bf16.mxu0 0
        %977 = vmatmul.mubr.bf16.gmra.mrb[0].mxu0 %v907
        %v978 = vpop.f32.mrb[0].mxu0
        %v979 = vadd.f32 0.0, %v978
        %v980 = vpop.f32.mrb[0].mxu0
        %v981 = vpop.f32.mrb[0].mxu0
        %v982 = vadd.f32 0.0, %v981
        %v983 = vpop.f32.mrb[0].mxu0
        %984 = vdwg.mxu0
        %v985 = vadd.f32 %v863, %v947
        %v986 = vadd.f32 %v864, %v950
        %v987 = vadd.f32 %v865, %v955
        %v988 = vadd.f32 %v866, %v958
        %v989 = vadd.f32 %v867, %v963
        %v990 = vadd.f32 %v868, %v966
        %v991 = vadd.f32 %v869, %v971
        %v992 = vadd.f32 %v870, %v974
        %v993 = vadd.f32 %v871, %v979
        %v994 = vadd.f32 %v872, %v982
        %s995 = scalar_lea.vmem [#allocation8], 16
        %v996 = vld [vmem:[%s995] sm:$0xf]
        %vm997 = vsmask.f32 6400
        %v999 = vshrl.u32 %v877, 16
        %v1001 = vrot.slane %v999, 1
        %v1002 = vshll.u32 %v877, 16
        %v1004 = vrot.slane %v1002, 2
        %v1005 = vor.u32 %v1001, %v1004
        %v1007 = vshrl.u32 %v878, 16
        %v1009 = vrot.slane %v1007, 1
        %v1010 = vshll.u32 %v878, 16
        %v1012 = vrot.slane %v1010, 2
        %v1013 = vor.u32 %v1009, %v1012
        %v1014 = vsel %vm997, %v1005, %v1013
        %v1016 = vshrl.u32 %v879, 16
        %v1018 = vrot.slane %v1016, 1
        %v1019 = vshll.u32 %v879, 16
        %v1021 = vrot.slane %v1019, 2
        %v1022 = vor.u32 %v1018, %v1021
        %v1023 = vsel %vm997, %v1013, %v1022
        %v1025 = vshrl.u32 %v880, 16
        %v1027 = vrot.slane %v1025, 1
        %v1028 = vshll.u32 %v880, 16
        %v1030 = vrot.slane %v1028, 2
        %v1031 = vor.u32 %v1027, %v1030
        %v1032 = vsel %vm997, %v1022, %v1031
        %v1034 = vshrl.u32 %v881, 16
        %v1036 = vrot.slane %v1034, 1
        %v1037 = vshll.u32 %v881, 16
        %v1039 = vrot.slane %v1037, 2
        %v1040 = vor.u32 %v1036, %v1039
        %v1041 = vsel %vm997, %v1031, %v1040
        %v1043 = vshrl.u32 %v882, 16
        %v1045 = vrot.slane %v1043, 1
        %v1046 = vshll.u32 %v882, 16
        %v1048 = vrot.slane %v1046, 2
        %v1049 = vor.u32 %v1045, %v1048
        %v1050 = vsel %vm997, %v1040, %v1049
        %v1052 = vsel %vm579, %v1014, 0
        %v1055 = vsel %vm579, %v1023, 0
        %v1058 = vsel %vm579, %v1032, 0
        %v1061 = vsel %vm579, %v1041, 0
        %v1064 = vsel %vm579, %v1050, 0
        %v1067 = vsel %vm595, %v996, 0
        %1069 = vmatprep.subr.bf16.mxu0 0
        %1070 = vmatpush1.bf16.msra.mxu0 %v1067
        %1071 = vmatprep.subr.bf16.mxu0 0
        %1072 = vmatpush1.bf16.msra.mxu0 0
        %1073 = vmatprep.subr.bf16.mxu0 0
        %1074 = vmatpush1.bf16.msra.mxu0 0
        %1075 = vmatprep.subr.bf16.mxu0 0
        %1076 = vmatpush1.bf16.msra.mxu0 0
        %1077 = vmatprep.subr.bf16.mxu0 0
        %1078 = vmatpush1.bf16.msra.mxu0 0
        %1079 = vmatprep.subr.bf16.mxu0 0
        %1080 = vmatpush1.bf16.msra.mxu0 0
        %1081 = vmatprep.subr.bf16.mxu0 0
        %1082 = vmatpush1.bf16.msra.mxu0 0
        %1083 = vmatprep.subr.bf16.mxu0 0
        %1084 = vmatpush1.bf16.msra.mxu0 0
        %1085 = vmatprep.subr.bf16.mxu0 0
        %1086 = vmatpush1.bf16.msra.mxu0 0
        %1087 = vmatprep.subr.bf16.mxu0 0
        %1088 = vmatpush1.bf16.msra.mxu0 0
        %1089 = vmatprep.subr.bf16.mxu0 0
        %1090 = vmatpush1.bf16.msra.mxu0 0
        %1091 = vmatprep.subr.bf16.mxu0 0
        %1092 = vmatpush1.bf16.msra.mxu0 0
        %1093 = vmatprep.subr.bf16.mxu0 0
        %1094 = vmatpush1.bf16.msra.mxu0 0
        %1095 = vmatprep.subr.bf16.mxu0 0
        %1096 = vmatpush1.bf16.msra.mxu0 0
        %1097 = vmatprep.subr.bf16.mxu0 0
        %1098 = vmatpush1.bf16.msra.mxu0 0
        %1099 = vmatprep.subr.bf16.mxu0 0
        %1100 = vmatpush1.bf16.msra.mxu0 0
        %1101 = vmatprep.mubr.bf16.mxu0 0
        %1102 = vmatmul.mubr.bf16.gmra.mrb[0].mxu0 %v1052
        %v1103 = vpop.f32.mrb[0].mxu0
        %v1104 = vadd.f32 0.0, %v1103
        %v1105 = vpop.f32.mrb[0].mxu0
        %v1106 = vpop.f32.mrb[0].mxu0
        %v1107 = vadd.f32 0.0, %v1106
        %v1108 = vpop.f32.mrb[0].mxu0
        %1109 = vmatprep.mubr.bf16.mxu0 0
        %1110 = vmatmul.mubr.bf16.gmra.mrb[0].mxu0 %v1055
        %v1111 = vpop.f32.mrb[0].mxu0
        %v1112 = vadd.f32 0.0, %v1111
        %v1113 = vpop.f32.mrb[0].mxu0
        %v1114 = vpop.f32.mrb[0].mxu0
        %v1115 = vadd.f32 0.0, %v1114
        %v1116 = vpop.f32.mrb[0].mxu0
        %1117 = vmatprep.mubr.bf16.mxu0 0
        %1118 = vmatmul.mubr.bf16.gmra.mrb[0].mxu0 %v1058
        %v1119 = vpop.f32.mrb[0].mxu0
        %v1120 = vadd.f32 0.0, %v1119
        %v1121 = vpop.f32.mrb[0].mxu0
        %v1122 = vpop.f32.mrb[0].mxu0
        %v1123 = vadd.f32 0.0, %v1122
        %v1124 = vpop.f32.mrb[0].mxu0
        %1125 = vmatprep.mubr.bf16.mxu0 0
        %1126 = vmatmul.mubr.bf16.gmra.mrb[0].mxu0 %v1061
        %v1127 = vpop.f32.mrb[0].mxu0
        %v1128 = vadd.f32 0.0, %v1127
        %v1129 = vpop.f32.mrb[0].mxu0
        %v1130 = vpop.f32.mrb[0].mxu0
        %v1131 = vadd.f32 0.0, %v1130
        %v1132 = vpop.f32.mrb[0].mxu0
        %1133 = vmatprep.mubr.bf16.mxu0 0
        %1134 = vmatmul.mubr.bf16.gmra.mrb[0].mxu0 %v1064
        %v1135 = vpop.f32.mrb[0].mxu0
        %v1136 = vadd.f32 0.0, %v1135
        %v1137 = vpop.f32.mrb[0].mxu0
        %v1138 = vpop.f32.mrb[0].mxu0
        %v1139 = vadd.f32 0.0, %v1138
        %v1140 = vpop.f32.mrb[0].mxu0
        %1141 = vdwg.mxu0
        %v1142 = vadd.f32 %v985, %v1104
        %v1143 = vadd.f32 %v986, %v1107
        %v1144 = vadd.f32 %v987, %v1112
        %v1145 = vadd.f32 %v988, %v1115
        %v1146 = vadd.f32 %v989, %v1120
        %v1147 = vadd.f32 %v990, %v1123
        %v1148 = vadd.f32 %v991, %v1128
        %v1149 = vadd.f32 %v992, %v1131
        %v1150 = vadd.f32 %v993, %v1136
        %v1151 = vadd.f32 %v994, %v1139
        %s1152 = scalar_lea.vmem [#allocation8], 20
        %v1153 = vld [vmem:[%s1152] sm:$0xf]
        %vm1154 = vcmask 1045504
        %v1155 = vrot.slane %v877, 2
        %v1156 = vrot.slane %v878, 2
        %v1157 = vsel %vm1154, %v1155, %v1156
        %v1158 = vrot.slane %v879, 2
        %v1159 = vsel %vm1154, %v1156, %v1158
        %v1160 = vrot.slane %v880, 2
        %v1161 = vsel %vm1154, %v1158, %v1160
        %v1162 = vrot.slane %v881, 2
        %v1163 = vsel %vm1154, %v1160, %v1162
        %v1164 = vrot.slane %v882, 2
        %v1165 = vsel %vm1154, %v1162, %v1164
        %v1167 = vsel %vm579, %v1157, 0
        %v1170 = vsel %vm579, %v1159, 0
        %v1173 = vsel %vm579, %v1161, 0
        %v1176 = vsel %vm579, %v1163, 0
        %v1179 = vsel %vm579, %v1165, 0
        %v1182 = vsel %vm595, %v1153, 0
        %1184 = vmatprep.subr.bf16.mxu0 0
        %1185 = vmatpush1.bf16.msra.mxu0 %v1182
        %1186 = vmatprep.subr.bf16.mxu0 0
        %1187 = vmatpush1.bf16.msra.mxu0 0
        %1188 = vmatprep.subr.bf16.mxu0 0
        %1189 = vmatpush1.bf16.msra.mxu0 0
        %1190 = vmatprep.subr.bf16.mxu0 0
        %1191 = vmatpush1.bf16.msra.mxu0 0
        %1192 = vmatprep.subr.bf16.mxu0 0
        %1193 = vmatpush1.bf16.msra.mxu0 0
        %1194 = vmatprep.subr.bf16.mxu0 0
        %1195 = vmatpush1.bf16.msra.mxu0 0
        %1196 = vmatprep.subr.bf16.mxu0 0
        %1197 = vmatpush1.bf16.msra.mxu0 0
        %1198 = vmatprep.subr.bf16.mxu0 0
        %1199 = vmatpush1.bf16.msra.mxu0 0
        %1200 = vmatprep.subr.bf16.mxu0 0
        %1201 = vmatpush1.bf16.msra.mxu0 0
        %1202 = vmatprep.subr.bf16.mxu0 0
        %1203 = vmatpush1.bf16.msra.mxu0 0
        %1204 = vmatprep.subr.bf16.mxu0 0
        %1205 = vmatpush1.bf16.msra.mxu0 0
        %1206 = vmatprep.subr.bf16.mxu0 0
        %1207 = vmatpush1.bf16.msra.mxu0 0
        %1208 = vmatprep.subr.bf16.mxu0 0
        %1209 = vmatpush1.bf16.msra.mxu0 0
        %1210 = vmatprep.subr.bf16.mxu0 0
        %1211 = vmatpush1.bf16.msra.mxu0 0
        %1212 = vmatprep.subr.bf16.mxu0 0
        %1213 = vmatpush1.bf16.msra.mxu0 0
        %1214 = vmatprep.subr.bf16.mxu0 0
        %1215 = vmatpush1.bf16.msra.mxu0 0
        %1216 = vmatprep.mubr.bf16.mxu0 0
        %1217 = vmatmul.mubr.bf16.gmra.mrb[0].mxu0 %v1167
        %v1218 = vpop.f32.mrb[0].mxu0
        %v1219 = vadd.f32 0.0, %v1218
        %v1220 = vpop.f32.mrb[0].mxu0
        %v1221 = vpop.f32.mrb[0].mxu0
        %v1222 = vadd.f32 0.0, %v1221
        %v1223 = vpop.f32.mrb[0].mxu0
        %1224 = vmatprep.mubr.bf16.mxu0 0
        %1225 = vmatmul.mubr.bf16.gmra.mrb[0].mxu0 %v1170
        %v1226 = vpop.f32.mrb[0].mxu0
        %v1227 = vadd.f32 0.0, %v1226
        %v1228 = vpop.f32.mrb[0].mxu0
        %v1229 = vpop.f32.mrb[0].mxu0
        %v1230 = vadd.f32 0.0, %v1229
        %v1231 = vpop.f32.mrb[0].mxu0
        %1232 = vmatprep.mubr.bf16.mxu0 0
        %1233 = vmatmul.mubr.bf16.gmra.mrb[0].mxu0 %v1173
        %v1234 = vpop.f32.mrb[0].mxu0
        %v1235 = vadd.f32 0.0, %v1234
        %v1236 = vpop.f32.mrb[0].mxu0
        %v1237 = vpop.f32.mrb[0].mxu0
        %v1238 = vadd.f32 0.0, %v1237
        %v1239 = vpop.f32.mrb[0].mxu0
        %1240 = vmatprep.mubr.bf16.mxu0 0
        %1241 = vmatmul.mubr.bf16.gmra.mrb[0].mxu0 %v1176
        %v1242 = vpop.f32.mrb[0].mxu0
        %v1243 = vadd.f32 0.0, %v1242
        %v1244 = vpop.f32.mrb[0].mxu0
        %v1245 = vpop.f32.mrb[0].mxu0
        %v1246 = vadd.f32 0.0, %v1245
        %v1247 = vpop.f32.mrb[0].mxu0
        %1248 = vmatprep.mubr.bf16.mxu0 0
        %1249 = vmatmul.mubr.bf16.gmra.mrb[0].mxu0 %v1179
        %v1250 = vpop.f32.mrb[0].mxu0
        %v1251 = vadd.f32 0.0, %v1250
        %v1252 = vpop.f32.mrb[0].mxu0
        %v1253 = vpop.f32.mrb[0].mxu0
        %v1254 = vadd.f32 0.0, %v1253
        %v1255 = vpop.f32.mrb[0].mxu0
        %1256 = vdwg.mxu0
        %v1257 = vadd.f32 %v1142, %v1219
        %v1258 = vadd.f32 %v1143, %v1222
        %v1259 = vadd.f32 %v1144, %v1227
        %v1260 = vadd.f32 %v1145, %v1230
        %v1261 = vadd.f32 %v1146, %v1235
        %v1262 = vadd.f32 %v1147, %v1238
        %v1263 = vadd.f32 %v1148, %v1243
        %v1264 = vadd.f32 %v1149, %v1246
        %v1265 = vadd.f32 %v1150, %v1251
        %v1266 = vadd.f32 %v1151, %v1254
        %s1267 = scalar_lea.vmem [#allocation8], 24
        %v1268 = vld [vmem:[%s1267] sm:$0xf]
        %v1270 = vunpack.c.l.b16 %v476
        %v1271 = vpack.c.b16 %v876, %v527
        %v1272 = vpack.c.b16 %v1270, %v1270
        %v1273 = vrot.slane %v529, 2
        %v1274 = vrot.slane %v530, 2
        %v1275 = vsel %vm1154, %v1273, %v1274
        %v1276 = vrot.slane %v531, 2
        %v1277 = vsel %vm1154, %v1274, %v1276
        %v1278 = vrot.slane %v532, 2
        %v1279 = vsel %vm1154, %v1276, %v1278
        %v1280 = vrot.slane %v1271, 2
        %v1281 = vsel %vm1154, %v1278, %v1280
        %v1282 = vrot.slane %v1272, 2
        %v1283 = vsel %vm1154, %v1280, %v1282
        %v1285 = vsel %vm579, %v1275, 0
        %v1288 = vsel %vm579, %v1277, 0
        %v1291 = vsel %vm579, %v1279, 0
        %v1294 = vsel %vm579, %v1281, 0
        %v1297 = vsel %vm579, %v1283, 0
        %v1300 = vsel %vm595, %v1268, 0
        %1302 = vmatprep.subr.bf16.mxu0 0
        %1303 = vmatpush1.bf16.msra.mxu0 %v1300
        %1304 = vmatprep.subr.bf16.mxu0 0
        %1305 = vmatpush1.bf16.msra.mxu0 0
        %1306 = vmatprep.subr.bf16.mxu0 0
        %1307 = vmatpush1.bf16.msra.mxu0 0
        %1308 = vmatprep.subr.bf16.mxu0 0
        %1309 = vmatpush1.bf16.msra.mxu0 0
        %1310 = vmatprep.subr.bf16.mxu0 0
        %1311 = vmatpush1.bf16.msra.mxu0 0
        %1312 = vmatprep.subr.bf16.mxu0 0
        %1313 = vmatpush1.bf16.msra.mxu0 0
        %1314 = vmatprep.subr.bf16.mxu0 0
        %1315 = vmatpush1.bf16.msra.mxu0 0
        %1316 = vmatprep.subr.bf16.mxu0 0
        %1317 = vmatpush1.bf16.msra.mxu0 0
        %1318 = vmatprep.subr.bf16.mxu0 0
        %1319 = vmatpush1.bf16.msra.mxu0 0
        %1320 = vmatprep.subr.bf16.mxu0 0
        %1321 = vmatpush1.bf16.msra.mxu0 0
        %1322 = vmatprep.subr.bf16.mxu0 0
        %1323 = vmatpush1.bf16.msra.mxu0 0
        %1324 = vmatprep.subr.bf16.mxu0 0
        %1325 = vmatpush1.bf16.msra.mxu0 0
        %1326 = vmatprep.subr.bf16.mxu0 0
        %1327 = vmatpush1.bf16.msra.mxu0 0
        %1328 = vmatprep.subr.bf16.mxu0 0
        %1329 = vmatpush1.bf16.msra.mxu0 0
        %1330 = vmatprep.subr.bf16.mxu0 0
        %1331 = vmatpush1.bf16.msra.mxu0 0
        %1332 = vmatprep.subr.bf16.mxu0 0
        %1333 = vmatpush1.bf16.msra.mxu0 0
        %1334 = vmatprep.mubr.bf16.mxu0 0
        %1335 = vmatmul.mubr.bf16.gmra.mrb[0].mxu0 %v1285
        %v1336 = vpop.f32.mrb[0].mxu0
        %v1337 = vadd.f32 0.0, %v1336
        %v1338 = vpop.f32.mrb[0].mxu0
        %v1339 = vpop.f32.mrb[0].mxu0
        %v1340 = vadd.f32 0.0, %v1339
        %v1341 = vpop.f32.mrb[0].mxu0
        %1342 = vmatprep.mubr.bf16.mxu0 0
        %1343 = vmatmul.mubr.bf16.gmra.mrb[0].mxu0 %v1288
        %v1344 = vpop.f32.mrb[0].mxu0
        %v1345 = vadd.f32 0.0, %v1344
        %v1346 = vpop.f32.mrb[0].mxu0
        %v1347 = vpop.f32.mrb[0].mxu0
        %v1348 = vadd.f32 0.0, %v1347
        %v1349 = vpop.f32.mrb[0].mxu0
        %1350 = vmatprep.mubr.bf16.mxu0 0
        %1351 = vmatmul.mubr.bf16.gmra.mrb[0].mxu0 %v1291
        %v1352 = vpop.f32.mrb[0].mxu0
        %v1353 = vadd.f32 0.0, %v1352
        %v1354 = vpop.f32.mrb[0].mxu0
        %v1355 = vpop.f32.mrb[0].mxu0
        %v1356 = vadd.f32 0.0, %v1355
        %v1357 = vpop.f32.mrb[0].mxu0
        %1358 = vmatprep.mubr.bf16.mxu0 0
        %1359 = vmatmul.mubr.bf16.gmra.mrb[0].mxu0 %v1294
        %v1360 = vpop.f32.mrb[0].mxu0
        %v1361 = vadd.f32 0.0, %v1360
        %v1362 = vpop.f32.mrb[0].mxu0
        %v1363 = vpop.f32.mrb[0].mxu0
        %v1364 = vadd.f32 0.0, %v1363
        %v1365 = vpop.f32.mrb[0].mxu0
        %1366 = vmatprep.mubr.bf16.mxu0 0
        %1367 = vmatmul.mubr.bf16.gmra.mrb[0].mxu0 %v1297
        %v1368 = vpop.f32.mrb[0].mxu0
        %v1369 = vadd.f32 0.0, %v1368
        %v1370 = vpop.f32.mrb[0].mxu0
        %v1371 = vpop.f32.mrb[0].mxu0
        %v1372 = vadd.f32 0.0, %v1371
        %v1373 = vpop.f32.mrb[0].mxu0
        %1374 = vdwg.mxu0
        %v1375 = vadd.f32 %v1257, %v1337
        %v1376 = vadd.f32 %v1258, %v1340
        %v1377 = vadd.f32 %v1259, %v1345
        %v1378 = vadd.f32 %v1260, %v1348
        %v1379 = vadd.f32 %v1261, %v1353
        %v1380 = vadd.f32 %v1262, %v1356
        %v1381 = vadd.f32 %v1263, %v1361
        %v1382 = vadd.f32 %v1264, %v1364
        %v1383 = vadd.f32 %v1265, %v1369
        %v1384 = vadd.f32 %v1266, %v1372
        %s1385 = scalar_lea.vmem [#allocation8], 28
        %v1386 = vld [vmem:[%s1385] sm:$0xf]
        %vm1387 = vsmask.f32 5376
        %v1388 = vrot.slane %v547, 2
        %v1389 = vrot.slane %v543, 3
        %v1390 = vor.u32 %v1388, %v1389
        %v1391 = vrot.slane %v555, 2
        %v1392 = vrot.slane %v551, 3
        %v1393 = vor.u32 %v1391, %v1392
        %v1394 = vsel %vm1387, %v1390, %v1393
        %v1395 = vrot.slane %v563, 2
        %v1396 = vrot.slane %v559, 3
        %v1397 = vor.u32 %v1395, %v1396
        %v1398 = vsel %vm1387, %v1393, %v1397
        %v1399 = vrot.slane %v571, 2
        %v1400 = vrot.slane %v567, 3
        %v1401 = vor.u32 %v1399, %v1400
        %v1402 = vsel %vm1387, %v1397, %v1401
        %v1404 = vshrl.u32 %v1271, 16
        %v1406 = vrot.slane %v1404, 2
        %v1407 = vshll.u32 %v1271, 16
        %v1409 = vrot.slane %v1407, 3
        %v1410 = vor.u32 %v1406, %v1409
        %v1411 = vsel %vm1387, %v1401, %v1410
        %v1413 = vshrl.u32 %v1272, 16
        %v1415 = vrot.slane %v1413, 2
        %v1416 = vshll.u32 %v1272, 16
        %v1418 = vrot.slane %v1416, 3
        %v1419 = vor.u32 %v1415, %v1418
        %v1420 = vsel %vm1387, %v1410, %v1419
        %v1422 = vsel %vm579, %v1394, 0
        %v1425 = vsel %vm579, %v1398, 0
        %v1428 = vsel %vm579, %v1402, 0
        %v1431 = vsel %vm579, %v1411, 0
        %v1434 = vsel %vm579, %v1420, 0
        %v1437 = vsel %vm595, %v1386, 0
        %1439 = vmatprep.subr.bf16.mxu0 0
        %1440 = vmatpush1.bf16.msra.mxu0 %v1437
        %1441 = vmatprep.subr.bf16.mxu0 0
        %1442 = vmatpush1.bf16.msra.mxu0 0
        %1443 = vmatprep.subr.bf16.mxu0 0
        %1444 = vmatpush1.bf16.msra.mxu0 0
        %1445 = vmatprep.subr.bf16.mxu0 0
        %1446 = vmatpush1.bf16.msra.mxu0 0
        %1447 = vmatprep.subr.bf16.mxu0 0
        %1448 = vmatpush1.bf16.msra.mxu0 0
        %1449 = vmatprep.subr.bf16.mxu0 0
        %1450 = vmatpush1.bf16.msra.mxu0 0
        %1451 = vmatprep.subr.bf16.mxu0 0
        %1452 = vmatpush1.bf16.msra.mxu0 0
        %1453 = vmatprep.subr.bf16.mxu0 0
        %1454 = vmatpush1.bf16.msra.mxu0 0
        %1455 = vmatprep.subr.bf16.mxu0 0
        %1456 = vmatpush1.bf16.msra.mxu0 0
        %1457 = vmatprep.subr.bf16.mxu0 0
        %1458 = vmatpush1.bf16.msra.mxu0 0
        %1459 = vmatprep.subr.bf16.mxu0 0
        %1460 = vmatpush1.bf16.msra.mxu0 0
        %1461 = vmatprep.subr.bf16.mxu0 0
        %1462 = vmatpush1.bf16.msra.mxu0 0
        %1463 = vmatprep.subr.bf16.mxu0 0
        %1464 = vmatpush1.bf16.msra.mxu0 0
        %1465 = vmatprep.subr.bf16.mxu0 0
        %1466 = vmatpush1.bf16.msra.mxu0 0
        %1467 = vmatprep.subr.bf16.mxu0 0
        %1468 = vmatpush1.bf16.msra.mxu0 0
        %1469 = vmatprep.subr.bf16.mxu0 0
        %1470 = vmatpush1.bf16.msra.mxu0 0
        %1471 = vmatprep.mubr.bf16.mxu0 0
        %1472 = vmatmul.mubr.bf16.gmra.mrb[0].mxu0 %v1422
        %v1473 = vpop.f32.mrb[0].mxu0
        %v1474 = vadd.f32 0.0, %v1473
        %v1475 = vpop.f32.mrb[0].mxu0
        %v1476 = vpop.f32.mrb[0].mxu0
        %v1477 = vadd.f32 0.0, %v1476
        %v1478 = vpop.f32.mrb[0].mxu0
        %1479 = vmatprep.mubr.bf16.mxu0 0
        %1480 = vmatmul.mubr.bf16.gmra.mrb[0].mxu0 %v1425
        %v1481 = vpop.f32.mrb[0].mxu0
        %v1482 = vadd.f32 0.0, %v1481
        %v1483 = vpop.f32.mrb[0].mxu0
        %v1484 = vpop.f32.mrb[0].mxu0
        %v1485 = vadd.f32 0.0, %v1484
        %v1486 = vpop.f32.mrb[0].mxu0
        %1487 = vmatprep.mubr.bf16.mxu0 0
        %1488 = vmatmul.mubr.bf16.gmra.mrb[0].mxu0 %v1428
        %v1489 = vpop.f32.mrb[0].mxu0
        %v1490 = vadd.f32 0.0, %v1489
        %v1491 = vpop.f32.mrb[0].mxu0
        %v1492 = vpop.f32.mrb[0].mxu0
        %v1493 = vadd.f32 0.0, %v1492
        %v1494 = vpop.f32.mrb[0].mxu0
        %1495 = vmatprep.mubr.bf16.mxu0 0
        %1496 = vmatmul.mubr.bf16.gmra.mrb[0].mxu0 %v1431
        %v1497 = vpop.f32.mrb[0].mxu0
        %v1498 = vadd.f32 0.0, %v1497
        %v1499 = vpop.f32.mrb[0].mxu0
        %v1500 = vpop.f32.mrb[0].mxu0
        %v1501 = vadd.f32 0.0, %v1500
        %v1502 = vpop.f32.mrb[0].mxu0
        %1503 = vmatprep.mubr.bf16.mxu0 0
        %1504 = vmatmul.mubr.bf16.gmra.mrb[0].mxu0 %v1434
        %v1505 = vpop.f32.mrb[0].mxu0
        %v1506 = vadd.f32 0.0, %v1505
        %v1507 = vpop.f32.mrb[0].mxu0
        %v1508 = vpop.f32.mrb[0].mxu0
        %v1509 = vadd.f32 0.0, %v1508
        %v1510 = vpop.f32.mrb[0].mxu0
        %1511 = vdwg.mxu0
        %v1512 = vadd.f32 %v1375, %v1474
        %v1513 = vadd.f32 %v1376, %v1477
        %v1514 = vadd.f32 %v1377, %v1482
        %v1515 = vadd.f32 %v1378, %v1485
        %v1516 = vadd.f32 %v1379, %v1490
        %v1517 = vadd.f32 %v1380, %v1493
        %v1518 = vadd.f32 %v1381, %v1498
        %v1519 = vadd.f32 %v1382, %v1501
        %v1520 = vadd.f32 %v1383, %v1506
        %v1521 = vadd.f32 %v1384, %v1509
        %s1522 = scalar_lea.vmem [#allocation8], 32
        %v1523 = vld [vmem:[%s1522] sm:$0xf]
        %vm1524 = vcmask 1044480
        %v1525 = vrot.slane %v529, 3
        %v1526 = vrot.slane %v530, 3
        %v1527 = vsel %vm1524, %v1525, %v1526
        %v1528 = vrot.slane %v531, 3
        %v1529 = vsel %vm1524, %v1526, %v1528
        %v1530 = vrot.slane %v532, 3
        %v1531 = vsel %vm1524, %v1528, %v1530
        %v1532 = vrot.slane %v1271, 3
        %v1533 = vsel %vm1524, %v1530, %v1532
        %v1534 = vrot.slane %v1272, 3
        %v1535 = vsel %vm1524, %v1532, %v1534
        %v1537 = vsel %vm579, %v1527, 0
        %v1540 = vsel %vm579, %v1529, 0
        %v1543 = vsel %vm579, %v1531, 0
        %v1546 = vsel %vm579, %v1533, 0
        %v1549 = vsel %vm579, %v1535, 0
        %v1552 = vsel %vm595, %v1523, 0
        %1554 = vmatprep.subr.bf16.mxu0 0
        %1555 = vmatpush1.bf16.msra.mxu0 %v1552
        %1556 = vmatprep.subr.bf16.mxu0 0
        %1557 = vmatpush1.bf16.msra.mxu0 0
        %1558 = vmatprep.subr.bf16.mxu0 0
        %1559 = vmatpush1.bf16.msra.mxu0 0
        %1560 = vmatprep.subr.bf16.mxu0 0
        %1561 = vmatpush1.bf16.msra.mxu0 0
        %1562 = vmatprep.subr.bf16.mxu0 0
        %1563 = vmatpush1.bf16.msra.mxu0 0
        %1564 = vmatprep.subr.bf16.mxu0 0
        %1565 = vmatpush1.bf16.msra.mxu0 0
        %1566 = vmatprep.subr.bf16.mxu0 0
        %1567 = vmatpush1.bf16.msra.mxu0 0
        %1568 = vmatprep.subr.bf16.mxu0 0
        %1569 = vmatpush1.bf16.msra.mxu0 0
        %1570 = vmatprep.subr.bf16.mxu0 0
        %1571 = vmatpush1.bf16.msra.mxu0 0
        %1572 = vmatprep.subr.bf16.mxu0 0
        %1573 = vmatpush1.bf16.msra.mxu0 0
        %1574 = vmatprep.subr.bf16.mxu0 0
        %1575 = vmatpush1.bf16.msra.mxu0 0
        %1576 = vmatprep.subr.bf16.mxu0 0
        %1577 = vmatpush1.bf16.msra.mxu0 0
        %1578 = vmatprep.subr.bf16.mxu0 0
        %1579 = vmatpush1.bf16.msra.mxu0 0
        %1580 = vmatprep.subr.bf16.mxu0 0
        %1581 = vmatpush1.bf16.msra.mxu0 0
        %1582 = vmatprep.subr.bf16.mxu0 0
        %1583 = vmatpush1.bf16.msra.mxu0 0
        %1584 = vmatprep.subr.bf16.mxu0 0
        %1585 = vmatpush1.bf16.msra.mxu0 0
        %1586 = vmatprep.mubr.bf16.mxu0 0
        %1587 = vmatmul.mubr.bf16.gmra.mrb[0].mxu0 %v1537
        %v1588 = vpop.f32.mrb[0].mxu0
        %v1589 = vadd.f32 0.0, %v1588
        %v1590 = vpop.f32.mrb[0].mxu0
        %v1591 = vpop.f32.mrb[0].mxu0
        %v1592 = vadd.f32 0.0, %v1591
        %v1593 = vpop.f32.mrb[0].mxu0
        %1594 = vmatprep.mubr.bf16.mxu0 0
        %1595 = vmatmul.mubr.bf16.gmra.mrb[0].mxu0 %v1540
        %v1596 = vpop.f32.mrb[0].mxu0
        %v1597 = vadd.f32 0.0, %v1596
        %v1598 = vpop.f32.mrb[0].mxu0
        %v1599 = vpop.f32.mrb[0].mxu0
        %v1600 = vadd.f32 0.0, %v1599
        %v1601 = vpop.f32.mrb[0].mxu0
        %1602 = vmatprep.mubr.bf16.mxu0 0
        %1603 = vmatmul.mubr.bf16.gmra.mrb[0].mxu0 %v1543
        %v1604 = vpop.f32.mrb[0].mxu0
        %v1605 = vadd.f32 0.0, %v1604
        %v1606 = vpop.f32.mrb[0].mxu0
        %v1607 = vpop.f32.mrb[0].mxu0
        %v1608 = vadd.f32 0.0, %v1607
        %v1609 = vpop.f32.mrb[0].mxu0
        %1610 = vmatprep.mubr.bf16.mxu0 0
        %1611 = vmatmul.mubr.bf16.gmra.mrb[0].mxu0 %v1546
        %v1612 = vpop.f32.mrb[0].mxu0
        %v1613 = vadd.f32 0.0, %v1612
        %v1614 = vpop.f32.mrb[0].mxu0
        %v1615 = vpop.f32.mrb[0].mxu0
        %v1616 = vadd.f32 0.0, %v1615
        %v1617 = vpop.f32.mrb[0].mxu0
        %1618 = vmatprep.mubr.bf16.mxu0 0
        %1619 = vmatmul.mubr.bf16.gmra.mrb[0].mxu0 %v1549
        %v1620 = vpop.f32.mrb[0].mxu0
        %v1621 = vadd.f32 0.0, %v1620
        %v1622 = vpop.f32.mrb[0].mxu0
        %v1623 = vpop.f32.mrb[0].mxu0
        %v1624 = vadd.f32 0.0, %v1623
        %v1625 = vpop.f32.mrb[0].mxu0
        %1626 = vdwg.mxu0
        %v1627 = vadd.f32 %v1512, %v1589
        %v1628 = vadd.f32 %v1513, %v1592
        %v1629 = vadd.f32 %v1514, %v1597
        %v1630 = vadd.f32 %v1515, %v1600
        %v1631 = vadd.f32 %v1516, %v1605
        %v1632 = vadd.f32 %v1517, %v1608
        %v1633 = vadd.f32 %v1518, %v1613
        %v1634 = vadd.f32 %v1519, %v1616
        %v1635 = vadd.f32 %v1520, %v1621
        %v1636 = vadd.f32 %v1521, %v1624
        %s1637 = scalar_lea.vmem [#allocation8], 36
        %v1638 = vld [vmem:[%s1637] sm:$0xf]
        %v1649 = vunpack.c.l.b16 %v477
        %v1650 = vunpack.c.l.b16 %v478
        %v1651 = vunpack.c.l.b16 %v479
        %v1652 = vunpack.c.l.b16 %v480
        %v1653 = vunpack.c.l.b16 %v481
        %v1654 = vunpack.c.l.b16 %v482
        %v1655 = vunpack.c.l.b16 %v483
        %v1656 = vunpack.c.l.b16 %v484
        %v1657 = vunpack.c.l.b16 %v485
        %v1658 = vunpack.c.l.b16 %v486
        %v1659 = vpack.c.b16 %v1650, %v1649
        %v1660 = vpack.c.b16 %v1652, %v1651
        %v1661 = vpack.c.b16 %v1654, %v1653
        %v1662 = vpack.c.b16 %v1656, %v1655
        %v1663 = vpack.c.b16 %v1658, %v1657
        %v1665 = vsel %vm579, %v1659, 0
        %v1668 = vsel %vm579, %v1660, 0
        %v1671 = vsel %vm579, %v1661, 0
        %v1674 = vsel %vm579, %v1662, 0
        %v1677 = vsel %vm579, %v1663, 0
        %v1680 = vsel %vm595, %v1638, 0
        %1682 = vmatprep.subr.bf16.mxu0 0
        %1683 = vmatpush1.bf16.msra.mxu0 %v1680
        %1684 = vmatprep.subr.bf16.mxu0 0
        %1685 = vmatpush1.bf16.msra.mxu0 0
        %1686 = vmatprep.subr.bf16.mxu0 0
        %1687 = vmatpush1.bf16.msra.mxu0 0
        %1688 = vmatprep.subr.bf16.mxu0 0
        %1689 = vmatpush1.bf16.msra.mxu0 0
        %1690 = vmatprep.subr.bf16.mxu0 0
        %1691 = vmatpush1.bf16.msra.mxu0 0
        %1692 = vmatprep.subr.bf16.mxu0 0
        %1693 = vmatpush1.bf16.msra.mxu0 0
        %1694 = vmatprep.subr.bf16.mxu0 0
        %1695 = vmatpush1.bf16.msra.mxu0 0
        %1696 = vmatprep.subr.bf16.mxu0 0
        %1697 = vmatpush1.bf16.msra.mxu0 0
        %1698 = vmatprep.subr.bf16.mxu0 0
        %1699 = vmatpush1.bf16.msra.mxu0 0
        %1700 = vmatprep.subr.bf16.mxu0 0
        %1701 = vmatpush1.bf16.msra.mxu0 0
        %1702 = vmatprep.subr.bf16.mxu0 0
        %1703 = vmatpush1.bf16.msra.mxu0 0
        %1704 = vmatprep.subr.bf16.mxu0 0
        %1705 = vmatpush1.bf16.msra.mxu0 0
        %1706 = vmatprep.subr.bf16.mxu0 0
        %1707 = vmatpush1.bf16.msra.mxu0 0
        %1708 = vmatprep.subr.bf16.mxu0 0
        %1709 = vmatpush1.bf16.msra.mxu0 0
        %1710 = vmatprep.subr.bf16.mxu0 0
        %1711 = vmatpush1.bf16.msra.mxu0 0
        %1712 = vmatprep.subr.bf16.mxu0 0
        %1713 = vmatpush1.bf16.msra.mxu0 0
        %1714 = vmatprep.mubr.bf16.mxu0 0
        %1715 = vmatmul.mubr.bf16.gmra.mrb[0].mxu0 %v1665
        %v1716 = vpop.f32.mrb[0].mxu0
        %v1717 = vadd.f32 0.0, %v1716
        %v1718 = vpop.f32.mrb[0].mxu0
        %v1719 = vpop.f32.mrb[0].mxu0
        %v1720 = vadd.f32 0.0, %v1719
        %v1721 = vpop.f32.mrb[0].mxu0
        %1722 = vmatprep.mubr.bf16.mxu0 0
        %1723 = vmatmul.mubr.bf16.gmra.mrb[0].mxu0 %v1668
        %v1724 = vpop.f32.mrb[0].mxu0
        %v1725 = vadd.f32 0.0, %v1724
        %v1726 = vpop.f32.mrb[0].mxu0
        %v1727 = vpop.f32.mrb[0].mxu0
        %v1728 = vadd.f32 0.0, %v1727
        %v1729 = vpop.f32.mrb[0].mxu0
        %1730 = vmatprep.mubr.bf16.mxu0 0
        %1731 = vmatmul.mubr.bf16.gmra.mrb[0].mxu0 %v1671
        %v1732 = vpop.f32.mrb[0].mxu0
        %v1733 = vadd.f32 0.0, %v1732
        %v1734 = vpop.f32.mrb[0].mxu0
        %v1735 = vpop.f32.mrb[0].mxu0
        %v1736 = vadd.f32 0.0, %v1735
        %v1737 = vpop.f32.mrb[0].mxu0
        %1738 = vmatprep.mubr.bf16.mxu0 0
        %1739 = vmatmul.mubr.bf16.gmra.mrb[0].mxu0 %v1674
        %v1740 = vpop.f32.mrb[0].mxu0
        %v1741 = vadd.f32 0.0, %v1740
        %v1742 = vpop.f32.mrb[0].mxu0
        %v1743 = vpop.f32.mrb[0].mxu0
        %v1744 = vadd.f32 0.0, %v1743
        %v1745 = vpop.f32.mrb[0].mxu0
        %1746 = vmatprep.mubr.bf16.mxu0 0
        %1747 = vmatmul.mubr.bf16.gmra.mrb[0].mxu0 %v1677
        %v1748 = vpop.f32.mrb[0].mxu0
        %v1749 = vadd.f32 0.0, %v1748
        %v1750 = vpop.f32.mrb[0].mxu0
        %v1751 = vpop.f32.mrb[0].mxu0
        %v1752 = vadd.f32 0.0, %v1751
        %v1753 = vpop.f32.mrb[0].mxu0
        %1754 = vdwg.mxu0
        %v1755 = vadd.f32 %v1627, %v1717
        %v1756 = vadd.f32 %v1628, %v1720
        %v1757 = vadd.f32 %v1629, %v1725
        %v1758 = vadd.f32 %v1630, %v1728
        %v1759 = vadd.f32 %v1631, %v1733
        %v1760 = vadd.f32 %v1632, %v1736
        %v1761 = vadd.f32 %v1633, %v1741
        %v1762 = vadd.f32 %v1634, %v1744
        %v1763 = vadd.f32 %v1635, %v1749
        %v1764 = vadd.f32 %v1636, %v1752
        %s1765 = scalar_lea.vmem [#allocation8], 40
        %v1766 = vld [vmem:[%s1765] sm:$0xf]
        %v1768 = vunpack.c.l.b16 %v487
        %v1769 = vpack.c.b16 %v1768, %v1768
        %v1770 = vshrl.u32 %v1659, 16
        %v1772 = vshll.u32 %v1659, 16
        %v1774 = vrot.slane %v1772, 1
        %v1775 = vor.u32 %v1770, %v1774
        %v1776 = vshll.u32 %v1660, 16
        %v1778 = vrot.slane %v1776, 1
        %v1779 = vsel %vm534, %v1775, %v1778
        %v1780 = vshrl.u32 %v1660, 16
        %v1782 = vor.u32 %v1780, %v1778
        %v1783 = vshll.u32 %v1661, 16
        %v1785 = vrot.slane %v1783, 1
        %v1786 = vsel %vm534, %v1782, %v1785
        %v1787 = vshrl.u32 %v1661, 16
        %v1789 = vor.u32 %v1787, %v1785
        %v1790 = vshll.u32 %v1662, 16
        %v1792 = vrot.slane %v1790, 1
        %v1793 = vsel %vm534, %v1789, %v1792
        %v1794 = vshrl.u32 %v1662, 16
        %v1796 = vor.u32 %v1794, %v1792
        %v1797 = vshll.u32 %v1663, 16
        %v1799 = vrot.slane %v1797, 1
        %v1800 = vsel %vm534, %v1796, %v1799
        %v1801 = vshrl.u32 %v1663, 16
        %v1803 = vor.u32 %v1801, %v1799
        %v1805 = vshll.u32 %v1769, 16
        %v1807 = vrot.slane %v1805, 1
        %v1808 = vsel %vm534, %v1803, %v1807
        %v1810 = vsel %vm579, %v1779, 0
        %v1813 = vsel %vm579, %v1786, 0
        %v1816 = vsel %vm579, %v1793, 0
        %v1819 = vsel %vm579, %v1800, 0
        %v1822 = vsel %vm579, %v1808, 0
        %v1825 = vsel %vm595, %v1766, 0
        %1827 = vmatprep.subr.bf16.mxu0 0
        %1828 = vmatpush1.bf16.msra.mxu0 %v1825
        %1829 = vmatprep.subr.bf16.mxu0 0
        %1830 = vmatpush1.bf16.msra.mxu0 0
        %1831 = vmatprep.subr.bf16.mxu0 0
        %1832 = vmatpush1.bf16.msra.mxu0 0
        %1833 = vmatprep.subr.bf16.mxu0 0
        %1834 = vmatpush1.bf16.msra.mxu0 0
        %1835 = vmatprep.subr.bf16.mxu0 0
        %1836 = vmatpush1.bf16.msra.mxu0 0
        %1837 = vmatprep.subr.bf16.mxu0 0
        %1838 = vmatpush1.bf16.msra.mxu0 0
        %1839 = vmatprep.subr.bf16.mxu0 0
        %1840 = vmatpush1.bf16.msra.mxu0 0
        %1841 = vmatprep.subr.bf16.mxu0 0
        %1842 = vmatpush1.bf16.msra.mxu0 0
        %1843 = vmatprep.subr.bf16.mxu0 0
        %1844 = vmatpush1.bf16.msra.mxu0 0
        %1845 = vmatprep.subr.bf16.mxu0 0
        %1846 = vmatpush1.bf16.msra.mxu0 0
        %1847 = vmatprep.subr.bf16.mxu0 0
        %1848 = vmatpush1.bf16.msra.mxu0 0
        %1849 = vmatprep.subr.bf16.mxu0 0
        %1850 = vmatpush1.bf16.msra.mxu0 0
        %1851 = vmatprep.subr.bf16.mxu0 0
        %1852 = vmatpush1.bf16.msra.mxu0 0
        %1853 = vmatprep.subr.bf16.mxu0 0
        %1854 = vmatpush1.bf16.msra.mxu0 0
        %1855 = vmatprep.subr.bf16.mxu0 0
        %1856 = vmatpush1.bf16.msra.mxu0 0
        %1857 = vmatprep.subr.bf16.mxu0 0
        %1858 = vmatpush1.bf16.msra.mxu0 0
        %1859 = vmatprep.mubr.bf16.mxu0 0
        %1860 = vmatmul.mubr.bf16.gmra.mrb[0].mxu0 %v1810
        %v1861 = vpop.f32.mrb[0].mxu0
        %v1862 = vadd.f32 0.0, %v1861
        %v1863 = vpop.f32.mrb[0].mxu0
        %v1864 = vpop.f32.mrb[0].mxu0
        %v1865 = vadd.f32 0.0, %v1864
        %v1866 = vpop.f32.mrb[0].mxu0
        %1867 = vmatprep.mubr.bf16.mxu0 0
        %1868 = vmatmul.mubr.bf16.gmra.mrb[0].mxu0 %v1813
        %v1869 = vpop.f32.mrb[0].mxu0
        %v1870 = vadd.f32 0.0, %v1869
        %v1871 = vpop.f32.mrb[0].mxu0
        %v1872 = vpop.f32.mrb[0].mxu0
        %v1873 = vadd.f32 0.0, %v1872
        %v1874 = vpop.f32.mrb[0].mxu0
        %1875 = vmatprep.mubr.bf16.mxu0 0
        %1876 = vmatmul.mubr.bf16.gmra.mrb[0].mxu0 %v1816
        %v1877 = vpop.f32.mrb[0].mxu0
        %v1878 = vadd.f32 0.0, %v1877
        %v1879 = vpop.f32.mrb[0].mxu0
        %v1880 = vpop.f32.mrb[0].mxu0
        %v1881 = vadd.f32 0.0, %v1880
        %v1882 = vpop.f32.mrb[0].mxu0
        %1883 = vmatprep.mubr.bf16.mxu0 0
        %1884 = vmatmul.mubr.bf16.gmra.mrb[0].mxu0 %v1819
        %v1885 = vpop.f32.mrb[0].mxu0
        %v1886 = vadd.f32 0.0, %v1885
        %v1887 = vpop.f32.mrb[0].mxu0
        %v1888 = vpop.f32.mrb[0].mxu0
        %v1889 = vadd.f32 0.0, %v1888
        %v1890 = vpop.f32.mrb[0].mxu0
        %1891 = vmatprep.mubr.bf16.mxu0 0
        %1892 = vmatmul.mubr.bf16.gmra.mrb[0].mxu0 %v1822
        %v1893 = vpop.f32.mrb[0].mxu0
        %v1894 = vadd.f32 0.0, %v1893
        %v1895 = vpop.f32.mrb[0].mxu0
        %v1896 = vpop.f32.mrb[0].mxu0
        %v1897 = vadd.f32 0.0, %v1896
        %v1898 = vpop.f32.mrb[0].mxu0
        %1899 = vdwg.mxu0
        %v1900 = vadd.f32 %v1755, %v1862
        %v1901 = vadd.f32 %v1756, %v1865
        %v1902 = vadd.f32 %v1757, %v1870
        %v1903 = vadd.f32 %v1758, %v1873
        %v1904 = vadd.f32 %v1759, %v1878
        %v1905 = vadd.f32 %v1760, %v1881
        %v1906 = vadd.f32 %v1761, %v1886
        %v1907 = vadd.f32 %v1762, %v1889
        %v1908 = vadd.f32 %v1763, %v1894
        %v1909 = vadd.f32 %v1764, %v1897
        %s1910 = scalar_lea.vmem [#allocation8], 44
        %v1911 = vld [vmem:[%s1910] sm:$0xf]
        %v1912 = vrot.slane %v1659, 1
        %v1913 = vrot.slane %v1660, 1
        %v1914 = vsel %vm760, %v1912, %v1913
        %v1915 = vrot.slane %v1661, 1
        %v1916 = vsel %vm760, %v1913, %v1915
        %v1917 = vrot.slane %v1662, 1
        %v1918 = vsel %vm760, %v1915, %v1917
        %v1919 = vrot.slane %v1663, 1
        %v1920 = vsel %vm760, %v1917, %v1919
        %v1921 = vrot.slane %v1769, 1
        %v1922 = vsel %vm760, %v1919, %v1921
        %v1924 = vsel %vm579, %v1914, 0
        %v1927 = vsel %vm579, %v1916, 0
        %v1930 = vsel %vm579, %v1918, 0
        %v1933 = vsel %vm579, %v1920, 0
        %v1936 = vsel %vm579, %v1922, 0
        %v1939 = vsel %vm595, %v1911, 0
        %1941 = vmatprep.subr.bf16.mxu0 0
        %1942 = vmatpush1.bf16.msra.mxu0 %v1939
        %1943 = vmatprep.subr.bf16.mxu0 0
        %1944 = vmatpush1.bf16.msra.mxu0 0
        %1945 = vmatprep.subr.bf16.mxu0 0
        %1946 = vmatpush1.bf16.msra.mxu0 0
        %1947 = vmatprep.subr.bf16.mxu0 0
        %1948 = vmatpush1.bf16.msra.mxu0 0
        %1949 = vmatprep.subr.bf16.mxu0 0
        %1950 = vmatpush1.bf16.msra.mxu0 0
        %1951 = vmatprep.subr.bf16.mxu0 0
        %1952 = vmatpush1.bf16.msra.mxu0 0
        %1953 = vmatprep.subr.bf16.mxu0 0
        %1954 = vmatpush1.bf16.msra.mxu0 0
        %1955 = vmatprep.subr.bf16.mxu0 0
        %1956 = vmatpush1.bf16.msra.mxu0 0
        %1957 = vmatprep.subr.bf16.mxu0 0
        %1958 = vmatpush1.bf16.msra.mxu0 0
        %1959 = vmatprep.subr.bf16.mxu0 0
        %1960 = vmatpush1.bf16.msra.mxu0 0
        %1961 = vmatprep.subr.bf16.mxu0 0
        %1962 = vmatpush1.bf16.msra.mxu0 0
        %1963 = vmatprep.subr.bf16.mxu0 0
        %1964 = vmatpush1.bf16.msra.mxu0 0
        %1965 = vmatprep.subr.bf16.mxu0 0
        %1966 = vmatpush1.bf16.msra.mxu0 0
        %1967 = vmatprep.subr.bf16.mxu0 0
        %1968 = vmatpush1.bf16.msra.mxu0 0
        %1969 = vmatprep.subr.bf16.mxu0 0
        %1970 = vmatpush1.bf16.msra.mxu0 0
        %1971 = vmatprep.subr.bf16.mxu0 0
        %1972 = vmatpush1.bf16.msra.mxu0 0
        %1973 = vmatprep.mubr.bf16.mxu0 0
        %1974 = vmatmul.mubr.bf16.gmra.mrb[0].mxu0 %v1924
        %v1975 = vpop.f32.mrb[0].mxu0
        %v1976 = vadd.f32 0.0, %v1975
        %v1977 = vpop.f32.mrb[0].mxu0
        %v1978 = vpop.f32.mrb[0].mxu0
        %v1979 = vadd.f32 0.0, %v1978
        %v1980 = vpop.f32.mrb[0].mxu0
        %1981 = vmatprep.mubr.bf16.mxu0 0
        %1982 = vmatmul.mubr.bf16.gmra.mrb[0].mxu0 %v1927
        %v1983 = vpop.f32.mrb[0].mxu0
        %v1984 = vadd.f32 0.0, %v1983
        %v1985 = vpop.f32.mrb[0].mxu0
        %v1986 = vpop.f32.mrb[0].mxu0
        %v1987 = vadd.f32 0.0, %v1986
        %v1988 = vpop.f32.mrb[0].mxu0
        %1989 = vmatprep.mubr.bf16.mxu0 0
        %1990 = vmatmul.mubr.bf16.gmra.mrb[0].mxu0 %v1930
        %v1991 = vpop.f32.mrb[0].mxu0
        %v1992 = vadd.f32 0.0, %v1991
        %v1993 = vpop.f32.mrb[0].mxu0
        %v1994 = vpop.f32.mrb[0].mxu0
        %v1995 = vadd.f32 0.0, %v1994
        %v1996 = vpop.f32.mrb[0].mxu0
        %1997 = vmatprep.mubr.bf16.mxu0 0
        %1998 = vmatmul.mubr.bf16.gmra.mrb[0].mxu0 %v1933
        %v1999 = vpop.f32.mrb[0].mxu0
        %v2000 = vadd.f32 0.0, %v1999
        %v2001 = vpop.f32.mrb[0].mxu0
        %v2002 = vpop.f32.mrb[0].mxu0
        %v2003 = vadd.f32 0.0, %v2002
        %v2004 = vpop.f32.mrb[0].mxu0
        %2005 = vmatprep.mubr.bf16.mxu0 0
        %2006 = vmatmul.mubr.bf16.gmra.mrb[0].mxu0 %v1936
        %v2007 = vpop.f32.mrb[0].mxu0
        %v2008 = vadd.f32 0.0, %v2007
        %v2009 = vpop.f32.mrb[0].mxu0
        %v2010 = vpop.f32.mrb[0].mxu0
        %v2011 = vadd.f32 0.0, %v2010
        %v2012 = vpop.f32.mrb[0].mxu0
        %2013 = vdwg.mxu0
        %v2014 = vadd.f32 %v1900, %v1976
        %v2015 = vadd.f32 %v1901, %v1979
        %v2016 = vadd.f32 %v1902, %v1984
        %v2017 = vadd.f32 %v1903, %v1987
        %v2018 = vadd.f32 %v1904, %v1992
        %v2019 = vadd.f32 %v1905, %v1995
        %v2020 = vadd.f32 %v1906, %v2000
        %v2021 = vadd.f32 %v1907, %v2003
        %v2022 = vadd.f32 %v1908, %v2008
        %v2023 = vadd.f32 %v1909, %v2011
        %s2024 = scalar_lea.vmem [#allocation8], 48
        %v2025 = vld [vmem:[%s2024] sm:$0xf]
        %v2027 = vunpack.c.l.b16 %v488
        %v2028 = vpack.c.b16 %v1651, %v1650
        %v2029 = vpack.c.b16 %v1653, %v1652
        %v2030 = vpack.c.b16 %v1655, %v1654
        %v2031 = vpack.c.b16 %v1657, %v1656
        %v2032 = vpack.c.b16 %v1768, %v1658
        %v2033 = vpack.c.b16 %v2027, %v2027
        %v2034 = vrot.slane %v2028, 1
        %v2035 = vrot.slane %v2029, 1
        %v2036 = vsel %vm760, %v2034, %v2035
        %v2037 = vrot.slane %v2030, 1
        %v2038 = vsel %vm760, %v2035, %v2037
        %v2039 = vrot.slane %v2031, 1
        %v2040 = vsel %vm760, %v2037, %v2039
        %v2041 = vrot.slane %v2032, 1
        %v2042 = vsel %vm760, %v2039, %v2041
        %v2043 = vrot.slane %v2033, 1
        %v2044 = vsel %vm760, %v2041, %v2043
        %v2046 = vsel %vm579, %v2036, 0
        %v2049 = vsel %vm579, %v2038, 0
        %v2052 = vsel %vm579, %v2040, 0
        %v2055 = vsel %vm579, %v2042, 0
        %v2058 = vsel %vm579, %v2044, 0
        %v2061 = vsel %vm595, %v2025, 0
        %2063 = vmatprep.subr.bf16.mxu0 0
        %2064 = vmatpush1.bf16.msra.mxu0 %v2061
        %2065 = vmatprep.subr.bf16.mxu0 0
        %2066 = vmatpush1.bf16.msra.mxu0 0
        %2067 = vmatprep.subr.bf16.mxu0 0
        %2068 = vmatpush1.bf16.msra.mxu0 0
        %2069 = vmatprep.subr.bf16.mxu0 0
        %2070 = vmatpush1.bf16.msra.mxu0 0
        %2071 = vmatprep.subr.bf16.mxu0 0
        %2072 = vmatpush1.bf16.msra.mxu0 0
        %2073 = vmatprep.subr.bf16.mxu0 0
        %2074 = vmatpush1.bf16.msra.mxu0 0
        %2075 = vmatprep.subr.bf16.mxu0 0
        %2076 = vmatpush1.bf16.msra.mxu0 0
        %2077 = vmatprep.subr.bf16.mxu0 0
        %2078 = vmatpush1.bf16.msra.mxu0 0
        %2079 = vmatprep.subr.bf16.mxu0 0
        %2080 = vmatpush1.bf16.msra.mxu0 0
        %2081 = vmatprep.subr.bf16.mxu0 0
        %2082 = vmatpush1.bf16.msra.mxu0 0
        %2083 = vmatprep.subr.bf16.mxu0 0
        %2084 = vmatpush1.bf16.msra.mxu0 0
        %2085 = vmatprep.subr.bf16.mxu0 0
        %2086 = vmatpush1.bf16.msra.mxu0 0
        %2087 = vmatprep.subr.bf16.mxu0 0
        %2088 = vmatpush1.bf16.msra.mxu0 0
        %2089 = vmatprep.subr.bf16.mxu0 0
        %2090 = vmatpush1.bf16.msra.mxu0 0
        %2091 = vmatprep.subr.bf16.mxu0 0
        %2092 = vmatpush1.bf16.msra.mxu0 0
        %2093 = vmatprep.subr.bf16.mxu0 0
        %2094 = vmatpush1.bf16.msra.mxu0 0
        %2095 = vmatprep.mubr.bf16.mxu0 0
        %2096 = vmatmul.mubr.bf16.gmra.mrb[0].mxu0 %v2046
        %v2097 = vpop.f32.mrb[0].mxu0
        %v2098 = vadd.f32 0.0, %v2097
        %v2099 = vpop.f32.mrb[0].mxu0
        %v2100 = vpop.f32.mrb[0].mxu0
        %v2101 = vadd.f32 0.0, %v2100
        %v2102 = vpop.f32.mrb[0].mxu0
        %2103 = vmatprep.mubr.bf16.mxu0 0
        %2104 = vmatmul.mubr.bf16.gmra.mrb[0].mxu0 %v2049
        %v2105 = vpop.f32.mrb[0].mxu0
        %v2106 = vadd.f32 0.0, %v2105
        %v2107 = vpop.f32.mrb[0].mxu0
        %v2108 = vpop.f32.mrb[0].mxu0
        %v2109 = vadd.f32 0.0, %v2108
        %v2110 = vpop.f32.mrb[0].mxu0
        %2111 = vmatprep.mubr.bf16.mxu0 0
        %2112 = vmatmul.mubr.bf16.gmra.mrb[0].mxu0 %v2052
        %v2113 = vpop.f32.mrb[0].mxu0
        %v2114 = vadd.f32 0.0, %v2113
        %v2115 = vpop.f32.mrb[0].mxu0
        %v2116 = vpop.f32.mrb[0].mxu0
        %v2117 = vadd.f32 0.0, %v2116
        %v2118 = vpop.f32.mrb[0].mxu0
        %2119 = vmatprep.mubr.bf16.mxu0 0
        %2120 = vmatmul.mubr.bf16.gmra.mrb[0].mxu0 %v2055
        %v2121 = vpop.f32.mrb[0].mxu0
        %v2122 = vadd.f32 0.0, %v2121
        %v2123 = vpop.f32.mrb[0].mxu0
        %v2124 = vpop.f32.mrb[0].mxu0
        %v2125 = vadd.f32 0.0, %v2124
        %v2126 = vpop.f32.mrb[0].mxu0
        %2127 = vmatprep.mubr.bf16.mxu0 0
        %2128 = vmatmul.mubr.bf16.gmra.mrb[0].mxu0 %v2058
        %v2129 = vpop.f32.mrb[0].mxu0
        %v2130 = vadd.f32 0.0, %v2129
        %v2131 = vpop.f32.mrb[0].mxu0
        %v2132 = vpop.f32.mrb[0].mxu0
        %v2133 = vadd.f32 0.0, %v2132
        %v2134 = vpop.f32.mrb[0].mxu0
        %2135 = vdwg.mxu0
        %v2136 = vadd.f32 %v2014, %v2098
        %v2137 = vadd.f32 %v2015, %v2101
        %v2138 = vadd.f32 %v2016, %v2106
        %v2139 = vadd.f32 %v2017, %v2109
        %v2140 = vadd.f32 %v2018, %v2114
        %v2141 = vadd.f32 %v2019, %v2117
        %v2142 = vadd.f32 %v2020, %v2122
        %v2143 = vadd.f32 %v2021, %v2125
        %v2144 = vadd.f32 %v2022, %v2130
        %v2145 = vadd.f32 %v2023, %v2133
        %s2146 = scalar_lea.vmem [#allocation8], 52
        %v2147 = vld [vmem:[%s2146] sm:$0xf]
        %v2149 = vshrl.u32 %v2028, 16
        %v2151 = vrot.slane %v2149, 1
        %v2152 = vshll.u32 %v2028, 16
        %v2154 = vrot.slane %v2152, 2
        %v2155 = vor.u32 %v2151, %v2154
        %v2157 = vshrl.u32 %v2029, 16
        %v2159 = vrot.slane %v2157, 1
        %v2160 = vshll.u32 %v2029, 16
        %v2162 = vrot.slane %v2160, 2
        %v2163 = vor.u32 %v2159, %v2162
        %v2164 = vsel %vm997, %v2155, %v2163
        %v2166 = vshrl.u32 %v2030, 16
        %v2168 = vrot.slane %v2166, 1
        %v2169 = vshll.u32 %v2030, 16
        %v2171 = vrot.slane %v2169, 2
        %v2172 = vor.u32 %v2168, %v2171
        %v2173 = vsel %vm997, %v2163, %v2172
        %v2175 = vshrl.u32 %v2031, 16
        %v2177 = vrot.slane %v2175, 1
        %v2178 = vshll.u32 %v2031, 16
        %v2180 = vrot.slane %v2178, 2
        %v2181 = vor.u32 %v2177, %v2180
        %v2182 = vsel %vm997, %v2172, %v2181
        %v2184 = vshrl.u32 %v2032, 16
        %v2186 = vrot.slane %v2184, 1
        %v2187 = vshll.u32 %v2032, 16
        %v2189 = vrot.slane %v2187, 2
        %v2190 = vor.u32 %v2186, %v2189
        %v2191 = vsel %vm997, %v2181, %v2190
        %v2193 = vshrl.u32 %v2033, 16
        %v2195 = vrot.slane %v2193, 1
        %v2196 = vshll.u32 %v2033, 16
        %v2198 = vrot.slane %v2196, 2
        %v2199 = vor.u32 %v2195, %v2198
        %v2200 = vsel %vm997, %v2190, %v2199
        %v2202 = vsel %vm579, %v2164, 0
        %v2205 = vsel %vm579, %v2173, 0
        %v2208 = vsel %vm579, %v2182, 0
        %v2211 = vsel %vm579, %v2191, 0
        %v2214 = vsel %vm579, %v2200, 0
        %v2217 = vsel %vm595, %v2147, 0
        %2219 = vmatprep.subr.bf16.mxu0 0
        %2220 = vmatpush1.bf16.msra.mxu0 %v2217
        %2221 = vmatprep.subr.bf16.mxu0 0
        %2222 = vmatpush1.bf16.msra.mxu0 0
        %2223 = vmatprep.subr.bf16.mxu0 0
        %2224 = vmatpush1.bf16.msra.mxu0 0
        %2225 = vmatprep.subr.bf16.mxu0 0
        %2226 = vmatpush1.bf16.msra.mxu0 0
        %2227 = vmatprep.subr.bf16.mxu0 0
        %2228 = vmatpush1.bf16.msra.mxu0 0
        %2229 = vmatprep.subr.bf16.mxu0 0
        %2230 = vmatpush1.bf16.msra.mxu0 0
        %2231 = vmatprep.subr.bf16.mxu0 0
        %2232 = vmatpush1.bf16.msra.mxu0 0
        %2233 = vmatprep.subr.bf16.mxu0 0
        %2234 = vmatpush1.bf16.msra.mxu0 0
        %2235 = vmatprep.subr.bf16.mxu0 0
        %2236 = vmatpush1.bf16.msra.mxu0 0
        %2237 = vmatprep.subr.bf16.mxu0 0
        %2238 = vmatpush1.bf16.msra.mxu0 0
        %2239 = vmatprep.subr.bf16.mxu0 0
        %2240 = vmatpush1.bf16.msra.mxu0 0
        %2241 = vmatprep.subr.bf16.mxu0 0
        %2242 = vmatpush1.bf16.msra.mxu0 0
        %2243 = vmatprep.subr.bf16.mxu0 0
        %2244 = vmatpush1.bf16.msra.mxu0 0
        %2245 = vmatprep.subr.bf16.mxu0 0
        %2246 = vmatpush1.bf16.msra.mxu0 0
        %2247 = vmatprep.subr.bf16.mxu0 0
        %2248 = vmatpush1.bf16.msra.mxu0 0
        %2249 = vmatprep.subr.bf16.mxu0 0
        %2250 = vmatpush1.bf16.msra.mxu0 0
        %2251 = vmatprep.mubr.bf16.mxu0 0
        %2252 = vmatmul.mubr.bf16.gmra.mrb[0].mxu0 %v2202
        %v2253 = vpop.f32.mrb[0].mxu0
        %v2254 = vadd.f32 0.0, %v2253
        %v2255 = vpop.f32.mrb[0].mxu0
        %v2256 = vpop.f32.mrb[0].mxu0
        %v2257 = vadd.f32 0.0, %v2256
        %v2258 = vpop.f32.mrb[0].mxu0
        %2259 = vmatprep.mubr.bf16.mxu0 0
        %2260 = vmatmul.mubr.bf16.gmra.mrb[0].mxu0 %v2205
        %v2261 = vpop.f32.mrb[0].mxu0
        %v2262 = vadd.f32 0.0, %v2261
        %v2263 = vpop.f32.mrb[0].mxu0
        %v2264 = vpop.f32.mrb[0].mxu0
        %v2265 = vadd.f32 0.0, %v2264
        %v2266 = vpop.f32.mrb[0].mxu0
        %2267 = vmatprep.mubr.bf16.mxu0 0
        %2268 = vmatmul.mubr.bf16.gmra.mrb[0].mxu0 %v2208
        %v2269 = vpop.f32.mrb[0].mxu0
        %v2270 = vadd.f32 0.0, %v2269
        %v2271 = vpop.f32.mrb[0].mxu0
        %v2272 = vpop.f32.mrb[0].mxu0
        %v2273 = vadd.f32 0.0, %v2272
        %v2274 = vpop.f32.mrb[0].mxu0
        %2275 = vmatprep.mubr.bf16.mxu0 0
        %2276 = vmatmul.mubr.bf16.gmra.mrb[0].mxu0 %v2211
        %v2277 = vpop.f32.mrb[0].mxu0
        %v2278 = vadd.f32 0.0, %v2277
        %v2279 = vpop.f32.mrb[0].mxu0
        %v2280 = vpop.f32.mrb[0].mxu0
        %v2281 = vadd.f32 0.0, %v2280
        %v2282 = vpop.f32.mrb[0].mxu0
        %2283 = vmatprep.mubr.bf16.mxu0 0
        %2284 = vmatmul.mubr.bf16.gmra.mrb[0].mxu0 %v2214
        %v2285 = vpop.f32.mrb[0].mxu0
        %v2286 = vadd.f32 0.0, %v2285
        %v2287 = vpop.f32.mrb[0].mxu0
        %v2288 = vpop.f32.mrb[0].mxu0
        %v2289 = vadd.f32 0.0, %v2288
        %v2290 = vpop.f32.mrb[0].mxu0
        %2291 = vdwg.mxu0
        %v2292 = vadd.f32 %v2136, %v2254
        %v2293 = vadd.f32 %v2137, %v2257
        %v2294 = vadd.f32 %v2138, %v2262
        %v2295 = vadd.f32 %v2139, %v2265
        %v2296 = vadd.f32 %v2140, %v2270
        %v2297 = vadd.f32 %v2141, %v2273
        %v2298 = vadd.f32 %v2142, %v2278
        %v2299 = vadd.f32 %v2143, %v2281
        %v2300 = vadd.f32 %v2144, %v2286
        %v2301 = vadd.f32 %v2145, %v2289
        %s2302 = scalar_lea.vmem [#allocation8], 56
        %v2303 = vld [vmem:[%s2302] sm:$0xf]
        %v2304 = vrot.slane %v2028, 2
        %v2305 = vrot.slane %v2029, 2
        %v2306 = vsel %vm1154, %v2304, %v2305
        %v2307 = vrot.slane %v2030, 2
        %v2308 = vsel %vm1154, %v2305, %v2307
        %v2309 = vrot.slane %v2031, 2
        %v2310 = vsel %vm1154, %v2307, %v2309
        %v2311 = vrot.slane %v2032, 2
        %v2312 = vsel %vm1154, %v2309, %v2311
        %v2313 = vrot.slane %v2033, 2
        %v2314 = vsel %vm1154, %v2311, %v2313
        %v2316 = vsel %vm579, %v2306, 0
        %v2319 = vsel %vm579, %v2308, 0
        %v2322 = vsel %vm579, %v2310, 0
        %v2325 = vsel %vm579, %v2312, 0
        %v2328 = vsel %vm579, %v2314, 0
        %v2331 = vsel %vm595, %v2303, 0
        %2333 = vmatprep.subr.bf16.mxu0 0
        %2334 = vmatpush1.bf16.msra.mxu0 %v2331
        %2335 = vmatprep.subr.bf16.mxu0 0
        %2336 = vmatpush1.bf16.msra.mxu0 0
        %2337 = vmatprep.subr.bf16.mxu0 0
        %2338 = vmatpush1.bf16.msra.mxu0 0
        %2339 = vmatprep.subr.bf16.mxu0 0
        %2340 = vmatpush1.bf16.msra.mxu0 0
        %2341 = vmatprep.subr.bf16.mxu0 0
        %2342 = vmatpush1.bf16.msra.mxu0 0
        %2343 = vmatprep.subr.bf16.mxu0 0
        %2344 = vmatpush1.bf16.msra.mxu0 0
        %2345 = vmatprep.subr.bf16.mxu0 0
        %2346 = vmatpush1.bf16.msra.mxu0 0
        %2347 = vmatprep.subr.bf16.mxu0 0
        %2348 = vmatpush1.bf16.msra.mxu0 0
        %2349 = vmatprep.subr.bf16.mxu0 0
        %2350 = vmatpush1.bf16.msra.mxu0 0
        %2351 = vmatprep.subr.bf16.mxu0 0
        %2352 = vmatpush1.bf16.msra.mxu0 0
        %2353 = vmatprep.subr.bf16.mxu0 0
        %2354 = vmatpush1.bf16.msra.mxu0 0
        %2355 = vmatprep.subr.bf16.mxu0 0
        %2356 = vmatpush1.bf16.msra.mxu0 0
        %2357 = vmatprep.subr.bf16.mxu0 0
        %2358 = vmatpush1.bf16.msra.mxu0 0
        %2359 = vmatprep.subr.bf16.mxu0 0
        %2360 = vmatpush1.bf16.msra.mxu0 0
        %2361 = vmatprep.subr.bf16.mxu0 0
        %2362 = vmatpush1.bf16.msra.mxu0 0
        %2363 = vmatprep.subr.bf16.mxu0 0
        %2364 = vmatpush1.bf16.msra.mxu0 0
        %2365 = vmatprep.mubr.bf16.mxu0 0
        %2366 = vmatmul.mubr.bf16.gmra.mrb[0].mxu0 %v2316
        %v2367 = vpop.f32.mrb[0].mxu0
        %v2368 = vadd.f32 0.0, %v2367
        %v2369 = vpop.f32.mrb[0].mxu0
        %v2370 = vpop.f32.mrb[0].mxu0
        %v2371 = vadd.f32 0.0, %v2370
        %v2372 = vpop.f32.mrb[0].mxu0
        %2373 = vmatprep.mubr.bf16.mxu0 0
        %2374 = vmatmul.mubr.bf16.gmra.mrb[0].mxu0 %v2319
        %v2375 = vpop.f32.mrb[0].mxu0
        %v2376 = vadd.f32 0.0, %v2375
        %v2377 = vpop.f32.mrb[0].mxu0
        %v2378 = vpop.f32.mrb[0].mxu0
        %v2379 = vadd.f32 0.0, %v2378
        %v2380 = vpop.f32.mrb[0].mxu0
        %2381 = vmatprep.mubr.bf16.mxu0 0
        %2382 = vmatmul.mubr.bf16.gmra.mrb[0].mxu0 %v2322
        %v2383 = vpop.f32.mrb[0].mxu0
        %v2384 = vadd.f32 0.0, %v2383
        %v2385 = vpop.f32.mrb[0].mxu0
        %v2386 = vpop.f32.mrb[0].mxu0
        %v2387 = vadd.f32 0.0, %v2386
        %v2388 = vpop.f32.mrb[0].mxu0
        %2389 = vmatprep.mubr.bf16.mxu0 0
        %2390 = vmatmul.mubr.bf16.gmra.mrb[0].mxu0 %v2325
        %v2391 = vpop.f32.mrb[0].mxu0
        %v2392 = vadd.f32 0.0, %v2391
        %v2393 = vpop.f32.mrb[0].mxu0
        %v2394 = vpop.f32.mrb[0].mxu0
        %v2395 = vadd.f32 0.0, %v2394
        %v2396 = vpop.f32.mrb[0].mxu0
        %2397 = vmatprep.mubr.bf16.mxu0 0
        %2398 = vmatmul.mubr.bf16.gmra.mrb[0].mxu0 %v2328
        %v2399 = vpop.f32.mrb[0].mxu0
        %v2400 = vadd.f32 0.0, %v2399
        %v2401 = vpop.f32.mrb[0].mxu0
        %v2402 = vpop.f32.mrb[0].mxu0
        %v2403 = vadd.f32 0.0, %v2402
        %v2404 = vpop.f32.mrb[0].mxu0
        %2405 = vdwg.mxu0
        %v2406 = vadd.f32 %v2292, %v2368
        %v2407 = vadd.f32 %v2293, %v2371
        %v2408 = vadd.f32 %v2294, %v2376
        %v2409 = vadd.f32 %v2295, %v2379
        %v2410 = vadd.f32 %v2296, %v2384
        %v2411 = vadd.f32 %v2297, %v2387
        %v2412 = vadd.f32 %v2298, %v2392
        %v2413 = vadd.f32 %v2299, %v2395
        %v2414 = vadd.f32 %v2300, %v2400
        %v2415 = vadd.f32 %v2301, %v2403
        %s2416 = scalar_lea.vmem [#allocation8], 60
        %v2417 = vld [vmem:[%s2416] sm:$0xf]
        %v2419 = vunpack.c.l.b16 %v489
        %v2420 = vpack.c.b16 %v2027, %v1768
        %v2421 = vpack.c.b16 %v2419, %v2419
        %v2422 = vrot.slane %v1660, 2
        %v2423 = vrot.slane %v1661, 2
        %v2424 = vsel %vm1154, %v2422, %v2423
        %v2425 = vrot.slane %v1662, 2
        %v2426 = vsel %vm1154, %v2423, %v2425
        %v2427 = vrot.slane %v1663, 2
        %v2428 = vsel %vm1154, %v2425, %v2427
        %v2429 = vrot.slane %v2420, 2
        %v2430 = vsel %vm1154, %v2427, %v2429
        %v2431 = vrot.slane %v2421, 2
        %v2432 = vsel %vm1154, %v2429, %v2431
        %v2434 = vsel %vm579, %v2424, 0
        %v2437 = vsel %vm579, %v2426, 0
        %v2440 = vsel %vm579, %v2428, 0
        %v2443 = vsel %vm579, %v2430, 0
        %v2446 = vsel %vm579, %v2432, 0
        %v2449 = vsel %vm595, %v2417, 0
        %2451 = vmatprep.subr.bf16.mxu0 0
        %2452 = vmatpush1.bf16.msra.mxu0 %v2449
        %2453 = vmatprep.subr.bf16.mxu0 0
        %2454 = vmatpush1.bf16.msra.mxu0 0
        %2455 = vmatprep.subr.bf16.mxu0 0
        %2456 = vmatpush1.bf16.msra.mxu0 0
        %2457 = vmatprep.subr.bf16.mxu0 0
        %2458 = vmatpush1.bf16.msra.mxu0 0
        %2459 = vmatprep.subr.bf16.mxu0 0
        %2460 = vmatpush1.bf16.msra.mxu0 0
        %2461 = vmatprep.subr.bf16.mxu0 0
        %2462 = vmatpush1.bf16.msra.mxu0 0
        %2463 = vmatprep.subr.bf16.mxu0 0
        %2464 = vmatpush1.bf16.msra.mxu0 0
        %2465 = vmatprep.subr.bf16.mxu0 0
        %2466 = vmatpush1.bf16.msra.mxu0 0
        %2467 = vmatprep.subr.bf16.mxu0 0
        %2468 = vmatpush1.bf16.msra.mxu0 0
        %2469 = vmatprep.subr.bf16.mxu0 0
        %2470 = vmatpush1.bf16.msra.mxu0 0
        %2471 = vmatprep.subr.bf16.mxu0 0
        %2472 = vmatpush1.bf16.msra.mxu0 0
        %2473 = vmatprep.subr.bf16.mxu0 0
        %2474 = vmatpush1.bf16.msra.mxu0 0
        %2475 = vmatprep.subr.bf16.mxu0 0
        %2476 = vmatpush1.bf16.msra.mxu0 0
        %2477 = vmatprep.subr.bf16.mxu0 0
        %2478 = vmatpush1.bf16.msra.mxu0 0
        %2479 = vmatprep.subr.bf16.mxu0 0
        %2480 = vmatpush1.bf16.msra.mxu0 0
        %2481 = vmatprep.subr.bf16.mxu0 0
        %2482 = vmatpush1.bf16.msra.mxu0 0
        %2483 = vmatprep.mubr.bf16.mxu0 0
        %2484 = vmatmul.mubr.bf16.gmra.mrb[0].mxu0 %v2434
        %v2485 = vpop.f32.mrb[0].mxu0
        %v2486 = vadd.f32 0.0, %v2485
        %v2487 = vpop.f32.mrb[0].mxu0
        %v2488 = vpop.f32.mrb[0].mxu0
        %v2489 = vadd.f32 0.0, %v2488
        %v2490 = vpop.f32.mrb[0].mxu0
        %2491 = vmatprep.mubr.bf16.mxu0 0
        %2492 = vmatmul.mubr.bf16.gmra.mrb[0].mxu0 %v2437
        %v2493 = vpop.f32.mrb[0].mxu0
        %v2494 = vadd.f32 0.0, %v2493
        %v2495 = vpop.f32.mrb[0].mxu0
        %v2496 = vpop.f32.mrb[0].mxu0
        %v2497 = vadd.f32 0.0, %v2496
        %v2498 = vpop.f32.mrb[0].mxu0
        %2499 = vmatprep.mubr.bf16.mxu0 0
        %2500 = vmatmul.mubr.bf16.gmra.mrb[0].mxu0 %v2440
        %v2501 = vpop.f32.mrb[0].mxu0
        %v2502 = vadd.f32 0.0, %v2501
        %v2503 = vpop.f32.mrb[0].mxu0
        %v2504 = vpop.f32.mrb[0].mxu0
        %v2505 = vadd.f32 0.0, %v2504
        %v2506 = vpop.f32.mrb[0].mxu0
        %2507 = vmatprep.mubr.bf16.mxu0 0
        %2508 = vmatmul.mubr.bf16.gmra.mrb[0].mxu0 %v2443
        %v2509 = vpop.f32.mrb[0].mxu0
        %v2510 = vadd.f32 0.0, %v2509
        %v2511 = vpop.f32.mrb[0].mxu0
        %v2512 = vpop.f32.mrb[0].mxu0
        %v2513 = vadd.f32 0.0, %v2512
        %v2514 = vpop.f32.mrb[0].mxu0
        %2515 = vmatprep.mubr.bf16.mxu0 0
        %2516 = vmatmul.mubr.bf16.gmra.mrb[0].mxu0 %v2446
        %v2517 = vpop.f32.mrb[0].mxu0
        %v2518 = vadd.f32 0.0, %v2517
        %v2519 = vpop.f32.mrb[0].mxu0
        %v2520 = vpop.f32.mrb[0].mxu0
        %v2521 = vadd.f32 0.0, %v2520
        %v2522 = vpop.f32.mrb[0].mxu0
        %2523 = vdwg.mxu0
        %v2524 = vadd.f32 %v2406, %v2486
        %v2525 = vadd.f32 %v2407, %v2489
        %v2526 = vadd.f32 %v2408, %v2494
        %v2527 = vadd.f32 %v2409, %v2497
        %v2528 = vadd.f32 %v2410, %v2502
        %v2529 = vadd.f32 %v2411, %v2505
        %v2530 = vadd.f32 %v2412, %v2510
        %v2531 = vadd.f32 %v2413, %v2513
        %v2532 = vadd.f32 %v2414, %v2518
        %v2533 = vadd.f32 %v2415, %v2521
        %s2534 = scalar_lea.vmem [#allocation8], 64
        %v2535 = vld [vmem:[%s2534] sm:$0xf]
        %v2536 = vrot.slane %v1780, 2
        %v2537 = vrot.slane %v1776, 3
        %v2538 = vor.u32 %v2536, %v2537
        %v2539 = vrot.slane %v1787, 2
        %v2540 = vrot.slane %v1783, 3
        %v2541 = vor.u32 %v2539, %v2540
        %v2542 = vsel %vm1387, %v2538, %v2541
        %v2543 = vrot.slane %v1794, 2
        %v2544 = vrot.slane %v1790, 3
        %v2545 = vor.u32 %v2543, %v2544
        %v2546 = vsel %vm1387, %v2541, %v2545
        %v2547 = vrot.slane %v1801, 2
        %v2548 = vrot.slane %v1797, 3
        %v2549 = vor.u32 %v2547, %v2548
        %v2550 = vsel %vm1387, %v2545, %v2549
        %v2552 = vshrl.u32 %v2420, 16
        %v2554 = vrot.slane %v2552, 2
        %v2555 = vshll.u32 %v2420, 16
        %v2557 = vrot.slane %v2555, 3
        %v2558 = vor.u32 %v2554, %v2557
        %v2559 = vsel %vm1387, %v2549, %v2558
        %v2561 = vshrl.u32 %v2421, 16
        %v2563 = vrot.slane %v2561, 2
        %v2564 = vshll.u32 %v2421, 16
        %v2566 = vrot.slane %v2564, 3
        %v2567 = vor.u32 %v2563, %v2566
        %v2568 = vsel %vm1387, %v2558, %v2567
        %v2570 = vsel %vm579, %v2542, 0
        %v2573 = vsel %vm579, %v2546, 0
        %v2576 = vsel %vm579, %v2550, 0
        %v2579 = vsel %vm579, %v2559, 0
        %v2582 = vsel %vm579, %v2568, 0
        %v2585 = vsel %vm595, %v2535, 0
        %2587 = vmatprep.subr.bf16.mxu0 0
        %2588 = vmatpush1.bf16.msra.mxu0 %v2585
        %2589 = vmatprep.subr.bf16.mxu0 0
        %2590 = vmatpush1.bf16.msra.mxu0 0
        %2591 = vmatprep.subr.bf16.mxu0 0
        %2592 = vmatpush1.bf16.msra.mxu0 0
        %2593 = vmatprep.subr.bf16.mxu0 0
        %2594 = vmatpush1.bf16.msra.mxu0 0
        %2595 = vmatprep.subr.bf16.mxu0 0
        %2596 = vmatpush1.bf16.msra.mxu0 0
        %2597 = vmatprep.subr.bf16.mxu0 0
        %2598 = vmatpush1.bf16.msra.mxu0 0
        %2599 = vmatprep.subr.bf16.mxu0 0
        %2600 = vmatpush1.bf16.msra.mxu0 0
        %2601 = vmatprep.subr.bf16.mxu0 0
        %2602 = vmatpush1.bf16.msra.mxu0 0
        %2603 = vmatprep.subr.bf16.mxu0 0
        %2604 = vmatpush1.bf16.msra.mxu0 0
        %2605 = vmatprep.subr.bf16.mxu0 0
        %2606 = vmatpush1.bf16.msra.mxu0 0
        %2607 = vmatprep.subr.bf16.mxu0 0
        %2608 = vmatpush1.bf16.msra.mxu0 0
        %2609 = vmatprep.subr.bf16.mxu0 0
        %2610 = vmatpush1.bf16.msra.mxu0 0
        %2611 = vmatprep.subr.bf16.mxu0 0
        %2612 = vmatpush1.bf16.msra.mxu0 0
        %2613 = vmatprep.subr.bf16.mxu0 0
        %2614 = vmatpush1.bf16.msra.mxu0 0
        %2615 = vmatprep.subr.bf16.mxu0 0
        %2616 = vmatpush1.bf16.msra.mxu0 0
        %2617 = vmatprep.subr.bf16.mxu0 0
        %2618 = vmatpush1.bf16.msra.mxu0 0
        %2619 = vmatprep.mubr.bf16.mxu0 0
        %2620 = vmatmul.mubr.bf16.gmra.mrb[0].mxu0 %v2570
        %v2621 = vpop.f32.mrb[0].mxu0
        %v2622 = vadd.f32 0.0, %v2621
        %v2623 = vpop.f32.mrb[0].mxu0
        %v2624 = vpop.f32.mrb[0].mxu0
        %v2625 = vadd.f32 0.0, %v2624
        %v2626 = vpop.f32.mrb[0].mxu0
        %2627 = vmatprep.mubr.bf16.mxu0 0
        %2628 = vmatmul.mubr.bf16.gmra.mrb[0].mxu0 %v2573
        %v2629 = vpop.f32.mrb[0].mxu0
        %v2630 = vadd.f32 0.0, %v2629
        %v2631 = vpop.f32.mrb[0].mxu0
        %v2632 = vpop.f32.mrb[0].mxu0
        %v2633 = vadd.f32 0.0, %v2632
        %v2634 = vpop.f32.mrb[0].mxu0
        %2635 = vmatprep.mubr.bf16.mxu0 0
        %2636 = vmatmul.mubr.bf16.gmra.mrb[0].mxu0 %v2576
        %v2637 = vpop.f32.mrb[0].mxu0
        %v2638 = vadd.f32 0.0, %v2637
        %v2639 = vpop.f32.mrb[0].mxu0
        %v2640 = vpop.f32.mrb[0].mxu0
        %v2641 = vadd.f32 0.0, %v2640
        %v2642 = vpop.f32.mrb[0].mxu0
        %2643 = vmatprep.mubr.bf16.mxu0 0
        %2644 = vmatmul.mubr.bf16.gmra.mrb[0].mxu0 %v2579
        %v2645 = vpop.f32.mrb[0].mxu0
        %v2646 = vadd.f32 0.0, %v2645
        %v2647 = vpop.f32.mrb[0].mxu0
        %v2648 = vpop.f32.mrb[0].mxu0
        %v2649 = vadd.f32 0.0, %v2648
        %v2650 = vpop.f32.mrb[0].mxu0
        %2651 = vmatprep.mubr.bf16.mxu0 0
        %2652 = vmatmul.mubr.bf16.gmra.mrb[0].mxu0 %v2582
        %v2653 = vpop.f32.mrb[0].mxu0
        %v2654 = vadd.f32 0.0, %v2653
        %v2655 = vpop.f32.mrb[0].mxu0
        %v2656 = vpop.f32.mrb[0].mxu0
        %v2657 = vadd.f32 0.0, %v2656
        %v2658 = vpop.f32.mrb[0].mxu0
        %2659 = vdwg.mxu0
        %v2660 = vadd.f32 %v2524, %v2622
        %v2661 = vadd.f32 %v2525, %v2625
        %v2662 = vadd.f32 %v2526, %v2630
        %v2663 = vadd.f32 %v2527, %v2633
        %v2664 = vadd.f32 %v2528, %v2638
        %v2665 = vadd.f32 %v2529, %v2641
        %v2666 = vadd.f32 %v2530, %v2646
        %v2667 = vadd.f32 %v2531, %v2649
        %v2668 = vadd.f32 %v2532, %v2654
        %v2669 = vadd.f32 %v2533, %v2657
        %s2670 = scalar_lea.vmem [#allocation8], 68
        %v2671 = vld [vmem:[%s2670] sm:$0xf]
        %v2672 = vrot.slane %v1660, 3
        %v2673 = vrot.slane %v1661, 3
        %v2674 = vsel %vm1524, %v2672, %v2673
        %v2675 = vrot.slane %v1662, 3
        %v2676 = vsel %vm1524, %v2673, %v2675
        %v2677 = vrot.slane %v1663, 3
        %v2678 = vsel %vm1524, %v2675, %v2677
        %v2679 = vrot.slane %v2420, 3
        %v2680 = vsel %vm1524, %v2677, %v2679
        %v2681 = vrot.slane %v2421, 3
        %v2682 = vsel %vm1524, %v2679, %v2681
        %v2684 = vsel %vm579, %v2674, 0
        %v2687 = vsel %vm579, %v2676, 0
        %v2690 = vsel %vm579, %v2678, 0
        %v2693 = vsel %vm579, %v2680, 0
        %v2696 = vsel %vm579, %v2682, 0
        %v2699 = vsel %vm595, %v2671, 0
        %2701 = vmatprep.subr.bf16.mxu0 0
        %2702 = vmatpush1.bf16.msra.mxu0 %v2699
        %2703 = vmatprep.subr.bf16.mxu0 0
        %2704 = vmatpush1.bf16.msra.mxu0 0
        %2705 = vmatprep.subr.bf16.mxu0 0
        %2706 = vmatpush1.bf16.msra.mxu0 0
        %2707 = vmatprep.subr.bf16.mxu0 0
        %2708 = vmatpush1.bf16.msra.mxu0 0
        %2709 = vmatprep.subr.bf16.mxu0 0
        %2710 = vmatpush1.bf16.msra.mxu0 0
        %2711 = vmatprep.subr.bf16.mxu0 0
        %2712 = vmatpush1.bf16.msra.mxu0 0
        %2713 = vmatprep.subr.bf16.mxu0 0
        %2714 = vmatpush1.bf16.msra.mxu0 0
        %2715 = vmatprep.subr.bf16.mxu0 0
        %2716 = vmatpush1.bf16.msra.mxu0 0
        %2717 = vmatprep.subr.bf16.mxu0 0
        %2718 = vmatpush1.bf16.msra.mxu0 0
        %2719 = vmatprep.subr.bf16.mxu0 0
        %2720 = vmatpush1.bf16.msra.mxu0 0
        %2721 = vmatprep.subr.bf16.mxu0 0
        %2722 = vmatpush1.bf16.msra.mxu0 0
        %2723 = vmatprep.subr.bf16.mxu0 0
        %2724 = vmatpush1.bf16.msra.mxu0 0
        %2725 = vmatprep.subr.bf16.mxu0 0
        %2726 = vmatpush1.bf16.msra.mxu0 0
        %2727 = vmatprep.subr.bf16.mxu0 0
        %2728 = vmatpush1.bf16.msra.mxu0 0
        %2729 = vmatprep.subr.bf16.mxu0 0
        %2730 = vmatpush1.bf16.msra.mxu0 0
        %2731 = vmatprep.subr.bf16.mxu0 0
        %2732 = vmatpush1.bf16.msra.mxu0 0
        %2733 = vmatprep.mubr.bf16.mxu0 0
        %2734 = vmatmul.mubr.bf16.gmra.mrb[0].mxu0 %v2684
        %v2735 = vpop.f32.mrb[0].mxu0
        %v2736 = vadd.f32 0.0, %v2735
        %v2737 = vpop.f32.mrb[0].mxu0
        %v2738 = vpop.f32.mrb[0].mxu0
        %v2739 = vadd.f32 0.0, %v2738
        %v2740 = vpop.f32.mrb[0].mxu0
        %2741 = vmatprep.mubr.bf16.mxu0 0
        %2742 = vmatmul.mubr.bf16.gmra.mrb[0].mxu0 %v2687
        %v2743 = vpop.f32.mrb[0].mxu0
        %v2744 = vadd.f32 0.0, %v2743
        %v2745 = vpop.f32.mrb[0].mxu0
        %v2746 = vpop.f32.mrb[0].mxu0
        %v2747 = vadd.f32 0.0, %v2746
        %v2748 = vpop.f32.mrb[0].mxu0
        %2749 = vmatprep.mubr.bf16.mxu0 0
        %2750 = vmatmul.mubr.bf16.gmra.mrb[0].mxu0 %v2690
        %v2751 = vpop.f32.mrb[0].mxu0
        %v2752 = vadd.f32 0.0, %v2751
        %v2753 = vpop.f32.mrb[0].mxu0
        %v2754 = vpop.f32.mrb[0].mxu0
        %v2755 = vadd.f32 0.0, %v2754
        %v2756 = vpop.f32.mrb[0].mxu0
        %2757 = vmatprep.mubr.bf16.mxu0 0
        %2758 = vmatmul.mubr.bf16.gmra.mrb[0].mxu0 %v2693
        %v2759 = vpop.f32.mrb[0].mxu0
        %v2760 = vadd.f32 0.0, %v2759
        %v2761 = vpop.f32.mrb[0].mxu0
        %v2762 = vpop.f32.mrb[0].mxu0
        %v2763 = vadd.f32 0.0, %v2762
        %v2764 = vpop.f32.mrb[0].mxu0
        %2765 = vmatprep.mubr.bf16.mxu0 0
        %2766 = vmatmul.mubr.bf16.gmra.mrb[0].mxu0 %v2696
        %v2767 = vpop.f32.mrb[0].mxu0
        %v2768 = vadd.f32 0.0, %v2767
        %v2769 = vpop.f32.mrb[0].mxu0
        %v2770 = vpop.f32.mrb[0].mxu0
        %v2771 = vadd.f32 0.0, %v2770
        %v2772 = vpop.f32.mrb[0].mxu0
        %2773 = vdwg.mxu0
        %v2774 = vadd.f32 %v2660, %v2736
        %v2775 = vadd.f32 %v2661, %v2739
        %v2776 = vadd.f32 %v2662, %v2744
        %v2777 = vadd.f32 %v2663, %v2747
        %v2778 = vadd.f32 %v2664, %v2752
        %v2779 = vadd.f32 %v2665, %v2755
        %v2780 = vadd.f32 %v2666, %v2760
        %v2781 = vadd.f32 %v2667, %v2763
        %v2782 = vadd.f32 %v2668, %v2768
        %v2783 = vadd.f32 %v2669, %v2771
        %s2784 = scalar_lea.vmem [#allocation8], 72
        %v2785 = vld [vmem:[%s2784] sm:$0xf]
        %v2796 = vunpack.c.l.b16 %v490
        %v2797 = vunpack.c.l.b16 %v491
        %v2798 = vunpack.c.l.b16 %v492
        %v2799 = vunpack.c.l.b16 %v493
        %v2800 = vunpack.c.l.b16 %v494
        %v2801 = vunpack.c.l.b16 %v495
        %v2802 = vunpack.c.l.b16 %v496
        %v2803 = vunpack.c.l.b16 %v497
        %v2804 = vunpack.c.l.b16 %v498
        %v2805 = vunpack.c.l.b16 %v499
        %v2806 = vpack.c.b16 %v2797, %v2796
        %v2807 = vpack.c.b16 %v2799, %v2798
        %v2808 = vpack.c.b16 %v2801, %v2800
        %v2809 = vpack.c.b16 %v2803, %v2802
        %v2810 = vpack.c.b16 %v2805, %v2804
        %v2812 = vsel %vm579, %v2806, 0
        %v2815 = vsel %vm579, %v2807, 0
        %v2818 = vsel %vm579, %v2808, 0
        %v2821 = vsel %vm579, %v2809, 0
        %v2824 = vsel %vm579, %v2810, 0
        %v2827 = vsel %vm595, %v2785, 0
        %2829 = vmatprep.subr.bf16.mxu0 0
        %2830 = vmatpush1.bf16.msra.mxu0 %v2827
        %2831 = vmatprep.subr.bf16.mxu0 0
        %2832 = vmatpush1.bf16.msra.mxu0 0
        %2833 = vmatprep.subr.bf16.mxu0 0
        %2834 = vmatpush1.bf16.msra.mxu0 0
        %2835 = vmatprep.subr.bf16.mxu0 0
        %2836 = vmatpush1.bf16.msra.mxu0 0
        %2837 = vmatprep.subr.bf16.mxu0 0
        %2838 = vmatpush1.bf16.msra.mxu0 0
        %2839 = vmatprep.subr.bf16.mxu0 0
        %2840 = vmatpush1.bf16.msra.mxu0 0
        %2841 = vmatprep.subr.bf16.mxu0 0
        %2842 = vmatpush1.bf16.msra.mxu0 0
        %2843 = vmatprep.subr.bf16.mxu0 0
        %2844 = vmatpush1.bf16.msra.mxu0 0
        %2845 = vmatprep.subr.bf16.mxu0 0
        %2846 = vmatpush1.bf16.msra.mxu0 0
        %2847 = vmatprep.subr.bf16.mxu0 0
        %2848 = vmatpush1.bf16.msra.mxu0 0
        %2849 = vmatprep.subr.bf16.mxu0 0
        %2850 = vmatpush1.bf16.msra.mxu0 0
        %2851 = vmatprep.subr.bf16.mxu0 0
        %2852 = vmatpush1.bf16.msra.mxu0 0
        %2853 = vmatprep.subr.bf16.mxu0 0
        %2854 = vmatpush1.bf16.msra.mxu0 0
        %2855 = vmatprep.subr.bf16.mxu0 0
        %2856 = vmatpush1.bf16.msra.mxu0 0
        %2857 = vmatprep.subr.bf16.mxu0 0
        %2858 = vmatpush1.bf16.msra.mxu0 0
        %2859 = vmatprep.subr.bf16.mxu0 0
        %2860 = vmatpush1.bf16.msra.mxu0 0
        %2861 = vmatprep.mubr.bf16.mxu0 0
        %2862 = vmatmul.mubr.bf16.gmra.mrb[0].mxu0 %v2812
        %v2863 = vpop.f32.mrb[0].mxu0
        %v2864 = vadd.f32 0.0, %v2863
        %v2865 = vpop.f32.mrb[0].mxu0
        %v2866 = vpop.f32.mrb[0].mxu0
        %v2867 = vadd.f32 0.0, %v2866
        %v2868 = vpop.f32.mrb[0].mxu0
        %2869 = vmatprep.mubr.bf16.mxu0 0
        %2870 = vmatmul.mubr.bf16.gmra.mrb[0].mxu0 %v2815
        %v2871 = vpop.f32.mrb[0].mxu0
        %v2872 = vadd.f32 0.0, %v2871
        %v2873 = vpop.f32.mrb[0].mxu0
        %v2874 = vpop.f32.mrb[0].mxu0
        %v2875 = vadd.f32 0.0, %v2874
        %v2876 = vpop.f32.mrb[0].mxu0
        %2877 = vmatprep.mubr.bf16.mxu0 0
        %2878 = vmatmul.mubr.bf16.gmra.mrb[0].mxu0 %v2818
        %v2879 = vpop.f32.mrb[0].mxu0
        %v2880 = vadd.f32 0.0, %v2879
        %v2881 = vpop.f32.mrb[0].mxu0
        %v2882 = vpop.f32.mrb[0].mxu0
        %v2883 = vadd.f32 0.0, %v2882
        %v2884 = vpop.f32.mrb[0].mxu0
        %2885 = vmatprep.mubr.bf16.mxu0 0
        %2886 = vmatmul.mubr.bf16.gmra.mrb[0].mxu0 %v2821
        %v2887 = vpop.f32.mrb[0].mxu0
        %v2888 = vadd.f32 0.0, %v2887
        %v2889 = vpop.f32.mrb[0].mxu0
        %v2890 = vpop.f32.mrb[0].mxu0
        %v2891 = vadd.f32 0.0, %v2890
        %v2892 = vpop.f32.mrb[0].mxu0
        %2893 = vmatprep.mubr.bf16.mxu0 0
        %2894 = vmatmul.mubr.bf16.gmra.mrb[0].mxu0 %v2824
        %v2895 = vpop.f32.mrb[0].mxu0
        %v2896 = vadd.f32 0.0, %v2895
        %v2897 = vpop.f32.mrb[0].mxu0
        %v2898 = vpop.f32.mrb[0].mxu0
        %v2899 = vadd.f32 0.0, %v2898
        %v2900 = vpop.f32.mrb[0].mxu0
        %2901 = vdwg.mxu0
        %v2902 = vadd.f32 %v2774, %v2864
        %v2903 = vadd.f32 %v2775, %v2867
        %v2904 = vadd.f32 %v2776, %v2872
        %v2905 = vadd.f32 %v2777, %v2875
        %v2906 = vadd.f32 %v2778, %v2880
        %v2907 = vadd.f32 %v2779, %v2883
        %v2908 = vadd.f32 %v2780, %v2888
        %v2909 = vadd.f32 %v2781, %v2891
        %v2910 = vadd.f32 %v2782, %v2896
        %v2911 = vadd.f32 %v2783, %v2899
        %s2912 = scalar_lea.vmem [#allocation8], 76
        %v2913 = vld [vmem:[%s2912] sm:$0xf]
        %v2915 = vunpack.c.l.b16 %v500
        %v2916 = vpack.c.b16 %v2915, %v2915
        %v2917 = vshrl.u32 %v2806, 16
        %v2919 = vshll.u32 %v2806, 16
        %v2921 = vrot.slane %v2919, 1
        %v2922 = vor.u32 %v2917, %v2921
        %v2923 = vshll.u32 %v2807, 16
        %v2925 = vrot.slane %v2923, 1
        %v2926 = vsel %vm534, %v2922, %v2925
        %v2927 = vshrl.u32 %v2807, 16
        %v2929 = vor.u32 %v2927, %v2925
        %v2930 = vshll.u32 %v2808, 16
        %v2932 = vrot.slane %v2930, 1
        %v2933 = vsel %vm534, %v2929, %v2932
        %v2934 = vshrl.u32 %v2808, 16
        %v2936 = vor.u32 %v2934, %v2932
        %v2937 = vshll.u32 %v2809, 16
        %v2939 = vrot.slane %v2937, 1
        %v2940 = vsel %vm534, %v2936, %v2939
        %v2941 = vshrl.u32 %v2809, 16
        %v2943 = vor.u32 %v2941, %v2939
        %v2944 = vshll.u32 %v2810, 16
        %v2946 = vrot.slane %v2944, 1
        %v2947 = vsel %vm534, %v2943, %v2946
        %v2948 = vshrl.u32 %v2810, 16
        %v2950 = vor.u32 %v2948, %v2946
        %v2952 = vshll.u32 %v2916, 16
        %v2954 = vrot.slane %v2952, 1
        %v2955 = vsel %vm534, %v2950, %v2954
        %v2957 = vsel %vm579, %v2926, 0
        %v2960 = vsel %vm579, %v2933, 0
        %v2963 = vsel %vm579, %v2940, 0
        %v2966 = vsel %vm579, %v2947, 0
        %v2969 = vsel %vm579, %v2955, 0
        %v2972 = vsel %vm595, %v2913, 0
        %2974 = vmatprep.subr.bf16.mxu0 0
        %2975 = vmatpush1.bf16.msra.mxu0 %v2972
        %2976 = vmatprep.subr.bf16.mxu0 0
        %2977 = vmatpush1.bf16.msra.mxu0 0
        %2978 = vmatprep.subr.bf16.mxu0 0
        %2979 = vmatpush1.bf16.msra.mxu0 0
        %2980 = vmatprep.subr.bf16.mxu0 0
        %2981 = vmatpush1.bf16.msra.mxu0 0
        %2982 = vmatprep.subr.bf16.mxu0 0
        %2983 = vmatpush1.bf16.msra.mxu0 0
        %2984 = vmatprep.subr.bf16.mxu0 0
        %2985 = vmatpush1.bf16.msra.mxu0 0
        %2986 = vmatprep.subr.bf16.mxu0 0
        %2987 = vmatpush1.bf16.msra.mxu0 0
        %2988 = vmatprep.subr.bf16.mxu0 0
        %2989 = vmatpush1.bf16.msra.mxu0 0
        %2990 = vmatprep.subr.bf16.mxu0 0
        %2991 = vmatpush1.bf16.msra.mxu0 0
        %2992 = vmatprep.subr.bf16.mxu0 0
        %2993 = vmatpush1.bf16.msra.mxu0 0
        %2994 = vmatprep.subr.bf16.mxu0 0
        %2995 = vmatpush1.bf16.msra.mxu0 0
        %2996 = vmatprep.subr.bf16.mxu0 0
        %2997 = vmatpush1.bf16.msra.mxu0 0
        %2998 = vmatprep.subr.bf16.mxu0 0
        %2999 = vmatpush1.bf16.msra.mxu0 0
        %3000 = vmatprep.subr.bf16.mxu0 0
        %3001 = vmatpush1.bf16.msra.mxu0 0
        %3002 = vmatprep.subr.bf16.mxu0 0
        %3003 = vmatpush1.bf16.msra.mxu0 0
        %3004 = vmatprep.subr.bf16.mxu0 0
        %3005 = vmatpush1.bf16.msra.mxu0 0
        %3006 = vmatprep.mubr.bf16.mxu0 0
        %3007 = vmatmul.mubr.bf16.gmra.mrb[0].mxu0 %v2957
        %v3008 = vpop.f32.mrb[0].mxu0
        %v3009 = vadd.f32 0.0, %v3008
        %v3010 = vpop.f32.mrb[0].mxu0
        %v3011 = vpop.f32.mrb[0].mxu0
        %v3012 = vadd.f32 0.0, %v3011
        %v3013 = vpop.f32.mrb[0].mxu0
        %3014 = vmatprep.mubr.bf16.mxu0 0
        %3015 = vmatmul.mubr.bf16.gmra.mrb[0].mxu0 %v2960
        %v3016 = vpop.f32.mrb[0].mxu0
        %v3017 = vadd.f32 0.0, %v3016
        %v3018 = vpop.f32.mrb[0].mxu0
        %v3019 = vpop.f32.mrb[0].mxu0
        %v3020 = vadd.f32 0.0, %v3019
        %v3021 = vpop.f32.mrb[0].mxu0
        %3022 = vmatprep.mubr.bf16.mxu0 0
        %3023 = vmatmul.mubr.bf16.gmra.mrb[0].mxu0 %v2963
        %v3024 = vpop.f32.mrb[0].mxu0
        %v3025 = vadd.f32 0.0, %v3024
        %v3026 = vpop.f32.mrb[0].mxu0
        %v3027 = vpop.f32.mrb[0].mxu0
        %v3028 = vadd.f32 0.0, %v3027
        %v3029 = vpop.f32.mrb[0].mxu0
        %3030 = vmatprep.mubr.bf16.mxu0 0
        %3031 = vmatmul.mubr.bf16.gmra.mrb[0].mxu0 %v2966
        %v3032 = vpop.f32.mrb[0].mxu0
        %v3033 = vadd.f32 0.0, %v3032
        %v3034 = vpop.f32.mrb[0].mxu0
        %v3035 = vpop.f32.mrb[0].mxu0
        %v3036 = vadd.f32 0.0, %v3035
        %v3037 = vpop.f32.mrb[0].mxu0
        %3038 = vmatprep.mubr.bf16.mxu0 0
        %3039 = vmatmul.mubr.bf16.gmra.mrb[0].mxu0 %v2969
        %v3040 = vpop.f32.mrb[0].mxu0
        %v3041 = vadd.f32 0.0, %v3040
        %v3042 = vpop.f32.mrb[0].mxu0
        %v3043 = vpop.f32.mrb[0].mxu0
        %v3044 = vadd.f32 0.0, %v3043
        %v3045 = vpop.f32.mrb[0].mxu0
        %3046 = vdwg.mxu0
        %v3047 = vadd.f32 %v2902, %v3009
        %v3048 = vadd.f32 %v2903, %v3012
        %v3049 = vadd.f32 %v2904, %v3017
        %v3050 = vadd.f32 %v2905, %v3020
        %v3051 = vadd.f32 %v2906, %v3025
        %v3052 = vadd.f32 %v2907, %v3028
        %v3053 = vadd.f32 %v2908, %v3033
        %v3054 = vadd.f32 %v2909, %v3036
        %v3055 = vadd.f32 %v2910, %v3041
        %v3056 = vadd.f32 %v2911, %v3044
        %s3057 = scalar_lea.vmem [#allocation8], 80
        %v3058 = vld [vmem:[%s3057] sm:$0xf]
        %v3059 = vrot.slane %v2806, 1
        %v3060 = vrot.slane %v2807, 1
        %v3061 = vsel %vm760, %v3059, %v3060
        %v3062 = vrot.slane %v2808, 1
        %v3063 = vsel %vm760, %v3060, %v3062
        %v3064 = vrot.slane %v2809, 1
        %v3065 = vsel %vm760, %v3062, %v3064
        %v3066 = vrot.slane %v2810, 1
        %v3067 = vsel %vm760, %v3064, %v3066
        %v3068 = vrot.slane %v2916, 1
        %v3069 = vsel %vm760, %v3066, %v3068
        %v3071 = vsel %vm579, %v3061, 0
        %v3074 = vsel %vm579, %v3063, 0
        %v3077 = vsel %vm579, %v3065, 0
        %v3080 = vsel %vm579, %v3067, 0
        %v3083 = vsel %vm579, %v3069, 0
        %v3086 = vsel %vm595, %v3058, 0
        %3088 = vmatprep.subr.bf16.mxu0 0
        %3089 = vmatpush1.bf16.msra.mxu0 %v3086
        %3090 = vmatprep.subr.bf16.mxu0 0
        %3091 = vmatpush1.bf16.msra.mxu0 0
        %3092 = vmatprep.subr.bf16.mxu0 0
        %3093 = vmatpush1.bf16.msra.mxu0 0
        %3094 = vmatprep.subr.bf16.mxu0 0
        %3095 = vmatpush1.bf16.msra.mxu0 0
        %3096 = vmatprep.subr.bf16.mxu0 0
        %3097 = vmatpush1.bf16.msra.mxu0 0
        %3098 = vmatprep.subr.bf16.mxu0 0
        %3099 = vmatpush1.bf16.msra.mxu0 0
        %3100 = vmatprep.subr.bf16.mxu0 0
        %3101 = vmatpush1.bf16.msra.mxu0 0
        %3102 = vmatprep.subr.bf16.mxu0 0
        %3103 = vmatpush1.bf16.msra.mxu0 0
        %3104 = vmatprep.subr.bf16.mxu0 0
        %3105 = vmatpush1.bf16.msra.mxu0 0
        %3106 = vmatprep.subr.bf16.mxu0 0
        %3107 = vmatpush1.bf16.msra.mxu0 0
        %3108 = vmatprep.subr.bf16.mxu0 0
        %3109 = vmatpush1.bf16.msra.mxu0 0
        %3110 = vmatprep.subr.bf16.mxu0 0
        %3111 = vmatpush1.bf16.msra.mxu0 0
        %3112 = vmatprep.subr.bf16.mxu0 0
        %3113 = vmatpush1.bf16.msra.mxu0 0
        %3114 = vmatprep.subr.bf16.mxu0 0
        %3115 = vmatpush1.bf16.msra.mxu0 0
        %3116 = vmatprep.subr.bf16.mxu0 0
        %3117 = vmatpush1.bf16.msra.mxu0 0
        %3118 = vmatprep.subr.bf16.mxu0 0
        %3119 = vmatpush1.bf16.msra.mxu0 0
        %3120 = vmatprep.mubr.bf16.mxu0 0
        %3121 = vmatmul.mubr.bf16.gmra.mrb[0].mxu0 %v3071
        %v3122 = vpop.f32.mrb[0].mxu0
        %v3123 = vadd.f32 0.0, %v3122
        %v3124 = vpop.f32.mrb[0].mxu0
        %v3125 = vpop.f32.mrb[0].mxu0
        %v3126 = vadd.f32 0.0, %v3125
        %v3127 = vpop.f32.mrb[0].mxu0
        %3128 = vmatprep.mubr.bf16.mxu0 0
        %3129 = vmatmul.mubr.bf16.gmra.mrb[0].mxu0 %v3074
        %v3130 = vpop.f32.mrb[0].mxu0
        %v3131 = vadd.f32 0.0, %v3130
        %v3132 = vpop.f32.mrb[0].mxu0
        %v3133 = vpop.f32.mrb[0].mxu0
        %v3134 = vadd.f32 0.0, %v3133
        %v3135 = vpop.f32.mrb[0].mxu0
        %3136 = vmatprep.mubr.bf16.mxu0 0
        %3137 = vmatmul.mubr.bf16.gmra.mrb[0].mxu0 %v3077
        %v3138 = vpop.f32.mrb[0].mxu0
        %v3139 = vadd.f32 0.0, %v3138
        %v3140 = vpop.f32.mrb[0].mxu0
        %v3141 = vpop.f32.mrb[0].mxu0
        %v3142 = vadd.f32 0.0, %v3141
        %v3143 = vpop.f32.mrb[0].mxu0
        %3144 = vmatprep.mubr.bf16.mxu0 0
        %3145 = vmatmul.mubr.bf16.gmra.mrb[0].mxu0 %v3080
        %v3146 = vpop.f32.mrb[0].mxu0
        %v3147 = vadd.f32 0.0, %v3146
        %v3148 = vpop.f32.mrb[0].mxu0
        %v3149 = vpop.f32.mrb[0].mxu0
        %v3150 = vadd.f32 0.0, %v3149
        %v3151 = vpop.f32.mrb[0].mxu0
        %3152 = vmatprep.mubr.bf16.mxu0 0
        %3153 = vmatmul.mubr.bf16.gmra.mrb[0].mxu0 %v3083
        %v3154 = vpop.f32.mrb[0].mxu0
        %v3155 = vadd.f32 0.0, %v3154
        %v3156 = vpop.f32.mrb[0].mxu0
        %v3157 = vpop.f32.mrb[0].mxu0
        %v3158 = vadd.f32 0.0, %v3157
        %v3159 = vpop.f32.mrb[0].mxu0
        %3160 = vdwg.mxu0
        %v3161 = vadd.f32 %v3047, %v3123
        %v3162 = vadd.f32 %v3048, %v3126
        %v3163 = vadd.f32 %v3049, %v3131
        %v3164 = vadd.f32 %v3050, %v3134
        %v3165 = vadd.f32 %v3051, %v3139
        %v3166 = vadd.f32 %v3052, %v3142
        %v3167 = vadd.f32 %v3053, %v3147
        %v3168 = vadd.f32 %v3054, %v3150
        %v3169 = vadd.f32 %v3055, %v3155
        %v3170 = vadd.f32 %v3056, %v3158
        %s3171 = scalar_lea.vmem [#allocation8], 84
        %v3172 = vld [vmem:[%s3171] sm:$0xf]
        %v3174 = vunpack.c.l.b16 %v501
        %v3175 = vpack.c.b16 %v2798, %v2797
        %v3176 = vpack.c.b16 %v2800, %v2799
        %v3177 = vpack.c.b16 %v2802, %v2801
        %v3178 = vpack.c.b16 %v2804, %v2803
        %v3179 = vpack.c.b16 %v2915, %v2805
        %v3180 = vpack.c.b16 %v3174, %v3174
        %v3181 = vrot.slane %v3175, 1
        %v3182 = vrot.slane %v3176, 1
        %v3183 = vsel %vm760, %v3181, %v3182
        %v3184 = vrot.slane %v3177, 1
        %v3185 = vsel %vm760, %v3182, %v3184
        %v3186 = vrot.slane %v3178, 1
        %v3187 = vsel %vm760, %v3184, %v3186
        %v3188 = vrot.slane %v3179, 1
        %v3189 = vsel %vm760, %v3186, %v3188
        %v3190 = vrot.slane %v3180, 1
        %v3191 = vsel %vm760, %v3188, %v3190
        %v3193 = vsel %vm579, %v3183, 0
        %v3196 = vsel %vm579, %v3185, 0
        %v3199 = vsel %vm579, %v3187, 0
        %v3202 = vsel %vm579, %v3189, 0
        %v3205 = vsel %vm579, %v3191, 0
        %v3208 = vsel %vm595, %v3172, 0
        %3210 = vmatprep.subr.bf16.mxu0 0
        %3211 = vmatpush1.bf16.msra.mxu0 %v3208
        %3212 = vmatprep.subr.bf16.mxu0 0
        %3213 = vmatpush1.bf16.msra.mxu0 0
        %3214 = vmatprep.subr.bf16.mxu0 0
        %3215 = vmatpush1.bf16.msra.mxu0 0
        %3216 = vmatprep.subr.bf16.mxu0 0
        %3217 = vmatpush1.bf16.msra.mxu0 0
        %3218 = vmatprep.subr.bf16.mxu0 0
        %3219 = vmatpush1.bf16.msra.mxu0 0
        %3220 = vmatprep.subr.bf16.mxu0 0
        %3221 = vmatpush1.bf16.msra.mxu0 0
        %3222 = vmatprep.subr.bf16.mxu0 0
        %3223 = vmatpush1.bf16.msra.mxu0 0
        %3224 = vmatprep.subr.bf16.mxu0 0
        %3225 = vmatpush1.bf16.msra.mxu0 0
        %3226 = vmatprep.subr.bf16.mxu0 0
        %3227 = vmatpush1.bf16.msra.mxu0 0
        %3228 = vmatprep.subr.bf16.mxu0 0
        %3229 = vmatpush1.bf16.msra.mxu0 0
        %3230 = vmatprep.subr.bf16.mxu0 0
        %3231 = vmatpush1.bf16.msra.mxu0 0
        %3232 = vmatprep.subr.bf16.mxu0 0
        %3233 = vmatpush1.bf16.msra.mxu0 0
        %3234 = vmatprep.subr.bf16.mxu0 0
        %3235 = vmatpush1.bf16.msra.mxu0 0
        %3236 = vmatprep.subr.bf16.mxu0 0
        %3237 = vmatpush1.bf16.msra.mxu0 0
        %3238 = vmatprep.subr.bf16.mxu0 0
        %3239 = vmatpush1.bf16.msra.mxu0 0
        %3240 = vmatprep.subr.bf16.mxu0 0
        %3241 = vmatpush1.bf16.msra.mxu0 0
        %3242 = vmatprep.mubr.bf16.mxu0 0
        %3243 = vmatmul.mubr.bf16.gmra.mrb[0].mxu0 %v3193
        %v3244 = vpop.f32.mrb[0].mxu0
        %v3245 = vadd.f32 0.0, %v3244
        %v3246 = vpop.f32.mrb[0].mxu0
        %v3247 = vpop.f32.mrb[0].mxu0
        %v3248 = vadd.f32 0.0, %v3247
        %v3249 = vpop.f32.mrb[0].mxu0
        %3250 = vmatprep.mubr.bf16.mxu0 0
        %3251 = vmatmul.mubr.bf16.gmra.mrb[0].mxu0 %v3196
        %v3252 = vpop.f32.mrb[0].mxu0
        %v3253 = vadd.f32 0.0, %v3252
        %v3254 = vpop.f32.mrb[0].mxu0
        %v3255 = vpop.f32.mrb[0].mxu0
        %v3256 = vadd.f32 0.0, %v3255
        %v3257 = vpop.f32.mrb[0].mxu0
        %3258 = vmatprep.mubr.bf16.mxu0 0
        %3259 = vmatmul.mubr.bf16.gmra.mrb[0].mxu0 %v3199
        %v3260 = vpop.f32.mrb[0].mxu0
        %v3261 = vadd.f32 0.0, %v3260
        %v3262 = vpop.f32.mrb[0].mxu0
        %v3263 = vpop.f32.mrb[0].mxu0
        %v3264 = vadd.f32 0.0, %v3263
        %v3265 = vpop.f32.mrb[0].mxu0
        %3266 = vmatprep.mubr.bf16.mxu0 0
        %3267 = vmatmul.mubr.bf16.gmra.mrb[0].mxu0 %v3202
        %v3268 = vpop.f32.mrb[0].mxu0
        %v3269 = vadd.f32 0.0, %v3268
        %v3270 = vpop.f32.mrb[0].mxu0
        %v3271 = vpop.f32.mrb[0].mxu0
        %v3272 = vadd.f32 0.0, %v3271
        %v3273 = vpop.f32.mrb[0].mxu0
        %3274 = vmatprep.mubr.bf16.mxu0 0
        %3275 = vmatmul.mubr.bf16.gmra.mrb[0].mxu0 %v3205
        %v3276 = vpop.f32.mrb[0].mxu0
        %v3277 = vadd.f32 0.0, %v3276
        %v3278 = vpop.f32.mrb[0].mxu0
        %v3279 = vpop.f32.mrb[0].mxu0
        %v3280 = vadd.f32 0.0, %v3279
        %v3281 = vpop.f32.mrb[0].mxu0
        %3282 = vdwg.mxu0
        %v3283 = vadd.f32 %v3161, %v3245
        %v3284 = vadd.f32 %v3162, %v3248
        %v3285 = vadd.f32 %v3163, %v3253
        %v3286 = vadd.f32 %v3164, %v3256
        %v3287 = vadd.f32 %v3165, %v3261
        %v3288 = vadd.f32 %v3166, %v3264
        %v3289 = vadd.f32 %v3167, %v3269
        %v3290 = vadd.f32 %v3168, %v3272
        %v3291 = vadd.f32 %v3169, %v3277
        %v3292 = vadd.f32 %v3170, %v3280
        %s3293 = scalar_lea.vmem [#allocation8], 88
        %v3294 = vld [vmem:[%s3293] sm:$0xf]
        %v3296 = vshrl.u32 %v3175, 16
        %v3298 = vrot.slane %v3296, 1
        %v3299 = vshll.u32 %v3175, 16
        %v3301 = vrot.slane %v3299, 2
        %v3302 = vor.u32 %v3298, %v3301
        %v3304 = vshrl.u32 %v3176, 16
        %v3306 = vrot.slane %v3304, 1
        %v3307 = vshll.u32 %v3176, 16
        %v3309 = vrot.slane %v3307, 2
        %v3310 = vor.u32 %v3306, %v3309
        %v3311 = vsel %vm997, %v3302, %v3310
        %v3313 = vshrl.u32 %v3177, 16
        %v3315 = vrot.slane %v3313, 1
        %v3316 = vshll.u32 %v3177, 16
        %v3318 = vrot.slane %v3316, 2
        %v3319 = vor.u32 %v3315, %v3318
        %v3320 = vsel %vm997, %v3310, %v3319
        %v3322 = vshrl.u32 %v3178, 16
        %v3324 = vrot.slane %v3322, 1
        %v3325 = vshll.u32 %v3178, 16
        %v3327 = vrot.slane %v3325, 2
        %v3328 = vor.u32 %v3324, %v3327
        %v3329 = vsel %vm997, %v3319, %v3328
        %v3331 = vshrl.u32 %v3179, 16
        %v3333 = vrot.slane %v3331, 1
        %v3334 = vshll.u32 %v3179, 16
        %v3336 = vrot.slane %v3334, 2
        %v3337 = vor.u32 %v3333, %v3336
        %v3338 = vsel %vm997, %v3328, %v3337
        %v3340 = vshrl.u32 %v3180, 16
        %v3342 = vrot.slane %v3340, 1
        %v3343 = vshll.u32 %v3180, 16
        %v3345 = vrot.slane %v3343, 2
        %v3346 = vor.u32 %v3342, %v3345
        %v3347 = vsel %vm997, %v3337, %v3346
        %v3349 = vsel %vm579, %v3311, 0
        %v3352 = vsel %vm579, %v3320, 0
        %v3355 = vsel %vm579, %v3329, 0
        %v3358 = vsel %vm579, %v3338, 0
        %v3361 = vsel %vm579, %v3347, 0
        %v3364 = vsel %vm595, %v3294, 0
        %3366 = vmatprep.subr.bf16.mxu0 0
        %3367 = vmatpush1.bf16.msra.mxu0 %v3364
        %3368 = vmatprep.subr.bf16.mxu0 0
        %3369 = vmatpush1.bf16.msra.mxu0 0
        %3370 = vmatprep.subr.bf16.mxu0 0
        %3371 = vmatpush1.bf16.msra.mxu0 0
        %3372 = vmatprep.subr.bf16.mxu0 0
        %3373 = vmatpush1.bf16.msra.mxu0 0
        %3374 = vmatprep.subr.bf16.mxu0 0
        %3375 = vmatpush1.bf16.msra.mxu0 0
        %3376 = vmatprep.subr.bf16.mxu0 0
        %3377 = vmatpush1.bf16.msra.mxu0 0
        %3378 = vmatprep.subr.bf16.mxu0 0
        %3379 = vmatpush1.bf16.msra.mxu0 0
        %3380 = vmatprep.subr.bf16.mxu0 0
        %3381 = vmatpush1.bf16.msra.mxu0 0
        %3382 = vmatprep.subr.bf16.mxu0 0
        %3383 = vmatpush1.bf16.msra.mxu0 0
        %3384 = vmatprep.subr.bf16.mxu0 0
        %3385 = vmatpush1.bf16.msra.mxu0 0
        %3386 = vmatprep.subr.bf16.mxu0 0
        %3387 = vmatpush1.bf16.msra.mxu0 0
        %3388 = vmatprep.subr.bf16.mxu0 0
        %3389 = vmatpush1.bf16.msra.mxu0 0
        %3390 = vmatprep.subr.bf16.mxu0 0
        %3391 = vmatpush1.bf16.msra.mxu0 0
        %3392 = vmatprep.subr.bf16.mxu0 0
        %3393 = vmatpush1.bf16.msra.mxu0 0
        %3394 = vmatprep.subr.bf16.mxu0 0
        %3395 = vmatpush1.bf16.msra.mxu0 0
        %3396 = vmatprep.subr.bf16.mxu0 0
        %3397 = vmatpush1.bf16.msra.mxu0 0
        %3398 = vmatprep.mubr.bf16.mxu0 0
        %3399 = vmatmul.mubr.bf16.gmra.mrb[0].mxu0 %v3349
        %v3400 = vpop.f32.mrb[0].mxu0
        %v3401 = vadd.f32 0.0, %v3400
        %v3402 = vpop.f32.mrb[0].mxu0
        %v3403 = vpop.f32.mrb[0].mxu0
        %v3404 = vadd.f32 0.0, %v3403
        %v3405 = vpop.f32.mrb[0].mxu0
        %3406 = vmatprep.mubr.bf16.mxu0 0
        %3407 = vmatmul.mubr.bf16.gmra.mrb[0].mxu0 %v3352
        %v3408 = vpop.f32.mrb[0].mxu0
        %v3409 = vadd.f32 0.0, %v3408
        %v3410 = vpop.f32.mrb[0].mxu0
        %v3411 = vpop.f32.mrb[0].mxu0
        %v3412 = vadd.f32 0.0, %v3411
        %v3413 = vpop.f32.mrb[0].mxu0
        %3414 = vmatprep.mubr.bf16.mxu0 0
        %3415 = vmatmul.mubr.bf16.gmra.mrb[0].mxu0 %v3355
        %v3416 = vpop.f32.mrb[0].mxu0
        %v3417 = vadd.f32 0.0, %v3416
        %v3418 = vpop.f32.mrb[0].mxu0
        %v3419 = vpop.f32.mrb[0].mxu0
        %v3420 = vadd.f32 0.0, %v3419
        %v3421 = vpop.f32.mrb[0].mxu0
        %3422 = vmatprep.mubr.bf16.mxu0 0
        %3423 = vmatmul.mubr.bf16.gmra.mrb[0].mxu0 %v3358
        %v3424 = vpop.f32.mrb[0].mxu0
        %v3425 = vadd.f32 0.0, %v3424
        %v3426 = vpop.f32.mrb[0].mxu0
        %v3427 = vpop.f32.mrb[0].mxu0
        %v3428 = vadd.f32 0.0, %v3427
        %v3429 = vpop.f32.mrb[0].mxu0
        %3430 = vmatprep.mubr.bf16.mxu0 0
        %3431 = vmatmul.mubr.bf16.gmra.mrb[0].mxu0 %v3361
        %v3432 = vpop.f32.mrb[0].mxu0
        %v3433 = vadd.f32 0.0, %v3432
        %v3434 = vpop.f32.mrb[0].mxu0
        %v3435 = vpop.f32.mrb[0].mxu0
        %v3436 = vadd.f32 0.0, %v3435
        %v3437 = vpop.f32.mrb[0].mxu0
        %3438 = vdwg.mxu0
        %v3439 = vadd.f32 %v3283, %v3401
        %v3440 = vadd.f32 %v3284, %v3404
        %v3441 = vadd.f32 %v3285, %v3409
        %v3442 = vadd.f32 %v3286, %v3412
        %v3443 = vadd.f32 %v3287, %v3417
        %v3444 = vadd.f32 %v3288, %v3420
        %v3445 = vadd.f32 %v3289, %v3425
        %v3446 = vadd.f32 %v3290, %v3428
        %v3447 = vadd.f32 %v3291, %v3433
        %v3448 = vadd.f32 %v3292, %v3436
        %s3449 = scalar_lea.vmem [#allocation8], 92
        %v3450 = vld [vmem:[%s3449] sm:$0xf]
        %v3451 = vrot.slane %v3175, 2
        %v3452 = vrot.slane %v3176, 2
        %v3453 = vsel %vm1154, %v3451, %v3452
        %v3454 = vrot.slane %v3177, 2
        %v3455 = vsel %vm1154, %v3452, %v3454
        %v3456 = vrot.slane %v3178, 2
        %v3457 = vsel %vm1154, %v3454, %v3456
        %v3458 = vrot.slane %v3179, 2
        %v3459 = vsel %vm1154, %v3456, %v3458
        %v3460 = vrot.slane %v3180, 2
        %v3461 = vsel %vm1154, %v3458, %v3460
        %v3463 = vsel %vm579, %v3453, 0
        %v3466 = vsel %vm579, %v3455, 0
        %v3469 = vsel %vm579, %v3457, 0
        %v3472 = vsel %vm579, %v3459, 0
        %v3475 = vsel %vm579, %v3461, 0
        %v3478 = vsel %vm595, %v3450, 0
        %3480 = vmatprep.subr.bf16.mxu0 0
        %3481 = vmatpush1.bf16.msra.mxu0 %v3478
        %3482 = vmatprep.subr.bf16.mxu0 0
        %3483 = vmatpush1.bf16.msra.mxu0 0
        %3484 = vmatprep.subr.bf16.mxu0 0
        %3485 = vmatpush1.bf16.msra.mxu0 0
        %3486 = vmatprep.subr.bf16.mxu0 0
        %3487 = vmatpush1.bf16.msra.mxu0 0
        %3488 = vmatprep.subr.bf16.mxu0 0
        %3489 = vmatpush1.bf16.msra.mxu0 0
        %3490 = vmatprep.subr.bf16.mxu0 0
        %3491 = vmatpush1.bf16.msra.mxu0 0
        %3492 = vmatprep.subr.bf16.mxu0 0
        %3493 = vmatpush1.bf16.msra.mxu0 0
        %3494 = vmatprep.subr.bf16.mxu0 0
        %3495 = vmatpush1.bf16.msra.mxu0 0
        %3496 = vmatprep.subr.bf16.mxu0 0
        %3497 = vmatpush1.bf16.msra.mxu0 0
        %3498 = vmatprep.subr.bf16.mxu0 0
        %3499 = vmatpush1.bf16.msra.mxu0 0
        %3500 = vmatprep.subr.bf16.mxu0 0
        %3501 = vmatpush1.bf16.msra.mxu0 0
        %3502 = vmatprep.subr.bf16.mxu0 0
        %3503 = vmatpush1.bf16.msra.mxu0 0
        %3504 = vmatprep.subr.bf16.mxu0 0
        %3505 = vmatpush1.bf16.msra.mxu0 0
        %3506 = vmatprep.subr.bf16.mxu0 0
        %3507 = vmatpush1.bf16.msra.mxu0 0
        %3508 = vmatprep.subr.bf16.mxu0 0
        %3509 = vmatpush1.bf16.msra.mxu0 0
        %3510 = vmatprep.subr.bf16.mxu0 0
        %3511 = vmatpush1.bf16.msra.mxu0 0
        %3512 = vmatprep.mubr.bf16.mxu0 0
        %3513 = vmatmul.mubr.bf16.gmra.mrb[0].mxu0 %v3463
        %v3514 = vpop.f32.mrb[0].mxu0
        %v3515 = vadd.f32 0.0, %v3514
        %v3516 = vpop.f32.mrb[0].mxu0
        %v3517 = vpop.f32.mrb[0].mxu0
        %v3518 = vadd.f32 0.0, %v3517
        %v3519 = vpop.f32.mrb[0].mxu0
        %3520 = vmatprep.mubr.bf16.mxu0 0
        %3521 = vmatmul.mubr.bf16.gmra.mrb[0].mxu0 %v3466
        %v3522 = vpop.f32.mrb[0].mxu0
        %v3523 = vadd.f32 0.0, %v3522
        %v3524 = vpop.f32.mrb[0].mxu0
        %v3525 = vpop.f32.mrb[0].mxu0
        %v3526 = vadd.f32 0.0, %v3525
        %v3527 = vpop.f32.mrb[0].mxu0
        %3528 = vmatprep.mubr.bf16.mxu0 0
        %3529 = vmatmul.mubr.bf16.gmra.mrb[0].mxu0 %v3469
        %v3530 = vpop.f32.mrb[0].mxu0
        %v3531 = vadd.f32 0.0, %v3530
        %v3532 = vpop.f32.mrb[0].mxu0
        %v3533 = vpop.f32.mrb[0].mxu0
        %v3534 = vadd.f32 0.0, %v3533
        %v3535 = vpop.f32.mrb[0].mxu0
        %3536 = vmatprep.mubr.bf16.mxu0 0
        %3537 = vmatmul.mubr.bf16.gmra.mrb[0].mxu0 %v3472
        %v3538 = vpop.f32.mrb[0].mxu0
        %v3539 = vadd.f32 0.0, %v3538
        %v3540 = vpop.f32.mrb[0].mxu0
        %v3541 = vpop.f32.mrb[0].mxu0
        %v3542 = vadd.f32 0.0, %v3541
        %v3543 = vpop.f32.mrb[0].mxu0
        %3544 = vmatprep.mubr.bf16.mxu0 0
        %3545 = vmatmul.mubr.bf16.gmra.mrb[0].mxu0 %v3475
        %v3546 = vpop.f32.mrb[0].mxu0
        %v3547 = vadd.f32 0.0, %v3546
        %v3548 = vpop.f32.mrb[0].mxu0
        %v3549 = vpop.f32.mrb[0].mxu0
        %v3550 = vadd.f32 0.0, %v3549
        %v3551 = vpop.f32.mrb[0].mxu0
        %3552 = vdwg.mxu0
        %v3553 = vadd.f32 %v3439, %v3515
        %v3554 = vadd.f32 %v3440, %v3518
        %v3555 = vadd.f32 %v3441, %v3523
        %v3556 = vadd.f32 %v3442, %v3526
        %v3557 = vadd.f32 %v3443, %v3531
        %v3558 = vadd.f32 %v3444, %v3534
        %v3559 = vadd.f32 %v3445, %v3539
        %v3560 = vadd.f32 %v3446, %v3542
        %v3561 = vadd.f32 %v3447, %v3547
        %v3562 = vadd.f32 %v3448, %v3550
        %s3563 = scalar_lea.vmem [#allocation8], 96
        %v3564 = vld [vmem:[%s3563] sm:$0xf]
        %v3566 = vunpack.c.l.b16 %v502
        %v3567 = vpack.c.b16 %v3174, %v2915
        %v3568 = vpack.c.b16 %v3566, %v3566
        %v3569 = vrot.slane %v2807, 2
        %v3570 = vrot.slane %v2808, 2
        %v3571 = vsel %vm1154, %v3569, %v3570
        %v3572 = vrot.slane %v2809, 2
        %v3573 = vsel %vm1154, %v3570, %v3572
        %v3574 = vrot.slane %v2810, 2
        %v3575 = vsel %vm1154, %v3572, %v3574
        %v3576 = vrot.slane %v3567, 2
        %v3577 = vsel %vm1154, %v3574, %v3576
        %v3578 = vrot.slane %v3568, 2
        %v3579 = vsel %vm1154, %v3576, %v3578
        %v3581 = vsel %vm579, %v3571, 0
        %v3584 = vsel %vm579, %v3573, 0
        %v3587 = vsel %vm579, %v3575, 0
        %v3590 = vsel %vm579, %v3577, 0
        %v3593 = vsel %vm579, %v3579, 0
        %v3596 = vsel %vm595, %v3564, 0
        %3598 = vmatprep.subr.bf16.mxu0 0
        %3599 = vmatpush1.bf16.msra.mxu0 %v3596
        %3600 = vmatprep.subr.bf16.mxu0 0
        %3601 = vmatpush1.bf16.msra.mxu0 0
        %3602 = vmatprep.subr.bf16.mxu0 0
        %3603 = vmatpush1.bf16.msra.mxu0 0
        %3604 = vmatprep.subr.bf16.mxu0 0
        %3605 = vmatpush1.bf16.msra.mxu0 0
        %3606 = vmatprep.subr.bf16.mxu0 0
        %3607 = vmatpush1.bf16.msra.mxu0 0
        %3608 = vmatprep.subr.bf16.mxu0 0
        %3609 = vmatpush1.bf16.msra.mxu0 0
        %3610 = vmatprep.subr.bf16.mxu0 0
        %3611 = vmatpush1.bf16.msra.mxu0 0
        %3612 = vmatprep.subr.bf16.mxu0 0
        %3613 = vmatpush1.bf16.msra.mxu0 0
        %3614 = vmatprep.subr.bf16.mxu0 0
        %3615 = vmatpush1.bf16.msra.mxu0 0
        %3616 = vmatprep.subr.bf16.mxu0 0
        %3617 = vmatpush1.bf16.msra.mxu0 0
        %3618 = vmatprep.subr.bf16.mxu0 0
        %3619 = vmatpush1.bf16.msra.mxu0 0
        %3620 = vmatprep.subr.bf16.mxu0 0
        %3621 = vmatpush1.bf16.msra.mxu0 0
        %3622 = vmatprep.subr.bf16.mxu0 0
        %3623 = vmatpush1.bf16.msra.mxu0 0
        %3624 = vmatprep.subr.bf16.mxu0 0
        %3625 = vmatpush1.bf16.msra.mxu0 0
        %3626 = vmatprep.subr.bf16.mxu0 0
        %3627 = vmatpush1.bf16.msra.mxu0 0
        %3628 = vmatprep.subr.bf16.mxu0 0
        %3629 = vmatpush1.bf16.msra.mxu0 0
        %3630 = vmatprep.mubr.bf16.mxu0 0
        %3631 = vmatmul.mubr.bf16.gmra.mrb[0].mxu0 %v3581
        %v3632 = vpop.f32.mrb[0].mxu0
        %v3633 = vadd.f32 0.0, %v3632
        %v3634 = vpop.f32.mrb[0].mxu0
        %v3635 = vpop.f32.mrb[0].mxu0
        %v3636 = vadd.f32 0.0, %v3635
        %v3637 = vpop.f32.mrb[0].mxu0
        %3638 = vmatprep.mubr.bf16.mxu0 0
        %3639 = vmatmul.mubr.bf16.gmra.mrb[0].mxu0 %v3584
        %v3640 = vpop.f32.mrb[0].mxu0
        %v3641 = vadd.f32 0.0, %v3640
        %v3642 = vpop.f32.mrb[0].mxu0
        %v3643 = vpop.f32.mrb[0].mxu0
        %v3644 = vadd.f32 0.0, %v3643
        %v3645 = vpop.f32.mrb[0].mxu0
        %3646 = vmatprep.mubr.bf16.mxu0 0
        %3647 = vmatmul.mubr.bf16.gmra.mrb[0].mxu0 %v3587
        %v3648 = vpop.f32.mrb[0].mxu0
        %v3649 = vadd.f32 0.0, %v3648
        %v3650 = vpop.f32.mrb[0].mxu0
        %v3651 = vpop.f32.mrb[0].mxu0
        %v3652 = vadd.f32 0.0, %v3651
        %v3653 = vpop.f32.mrb[0].mxu0
        %3654 = vmatprep.mubr.bf16.mxu0 0
        %3655 = vmatmul.mubr.bf16.gmra.mrb[0].mxu0 %v3590
        %v3656 = vpop.f32.mrb[0].mxu0
        %v3657 = vadd.f32 0.0, %v3656
        %v3658 = vpop.f32.mrb[0].mxu0
        %v3659 = vpop.f32.mrb[0].mxu0
        %v3660 = vadd.f32 0.0, %v3659
        %v3661 = vpop.f32.mrb[0].mxu0
        %3662 = vmatprep.mubr.bf16.mxu0 0
        %3663 = vmatmul.mubr.bf16.gmra.mrb[0].mxu0 %v3593
        %v3664 = vpop.f32.mrb[0].mxu0
        %v3665 = vadd.f32 0.0, %v3664
        %v3666 = vpop.f32.mrb[0].mxu0
        %v3667 = vpop.f32.mrb[0].mxu0
        %v3668 = vadd.f32 0.0, %v3667
        %v3669 = vpop.f32.mrb[0].mxu0
        %3670 = vdwg.mxu0
        %v3671 = vadd.f32 %v3553, %v3633
        %v3672 = vadd.f32 %v3554, %v3636
        %v3673 = vadd.f32 %v3555, %v3641
        %v3674 = vadd.f32 %v3556, %v3644
        %v3675 = vadd.f32 %v3557, %v3649
        %v3676 = vadd.f32 %v3558, %v3652
        %v3677 = vadd.f32 %v3559, %v3657
        %v3678 = vadd.f32 %v3560, %v3660
        %v3679 = vadd.f32 %v3561, %v3665
        %v3680 = vadd.f32 %v3562, %v3668
        %s3681 = scalar_lea.vmem [#allocation8], 100
        %v3682 = vld [vmem:[%s3681] sm:$0xf]
        %v3683 = vrot.slane %v2927, 2
        %v3684 = vrot.slane %v2923, 3
        %v3685 = vor.u32 %v3683, %v3684
        %v3686 = vrot.slane %v2934, 2
        %v3687 = vrot.slane %v2930, 3
        %v3688 = vor.u32 %v3686, %v3687
        %v3689 = vsel %vm1387, %v3685, %v3688
        %v3690 = vrot.slane %v2941, 2
        %v3691 = vrot.slane %v2937, 3
        %v3692 = vor.u32 %v3690, %v3691
        %v3693 = vsel %vm1387, %v3688, %v3692
        %v3694 = vrot.slane %v2948, 2
        %v3695 = vrot.slane %v2944, 3
        %v3696 = vor.u32 %v3694, %v3695
        %v3697 = vsel %vm1387, %v3692, %v3696
        %v3699 = vshrl.u32 %v3567, 16
        %v3701 = vrot.slane %v3699, 2
        %v3702 = vshll.u32 %v3567, 16
        %v3704 = vrot.slane %v3702, 3
        %v3705 = vor.u32 %v3701, %v3704
        %v3706 = vsel %vm1387, %v3696, %v3705
        %v3708 = vshrl.u32 %v3568, 16
        %v3710 = vrot.slane %v3708, 2
        %v3711 = vshll.u32 %v3568, 16
        %v3713 = vrot.slane %v3711, 3
        %v3714 = vor.u32 %v3710, %v3713
        %v3715 = vsel %vm1387, %v3705, %v3714
        %v3717 = vsel %vm579, %v3689, 0
        %v3720 = vsel %vm579, %v3693, 0
        %v3723 = vsel %vm579, %v3697, 0
        %v3726 = vsel %vm579, %v3706, 0
        %v3729 = vsel %vm579, %v3715, 0
        %v3732 = vsel %vm595, %v3682, 0
        %3734 = vmatprep.subr.bf16.mxu0 0
        %3735 = vmatpush1.bf16.msra.mxu0 %v3732
        %3736 = vmatprep.subr.bf16.mxu0 0
        %3737 = vmatpush1.bf16.msra.mxu0 0
        %3738 = vmatprep.subr.bf16.mxu0 0
        %3739 = vmatpush1.bf16.msra.mxu0 0
        %3740 = vmatprep.subr.bf16.mxu0 0
        %3741 = vmatpush1.bf16.msra.mxu0 0
        %3742 = vmatprep.subr.bf16.mxu0 0
        %3743 = vmatpush1.bf16.msra.mxu0 0
        %3744 = vmatprep.subr.bf16.mxu0 0
        %3745 = vmatpush1.bf16.msra.mxu0 0
        %3746 = vmatprep.subr.bf16.mxu0 0
        %3747 = vmatpush1.bf16.msra.mxu0 0
        %3748 = vmatprep.subr.bf16.mxu0 0
        %3749 = vmatpush1.bf16.msra.mxu0 0
        %3750 = vmatprep.subr.bf16.mxu0 0
        %3751 = vmatpush1.bf16.msra.mxu0 0
        %3752 = vmatprep.subr.bf16.mxu0 0
        %3753 = vmatpush1.bf16.msra.mxu0 0
        %3754 = vmatprep.subr.bf16.mxu0 0
        %3755 = vmatpush1.bf16.msra.mxu0 0
        %3756 = vmatprep.subr.bf16.mxu0 0
        %3757 = vmatpush1.bf16.msra.mxu0 0
        %3758 = vmatprep.subr.bf16.mxu0 0
        %3759 = vmatpush1.bf16.msra.mxu0 0
        %3760 = vmatprep.subr.bf16.mxu0 0
        %3761 = vmatpush1.bf16.msra.mxu0 0
        %3762 = vmatprep.subr.bf16.mxu0 0
        %3763 = vmatpush1.bf16.msra.mxu0 0
        %3764 = vmatprep.subr.bf16.mxu0 0
        %3765 = vmatpush1.bf16.msra.mxu0 0
        %3766 = vmatprep.mubr.bf16.mxu0 0
        %3767 = vmatmul.mubr.bf16.gmra.mrb[0].mxu0 %v3717
        %v3768 = vpop.f32.mrb[0].mxu0
        %v3769 = vadd.f32 0.0, %v3768
        %v3770 = vpop.f32.mrb[0].mxu0
        %v3771 = vpop.f32.mrb[0].mxu0
        %v3772 = vadd.f32 0.0, %v3771
        %v3773 = vpop.f32.mrb[0].mxu0
        %3774 = vmatprep.mubr.bf16.mxu0 0
        %3775 = vmatmul.mubr.bf16.gmra.mrb[0].mxu0 %v3720
        %v3776 = vpop.f32.mrb[0].mxu0
        %v3777 = vadd.f32 0.0, %v3776
        %v3778 = vpop.f32.mrb[0].mxu0
        %v3779 = vpop.f32.mrb[0].mxu0
        %v3780 = vadd.f32 0.0, %v3779
        %v3781 = vpop.f32.mrb[0].mxu0
        %3782 = vmatprep.mubr.bf16.mxu0 0
        %3783 = vmatmul.mubr.bf16.gmra.mrb[0].mxu0 %v3723
        %v3784 = vpop.f32.mrb[0].mxu0
        %v3785 = vadd.f32 0.0, %v3784
        %v3786 = vpop.f32.mrb[0].mxu0
        %v3787 = vpop.f32.mrb[0].mxu0
        %v3788 = vadd.f32 0.0, %v3787
        %v3789 = vpop.f32.mrb[0].mxu0
        %3790 = vmatprep.mubr.bf16.mxu0 0
        %3791 = vmatmul.mubr.bf16.gmra.mrb[0].mxu0 %v3726
        %v3792 = vpop.f32.mrb[0].mxu0
        %v3793 = vadd.f32 0.0, %v3792
        %v3794 = vpop.f32.mrb[0].mxu0
        %v3795 = vpop.f32.mrb[0].mxu0
        %v3796 = vadd.f32 0.0, %v3795
        %v3797 = vpop.f32.mrb[0].mxu0
        %3798 = vmatprep.mubr.bf16.mxu0 0
        %3799 = vmatmul.mubr.bf16.gmra.mrb[0].mxu0 %v3729
        %v3800 = vpop.f32.mrb[0].mxu0
        %v3801 = vadd.f32 0.0, %v3800
        %v3802 = vpop.f32.mrb[0].mxu0
        %v3803 = vpop.f32.mrb[0].mxu0
        %v3804 = vadd.f32 0.0, %v3803
        %v3805 = vpop.f32.mrb[0].mxu0
        %3806 = vdwg.mxu0
        %v3807 = vadd.f32 %v3671, %v3769
        %v3808 = vadd.f32 %v3672, %v3772
        %v3809 = vadd.f32 %v3673, %v3777
        %v3810 = vadd.f32 %v3674, %v3780
        %v3811 = vadd.f32 %v3675, %v3785
        %v3812 = vadd.f32 %v3676, %v3788
        %v3813 = vadd.f32 %v3677, %v3793
        %v3814 = vadd.f32 %v3678, %v3796
        %v3815 = vadd.f32 %v3679, %v3801
        %v3816 = vadd.f32 %v3680, %v3804
        %s3817 = scalar_lea.vmem [#allocation8], 104
        %v3818 = vld [vmem:[%s3817] sm:$0xf]
        %v3819 = vrot.slane %v2807, 3
        %v3820 = vrot.slane %v2808, 3
        %v3821 = vsel %vm1524, %v3819, %v3820
        %v3822 = vrot.slane %v2809, 3
        %v3823 = vsel %vm1524, %v3820, %v3822
        %v3824 = vrot.slane %v2810, 3
        %v3825 = vsel %vm1524, %v3822, %v3824
        %v3826 = vrot.slane %v3567, 3
        %v3827 = vsel %vm1524, %v3824, %v3826
        %v3828 = vrot.slane %v3568, 3
        %v3829 = vsel %vm1524, %v3826, %v3828
        %v3831 = vsel %vm579, %v3821, 0
        %v3834 = vsel %vm579, %v3823, 0
        %v3837 = vsel %vm579, %v3825, 0
        %v3840 = vsel %vm579, %v3827, 0
        %v3843 = vsel %vm579, %v3829, 0
        %v3846 = vsel %vm595, %v3818, 0
        %3848 = vmatprep.subr.bf16.mxu0 0
        %3849 = vmatpush1.bf16.msra.mxu0 %v3846
        %3850 = vmatprep.subr.bf16.mxu0 0
        %3851 = vmatpush1.bf16.msra.mxu0 0
        %3852 = vmatprep.subr.bf16.mxu0 0
        %3853 = vmatpush1.bf16.msra.mxu0 0
        %3854 = vmatprep.subr.bf16.mxu0 0
        %3855 = vmatpush1.bf16.msra.mxu0 0
        %3856 = vmatprep.subr.bf16.mxu0 0
        %3857 = vmatpush1.bf16.msra.mxu0 0
        %3858 = vmatprep.subr.bf16.mxu0 0
        %3859 = vmatpush1.bf16.msra.mxu0 0
        %3860 = vmatprep.subr.bf16.mxu0 0
        %3861 = vmatpush1.bf16.msra.mxu0 0
        %3862 = vmatprep.subr.bf16.mxu0 0
        %3863 = vmatpush1.bf16.msra.mxu0 0
        %3864 = vmatprep.subr.bf16.mxu0 0
        %3865 = vmatpush1.bf16.msra.mxu0 0
        %3866 = vmatprep.subr.bf16.mxu0 0
        %3867 = vmatpush1.bf16.msra.mxu0 0
        %3868 = vmatprep.subr.bf16.mxu0 0
        %3869 = vmatpush1.bf16.msra.mxu0 0
        %3870 = vmatprep.subr.bf16.mxu0 0
        %3871 = vmatpush1.bf16.msra.mxu0 0
        %3872 = vmatprep.subr.bf16.mxu0 0
        %3873 = vmatpush1.bf16.msra.mxu0 0
        %3874 = vmatprep.subr.bf16.mxu0 0
        %3875 = vmatpush1.bf16.msra.mxu0 0
        %3876 = vmatprep.subr.bf16.mxu0 0
        %3877 = vmatpush1.bf16.msra.mxu0 0
        %3878 = vmatprep.subr.bf16.mxu0 0
        %3879 = vmatpush1.bf16.msra.mxu0 0
        %3880 = vmatprep.mubr.bf16.mxu0 0
        %3881 = vmatmul.mubr.bf16.gmra.mrb[0].mxu0 %v3831
        %v3882 = vpop.f32.mrb[0].mxu0
        %v3883 = vadd.f32 0.0, %v3882
        %v3884 = vpop.f32.mrb[0].mxu0
        %v3885 = vpop.f32.mrb[0].mxu0
        %v3886 = vadd.f32 0.0, %v3885
        %v3887 = vpop.f32.mrb[0].mxu0
        %3888 = vmatprep.mubr.bf16.mxu0 0
        %3889 = vmatmul.mubr.bf16.gmra.mrb[0].mxu0 %v3834
        %v3890 = vpop.f32.mrb[0].mxu0
        %v3891 = vadd.f32 0.0, %v3890
        %v3892 = vpop.f32.mrb[0].mxu0
        %v3893 = vpop.f32.mrb[0].mxu0
        %v3894 = vadd.f32 0.0, %v3893
        %v3895 = vpop.f32.mrb[0].mxu0
        %3896 = vmatprep.mubr.bf16.mxu0 0
        %3897 = vmatmul.mubr.bf16.gmra.mrb[0].mxu0 %v3837
        %v3898 = vpop.f32.mrb[0].mxu0
        %v3899 = vadd.f32 0.0, %v3898
        %v3900 = vpop.f32.mrb[0].mxu0
        %v3901 = vpop.f32.mrb[0].mxu0
        %v3902 = vadd.f32 0.0, %v3901
        %v3903 = vpop.f32.mrb[0].mxu0
        %3904 = vmatprep.mubr.bf16.mxu0 0
        %3905 = vmatmul.mubr.bf16.gmra.mrb[0].mxu0 %v3840
        %v3906 = vpop.f32.mrb[0].mxu0
        %v3907 = vadd.f32 0.0, %v3906
        %v3908 = vpop.f32.mrb[0].mxu0
        %v3909 = vpop.f32.mrb[0].mxu0
        %v3910 = vadd.f32 0.0, %v3909
        %v3911 = vpop.f32.mrb[0].mxu0
        %3912 = vmatprep.mubr.bf16.mxu0 0
        %3913 = vmatmul.mubr.bf16.gmra.mrb[0].mxu0 %v3843
        %v3914 = vpop.f32.mrb[0].mxu0
        %v3915 = vadd.f32 0.0, %v3914
        %v3916 = vpop.f32.mrb[0].mxu0
        %v3917 = vpop.f32.mrb[0].mxu0
        %v3918 = vadd.f32 0.0, %v3917
        %v3919 = vpop.f32.mrb[0].mxu0
        %3920 = vdwg.mxu0
        %v3921 = vadd.f32 %v3807, %v3883
        %v3922 = vadd.f32 %v3808, %v3886
        %v3923 = vadd.f32 %v3809, %v3891
        %v3924 = vadd.f32 %v3810, %v3894
        %v3925 = vadd.f32 %v3811, %v3899
        %v3926 = vadd.f32 %v3812, %v3902
        %v3927 = vadd.f32 %v3813, %v3907
        %v3928 = vadd.f32 %v3814, %v3910
        %v3929 = vadd.f32 %v3815, %v3915
        %v3930 = vadd.f32 %v3816, %v3918
        %v3931 = vld [vmem:[#allocation10] sm:$0x1]
        %v3933 = vlaneseq
        %v3934 = vshrl.u32 %v3933, 7
        %v3935 = vsub.s32 0, %v3934
        %v3936 = vrot.slane %v3931, %v3935
        %v3938 = vadd.f32 %v3921, %v3936
        %v3939 = vadd.f32 %v3922, %v3936
        %v3940 = vadd.f32 %v3923, %v3936
        %v3941 = vadd.f32 %v3924, %v3936
        %v3942 = vadd.f32 %v3925, %v3936
        %v3943 = vadd.f32 %v3926, %v3936
        %v3944 = vadd.f32 %v3927, %v3936
        %v3945 = vadd.f32 %v3928, %v3936
        %v3946 = vadd.f32 %v3929, %v3936
        %v3947 = vadd.f32 %v3930, %v3936
        %v3948 = vpack.c.bf16 %v3939, %v3938
        %v3949 = vpack.c.bf16 %v3941, %v3940
        %v3950 = vpack.c.bf16 %v3943, %v3942
        %v3951 = vpack.c.bf16 %v3945, %v3944
        %v3952 = vpack.c.bf16 %v3947, %v3946
        %v3958 = vunpack.c.l.b16 %v3948
        %v3959 = vunpack.c.h.b16 %v3948
        %v3960 = vunpack.c.l.b16 %v3949
        %v3961 = vunpack.c.h.b16 %v3949
        %v3962 = vunpack.c.l.b16 %v3950
        %v3963 = vunpack.c.h.b16 %v3950
        %v3964 = vunpack.c.l.b16 %v3951
        %v3965 = vunpack.c.h.b16 %v3951
        %v3966 = vunpack.c.l.b16 %v3952
        %v3967 = vunpack.c.h.b16 %v3952
        %v3968 = vpack.c.b16 %v3958, %v3958
        %v3969 = vpack.c.b16 %v3959, %v3959
        %v3970 = vpack.c.b16 %v3960, %v3960
        %v3971 = vpack.c.b16 %v3961, %v3961
        %v3972 = vpack.c.b16 %v3962, %v3962
        %v3973 = vpack.c.b16 %v3963, %v3963
        %v3974 = vpack.c.b16 %v3964, %v3964
        %v3975 = vpack.c.b16 %v3965, %v3965
        %v3976 = vpack.c.b16 %v3966, %v3966
        %v3977 = vpack.c.b16 %v3967, %v3967
        %3988 = vst [vmem:[%s444] sm:$0xf] %v3968
        %3989 = vst [vmem:[%s444 + $0x4] sm:$0xf] %v3969
        %3990 = vst [vmem:[%s444 + $0x8] sm:$0xf] %v3970
        %3991 = vst [vmem:[%s444 + $0xc] sm:$0xf] %v3971
        %3992 = vst [vmem:[%s444 + $0x10] sm:$0xf] %v3972
        %3993 = vst [vmem:[%s444 + $0x14] sm:$0xf] %v3973
        %3994 = vst [vmem:[%s444 + $0x18] sm:$0xf] %v3974
        %3995 = vst [vmem:[%s444 + $0x1c] sm:$0xf] %v3975
        %3996 = vst [vmem:[%s444 + $0x20] sm:$0xf] %v3976
        %3997 = vst [vmem:[%s444 + $0x24] sm:$0xf] %v3977
        %v3998 = vlaneseq
        %v3999 = vshrl.u32 %v3998, 7
        %v4000 = vadd.s32 %v3999, 8
        %v4001 = vadd.s32 %v3999, 16
        %v4002 = vadd.s32 %v3999, 24
        %v4003 = vadd.s32 %v3999, 32
        %v4004 = vadd.s32 %v3999, 40
        %v4005 = vadd.s32 %v3999, 48
        %v4006 = vadd.s32 %v3999, 56
        %v4007 = vadd.s32 %v3999, 64
        %v4008 = vadd.s32 %v3999, 72
        %vm4009 = vcmp.lt.s32.totalorder %v3999, 0
        %v4010 = vsub.s32 0, %v3999
        %v4011 = vsel %vm4009, %v4010, %v3999
        %v4012 = vmul.u32.u64.compose %v4011, 3435973837
        %v4013 = vextract.low.u32 %v4012
        %v4014 = vextract.high.u32 %v4012
        %v4015 = vshrl.u32 %v4014, 3
        %v4016 = vmul.u32 %v4015, 10
        %v4017 = vsub.s32 %v4011, %v4016
        %v4018 = vsub.s32 0, %v4017
        %v4019 = vsel %vm4009, %v4018, %v4017
        %vm4020 = vcmp.lt.s32.totalorder %v4000, 0
        %v4021 = vsub.s32 0, %v4000
        %v4022 = vsel %vm4020, %v4021, %v4000
        %v4023 = vmul.u32.u64.compose %v4022, 3435973837
        %v4024 = vextract.low.u32 %v4023
        %v4025 = vextract.high.u32 %v4023
        %v4026 = vshrl.u32 %v4025, 3
        %v4027 = vmul.u32 %v4026, 10
        %v4028 = vsub.s32 %v4022, %v4027
        %v4029 = vsub.s32 0, %v4028
        %v4030 = vsel %vm4020, %v4029, %v4028
        %vm4031 = vcmp.lt.s32.totalorder %v4001, 0
        %v4032 = vsub.s32 0, %v4001
        %v4033 = vsel %vm4031, %v4032, %v4001
        %v4034 = vmul.u32.u64.compose %v4033, 3435973837
        %v4035 = vextract.low.u32 %v4034
        %v4036 = vextract.high.u32 %v4034
        %v4037 = vshrl.u32 %v4036, 3
        %v4038 = vmul.u32 %v4037, 10
        %v4039 = vsub.s32 %v4033, %v4038
        %v4040 = vsub.s32 0, %v4039
        %v4041 = vsel %vm4031, %v4040, %v4039
        %vm4042 = vcmp.lt.s32.totalorder %v4002, 0
        %v4043 = vsub.s32 0, %v4002
        %v4044 = vsel %vm4042, %v4043, %v4002
        %v4045 = vmul.u32.u64.compose %v4044, 3435973837
        %v4046 = vextract.low.u32 %v4045
        %v4047 = vextract.high.u32 %v4045
        %v4048 = vshrl.u32 %v4047, 3
        %v4049 = vmul.u32 %v4048, 10
        %v4050 = vsub.s32 %v4044, %v4049
        %v4051 = vsub.s32 0, %v4050
        %v4052 = vsel %vm4042, %v4051, %v4050
        %vm4053 = vcmp.lt.s32.totalorder %v4003, 0
        %v4054 = vsub.s32 0, %v4003
        %v4055 = vsel %vm4053, %v4054, %v4003
        %v4056 = vmul.u32.u64.compose %v4055, 3435973837
        %v4057 = vextract.low.u32 %v4056
        %v4058 = vextract.high.u32 %v4056
        %v4059 = vshrl.u32 %v4058, 3
        %v4060 = vmul.u32 %v4059, 10
        %v4061 = vsub.s32 %v4055, %v4060
        %v4062 = vsub.s32 0, %v4061
        %v4063 = vsel %vm4053, %v4062, %v4061
        %vm4064 = vcmp.lt.s32.totalorder %v4004, 0
        %v4065 = vsub.s32 0, %v4004
        %v4066 = vsel %vm4064, %v4065, %v4004
        %v4067 = vmul.u32.u64.compose %v4066, 3435973837
        %v4068 = vextract.low.u32 %v4067
        %v4069 = vextract.high.u32 %v4067
        %v4070 = vshrl.u32 %v4069, 3
        %v4071 = vmul.u32 %v4070, 10
        %v4072 = vsub.s32 %v4066, %v4071
        %v4073 = vsub.s32 0, %v4072
        %v4074 = vsel %vm4064, %v4073, %v4072
        %vm4075 = vcmp.lt.s32.totalorder %v4005, 0
        %v4076 = vsub.s32 0, %v4005
        %v4077 = vsel %vm4075, %v4076, %v4005
        %v4078 = vmul.u32.u64.compose %v4077, 3435973837
        %v4079 = vextract.low.u32 %v4078
        %v4080 = vextract.high.u32 %v4078
        %v4081 = vshrl.u32 %v4080, 3
        %v4082 = vmul.u32 %v4081, 10
        %v4083 = vsub.s32 %v4077, %v4082
        %v4084 = vsub.s32 0, %v4083
        %v4085 = vsel %vm4075, %v4084, %v4083
        %vm4086 = vcmp.lt.s32.totalorder %v4006, 0
        %v4087 = vsub.s32 0, %v4006
        %v4088 = vsel %vm4086, %v4087, %v4006
        %v4089 = vmul.u32.u64.compose %v4088, 3435973837
        %v4090 = vextract.low.u32 %v4089
        %v4091 = vextract.high.u32 %v4089
        %v4092 = vshrl.u32 %v4091, 3
        %v4093 = vmul.u32 %v4092, 10
        %v4094 = vsub.s32 %v4088, %v4093
        %v4095 = vsub.s32 0, %v4094
        %v4096 = vsel %vm4086, %v4095, %v4094
        %vm4097 = vcmp.lt.s32.totalorder %v4007, 0
        %v4098 = vsub.s32 0, %v4007
        %v4099 = vsel %vm4097, %v4098, %v4007
        %v4100 = vmul.u32.u64.compose %v4099, 3435973837
        %v4101 = vextract.low.u32 %v4100
        %v4102 = vextract.high.u32 %v4100
        %v4103 = vshrl.u32 %v4102, 3
        %v4104 = vmul.u32 %v4103, 10
        %v4105 = vsub.s32 %v4099, %v4104
        %v4106 = vsub.s32 0, %v4105
        %v4107 = vsel %vm4097, %v4106, %v4105
        %vm4108 = vcmp.lt.s32.totalorder %v4008, 0
        %v4109 = vsub.s32 0, %v4008
        %v4110 = vsel %vm4108, %v4109, %v4008
        %v4111 = vmul.u32.u64.compose %v4110, 3435973837
        %v4112 = vextract.low.u32 %v4111
        %v4113 = vextract.high.u32 %v4111
        %v4114 = vshrl.u32 %v4113, 3
        %v4115 = vmul.u32 %v4114, 10
        %v4116 = vsub.s32 %v4110, %v4115
        %v4117 = vsub.s32 0, %v4116
        %v4118 = vsel %vm4108, %v4117, %v4116
        %vm4119 = vcmp.ne.s32.totalorder %v4019, 0
        %vm4120 = vcmp.ne.s32.totalorder %v4030, 0
        %vm4121 = vcmp.ne.s32.totalorder %v4041, 0
        %vm4122 = vcmp.ne.s32.totalorder %v4052, 0
        %vm4123 = vcmp.ne.s32.totalorder %v4063, 0
        %vm4124 = vcmp.ne.s32.totalorder %v4074, 0
        %vm4125 = vcmp.ne.s32.totalorder %v4085, 0
        %vm4126 = vcmp.ne.s32.totalorder %v4096, 0
        %vm4127 = vcmp.ne.s32.totalorder %v4107, 0
        %vm4128 = vcmp.ne.s32.totalorder %v4118, 0
        %vm4129 = vcmp.lt.s32.totalorder %v4019, 0
        %vm4130 = vcmp.lt.s32.totalorder %v4030, 0
        %vm4131 = vcmp.lt.s32.totalorder %v4041, 0
        %vm4132 = vcmp.lt.s32.totalorder %v4052, 0
        %vm4133 = vcmp.lt.s32.totalorder %v4063, 0
        %vm4134 = vcmp.lt.s32.totalorder %v4074, 0
        %vm4135 = vcmp.lt.s32.totalorder %v4085, 0
        %vm4136 = vcmp.lt.s32.totalorder %v4096, 0
        %vm4137 = vcmp.lt.s32.totalorder %v4107, 0
        %vm4138 = vcmp.lt.s32.totalorder %v4118, 0
        %vm4139 = vmand %vm4129, %vm4119
        %vm4140 = vmand %vm4130, %vm4120
        %vm4141 = vmand %vm4131, %vm4121
        %vm4142 = vmand %vm4132, %vm4122
        %vm4143 = vmand %vm4133, %vm4123
        %vm4144 = vmand %vm4134, %vm4124
        %vm4145 = vmand %vm4135, %vm4125
        %vm4146 = vmand %vm4136, %vm4126
        %vm4147 = vmand %vm4137, %vm4127
        %vm4148 = vmand %vm4138, %vm4128
        %v4149 = vadd.s32 %v4019, 10
        %v4150 = vadd.s32 %v4030, 10
        %v4151 = vadd.s32 %v4041, 10
        %v4152 = vadd.s32 %v4052, 10
        %v4153 = vadd.s32 %v4063, 10
        %v4154 = vadd.s32 %v4074, 10
        %v4155 = vadd.s32 %v4085, 10
        %v4156 = vadd.s32 %v4096, 10
        %v4157 = vadd.s32 %v4107, 10
        %v4158 = vadd.s32 %v4118, 10
        %v4159 = vsel %vm4139, %v4149, %v4019
        %v4160 = vsel %vm4140, %v4150, %v4030
        %v4161 = vsel %vm4141, %v4151, %v4041
        %v4162 = vsel %vm4142, %v4152, %v4052
        %v4163 = vsel %vm4143, %v4153, %v4063
        %v4164 = vsel %vm4144, %v4154, %v4074
        %v4165 = vsel %vm4145, %v4155, %v4085
        %v4166 = vsel %vm4146, %v4156, %v4096
        %v4167 = vsel %vm4147, %v4157, %v4107
        %v4168 = vsel %vm4148, %v4158, %v4118
        %vm4169 = vcmp.lt.s32.totalorder %v4159, 8
        %vm4170 = vcmp.lt.s32.totalorder %v4160, 8
        %vm4171 = vcmp.lt.s32.totalorder %v4161, 8
        %vm4172 = vcmp.lt.s32.totalorder %v4162, 8
        %vm4173 = vcmp.lt.s32.totalorder %v4163, 8
        %vm4174 = vcmp.lt.s32.totalorder %v4164, 8
        %vm4175 = vcmp.lt.s32.totalorder %v4165, 8
        %vm4176 = vcmp.lt.s32.totalorder %v4166, 8
        %vm4177 = vcmp.lt.s32.totalorder %v4167, 8
        %vm4178 = vcmp.lt.s32.totalorder %v4168, 8
        %v4179 = vsel %vm4169, 1, 0
        %v4180 = vsel %vm4170, 1, 0
        %v4181 = vsel %vm4171, 1, 0
        %v4182 = vsel %vm4172, 1, 0
        %v4183 = vsel %vm4173, 1, 0
        %v4184 = vsel %vm4174, 1, 0
        %v4185 = vsel %vm4175, 1, 0
        %v4186 = vsel %vm4176, 1, 0
        %v4187 = vsel %vm4177, 1, 0
        %v4188 = vsel %vm4178, 1, 0
        %v4189 = vcvt.s32.f32 %v4179
        %v4190 = vcvt.s32.f32 %v4180
        %v4191 = vcvt.s32.f32 %v4181
        %v4192 = vcvt.s32.f32 %v4182
        %v4193 = vcvt.s32.f32 %v4183
        %v4194 = vcvt.s32.f32 %v4184
        %v4195 = vcvt.s32.f32 %v4185
        %v4196 = vcvt.s32.f32 %v4186
        %v4197 = vcvt.s32.f32 %v4187
        %v4198 = vcvt.s32.f32 %v4188
        %v4199 = vmul.f32 %v3938, %v4189
        %v4200 = vmul.f32 %v3939, %v4190
        %v4201 = vmul.f32 %v3940, %v4191
        %v4202 = vmul.f32 %v3941, %v4192
        %v4203 = vmul.f32 %v3942, %v4193
        %v4204 = vmul.f32 %v3943, %v4194
        %v4205 = vmul.f32 %v3944, %v4195
        %v4206 = vmul.f32 %v3945, %v4196
        %v4207 = vmul.f32 %v3946, %v4197
        %v4208 = vmul.f32 %v3947, %v4198
        %v4209 = vadd.f32 %v4199, %v4200
        %v4210 = vadd.f32 %v4209, %v4201
        %v4211 = vadd.f32 %v4210, %v4202
        %v4212 = vadd.f32 %v4211, %v4203
        %v4213 = vadd.f32 %v4212, %v4204
        %v4214 = vadd.f32 %v4213, %v4205
        %v4215 = vadd.f32 %v4214, %v4206
        %v4216 = vadd.f32 %v4215, %v4207
        %v4217 = vadd.f32 %v4216, %v4208
        %v4218 = vrot.slane %v4217, 4
        %v4219 = vadd.f32 %v4217, %v4218
        %v4220 = vrot.slane %v4219, 2
        %v4221 = vadd.f32 %v4219, %v4220
        %v4222 = vrot.slane %v4221, 1
        %v4223 = vadd.f32 %v4221, %v4222
        %4224 = vst [vmem:[%s450] sm:$0x1] %v4223
        %v4225 = vmul.f32 %v4199, %v4199
        %v4226 = vmul.f32 %v4200, %v4200
        %v4227 = vmul.f32 %v4201, %v4201
        %v4228 = vmul.f32 %v4202, %v4202
        %v4229 = vmul.f32 %v4203, %v4203
        %v4230 = vmul.f32 %v4204, %v4204
        %v4231 = vmul.f32 %v4205, %v4205
        %v4232 = vmul.f32 %v4206, %v4206
        %v4233 = vmul.f32 %v4207, %v4207
        %v4234 = vmul.f32 %v4208, %v4208
        %v4235 = vadd.f32 %v4225, %v4226
        %v4236 = vadd.f32 %v4235, %v4227
        %v4237 = vadd.f32 %v4236, %v4228
        %v4238 = vadd.f32 %v4237, %v4229
        %v4239 = vadd.f32 %v4238, %v4230
        %v4240 = vadd.f32 %v4239, %v4231
        %v4241 = vadd.f32 %v4240, %v4232
        %v4242 = vadd.f32 %v4241, %v4233
        %v4243 = vadd.f32 %v4242, %v4234
        %v4244 = vrot.slane %v4243, 4
        %v4245 = vadd.f32 %v4243, %v4244
        %v4246 = vrot.slane %v4245, 2
        %v4247 = vadd.f32 %v4245, %v4246
        %v4248 = vrot.slane %v4247, 1
        %v4249 = vadd.f32 %v4247, %v4248
        %4250 = vst [vmem:[%s456] sm:$0x1] %v4249
        %s4251 = sand.u32 %s184, 1
        %s4252 = scalar_lea.sflag [#allocation4], %s4251
        %s4253 = sand.u32 %s184, 1
        %s4254 = smul.addr %s4253, 40
        %s4255 = scalar_lea.vmem [#allocation11], %s4254
        %s4256 = sand.u32 %s32, 1
        %s4257 = scalar_lea.sflag [#allocation13], %s4256
        %s4258 = sand.u32 %s214, 1
        %s4259 = scalar_lea.vmem [#allocation12], %s4258
        %s4260 = sand.u32 %s32, 1
        %s4261 = scalar_lea.sflag [#allocation13], %s4260
        %s4262 = sand.u32 %s244, 1
        %s4263 = scalar_lea.vmem [#allocation14], %s4262
        // Predicated region
        $region61: #{unet_block_forward.6} parent=39 // pred_check
          %p4264 = pneg %p194
        $region62: #{unet_block_forward.6} parent=39 // pred_check_branch
          %4266 = sbr.rel (%p4264) target = $region64
        $region63: #{unet_block_forward.6} parent=39 // pred_region
          %s4268 = ssub.s32 640, 640
          %4269 = vsyncadd %s4252, %s4268
          %s4270 = smul.addr %s37, 10
          %s4271 = smul.addr %s36, 80
          %s4272 = sadd.s32 %s4270, %s4271
          %s4273 = smul.addr %s4272, 64
          %s4274 = scalar_lea.hbm %s5, %s4273
          %s4275 = sshll.u32 %s4255, 4
          %s4276 = int_to_ptr.vmem [resolvable:$true] %s4275
          %4281 = dma.vmem_to_hbm [thread:$0]  %s4276, 640, %s4274, %s4252, 64, 64, 4
        $region64: #{unet_block_forward.6} parent=39 // pred_fallthru
          _
        // Predicated region
        $region65: #{unet_block_forward.6} parent=39 // pred_check
          %p4282 = pneg %p224
        $region66: #{unet_block_forward.6} parent=39 // pred_check_branch
          %4284 = sbr.rel (%p4282) target = $region68
        $region67: #{unet_block_forward.6} parent=39 // pred_region
          %s4285 = smul.u32 %s36, 8
          %s4286 = sadd.s32 %s4285, %s37
          %s4288 = ssub.s32 16, 16
          %4289 = vsyncadd %s4257, %s4288
          %s4290 = smul.addr %s4286, 16
          %s4291 = scalar_lea.hbm %s6, %s4290
          %s4293 = sshll.u32 %s4259, 4
          %s4294 = int_to_ptr.vmem [resolvable:$true] %s4293
          %4296 = dma.vmem_to_hbm [thread:$0]  %s4294, 16, %s4291, %s4257
        $region68: #{unet_block_forward.6} parent=39 // pred_fallthru
          _
        // Predicated region
        $region69: #{unet_block_forward.6} parent=39 // pred_check
          %p4297 = pneg %p254
        $region70: #{unet_block_forward.6} parent=39 // pred_check_branch
          %4299 = sbr.rel (%p4297) target = $region72
        $region71: #{unet_block_forward.6} parent=39 // pred_region
          %s4300 = smul.u32 %s36, 8
          %s4301 = sadd.s32 %s4300, %s37
          %s4303 = ssub.s32 16, 16
          %4304 = vsyncadd %s4261, %s4303
          %s4305 = smul.addr %s4301, 16
          %s4306 = scalar_lea.hbm %s7, %s4305
          %s4308 = sshll.u32 %s4263, 4
          %s4309 = int_to_ptr.vmem [resolvable:$true] %s4308
          %4311 = dma.vmem_to_hbm [thread:$0]  %s4309, 16, %s4306, %s4261
        $region72: #{unet_block_forward.6} parent=39 // pred_fallthru
          _
      $region40: #{unet_block_forward.6} parent=5 // pred_fallthru
        _
      %p4312 = scmp.le.s32.totalorder 2, %s27
      // Predicated region
      $region73: #{unet_block_forward.6} parent=5 // pred_check
        %p4313 = pneg %p4312
      $region74: #{unet_block_forward.6} parent=5 // pred_check_branch
        %4315 = sbr.rel (%p4313) target = $region76
      $region75: #{unet_block_forward.6} parent=5 // pred_region
        %s4316 = ssub.s32 %s27, 2
        // Predicated region
        $region77: #{unet_block_forward.6} parent=75 // pred_check
          %p4317 = pneg %p200
        $region78: #{unet_block_forward.6} parent=75 // pred_check_branch
          %4319 = sbr.rel (%p4317) target = $region80
        $region79: #{unet_block_forward.6} parent=75 // pred_region
          %s4320 = sand.u32 %s185, 1
          %s4321 = scalar_lea.sflag [#allocation4], %s4320
          %s4322 = sand.u32 %s185, 1
          %s4323 = smul.addr %s4322, 40
          %s4324 = scalar_lea.vmem [#allocation11], %s4323
          %4325 = dma.done %s4321, 640
        $region80: #{unet_block_forward.6} parent=75 // pred_fallthru
          _
        // Predicated region
        $region81: #{unet_block_forward.6} parent=75 // pred_check
          %p4326 = pneg %p230
        $region82: #{unet_block_forward.6} parent=75 // pred_check_branch
          %4328 = sbr.rel (%p4326) target = $region84
        $region83: #{unet_block_forward.6} parent=75 // pred_region
          %s4329 = sand.u32 %s33, 1
          %s4330 = scalar_lea.sflag [#allocation13], %s4329
          %s4331 = sand.u32 %s215, 1
          %s4332 = scalar_lea.vmem [#allocation12], %s4331
          %4333 = dma.done %s4330, 16
        $region84: #{unet_block_forward.6} parent=75 // pred_fallthru
          _
        // Predicated region
        $region85: #{unet_block_forward.6} parent=75 // pred_check
          %p4334 = pneg %p260
        $region86: #{unet_block_forward.6} parent=75 // pred_check_branch
          %4336 = sbr.rel (%p4334) target = $region88
        $region87: #{unet_block_forward.6} parent=75 // pred_region
          %s4337 = sand.u32 %s33, 1
          %s4338 = scalar_lea.sflag [#allocation13], %s4337
          %s4339 = sand.u32 %s245, 1
          %s4340 = scalar_lea.vmem [#allocation14], %s4339
          %4341 = dma.done %s4338, 16
        $region88: #{unet_block_forward.6} parent=75 // pred_fallthru
          _
      $region76: #{unet_block_forward.6} parent=5 // pred_fallthru
        _
    $region6: #{unet_block_forward.6} parent=1 // loop_footer
      %s31 = sadd.s32 1, %s27
    $region7: #{unet_block_forward.6} parent=1 // loop_footer_branch
      %26 = sbr.rel target = $region3
    $region8: #{unet_block_forward.6} parent=1 // loop_exit
      _
    %4342 = vsyncpa [#allocation3], 1
    %s4343 = scalar_lea.sflag [#allocation3], 1
    %4344 = vsyncpa %s4343, 1
    %4345 = vsyncpa [#allocation6], 1
    %s4346 = scalar_lea.sflag [#allocation6], 1
    %4347 = vsyncpa %s4346, 1
    %4348 = vsyncpa [#allocation9], 1
    %4349 = vsyncpa [#allocation4], 1
    %s4350 = scalar_lea.sflag [#allocation4], 1
    %4351 = vsyncpa %s4350, 1
    %4352 = vsyncpa [#allocation13], 1
    %s4353 = scalar_lea.sflag [#allocation13], 1
    %4354 = vsyncpa %s4353, 1

</llo_original>
